<compile_context>
chip_gen: v5e
topology: v5e:2x2
jax: 0.10.0
libtpu: 0.0.40
codegen_flags: <defaults>
</compile_context>

<pallas_src>
import functools

import jax
import jax.numpy as jnp
from jax.experimental import pallas as pl
from jax.experimental.pallas import tpu as pltpu


def _swish(x):
    return x * jax.nn.sigmoid(x)


# ------------------------------ fused Pallas kernel -------------------------------

def _fused_effnet_kernel(
    cols_ref,                                   # (b_tile, ho, wo, 9*c_in)  im2col'd stem input
    stem_w_ref, stem_b_ref,                     # (9*c_in, c_stem), (1, c_stem)   [BN folded]
    exp_w_ref, exp_b_ref,                       # (c_stem, c_exp) bf16, (1, c_exp) [BN folded]
    dw_w_ref, dw_b_ref,                         # (9, c_exp), (1, c_exp)           [BN folded]
    se_w1t_ref, se_b1_ref, se_w2t_ref, se_b2_ref,  # SE weights pre-transposed: (c_se,c_exp),(1,c_se),(c_exp,c_se),(1,c_exp)
    ph_w_ref, ph_b_ref,                         # project@head folded offline: (c_exp, c_head) bf16, (1, c_head)
    cls_w_ref, cls_b_ref,                       # (1, c_head), (1, 1)
    o_ref,                                      # (1, b_tile, 1)
    dwpad_ref,                                  # VMEM scratch (b_tile, ho+2, wo+2, c_exp)
    *, b_tile, ho, wo, c_exp,
):
    hw = ho * wo
    m = b_tile * hw
    k_stem = cols_ref.shape[-1]

    # ---- stem conv3x3/s2 (+folded BN) + swish: one full-M MXU matmul -------------------
    cols = cols_ref[...].reshape(m, k_stem)
    x0 = _swish(jnp.dot(cols, stem_w_ref[...], preferred_element_type=jnp.float32)
                + stem_b_ref[...])                                        # (m, c_stem) f32

    # ---- MBConv expand 1x1 (+folded BN) + swish: bf16 operands, f32 accumulation -------
    h = _swish(jnp.dot(x0.astype(jnp.bfloat16), exp_w_ref[...],
                       preferred_element_type=jnp.float32) + exp_b_ref[...])   # (m, c_exp)

    # ---- depthwise 3x3 stride 1 (+folded BN) + swish -----------------------------------
    # Halo scratch: only the 1-wide border needs zeroing (interior is fully overwritten
    # every step).  Zeroed every step because each TensorCore owns its own scratch under
    # megacore sharding (a program_id==0 guard would leave the second core's halo stale).
    zrow = jnp.zeros((b_tile, 1, wo + 2, c_exp), jnp.float32)
    zcol = jnp.zeros((b_tile, ho + 2, 1, c_exp), jnp.float32)
    dwpad_ref[:, 0:1, :, :] = zrow
    dwpad_ref[:, ho + 1:ho + 2, :, :] = zrow
    dwpad_ref[:, :, 0:1, :] = zcol
    dwpad_ref[:, :, wo + 1:wo + 2, :] = zcol
    dwpad_ref[:, 1:ho + 1, 1:wo + 1, :] = h.reshape(b_tile, ho, wo, c_exp)

    wd = dw_w_ref[...]                                      # hoisted: loaded once, indexed per tap
    acc3 = jnp.zeros((b_tile, ho, wo, c_exp), jnp.float32)
    for di in range(3):
        for dj in range(3):
            t = di * 3 + dj
            acc3 = acc3 + dwpad_ref[:, di:di + ho, dj:dj + wo, :] * wd[t:t + 1, :]
    d3 = _swish(acc3 + dw_b_ref[...]).reshape(b_tile, hw, c_exp)          # (b_tile, hw, c_exp)

    # ---- squeeze-and-excite: per-image, on the VPU/XLU (no MXU round-trip on this
    #      strictly serial path); contraction runs over the lane axis (pre-transposed W) --
    pooled = jnp.sum(d3, axis=1) * (1.0 / hw)                             # (b_tile, c_exp)
    s1 = _swish(jnp.sum(pooled[:, None, :] * se_w1t_ref[...][None, :, :], axis=-1)
                + se_b1_ref[...])                                         # (b_tile, c_se)
    se = jax.nn.sigmoid(jnp.sum(s1[:, None, :] * se_w2t_ref[...][None, :, :], axis=-1)
                        + se_b2_ref[...])                                 # (b_tile, c_exp)
    d3 = d3 * se[:, None, :]

    # ---- project 1x1 (+BN, linear) folded offline with head 1x1 (+BN) + swish (bf16 MXU)
    d2 = d3.reshape(m, c_exp).astype(jnp.bfloat16)
    h2 = _swish(jnp.dot(d2, ph_w_ref[...], preferred_element_type=jnp.float32)
                + ph_b_ref[...])                                          # (m, c_head) f32

    # ---- global avg pool + flatten + dropout(identity, eval) + Linear(c_head, 1) -------
    # TODO(synk): train-mode stochastic dropout not implemented (eval semantics only).
    c_head = ph_w_ref.shape[1]
    pooled2 = jnp.sum(h2.reshape(b_tile, hw, c_head), axis=1) * (1.0 / hw)  # (b_tile, c_head)
    out = jnp.sum(pooled2 * cls_w_ref[...], axis=1, keepdims=True) + cls_b_ref[...]
    o_ref[0] = out.astype(o_ref.dtype)                                    # one contiguous store


_WEIGHT_ORDER = ("stem_w", "stem_b", "exp_w", "exp_b", "dw_w", "dw_b",
                 "se_w1t", "se_b1", "se_w2t", "se_b2", "ph_w", "ph_b", "cls_w", "cls_b")


def _pick_b_tile(n, want=4):
    """Largest divisor of n that is <= `want`, preferring >= 2 grid steps (v7x megacore)."""
    divisors = [d for d in range(1, n + 1) if n % d == 0]
    candidates = ([d for d in divisors if d <= want and n // d >= 2]
                  or [d for d in divisors if d <= want])
    return max(candidates)


def _pallas_forward(cols, p, *, n, ho, wo, c_exp, b_tile):
    kern = functools.partial(_fused_effnet_kernel, b_tile=b_tile, ho=ho, wo=wo, c_exp=c_exp)
    weights = [p[k] for k in _WEIGHT_ORDER]
    num_blocks = n // b_tile
    k_stem = cols.shape[-1]

    def _full(a):
        return pl.BlockSpec(a.shape, lambda b, nd=a.ndim: (0,) * nd)

    cols_spec = pl.BlockSpec((b_tile, ho, wo, k_stem), lambda b: (b, 0, 0, 0))
    in_specs = [cols_spec] + [_full(w) for w in weights]
    out_spec = pl.BlockSpec((1, b_tile, 1), lambda b: (b, 0, 0))

    out = pl.pallas_call(
        kern,
        out_shape=jax.ShapeDtypeStruct((num_blocks, b_tile, 1), jnp.float32),
        grid_spec=pltpu.PrefetchScalarGridSpec(
            num_scalar_prefetch=0,
            grid=(num_blocks,),
            in_specs=in_specs,
            out_specs=out_spec,
            scratch_shapes=[pltpu.VMEM((b_tile, ho + 2, wo + 2, c_exp), jnp.float32)],
        ),
        compiler_params=pltpu.CompilerParams(
            dimension_semantics=("parallel",),       # shard batch blocks across TCs (v7x megacore)
            # 32 MiB scoped: safe on v5e/v6e (128 MiB) and within v7x's 64 MiB physical VMEM.
            vmem_limit_bytes=32 * 1024 * 1024,
        ),
    )(cols, *weights)
    return out.reshape(n, 1)


# --------------------------------- JAX glue / params -------------------------------

def fold_bn(w, gamma, beta, mean, var, eps=1e-3):
    """Fold inference BatchNorm into the preceding (bias-free) conv/matmul weight."""
    scale = gamma / jnp.sqrt(var + eps)
    return w * scale[None, :], (beta - mean * scale).reshape(1, -1)


def init_params(key):
    keys = jax.random.split(key, 16)

    def nrm(k, shape, scale=0.1):
        return scale * jax.random.normal(k, shape, jnp.float32)

    def bn(k, c):
        k1, k2, k3, k4 = jax.random.split(k, 4)
        gamma = 1.0 + 0.05 * jax.random.normal(k1, (c,), jnp.float32)
        beta = 0.05 * jax.random.normal(k2, (c,), jnp.float32)
        mean = 0.05 * jax.random.normal(k3, (c,), jnp.float32)
        var = 1.0 + 0.1 * jnp.abs(jax.random.normal(k4, (c,), jnp.float32))
        return gamma, beta, mean, var

    C_IN, C_STEM, C_EXP, C_SE, C_PROJ, C_HEAD = 3, 8, 32, 8, 16, 32
    p = {}
    # Stem rows ordered tap-major / channel-minor (t*C_IN + c), matching the wrapper im2col.
    p["stem_w"], p["stem_b"] = fold_bn(nrm(keys[0], (9 * C_IN, C_STEM)), *bn(keys[1], C_STEM))
    exp_w, p["exp_b"] = fold_bn(nrm(keys[2], (C_STEM, C_EXP)), *bn(keys[3], C_EXP))
    p["exp_w"] = exp_w.astype(jnp.bfloat16)          # bf16 MXU operand (f32 accumulation)
    p["dw_w"], p["dw_b"] = fold_bn(nrm(keys[4], (9, C_EXP)), *bn(keys[5], C_EXP))
    # SE weights stored pre-transposed so the in-kernel VPU contraction is a lane reduction.
    p["se_w1t"] = nrm(keys[6], (C_SE, C_EXP))
    p["se_b1"] = nrm(keys[7], (1, C_SE))
    p["se_w2t"] = nrm(keys[8], (C_EXP, C_SE))
    p["se_b2"] = nrm(keys[9], (1, C_EXP))
    proj_w, proj_b = fold_bn(nrm(keys[10], (C_EXP, C_PROJ)), *bn(keys[11], C_PROJ))
    head_w, head_b = fold_bn(nrm(keys[12], (C_PROJ, C_HEAD)), *bn(keys[13], C_HEAD))
    # Offline fold of project (linear) @ head 1x1 — mathematically exact.
    p["ph_w"] = (proj_w @ head_w).astype(jnp.bfloat16)
    p["ph_b"] = proj_b @ head_w + head_b
    p["cls_w"] = nrm(keys[14], (1, C_HEAD))
    p["cls_b"] = nrm(keys[15], (1, 1))
    return p


def efficientnet_gen_forward(x_nchw, p):
    """Equivalent of EfficientNetGen.forward (inference), fully fused on TPU."""
    x = jnp.transpose(x_nchw, (0, 2, 3, 1)).astype(jnp.float32)      # NCHW -> NHWC
    n, h, w, c_in = x.shape
    assert h % 2 == 0 and w % 2 == 0, "even spatial dims required for the stride-2 stem"
    ho, wo = h // 2, w // 2
    # Wrapper-side im2col for the stride-2 stem: HBM bytes are trivial at this size and it
    # turns the in-kernel stem into a single full-M MXU matmul (no 27-tap broadcast chain).
    xp = jnp.pad(x, ((0, 0), (1, 1), (1, 1), (0, 0)))
    cols = jnp.concatenate(
        [xp[:, di:di + h:2, dj:dj + w:2, :] for di in range(3) for dj in range(3)],
        axis=-1)                                                      # (n, ho, wo, 9*c_in)
    c_exp = p["dw_w"].shape[1]
    b_tile = _pick_b_tile(n)
    return _pallas_forward(cols, p, n=n, ho=ho, wo=wo, c_exp=c_exp, b_tile=b_tile)


if __name__ == "__main__":
    key = jax.random.PRNGKey(0)
    kx, kp = jax.random.split(key)
    # batch=8 so that b_tile=4 (M = 4*64 = 256 rows per matmul) still leaves a 2-step
    # grid for v7x's two TensorCores.
    x = jax.random.normal(kx, (8, 3, 16, 16), jnp.float32)            # NCHW, like PyTorch
    params = init_params(kp)

    out = jax.jit(efficientnet_gen_forward)(x, params)
    out = jax.block_until_ready(out)
    assert out.shape == (8, 1) and out.dtype == jnp.float32
    print("KERNEL_OK")
</pallas_src>

<mosaic_0001>
module attributes {stable_mosaic.version = 11 : i64} {
  func.func @_fused_effnet_kernel(%arg0: i32, %arg1: memref<4x8x8x27xf32, #tpu.memory_space<vmem>>, %arg2: memref<27x8xf32, #tpu.memory_space<vmem>>, %arg3: memref<1x8xf32, #tpu.memory_space<vmem>>, %arg4: memref<8x32xbf16, #tpu.memory_space<vmem>>, %arg5: memref<1x32xf32, #tpu.memory_space<vmem>>, %arg6: memref<9x32xf32, #tpu.memory_space<vmem>>, %arg7: memref<1x32xf32, #tpu.memory_space<vmem>>, %arg8: memref<8x32xf32, #tpu.memory_space<vmem>>, %arg9: memref<1x8xf32, #tpu.memory_space<vmem>>, %arg10: memref<32x8xf32, #tpu.memory_space<vmem>>, %arg11: memref<1x32xf32, #tpu.memory_space<vmem>>, %arg12: memref<32x32xbf16, #tpu.memory_space<vmem>>, %arg13: memref<1x32xf32, #tpu.memory_space<vmem>>, %arg14: memref<1x32xf32, #tpu.memory_space<vmem>>, %arg15: memref<1x1xf32, #tpu.memory_space<vmem>>, %arg16: memref<1x4x1xf32, #tpu.memory_space<vmem>>, %arg17: memref<4x10x10x32xf32, #tpu.memory_space<vmem>>) attributes {dimension_semantics = [#tpu.dimension_semantics<parallel>], iteration_bounds = array<i64: 2>, scalar_prefetch = 0 : i64, scratch_operands = 1 : i64, tpu.core_type = #tpu.core_type<tc>, window_params = [{transform_indices = @transform_0, window_bounds = array<i64: 4, 8, 8, 27>}, {pipeline_mode = #tpu.pipeline_mode<synchronous>, transform_indices = @transform_1, window_bounds = array<i64: 27, 8>}, {pipeline_mode = #tpu.pipeline_mode<synchronous>, transform_indices = @transform_2, window_bounds = array<i64: 1, 8>}, {pipeline_mode = #tpu.pipeline_mode<synchronous>, transform_indices = @transform_3, window_bounds = array<i64: 8, 32>}, {pipeline_mode = #tpu.pipeline_mode<synchronous>, transform_indices = @transform_4, window_bounds = array<i64: 1, 32>}, {pipeline_mode = #tpu.pipeline_mode<synchronous>, transform_indices = @transform_5, window_bounds = array<i64: 9, 32>}, {pipeline_mode = #tpu.pipeline_mode<synchronous>, transform_indices = @transform_6, window_bounds = array<i64: 1, 32>}, {pipeline_mode = #tpu.pipeline_mode<synchronous>, transform_indices = @transform_7, window_bounds = array<i64: 8, 32>}, {pipeline_mode = #tpu.pipeline_mode<synchronous>, transform_indices = @transform_8, window_bounds = array<i64: 1, 8>}, {pipeline_mode = #tpu.pipeline_mode<synchronous>, transform_indices = @transform_9, window_bounds = array<i64: 32, 8>}, {pipeline_mode = #tpu.pipeline_mode<synchronous>, transform_indices = @transform_10, window_bounds = array<i64: 1, 32>}, {pipeline_mode = #tpu.pipeline_mode<synchronous>, transform_indices = @transform_11, window_bounds = array<i64: 32, 32>}, {pipeline_mode = #tpu.pipeline_mode<synchronous>, transform_indices = @transform_12, window_bounds = array<i64: 1, 32>}, {pipeline_mode = #tpu.pipeline_mode<synchronous>, transform_indices = @transform_13, window_bounds = array<i64: 1, 32>}, {pipeline_mode = #tpu.pipeline_mode<synchronous>, transform_indices = @transform_14, window_bounds = array<i64: 1, 1>}, {transform_indices = @transform_15, window_bounds = array<i64: 1, 4, 1>}]} {
    %c0 = arith.constant 0 : index
    %c0_0 = arith.constant 0 : index
    %c0_1 = arith.constant 0 : index
    %c0_2 = arith.constant 0 : index
    %0 = vector.load %arg1[%c0, %c0_0, %c0_1, %c0_2] : memref<4x8x8x27xf32, #tpu.memory_space<vmem>>, vector<4x8x8x27xf32>
    %1 = vector.shape_cast %0 : vector<4x8x8x27xf32> to vector<256x27xf32>
    %c0_3 = arith.constant 0 : index
    %c0_4 = arith.constant 0 : index
    %2 = vector.load %arg2[%c0_3, %c0_4] : memref<27x8xf32, #tpu.memory_space<vmem>>, vector<27x8xf32>
    %cst = arith.constant dense<0.000000e+00> : vector<256x8xf32>
    %3 = tpu.matmul %1, %2, %cst {dimension_numbers = #tpu.dot_dimension_numbers<[1], [0], [0], [1], [0, 0, 1, 1], [], []>} : vector<256x27xf32>, vector<27x8xf32>, vector<256x8xf32> -> vector<256x8xf32>
    %c0_5 = arith.constant 0 : index
    %c0_6 = arith.constant 0 : index
    %4 = vector.load %arg3[%c0_5, %c0_6] : memref<1x8xf32, #tpu.memory_space<vmem>>, vector<1x8xf32>
    %5 = vector.broadcast %4 : vector<1x8xf32> to vector<256x8xf32>
    %6 = arith.addf %3, %5 : vector<256x8xf32>
    %7 = arith.negf %6 : vector<256x8xf32>
    %8 = math.exp %7 : vector<256x8xf32>
    %cst_7 = arith.constant 1.000000e+00 : f32
    %9 = vector.broadcast %cst_7 : f32 to vector<256x8xf32>
    %10 = arith.addf %9, %8 : vector<256x8xf32>
    %11 = arith.divf %9, %10 : vector<256x8xf32>
    %12 = arith.mulf %6, %11 : vector<256x8xf32>
    %13 = arith.truncf %12 : vector<256x8xf32> to vector<256x8xbf16>
    %c0_8 = arith.constant 0 : index
    %c0_9 = arith.constant 0 : index
    %14 = vector.load %arg4[%c0_8, %c0_9] : memref<8x32xbf16, #tpu.memory_space<vmem>>, vector<8x32xbf16>
    %cst_10 = arith.constant dense<0.000000e+00> : vector<256x32xf32>
    %15 = tpu.matmul %13, %14, %cst_10 {dimension_numbers = #tpu.dot_dimension_numbers<[1], [0], [0], [1], [0, 0, 1, 1], [], []>} : vector<256x8xbf16>, vector<8x32xbf16>, vector<256x32xf32> -> vector<256x32xf32>
    %c0_11 = arith.constant 0 : index
    %c0_12 = arith.constant 0 : index
    %16 = vector.load %arg5[%c0_11, %c0_12] : memref<1x32xf32, #tpu.memory_space<vmem>>, vector<1x32xf32>
    %17 = vector.broadcast %16 : vector<1x32xf32> to vector<256x32xf32>
    %18 = arith.addf %15, %17 : vector<256x32xf32>
    %19 = arith.negf %18 : vector<256x32xf32>
    %20 = math.exp %19 : vector<256x32xf32>
    %cst_13 = arith.constant 1.000000e+00 : f32
    %21 = vector.broadcast %cst_13 : f32 to vector<256x32xf32>
    %22 = arith.addf %21, %20 : vector<256x32xf32>
    %23 = arith.divf %21, %22 : vector<256x32xf32>
    %24 = arith.mulf %18, %23 : vector<256x32xf32>
    %cst_14 = arith.constant 0.000000e+00 : f32
    %25 = vector.broadcast %cst_14 : f32 to vector<4x1x10x32xf32>
    %cst_15 = arith.constant 0.000000e+00 : f32
    %26 = vector.broadcast %cst_15 : f32 to vector<4x10x1x32xf32>
    %c0_16 = arith.constant 0 : index
    %c0_17 = arith.constant 0 : index
    %c0_18 = arith.constant 0 : index
    %c0_19 = arith.constant 0 : index
    %27 = vector.load %arg17[%c0_16, %c0_17, %c0_18, %c0_19] : memref<4x10x10x32xf32, #tpu.memory_space<vmem>>, vector<4x1x10x32xf32>
    tpu.vector_store %arg17[%c0_16, %c0_17, %c0_18, %c0_19], %25 {strides = array<i32>} : memref<4x10x10x32xf32, #tpu.memory_space<vmem>>, vector<4x1x10x32xf32>,
    %c0_20 = arith.constant 0 : index
    %c9 = arith.constant 9 : index
    %c0_21 = arith.constant 0 : index
    %c0_22 = arith.constant 0 : index
    %28 = vector.load %arg17[%c0_20, %c9, %c0_21, %c0_22] : memref<4x10x10x32xf32, #tpu.memory_space<vmem>>, vector<4x1x10x32xf32>
    tpu.vector_store %arg17[%c0_20, %c9, %c0_21, %c0_22], %25 {strides = array<i32>} : memref<4x10x10x32xf32, #tpu.memory_space<vmem>>, vector<4x1x10x32xf32>,
    %c0_23 = arith.constant 0 : index
    %c0_24 = arith.constant 0 : index
    %c0_25 = arith.constant 0 : index
    %c0_26 = arith.constant 0 : index
    %29 = vector.load %arg17[%c0_23, %c0_24, %c0_25, %c0_26] : memref<4x10x10x32xf32, #tpu.memory_space<vmem>>, vector<4x10x1x32xf32>
    tpu.vector_store %arg17[%c0_23, %c0_24, %c0_25, %c0_26], %26 {strides = array<i32>} : memref<4x10x10x32xf32, #tpu.memory_space<vmem>>, vector<4x10x1x32xf32>,
    %c0_27 = arith.constant 0 : index
    %c0_28 = arith.constant 0 : index
    %c9_29 = arith.constant 9 : index
    %c0_30 = arith.constant 0 : index
    %30 = vector.load %arg17[%c0_27, %c0_28, %c9_29, %c0_30] : memref<4x10x10x32xf32, #tpu.memory_space<vmem>>, vector<4x10x1x32xf32>
    tpu.vector_store %arg17[%c0_27, %c0_28, %c9_29, %c0_30], %26 {strides = array<i32>} : memref<4x10x10x32xf32, #tpu.memory_space<vmem>>, vector<4x10x1x32xf32>,
    %31 = vector.shape_cast %24 : vector<256x32xf32> to vector<4x8x8x32xf32>
    %c0_31 = arith.constant 0 : index
    %c1 = arith.constant 1 : index
    %c1_32 = arith.constant 1 : index
    %c0_33 = arith.constant 0 : index
    %32 = vector.load %arg17[%c0_31, %c1, %c1_32, %c0_33] : memref<4x10x10x32xf32, #tpu.memory_space<vmem>>, vector<4x8x8x32xf32>
    tpu.vector_store %arg17[%c0_31, %c1, %c1_32, %c0_33], %31 {strides = array<i32>} : memref<4x10x10x32xf32, #tpu.memory_space<vmem>>, vector<4x8x8x32xf32>,
    %c0_34 = arith.constant 0 : index
    %c0_35 = arith.constant 0 : index
    %33 = vector.load %arg6[%c0_34, %c0_35] : memref<9x32xf32, #tpu.memory_space<vmem>>, vector<9x32xf32>
    %cst_36 = arith.constant 0.000000e+00 : f32
    %34 = vector.broadcast %cst_36 : f32 to vector<4x8x8x32xf32>
    %c0_37 = arith.constant 0 : index
    %c0_38 = arith.constant 0 : index
    %c0_39 = arith.constant 0 : index
    %c0_40 = arith.constant 0 : index
    %35 = vector.load %arg17[%c0_37, %c0_38, %c0_39, %c0_40] : memref<4x10x10x32xf32, #tpu.memory_space<vmem>>, vector<4x8x8x32xf32>
    %36 = vector.extract_strided_slice %33 {offsets = [0, 0], sizes = [1, 32], strides = [1, 1]} : vector<9x32xf32> to vector<1x32xf32>
    %37 = vector.shape_cast %36 : vector<1x32xf32> to vector<1x1x1x32xf32>
    %38 = vector.broadcast %37 : vector<1x1x1x32xf32> to vector<4x8x8x32xf32>
    %39 = arith.mulf %35, %38 : vector<4x8x8x32xf32>
    %40 = arith.addf %34, %39 : vector<4x8x8x32xf32>
    %c0_41 = arith.constant 0 : index
    %c0_42 = arith.constant 0 : index
    %c1_43 = arith.constant 1 : index
    %c0_44 = arith.constant 0 : index
    %41 = vector.load %arg17[%c0_41, %c0_42, %c1_43, %c0_44] : memref<4x10x10x32xf32, #tpu.memory_space<vmem>>, vector<4x8x8x32xf32>
    %42 = vector.extract_strided_slice %33 {offsets = [1, 0], sizes = [1, 32], strides = [1, 1]} : vector<9x32xf32> to vector<1x32xf32>
    %43 = vector.shape_cast %42 : vector<1x32xf32> to vector<1x1x1x32xf32>
    %44 = vector.broadcast %43 : vector<1x1x1x32xf32> to vector<4x8x8x32xf32>
    %45 = arith.mulf %41, %44 : vector<4x8x8x32xf32>
    %46 = arith.addf %40, %45 : vector<4x8x8x32xf32>
    %c0_45 = arith.constant 0 : index
    %c0_46 = arith.constant 0 : index
    %c2 = arith.constant 2 : index
    %c0_47 = arith.constant 0 : index
    %47 = vector.load %arg17[%c0_45, %c0_46, %c2, %c0_47] : memref<4x10x10x32xf32, #tpu.memory_space<vmem>>, vector<4x8x8x32xf32>
    %48 = vector.extract_strided_slice %33 {offsets = [2, 0], sizes = [1, 32], strides = [1, 1]} : vector<9x32xf32> to vector<1x32xf32>
    %49 = vector.shape_cast %48 : vector<1x32xf32> to vector<1x1x1x32xf32>
    %50 = vector.broadcast %49 : vector<1x1x1x32xf32> to vector<4x8x8x32xf32>
    %51 = arith.mulf %47, %50 : vector<4x8x8x32xf32>
    %52 = arith.addf %46, %51 : vector<4x8x8x32xf32>
    %c0_48 = arith.constant 0 : index
    %c1_49 = arith.constant 1 : index
    %c0_50 = arith.constant 0 : index
    %c0_51 = arith.constant 0 : index
    %53 = vector.load %arg17[%c0_48, %c1_49, %c0_50, %c0_51] : memref<4x10x10x32xf32, #tpu.memory_space<vmem>>, vector<4x8x8x32xf32>
    %54 = vector.extract_strided_slice %33 {offsets = [3, 0], sizes = [1, 32], strides = [1, 1]} : vector<9x32xf32> to vector<1x32xf32>
    %55 = vector.shape_cast %54 : vector<1x32xf32> to vector<1x1x1x32xf32>
    %56 = vector.broadcast %55 : vector<1x1x1x32xf32> to vector<4x8x8x32xf32>
    %57 = arith.mulf %53, %56 : vector<4x8x8x32xf32>
    %58 = arith.addf %52, %57 : vector<4x8x8x32xf32>
    %c0_52 = arith.constant 0 : index
    %c1_53 = arith.constant 1 : index
    %c1_54 = arith.constant 1 : index
    %c0_55 = arith.constant 0 : index
    %59 = vector.load %arg17[%c0_52, %c1_53, %c1_54, %c0_55] : memref<4x10x10x32xf32, #tpu.memory_space<vmem>>, vector<4x8x8x32xf32>
    %60 = vector.extract_strided_slice %33 {offsets = [4, 0], sizes = [1, 32], strides = [1, 1]} : vector<9x32xf32> to vector<1x32xf32>
    %61 = vector.shape_cast %60 : vector<1x32xf32> to vector<1x1x1x32xf32>
    %62 = vector.broadcast %61 : vector<1x1x1x32xf32> to vector<4x8x8x32xf32>
    %63 = arith.mulf %59, %62 : vector<4x8x8x32xf32>
    %64 = arith.addf %58, %63 : vector<4x8x8x32xf32>
    %c0_56 = arith.constant 0 : index
    %c1_57 = arith.constant 1 : index
    %c2_58 = arith.constant 2 : index
    %c0_59 = arith.constant 0 : index
    %65 = vector.load %arg17[%c0_56, %c1_57, %c2_58, %c0_59] : memref<4x10x10x32xf32, #tpu.memory_space<vmem>>, vector<4x8x8x32xf32>
    %66 = vector.extract_strided_slice %33 {offsets = [5, 0], sizes = [1, 32], strides = [1, 1]} : vector<9x32xf32> to vector<1x32xf32>
    %67 = vector.shape_cast %66 : vector<1x32xf32> to vector<1x1x1x32xf32>
    %68 = vector.broadcast %67 : vector<1x1x1x32xf32> to vector<4x8x8x32xf32>
    %69 = arith.mulf %65, %68 : vector<4x8x8x32xf32>
    %70 = arith.addf %64, %69 : vector<4x8x8x32xf32>
    %c0_60 = arith.constant 0 : index
    %c2_61 = arith.constant 2 : index
    %c0_62 = arith.constant 0 : index
    %c0_63 = arith.constant 0 : index
    %71 = vector.load %arg17[%c0_60, %c2_61, %c0_62, %c0_63] : memref<4x10x10x32xf32, #tpu.memory_space<vmem>>, vector<4x8x8x32xf32>
    %72 = vector.extract_strided_slice %33 {offsets = [6, 0], sizes = [1, 32], strides = [1, 1]} : vector<9x32xf32> to vector<1x32xf32>
    %73 = vector.shape_cast %72 : vector<1x32xf32> to vector<1x1x1x32xf32>
    %74 = vector.broadcast %73 : vector<1x1x1x32xf32> to vector<4x8x8x32xf32>
    %75 = arith.mulf %71, %74 : vector<4x8x8x32xf32>
    %76 = arith.addf %70, %75 : vector<4x8x8x32xf32>
    %c0_64 = arith.constant 0 : index
    %c2_65 = arith.constant 2 : index
    %c1_66 = arith.constant 1 : index
    %c0_67 = arith.constant 0 : index
    %77 = vector.load %arg17[%c0_64, %c2_65, %c1_66, %c0_67] : memref<4x10x10x32xf32, #tpu.memory_space<vmem>>, vector<4x8x8x32xf32>
    %78 = vector.extract_strided_slice %33 {offsets = [7, 0], sizes = [1, 32], strides = [1, 1]} : vector<9x32xf32> to vector<1x32xf32>
    %79 = vector.shape_cast %78 : vector<1x32xf32> to vector<1x1x1x32xf32>
    %80 = vector.broadcast %79 : vector<1x1x1x32xf32> to vector<4x8x8x32xf32>
    %81 = arith.mulf %77, %80 : vector<4x8x8x32xf32>
    %82 = arith.addf %76, %81 : vector<4x8x8x32xf32>
    %c0_68 = arith.constant 0 : index
    %c2_69 = arith.constant 2 : index
    %c2_70 = arith.constant 2 : index
    %c0_71 = arith.constant 0 : index
    %83 = vector.load %arg17[%c0_68, %c2_69, %c2_70, %c0_71] : memref<4x10x10x32xf32, #tpu.memory_space<vmem>>, vector<4x8x8x32xf32>
    %84 = vector.extract_strided_slice %33 {offsets = [8, 0], sizes = [1, 32], strides = [1, 1]} : vector<9x32xf32> to vector<1x32xf32>
    %85 = vector.shape_cast %84 : vector<1x32xf32> to vector<1x1x1x32xf32>
    %86 = vector.broadcast %85 : vector<1x1x1x32xf32> to vector<4x8x8x32xf32>
    %87 = arith.mulf %83, %86 : vector<4x8x8x32xf32>
    %88 = arith.addf %82, %87 : vector<4x8x8x32xf32>
    %c0_72 = arith.constant 0 : index
    %c0_73 = arith.constant 0 : index
    %89 = vector.load %arg7[%c0_72, %c0_73] : memref<1x32xf32, #tpu.memory_space<vmem>>, vector<1x32xf32>
    %90 = vector.shape_cast %89 : vector<1x32xf32> to vector<1x1x1x32xf32>
    %91 = vector.broadcast %90 : vector<1x1x1x32xf32> to vector<4x8x8x32xf32>
    %92 = arith.addf %88, %91 : vector<4x8x8x32xf32>
    %93 = arith.negf %92 : vector<4x8x8x32xf32>
    %94 = math.exp %93 : vector<4x8x8x32xf32>
    %cst_74 = arith.constant 1.000000e+00 : f32
    %95 = vector.broadcast %cst_74 : f32 to vector<4x8x8x32xf32>
    %96 = arith.addf %95, %94 : vector<4x8x8x32xf32>
    %97 = arith.divf %95, %96 : vector<4x8x8x32xf32>
    %98 = arith.mulf %92, %97 : vector<4x8x8x32xf32>
    %99 = vector.shape_cast %98 : vector<4x8x8x32xf32> to vector<4x64x32xf32>
    %cst_75 = arith.constant dense<0.000000e+00> : vector<4x32xf32>
    %100 = vector.multi_reduction <add>, %99, %cst_75 [1] : vector<4x64x32xf32> to vector<4x32xf32>
    %cst_76 = arith.constant 1.562500e-02 : f32
    %101 = vector.broadcast %cst_76 : f32 to vector<4x32xf32>
    %102 = arith.mulf %100, %101 : vector<4x32xf32>
    %103 = vector.shape_cast %102 : vector<4x32xf32> to vector<4x1x32xf32>
    %c0_77 = arith.constant 0 : index
    %c0_78 = arith.constant 0 : index
    %104 = vector.load %arg8[%c0_77, %c0_78] : memref<8x32xf32, #tpu.memory_space<vmem>>, vector<8x32xf32>
    %105 = vector.shape_cast %104 : vector<8x32xf32> to vector<1x8x32xf32>
    %106 = vector.broadcast %103 : vector<4x1x32xf32> to vector<4x8x32xf32>
    %107 = vector.broadcast %105 : vector<1x8x32xf32> to vector<4x8x32xf32>
    %108 = arith.mulf %106, %107 : vector<4x8x32xf32>
    %cst_79 = arith.constant dense<0.000000e+00> : vector<4x8xf32>
    %109 = vector.multi_reduction <add>, %108, %cst_79 [2] : vector<4x8x32xf32> to vector<4x8xf32>
    %c0_80 = arith.constant 0 : index
    %c0_81 = arith.constant 0 : index
    %110 = vector.load %arg9[%c0_80, %c0_81] : memref<1x8xf32, #tpu.memory_space<vmem>>, vector<1x8xf32>
    %111 = vector.broadcast %110 : vector<1x8xf32> to vector<4x8xf32>
    %112 = arith.addf %109, %111 : vector<4x8xf32>
    %113 = arith.negf %112 : vector<4x8xf32>
    %114 = math.exp %113 : vector<4x8xf32>
    %cst_82 = arith.constant 1.000000e+00 : f32
    %115 = vector.broadcast %cst_82 : f32 to vector<4x8xf32>
    %116 = arith.addf %115, %114 : vector<4x8xf32>
    %117 = arith.divf %115, %116 : vector<4x8xf32>
    %118 = arith.mulf %112, %117 : vector<4x8xf32>
    %119 = vector.shape_cast %118 : vector<4x8xf32> to vector<4x1x8xf32>
    %c0_83 = arith.constant 0 : index
    %c0_84 = arith.constant 0 : index
    %120 = vector.load %arg10[%c0_83, %c0_84] : memref<32x8xf32, #tpu.memory_space<vmem>>, vector<32x8xf32>
    %121 = vector.shape_cast %120 : vector<32x8xf32> to vector<1x32x8xf32>
    %122 = vector.broadcast %119 : vector<4x1x8xf32> to vector<4x32x8xf32>
    %123 = vector.broadcast %121 : vector<1x32x8xf32> to vector<4x32x8xf32>
    %124 = arith.mulf %122, %123 : vector<4x32x8xf32>
    %cst_85 = arith.constant dense<0.000000e+00> : vector<4x32xf32>
    %125 = vector.multi_reduction <add>, %124, %cst_85 [2] : vector<4x32x8xf32> to vector<4x32xf32>
    %c0_86 = arith.constant 0 : index
    %c0_87 = arith.constant 0 : index
    %126 = vector.load %arg11[%c0_86, %c0_87] : memref<1x32xf32, #tpu.memory_space<vmem>>, vector<1x32xf32>
    %127 = vector.broadcast %126 : vector<1x32xf32> to vector<4x32xf32>
    %128 = arith.addf %125, %127 : vector<4x32xf32>
    %129 = arith.negf %128 : vector<4x32xf32>
    %130 = math.exp %129 : vector<4x32xf32>
    %cst_88 = arith.constant 1.000000e+00 : f32
    %131 = vector.broadcast %cst_88 : f32 to vector<4x32xf32>
    %132 = arith.addf %131, %130 : vector<4x32xf32>
    %133 = arith.divf %131, %132 : vector<4x32xf32>
    %134 = vector.shape_cast %133 : vector<4x32xf32> to vector<4x1x32xf32>
    %135 = vector.broadcast %134 : vector<4x1x32xf32> to vector<4x64x32xf32>
    %136 = arith.mulf %99, %135 : vector<4x64x32xf32>
    %137 = vector.shape_cast %136 : vector<4x64x32xf32> to vector<256x32xf32>
    %138 = arith.truncf %137 : vector<256x32xf32> to vector<256x32xbf16>
    %c0_89 = arith.constant 0 : index
    %c0_90 = arith.constant 0 : index
    %139 = vector.load %arg12[%c0_89, %c0_90] : memref<32x32xbf16, #tpu.memory_space<vmem>>, vector<32x32xbf16>
    %cst_91 = arith.constant dense<0.000000e+00> : vector<256x32xf32>
    %140 = tpu.matmul %138, %139, %cst_91 {dimension_numbers = #tpu.dot_dimension_numbers<[1], [0], [0], [1], [0, 0, 1, 1], [], []>} : vector<256x32xbf16>, vector<32x32xbf16>, vector<256x32xf32> -> vector<256x32xf32>
    %c0_92 = arith.constant 0 : index
    %c0_93 = arith.constant 0 : index
    %141 = vector.load %arg13[%c0_92, %c0_93] : memref<1x32xf32, #tpu.memory_space<vmem>>, vector<1x32xf32>
    %142 = vector.broadcast %141 : vector<1x32xf32> to vector<256x32xf32>
    %143 = arith.addf %140, %142 : vector<256x32xf32>
    %144 = arith.negf %143 : vector<256x32xf32>
    %145 = math.exp %144 : vector<256x32xf32>
    %cst_94 = arith.constant 1.000000e+00 : f32
    %146 = vector.broadcast %cst_94 : f32 to vector<256x32xf32>
    %147 = arith.addf %146, %145 : vector<256x32xf32>
    %148 = arith.divf %146, %147 : vector<256x32xf32>
    %149 = arith.mulf %143, %148 : vector<256x32xf32>
    %150 = vector.shape_cast %149 : vector<256x32xf32> to vector<4x64x32xf32>
    %cst_95 = arith.constant dense<0.000000e+00> : vector<4x32xf32>
    %151 = vector.multi_reduction <add>, %150, %cst_95 [1] : vector<4x64x32xf32> to vector<4x32xf32>
    %cst_96 = arith.constant 1.562500e-02 : f32
    %152 = vector.broadcast %cst_96 : f32 to vector<4x32xf32>
    %153 = arith.mulf %151, %152 : vector<4x32xf32>
    %c0_97 = arith.constant 0 : index
    %c0_98 = arith.constant 0 : index
    %154 = vector.load %arg14[%c0_97, %c0_98] : memref<1x32xf32, #tpu.memory_space<vmem>>, vector<1x32xf32>
    %155 = vector.broadcast %154 : vector<1x32xf32> to vector<4x32xf32>
    %156 = arith.mulf %153, %155 : vector<4x32xf32>
    %cst_99 = arith.constant dense<0.000000e+00> : vector<4xf32>
    %157 = vector.multi_reduction <add>, %156, %cst_99 [1] : vector<4x32xf32> to vector<4xf32>
    %158 = vector.shape_cast %157 : vector<4xf32> to vector<4x1xf32>
    %c0_100 = arith.constant 0 : index
    %c0_101 = arith.constant 0 : index
    %159 = vector.load %arg15[%c0_100, %c0_101] : memref<1x1xf32, #tpu.memory_space<vmem>>, vector<1x1xf32>
    %160 = vector.broadcast %159 : vector<1x1xf32> to vector<4x1xf32>
    %161 = arith.addf %158, %160 : vector<4x1xf32>
    %c0_102 = arith.constant 0 : index
    %c0_103 = arith.constant 0 : index
    %c0_104 = arith.constant 0 : index
    %162 = vector.load %arg16[%c0_102, %c0_103, %c0_104] : memref<1x4x1xf32, #tpu.memory_space<vmem>>, vector<1x4x1xf32>
    %163 = vector.shape_cast %162 : vector<1x4x1xf32> to vector<4x1xf32>
    %164 = vector.shape_cast %161 : vector<4x1xf32> to vector<1x4x1xf32>
    tpu.vector_store %arg16[%c0_102, %c0_103, %c0_104], %164 {strides = array<i32>} : memref<1x4x1xf32, #tpu.memory_space<vmem>>, vector<1x4x1xf32>,
    return
  }
  func.func @transform_0(%arg0: i32) -> (i32, i32, i32, i32) {
    %c0_i32 = arith.constant 0 : i32
    %c0_i32_0 = arith.constant 0 : i32
    %c0_i32_1 = arith.constant 0 : i32
    %c0_i32_2 = arith.constant 0 : i32
    return %arg0, %c0_i32, %c0_i32_0, %c0_i32_1 : i32, i32, i32, i32
  }
  func.func @transform_1(%arg0: i32) -> (i32, i32) {
    %c0_i32 = arith.constant 0 : i32
    %c0_i32_0 = arith.constant 0 : i32
    %c0_i32_1 = arith.constant 0 : i32
    return %c0_i32, %c0_i32_0 : i32, i32
  }
  func.func @transform_2(%arg0: i32) -> (i32, i32) {
    %c0_i32 = arith.constant 0 : i32
    %c0_i32_0 = arith.constant 0 : i32
    %c0_i32_1 = arith.constant 0 : i32
    return %c0_i32, %c0_i32_0 : i32, i32
  }
  func.func @transform_3(%arg0: i32) -> (i32, i32) {
    %c0_i32 = arith.constant 0 : i32
    %c0_i32_0 = arith.constant 0 : i32
    %c0_i32_1 = arith.constant 0 : i32
    return %c0_i32, %c0_i32_0 : i32, i32
  }
  func.func @transform_4(%arg0: i32) -> (i32, i32) {
    %c0_i32 = arith.constant 0 : i32
    %c0_i32_0 = arith.constant 0 : i32
    %c0_i32_1 = arith.constant 0 : i32
    return %c0_i32, %c0_i32_0 : i32, i32
  }
  func.func @transform_5(%arg0: i32) -> (i32, i32) {
    %c0_i32 = arith.constant 0 : i32
    %c0_i32_0 = arith.constant 0 : i32
    %c0_i32_1 = arith.constant 0 : i32
    return %c0_i32, %c0_i32_0 : i32, i32
  }
  func.func @transform_6(%arg0: i32) -> (i32, i32) {
    %c0_i32 = arith.constant 0 : i32
    %c0_i32_0 = arith.constant 0 : i32
    %c0_i32_1 = arith.constant 0 : i32
    return %c0_i32, %c0_i32_0 : i32, i32
  }
  func.func @transform_7(%arg0: i32) -> (i32, i32) {
    %c0_i32 = arith.constant 0 : i32
    %c0_i32_0 = arith.constant 0 : i32
    %c0_i32_1 = arith.constant 0 : i32
    return %c0_i32, %c0_i32_0 : i32, i32
  }
  func.func @transform_8(%arg0: i32) -> (i32, i32) {
    %c0_i32 = arith.constant 0 : i32
    %c0_i32_0 = arith.constant 0 : i32
    %c0_i32_1 = arith.constant 0 : i32
    return %c0_i32, %c0_i32_0 : i32, i32
  }
  func.func @transform_9(%arg0: i32) -> (i32, i32) {
    %c0_i32 = arith.constant 0 : i32
    %c0_i32_0 = arith.constant 0 : i32
    %c0_i32_1 = arith.constant 0 : i32
    return %c0_i32, %c0_i32_0 : i32, i32
  }
  func.func @transform_10(%arg0: i32) -> (i32, i32) {
    %c0_i32 = arith.constant 0 : i32
    %c0_i32_0 = arith.constant 0 : i32
    %c0_i32_1 = arith.constant 0 : i32
    return %c0_i32, %c0_i32_0 : i32, i32
  }
  func.func @transform_11(%arg0: i32) -> (i32, i32) {
    %c0_i32 = arith.constant 0 : i32
    %c0_i32_0 = arith.constant 0 : i32
    %c0_i32_1 = arith.constant 0 : i32
    return %c0_i32, %c0_i32_0 : i32, i32
  }
  func.func @transform_12(%arg0: i32) -> (i32, i32) {
    %c0_i32 = arith.constant 0 : i32
    %c0_i32_0 = arith.constant 0 : i32
    %c0_i32_1 = arith.constant 0 : i32
    return %c0_i32, %c0_i32_0 : i32, i32
  }
  func.func @transform_13(%arg0: i32) -> (i32, i32) {
    %c0_i32 = arith.constant 0 : i32
    %c0_i32_0 = arith.constant 0 : i32
    %c0_i32_1 = arith.constant 0 : i32
    return %c0_i32, %c0_i32_0 : i32, i32
  }
  func.func @transform_14(%arg0: i32) -> (i32, i32) {
    %c0_i32 = arith.constant 0 : i32
    %c0_i32_0 = arith.constant 0 : i32
    %c0_i32_1 = arith.constant 0 : i32
    return %c0_i32, %c0_i32_0 : i32, i32
  }
  func.func @transform_15(%arg0: i32) -> (i32, i32, i32) {
    %c0_i32 = arith.constant 0 : i32
    %c0_i32_0 = arith.constant 0 : i32
    %c0_i32_1 = arith.constant 0 : i32
    return %arg0, %c0_i32, %c0_i32_0 : i32, i32, i32
  }
}

</mosaic_0001>

<llo_original>
// kernel: efficientnet_gen_forward.1
$region0: #{efficientnet_gen_forward.1}
  #allocation0 [shape = 'u32[]', space=smem, size = 0x4, offset = 0x4, fixed_abs, tag = 'smem constant byte address 0x4 - core index']
  #allocation1 [shape = 'u32[72,128]{1,0:T(1,128)}', space=vmem, size = 0x9000, scoped, tag = 'internal scratch']
  #allocation2 [shape = 'f32[4,10,10,32]{3,2,1,0:T(8,128)}', space=vmem, size = 0x50000, scoped, tag = 'scratch operand']
  #allocation3 [shape = 'f32[1,1]{1,0:T(1,128)S(1)}', space=vmem, size = 0x200, scoped, tag = 'scoped memory for efficientnet_gen_forward.1']
  %s0 = inlined_call_operand.vmem [shape: f32[8,8,8,27], index: 0, kind: input, shape index: {}]
  %s1 = inlined_call_operand.vmem [shape: f32[27,8], index: 1, kind: input, shape index: {}]
  %s2 = inlined_call_operand.vmem [shape: f32[1,8], index: 2, kind: input, shape index: {}]
  %s3 = inlined_call_operand.vmem [shape: bf16[8,32], index: 3, kind: input, shape index: {}]
  %s4 = inlined_call_operand.vmem [shape: f32[1,32], index: 4, kind: input, shape index: {}]
  %s5 = inlined_call_operand.vmem [shape: f32[9,32], index: 5, kind: input, shape index: {}]
  %s6 = inlined_call_operand.vmem [shape: f32[1,32], index: 6, kind: input, shape index: {}]
  %s7 = inlined_call_operand.vmem [shape: f32[8,32], index: 7, kind: input, shape index: {}]
  %s8 = inlined_call_operand.vmem [shape: f32[1,8], index: 8, kind: input, shape index: {}]
  %s9 = inlined_call_operand.vmem [shape: f32[32,8], index: 9, kind: input, shape index: {}]
  %s10 = inlined_call_operand.vmem [shape: f32[1,32], index: 10, kind: input, shape index: {}]
  %s11 = inlined_call_operand.vmem [shape: bf16[32,32], index: 11, kind: input, shape index: {}]
  %s12 = inlined_call_operand.vmem [shape: f32[1,32], index: 12, kind: input, shape index: {}]
  %s13 = inlined_call_operand.vmem [shape: f32[1,32], index: 13, kind: input, shape index: {}]
  %s14 = inlined_call_operand.<no memory space> [shape: f32[1,1], index: 14, kind: input, shape index: {}]
  %s15 = inlined_call_operand.vmem [shape: f32[2,4,1], index: 15, kind: output, shape index: {}]
  %s16 = sld [smem:[#allocation0]]
  $region93: #{efficientnet_gen_forward.1} parent=0
    _
  %s18 = ssub.s32 1, %s16
  %s19 = scalar_select 0, %s18, %s16
  %v20 = vstv %s14
  %21 = vst [vmem:[#allocation3] sm:$0x1] %v20
  loop: start=0, step=1, limit=4
  $region2: #{efficientnet_gen_forward.1} parent=0 // loop_pre_header
    _
  $region3: #{efficientnet_gen_forward.1} parent=0 // loop_header
    %s23 = sphi 0, %s27
    %p24 = scmp.ge.s32.totalorder %s23, 4
    %s33 = sphi 0, %s35
    %s36 = sphi 0, %s33
    %s37 = sphi 0, %s36
    %s53 = sphi 0, %s37
    %s57 = sphi 0, %s57
    %s59 = sphi 0, %s57
    %s60 = sphi 0, %s59
    %s74 = sphi 0, %s60
    %s78 = sphi 0, %s78
    %s80 = sphi 0, %s78
    %s81 = sphi 0, %s80
    %s95 = sphi 0, %s81
    %s99 = sphi 0, %s99
    %s101 = sphi 0, %s99
    %s102 = sphi 0, %s101
    %s116 = sphi 0, %s102
    %s120 = sphi 0, %s120
    %s122 = sphi 0, %s120
    %s123 = sphi 0, %s122
    %s137 = sphi 0, %s123
    %s141 = sphi 0, %s141
    %s143 = sphi 0, %s141
    %s144 = sphi 0, %s143
    %s158 = sphi 0, %s144
    %s162 = sphi 0, %s162
    %s164 = sphi 0, %s162
    %s165 = sphi 0, %s164
    %s179 = sphi 0, %s165
    %s183 = sphi 0, %s183
    %s185 = sphi 0, %s183
    %s186 = sphi 0, %s185
    %s200 = sphi 0, %s186
    %s204 = sphi 0, %s204
    %s206 = sphi 0, %s204
    %s207 = sphi 0, %s206
    %s221 = sphi 0, %s207
    %s225 = sphi 0, %s225
    %s227 = sphi 0, %s225
    %s228 = sphi 0, %s227
    %s242 = sphi 0, %s228
    %s246 = sphi 0, %s246
    %s248 = sphi 0, %s246
    %s249 = sphi 0, %s248
    %s263 = sphi 0, %s249
    %s267 = sphi 0, %s267
    %s269 = sphi 0, %s267
    %s270 = sphi 0, %s269
    %s284 = sphi 0, %s270
    %s288 = sphi 0, %s288
    %s290 = sphi 0, %s288
    %s291 = sphi 0, %s290
    %s305 = sphi 0, %s291
    %s309 = sphi 0, %s309
    %s311 = sphi 0, %s309
    %s312 = sphi 0, %s311
    %s326 = sphi 0, %s312
    %s330 = sphi 0, %s330
    %s332 = sphi 0, %s330
    %s333 = sphi 0, %s332
    %s347 = sphi 0, %s333
    %s353 = sphi 0, %s355
    %s356 = sphi 0, %s353
    %s357 = sphi 0, %s356
    %s373 = sphi 0, %s357
  $region4: #{efficientnet_gen_forward.1} parent=0 // loop_header_branch
    %26 = sbr.rel (%p24) target = $region8
  $region5: #{efficientnet_gen_forward.1} parent=0 // loop_body
    %s28 = ssub.s32 %s23, 1
    %s29 = ssub.s32 %s23, 2
    %s30 = sadd.s32 %s23, 1
    %s31 = ssub.s32 %s23, %s30
    %p32 = scmp.eq.s32.totalorder %s31, 0
    %s34 = sadd.s32 %s33, 1
    %s35 = scalar_select %p32, %s33, %s34
    %p38 = pneg %p32
    %p39 = scmp.eq.s32.totalorder %s23, 1
    %p40 = por %p38, %p39
    %p41 = scmp.ne.s32.totalorder %s33, %s36
    %p42 = scmp.eq.s32.totalorder %s23, 0
    %p43 = por %p41, %p42
    %p44 = scmp.ne.s32.totalorder %s33, %s36
    %p45 = scmp.eq.s32.totalorder %s28, 1
    %p46 = por %p44, %p45
    %p47 = scmp.ne.s32.totalorder %s36, %s37
    %p48 = scmp.eq.s32.totalorder %s28, 0
    %p49 = por %p47, %p48
    %p50 = scmp.ne.s32.totalorder %s36, %s37
    %p51 = scmp.eq.s32.totalorder %s29, 1
    %p52 = por %p50, %p51
    %p54 = scmp.ne.s32.totalorder %s37, %s53
    %p55 = scmp.eq.s32.totalorder %s29, 0
    %p56 = por %p54, %p55
    %s58 = sadd.s32 %s57, 1
    %p61 = scmp.eq.s32.totalorder %s23, 1
    %p62 = scmp.ne.s32.totalorder %s57, %s59
    %p63 = scmp.eq.s32.totalorder %s23, 0
    %p64 = por %p62, %p63
    %p65 = scmp.ne.s32.totalorder %s57, %s59
    %p66 = scmp.eq.s32.totalorder %s28, 1
    %p67 = por %p65, %p66
    %p68 = scmp.ne.s32.totalorder %s59, %s60
    %p69 = scmp.eq.s32.totalorder %s28, 0
    %p70 = por %p68, %p69
    %p71 = scmp.ne.s32.totalorder %s59, %s60
    %p72 = scmp.eq.s32.totalorder %s29, 1
    %p73 = por %p71, %p72
    %p75 = scmp.ne.s32.totalorder %s60, %s74
    %p76 = scmp.eq.s32.totalorder %s29, 0
    %p77 = por %p75, %p76
    %s79 = sadd.s32 %s78, 1
    %p82 = scmp.eq.s32.totalorder %s23, 1
    %p83 = scmp.ne.s32.totalorder %s78, %s80
    %p84 = scmp.eq.s32.totalorder %s23, 0
    %p85 = por %p83, %p84
    %p86 = scmp.ne.s32.totalorder %s78, %s80
    %p87 = scmp.eq.s32.totalorder %s28, 1
    %p88 = por %p86, %p87
    %p89 = scmp.ne.s32.totalorder %s80, %s81
    %p90 = scmp.eq.s32.totalorder %s28, 0
    %p91 = por %p89, %p90
    %p92 = scmp.ne.s32.totalorder %s80, %s81
    %p93 = scmp.eq.s32.totalorder %s29, 1
    %p94 = por %p92, %p93
    %p96 = scmp.ne.s32.totalorder %s81, %s95
    %p97 = scmp.eq.s32.totalorder %s29, 0
    %p98 = por %p96, %p97
    %s100 = sadd.s32 %s99, 1
    %p103 = scmp.eq.s32.totalorder %s23, 1
    %p104 = scmp.ne.s32.totalorder %s99, %s101
    %p105 = scmp.eq.s32.totalorder %s23, 0
    %p106 = por %p104, %p105
    %p107 = scmp.ne.s32.totalorder %s99, %s101
    %p108 = scmp.eq.s32.totalorder %s28, 1
    %p109 = por %p107, %p108
    %p110 = scmp.ne.s32.totalorder %s101, %s102
    %p111 = scmp.eq.s32.totalorder %s28, 0
    %p112 = por %p110, %p111
    %p113 = scmp.ne.s32.totalorder %s101, %s102
    %p114 = scmp.eq.s32.totalorder %s29, 1
    %p115 = por %p113, %p114
    %p117 = scmp.ne.s32.totalorder %s102, %s116
    %p118 = scmp.eq.s32.totalorder %s29, 0
    %p119 = por %p117, %p118
    %s121 = sadd.s32 %s120, 1
    %p124 = scmp.eq.s32.totalorder %s23, 1
    %p125 = scmp.ne.s32.totalorder %s120, %s122
    %p126 = scmp.eq.s32.totalorder %s23, 0
    %p127 = por %p125, %p126
    %p128 = scmp.ne.s32.totalorder %s120, %s122
    %p129 = scmp.eq.s32.totalorder %s28, 1
    %p130 = por %p128, %p129
    %p131 = scmp.ne.s32.totalorder %s122, %s123
    %p132 = scmp.eq.s32.totalorder %s28, 0
    %p133 = por %p131, %p132
    %p134 = scmp.ne.s32.totalorder %s122, %s123
    %p135 = scmp.eq.s32.totalorder %s29, 1
    %p136 = por %p134, %p135
    %p138 = scmp.ne.s32.totalorder %s123, %s137
    %p139 = scmp.eq.s32.totalorder %s29, 0
    %p140 = por %p138, %p139
    %s142 = sadd.s32 %s141, 1
    %p145 = scmp.eq.s32.totalorder %s23, 1
    %p146 = scmp.ne.s32.totalorder %s141, %s143
    %p147 = scmp.eq.s32.totalorder %s23, 0
    %p148 = por %p146, %p147
    %p149 = scmp.ne.s32.totalorder %s141, %s143
    %p150 = scmp.eq.s32.totalorder %s28, 1
    %p151 = por %p149, %p150
    %p152 = scmp.ne.s32.totalorder %s143, %s144
    %p153 = scmp.eq.s32.totalorder %s28, 0
    %p154 = por %p152, %p153
    %p155 = scmp.ne.s32.totalorder %s143, %s144
    %p156 = scmp.eq.s32.totalorder %s29, 1
    %p157 = por %p155, %p156
    %p159 = scmp.ne.s32.totalorder %s144, %s158
    %p160 = scmp.eq.s32.totalorder %s29, 0
    %p161 = por %p159, %p160
    %s163 = sadd.s32 %s162, 1
    %p166 = scmp.eq.s32.totalorder %s23, 1
    %p167 = scmp.ne.s32.totalorder %s162, %s164
    %p168 = scmp.eq.s32.totalorder %s23, 0
    %p169 = por %p167, %p168
    %p170 = scmp.ne.s32.totalorder %s162, %s164
    %p171 = scmp.eq.s32.totalorder %s28, 1
    %p172 = por %p170, %p171
    %p173 = scmp.ne.s32.totalorder %s164, %s165
    %p174 = scmp.eq.s32.totalorder %s28, 0
    %p175 = por %p173, %p174
    %p176 = scmp.ne.s32.totalorder %s164, %s165
    %p177 = scmp.eq.s32.totalorder %s29, 1
    %p178 = por %p176, %p177
    %p180 = scmp.ne.s32.totalorder %s165, %s179
    %p181 = scmp.eq.s32.totalorder %s29, 0
    %p182 = por %p180, %p181
    %s184 = sadd.s32 %s183, 1
    %p187 = scmp.eq.s32.totalorder %s23, 1
    %p188 = scmp.ne.s32.totalorder %s183, %s185
    %p189 = scmp.eq.s32.totalorder %s23, 0
    %p190 = por %p188, %p189
    %p191 = scmp.ne.s32.totalorder %s183, %s185
    %p192 = scmp.eq.s32.totalorder %s28, 1
    %p193 = por %p191, %p192
    %p194 = scmp.ne.s32.totalorder %s185, %s186
    %p195 = scmp.eq.s32.totalorder %s28, 0
    %p196 = por %p194, %p195
    %p197 = scmp.ne.s32.totalorder %s185, %s186
    %p198 = scmp.eq.s32.totalorder %s29, 1
    %p199 = por %p197, %p198
    %p201 = scmp.ne.s32.totalorder %s186, %s200
    %p202 = scmp.eq.s32.totalorder %s29, 0
    %p203 = por %p201, %p202
    %s205 = sadd.s32 %s204, 1
    %p208 = scmp.eq.s32.totalorder %s23, 1
    %p209 = scmp.ne.s32.totalorder %s204, %s206
    %p210 = scmp.eq.s32.totalorder %s23, 0
    %p211 = por %p209, %p210
    %p212 = scmp.ne.s32.totalorder %s204, %s206
    %p213 = scmp.eq.s32.totalorder %s28, 1
    %p214 = por %p212, %p213
    %p215 = scmp.ne.s32.totalorder %s206, %s207
    %p216 = scmp.eq.s32.totalorder %s28, 0
    %p217 = por %p215, %p216
    %p218 = scmp.ne.s32.totalorder %s206, %s207
    %p219 = scmp.eq.s32.totalorder %s29, 1
    %p220 = por %p218, %p219
    %p222 = scmp.ne.s32.totalorder %s207, %s221
    %p223 = scmp.eq.s32.totalorder %s29, 0
    %p224 = por %p222, %p223
    %s226 = sadd.s32 %s225, 1
    %p229 = scmp.eq.s32.totalorder %s23, 1
    %p230 = scmp.ne.s32.totalorder %s225, %s227
    %p231 = scmp.eq.s32.totalorder %s23, 0
    %p232 = por %p230, %p231
    %p233 = scmp.ne.s32.totalorder %s225, %s227
    %p234 = scmp.eq.s32.totalorder %s28, 1
    %p235 = por %p233, %p234
    %p236 = scmp.ne.s32.totalorder %s227, %s228
    %p237 = scmp.eq.s32.totalorder %s28, 0
    %p238 = por %p236, %p237
    %p239 = scmp.ne.s32.totalorder %s227, %s228
    %p240 = scmp.eq.s32.totalorder %s29, 1
    %p241 = por %p239, %p240
    %p243 = scmp.ne.s32.totalorder %s228, %s242
    %p244 = scmp.eq.s32.totalorder %s29, 0
    %p245 = por %p243, %p244
    %s247 = sadd.s32 %s246, 1
    %p250 = scmp.eq.s32.totalorder %s23, 1
    %p251 = scmp.ne.s32.totalorder %s246, %s248
    %p252 = scmp.eq.s32.totalorder %s23, 0
    %p253 = por %p251, %p252
    %p254 = scmp.ne.s32.totalorder %s246, %s248
    %p255 = scmp.eq.s32.totalorder %s28, 1
    %p256 = por %p254, %p255
    %p257 = scmp.ne.s32.totalorder %s248, %s249
    %p258 = scmp.eq.s32.totalorder %s28, 0
    %p259 = por %p257, %p258
    %p260 = scmp.ne.s32.totalorder %s248, %s249
    %p261 = scmp.eq.s32.totalorder %s29, 1
    %p262 = por %p260, %p261
    %p264 = scmp.ne.s32.totalorder %s249, %s263
    %p265 = scmp.eq.s32.totalorder %s29, 0
    %p266 = por %p264, %p265
    %s268 = sadd.s32 %s267, 1
    %p271 = scmp.eq.s32.totalorder %s23, 1
    %p272 = scmp.ne.s32.totalorder %s267, %s269
    %p273 = scmp.eq.s32.totalorder %s23, 0
    %p274 = por %p272, %p273
    %p275 = scmp.ne.s32.totalorder %s267, %s269
    %p276 = scmp.eq.s32.totalorder %s28, 1
    %p277 = por %p275, %p276
    %p278 = scmp.ne.s32.totalorder %s269, %s270
    %p279 = scmp.eq.s32.totalorder %s28, 0
    %p280 = por %p278, %p279
    %p281 = scmp.ne.s32.totalorder %s269, %s270
    %p282 = scmp.eq.s32.totalorder %s29, 1
    %p283 = por %p281, %p282
    %p285 = scmp.ne.s32.totalorder %s270, %s284
    %p286 = scmp.eq.s32.totalorder %s29, 0
    %p287 = por %p285, %p286
    %s289 = sadd.s32 %s288, 1
    %p292 = scmp.eq.s32.totalorder %s23, 1
    %p293 = scmp.ne.s32.totalorder %s288, %s290
    %p294 = scmp.eq.s32.totalorder %s23, 0
    %p295 = por %p293, %p294
    %p296 = scmp.ne.s32.totalorder %s288, %s290
    %p297 = scmp.eq.s32.totalorder %s28, 1
    %p298 = por %p296, %p297
    %p299 = scmp.ne.s32.totalorder %s290, %s291
    %p300 = scmp.eq.s32.totalorder %s28, 0
    %p301 = por %p299, %p300
    %p302 = scmp.ne.s32.totalorder %s290, %s291
    %p303 = scmp.eq.s32.totalorder %s29, 1
    %p304 = por %p302, %p303
    %p306 = scmp.ne.s32.totalorder %s291, %s305
    %p307 = scmp.eq.s32.totalorder %s29, 0
    %p308 = por %p306, %p307
    %s310 = sadd.s32 %s309, 1
    %p313 = scmp.eq.s32.totalorder %s23, 1
    %p314 = scmp.ne.s32.totalorder %s309, %s311
    %p315 = scmp.eq.s32.totalorder %s23, 0
    %p316 = por %p314, %p315
    %p317 = scmp.ne.s32.totalorder %s309, %s311
    %p318 = scmp.eq.s32.totalorder %s28, 1
    %p319 = por %p317, %p318
    %p320 = scmp.ne.s32.totalorder %s311, %s312
    %p321 = scmp.eq.s32.totalorder %s28, 0
    %p322 = por %p320, %p321
    %p323 = scmp.ne.s32.totalorder %s311, %s312
    %p324 = scmp.eq.s32.totalorder %s29, 1
    %p325 = por %p323, %p324
    %p327 = scmp.ne.s32.totalorder %s312, %s326
    %p328 = scmp.eq.s32.totalorder %s29, 0
    %p329 = por %p327, %p328
    %s331 = sadd.s32 %s330, 1
    %p334 = scmp.eq.s32.totalorder %s23, 1
    %p335 = scmp.ne.s32.totalorder %s330, %s332
    %p336 = scmp.eq.s32.totalorder %s23, 0
    %p337 = por %p335, %p336
    %p338 = scmp.ne.s32.totalorder %s330, %s332
    %p339 = scmp.eq.s32.totalorder %s28, 1
    %p340 = por %p338, %p339
    %p341 = scmp.ne.s32.totalorder %s332, %s333
    %p342 = scmp.eq.s32.totalorder %s28, 0
    %p343 = por %p341, %p342
    %p344 = scmp.ne.s32.totalorder %s332, %s333
    %p345 = scmp.eq.s32.totalorder %s29, 1
    %p346 = por %p344, %p345
    %p348 = scmp.ne.s32.totalorder %s333, %s347
    %p349 = scmp.eq.s32.totalorder %s29, 0
    %p350 = por %p348, %p349
    %s351 = ssub.s32 %s23, %s30
    %p352 = scmp.eq.s32.totalorder %s351, 0
    %s354 = sadd.s32 %s353, 1
    %s355 = scalar_select %p352, %s353, %s354
    %p358 = pneg %p352
    %p359 = scmp.eq.s32.totalorder %s23, 1
    %p360 = por %p358, %p359
    %p361 = scmp.ne.s32.totalorder %s353, %s356
    %p362 = scmp.eq.s32.totalorder %s23, 0
    %p363 = por %p361, %p362
    %p364 = scmp.ne.s32.totalorder %s353, %s356
    %p365 = scmp.eq.s32.totalorder %s28, 1
    %p366 = por %p364, %p365
    %p367 = scmp.ne.s32.totalorder %s356, %s357
    %p368 = scmp.eq.s32.totalorder %s28, 0
    %p369 = por %p367, %p368
    %p370 = scmp.ne.s32.totalorder %s356, %s357
    %p371 = scmp.eq.s32.totalorder %s29, 1
    %p372 = por %p370, %p371
    %p374 = scmp.ne.s32.totalorder %s357, %s373
    %p375 = scmp.eq.s32.totalorder %s29, 0
    %p376 = por %p374, %p375
    %p377 = scmp.le.s32.totalorder 1, %s23
    %p378 = scmp.lt.s32.totalorder %s23, 3
    %p379 = pnand %p377, %p378
    %p380 = pneg %p379
    // Predicated region
    $region9: #{efficientnet_gen_forward.1} parent=5 // pred_check
      _
    $region10: #{efficientnet_gen_forward.1} parent=5 // pred_check_branch
      %382 = sbr.rel (%p379) target = $region12
    $region11: #{efficientnet_gen_forward.1} parent=5 // pred_region
      %s383 = ssub.s32 %s23, 1
      // Predicated region
      $region13: #{efficientnet_gen_forward.1} parent=11 // pred_check
        %p384 = pneg %p70
      $region14: #{efficientnet_gen_forward.1} parent=11 // pred_check_branch
        %386 = sbr.rel (%p384) target = $region16
      $region15: #{efficientnet_gen_forward.1} parent=11 // pred_region
        _
      $region16: #{efficientnet_gen_forward.1} parent=11 // pred_fallthru
        _
      // Predicated region
      $region17: #{efficientnet_gen_forward.1} parent=11 // pred_check
        %p387 = pneg %p91
      $region18: #{efficientnet_gen_forward.1} parent=11 // pred_check_branch
        %389 = sbr.rel (%p387) target = $region20
      $region19: #{efficientnet_gen_forward.1} parent=11 // pred_region
        _
      $region20: #{efficientnet_gen_forward.1} parent=11 // pred_fallthru
        _
      // Predicated region
      $region21: #{efficientnet_gen_forward.1} parent=11 // pred_check
        %p390 = pneg %p112
      $region22: #{efficientnet_gen_forward.1} parent=11 // pred_check_branch
        %392 = sbr.rel (%p390) target = $region24
      $region23: #{efficientnet_gen_forward.1} parent=11 // pred_region
        _
      $region24: #{efficientnet_gen_forward.1} parent=11 // pred_fallthru
        _
      // Predicated region
      $region25: #{efficientnet_gen_forward.1} parent=11 // pred_check
        %p393 = pneg %p133
      $region26: #{efficientnet_gen_forward.1} parent=11 // pred_check_branch
        %395 = sbr.rel (%p393) target = $region28
      $region27: #{efficientnet_gen_forward.1} parent=11 // pred_region
        _
      $region28: #{efficientnet_gen_forward.1} parent=11 // pred_fallthru
        _
      // Predicated region
      $region29: #{efficientnet_gen_forward.1} parent=11 // pred_check
        %p396 = pneg %p154
      $region30: #{efficientnet_gen_forward.1} parent=11 // pred_check_branch
        %398 = sbr.rel (%p396) target = $region32
      $region31: #{efficientnet_gen_forward.1} parent=11 // pred_region
        _
      $region32: #{efficientnet_gen_forward.1} parent=11 // pred_fallthru
        _
      // Predicated region
      $region33: #{efficientnet_gen_forward.1} parent=11 // pred_check
        %p399 = pneg %p175
      $region34: #{efficientnet_gen_forward.1} parent=11 // pred_check_branch
        %401 = sbr.rel (%p399) target = $region36
      $region35: #{efficientnet_gen_forward.1} parent=11 // pred_region
        _
      $region36: #{efficientnet_gen_forward.1} parent=11 // pred_fallthru
        _
      // Predicated region
      $region37: #{efficientnet_gen_forward.1} parent=11 // pred_check
        %p402 = pneg %p196
      $region38: #{efficientnet_gen_forward.1} parent=11 // pred_check_branch
        %404 = sbr.rel (%p402) target = $region40
      $region39: #{efficientnet_gen_forward.1} parent=11 // pred_region
        _
      $region40: #{efficientnet_gen_forward.1} parent=11 // pred_fallthru
        _
      // Predicated region
      $region41: #{efficientnet_gen_forward.1} parent=11 // pred_check
        %p405 = pneg %p217
      $region42: #{efficientnet_gen_forward.1} parent=11 // pred_check_branch
        %407 = sbr.rel (%p405) target = $region44
      $region43: #{efficientnet_gen_forward.1} parent=11 // pred_region
        _
      $region44: #{efficientnet_gen_forward.1} parent=11 // pred_fallthru
        _
      // Predicated region
      $region45: #{efficientnet_gen_forward.1} parent=11 // pred_check
        %p408 = pneg %p238
      $region46: #{efficientnet_gen_forward.1} parent=11 // pred_check_branch
        %410 = sbr.rel (%p408) target = $region48
      $region47: #{efficientnet_gen_forward.1} parent=11 // pred_region
        _
      $region48: #{efficientnet_gen_forward.1} parent=11 // pred_fallthru
        _
      // Predicated region
      $region49: #{efficientnet_gen_forward.1} parent=11 // pred_check
        %p411 = pneg %p259
      $region50: #{efficientnet_gen_forward.1} parent=11 // pred_check_branch
        %413 = sbr.rel (%p411) target = $region52
      $region51: #{efficientnet_gen_forward.1} parent=11 // pred_region
        _
      $region52: #{efficientnet_gen_forward.1} parent=11 // pred_fallthru
        _
      // Predicated region
      $region53: #{efficientnet_gen_forward.1} parent=11 // pred_check
        %p414 = pneg %p280
      $region54: #{efficientnet_gen_forward.1} parent=11 // pred_check_branch
        %416 = sbr.rel (%p414) target = $region56
      $region55: #{efficientnet_gen_forward.1} parent=11 // pred_region
        _
      $region56: #{efficientnet_gen_forward.1} parent=11 // pred_fallthru
        _
      // Predicated region
      $region57: #{efficientnet_gen_forward.1} parent=11 // pred_check
        %p417 = pneg %p301
      $region58: #{efficientnet_gen_forward.1} parent=11 // pred_check_branch
        %419 = sbr.rel (%p417) target = $region60
      $region59: #{efficientnet_gen_forward.1} parent=11 // pred_region
        _
      $region60: #{efficientnet_gen_forward.1} parent=11 // pred_fallthru
        _
      // Predicated region
      $region61: #{efficientnet_gen_forward.1} parent=11 // pred_check
        %p420 = pneg %p322
      $region62: #{efficientnet_gen_forward.1} parent=11 // pred_check_branch
        %422 = sbr.rel (%p420) target = $region64
      $region63: #{efficientnet_gen_forward.1} parent=11 // pred_region
        _
      $region64: #{efficientnet_gen_forward.1} parent=11 // pred_fallthru
        _
      // Predicated region
      $region65: #{efficientnet_gen_forward.1} parent=11 // pred_check
        %p423 = pneg %p343
      $region66: #{efficientnet_gen_forward.1} parent=11 // pred_check_branch
        %425 = sbr.rel (%p423) target = $region68
      $region67: #{efficientnet_gen_forward.1} parent=11 // pred_region
        _
      $region68: #{efficientnet_gen_forward.1} parent=11 // pred_fallthru
        _
    $region12: #{efficientnet_gen_forward.1} parent=5 // pred_fallthru
      _
    %p426 = scmp.lt.s32.totalorder %s23, 2
    // Predicated region
    $region69: #{efficientnet_gen_forward.1} parent=5 // pred_check
      %p427 = pneg %p426
    $region70: #{efficientnet_gen_forward.1} parent=5 // pred_check_branch
      %429 = sbr.rel (%p427) target = $region72
    $region71: #{efficientnet_gen_forward.1} parent=5 // pred_region
      // Predicated region
      $region73: #{efficientnet_gen_forward.1} parent=71 // pred_check
        %p430 = pneg %p43
      $region74: #{efficientnet_gen_forward.1} parent=71 // pred_check_branch
        %432 = sbr.rel (%p430) target = $region76
      $region75: #{efficientnet_gen_forward.1} parent=71 // pred_region
        %s433 = smul.u32 4, %s23
        %p434 = scmp.lt.s32.totalorder %s433, 7
        %s435 = scalar_select %p434, %s433, 7
        %s436 = smul.addr %s435, 8
        %s437 = smul.addr %s436, 8
        %s438 = scalar_lea.vmem %s0, %s437
        %s439 = smul.u32 4, %s23
      $region76: #{efficientnet_gen_forward.1} parent=71 // pred_fallthru
        _
    $region72: #{efficientnet_gen_forward.1} parent=5 // pred_fallthru
      _
    %p440 = scmp.le.s32.totalorder 1, %s23
    %p441 = scmp.lt.s32.totalorder %s23, 3
    %p442 = pnand %p440, %p441
    %p443 = pneg %p442
    // Predicated region
    $region77: #{efficientnet_gen_forward.1} parent=5 // pred_check
      _
    $region78: #{efficientnet_gen_forward.1} parent=5 // pred_check_branch
      %445 = sbr.rel (%p442) target = $region80
    $region79: #{efficientnet_gen_forward.1} parent=5 // pred_region
      %s446 = ssub.s32 %s23, 1
      %s447 = smul.u32 4, %s28
      %p448 = scmp.lt.s32.totalorder %s447, 7
      %s449 = scalar_select %p448, %s447, 7
      %s450 = smul.addr %s449, 8
      %s451 = smul.addr %s450, 8
      %s452 = scalar_lea.vmem %s0, %s451
      %p453 = pneg %p49
      %p454 = pneg %p46
      %p455 = pneg %p70
      %p456 = pneg %p67
      %p457 = pneg %p91
      %p458 = pneg %p88
      %p459 = pneg %p112
      %p460 = pneg %p109
      %p461 = pneg %p133
      %p462 = pneg %p130
      %p463 = pneg %p154
      %p464 = pneg %p151
      %p465 = pneg %p175
      %p466 = pneg %p172
      %p467 = pneg %p196
      %p468 = pneg %p193
      %p469 = pneg %p217
      %p470 = pneg %p214
      %p471 = pneg %p238
      %p472 = pneg %p235
      %p473 = pneg %p259
      %p474 = pneg %p256
      %p475 = pneg %p280
      %p476 = pneg %p277
      %p477 = pneg %p301
      %p478 = pneg %p298
      %p479 = pneg %p322
      %p480 = pneg %p319
      %p481 = pneg %p343
      %p482 = pneg %p340
      %p483 = pneg %p369
      %p484 = pneg %p366
      %p485 = scmp.lt.s32.totalorder %s28, 1
      %s486 = scalar_select %p485, %s28, 1
      %s487 = smul.addr %s486, 4
      %s488 = scalar_lea.vmem %s15, %s487
      %s489 = smul.u32 4, %s28
      %p490 = scmp.lt.s32.totalorder %s489, 7
      %s491 = scalar_select %p490, %s489, 7
      %s492 = smul.addr %s491, 8
      %s493 = smul.addr %s492, 8
      %s494 = scalar_lea.vmem %s0, %s493
      %s495 = smul.u32 4, %s28
      %p496 = scmp.lt.s32.totalorder %s28, 1
      %s497 = scalar_select %p496, %s28, 1
      %s498 = smul.addr %s497, 4
      %s499 = scalar_lea.vmem %s15, %s498
      %v501 = vld [vmem:[%s494] sm:$0xff]
      %v502 = vld [vmem:[%s494 + $0x8] sm:$0xff]
      %v503 = vld [vmem:[%s494 + $0x10] sm:$0xff]
      %v504 = vld [vmem:[%s494 + $0x18] sm:$0xff]
      %v505 = vld [vmem:[%s494 + $0x20] sm:$0xff]
      %v506 = vld [vmem:[%s494 + $0x28] sm:$0xff]
      %v507 = vld [vmem:[%s494 + $0x30] sm:$0xff]
      %v508 = vld [vmem:[%s494 + $0x38] sm:$0xff]
      %v509 = vld [vmem:[%s494 + $0x40] sm:$0xff]
      %v510 = vld [vmem:[%s494 + $0x48] sm:$0xff]
      %v511 = vld [vmem:[%s494 + $0x50] sm:$0xff]
      %v512 = vld [vmem:[%s494 + $0x58] sm:$0xff]
      %v513 = vld [vmem:[%s494 + $0x60] sm:$0xff]
      %v514 = vld [vmem:[%s494 + $0x68] sm:$0xff]
      %v515 = vld [vmem:[%s494 + $0x70] sm:$0xff]
      %v516 = vld [vmem:[%s494 + $0x78] sm:$0xff]
      %v517 = vld [vmem:[%s494 + $0x80] sm:$0xff]
      %v518 = vld [vmem:[%s494 + $0x88] sm:$0xff]
      %v519 = vld [vmem:[%s494 + $0x90] sm:$0xff]
      %v520 = vld [vmem:[%s494 + $0x98] sm:$0xff]
      %v521 = vld [vmem:[%s494 + $0xa0] sm:$0xff]
      %v522 = vld [vmem:[%s494 + $0xa8] sm:$0xff]
      %v523 = vld [vmem:[%s494 + $0xb0] sm:$0xff]
      %v524 = vld [vmem:[%s494 + $0xb8] sm:$0xff]
      %v525 = vld [vmem:[%s494 + $0xc0] sm:$0xff]
      %v526 = vld [vmem:[%s494 + $0xc8] sm:$0xff]
      %v527 = vld [vmem:[%s494 + $0xd0] sm:$0xff]
      %v528 = vld [vmem:[%s494 + $0xd8] sm:$0xff]
      %v529 = vld [vmem:[%s494 + $0xe0] sm:$0xff]
      %v530 = vld [vmem:[%s494 + $0xe8] sm:$0xff]
      %v531 = vld [vmem:[%s494 + $0xf0] sm:$0xff]
      %v532 = vld [vmem:[%s494 + $0xf8] sm:$0xff]
      %v533 = vld [vmem:[%s1] sm:$0xff]
      %v534 = vld [vmem:[%s1 + $0x8] sm:$0xff]
      %v535 = vld [vmem:[%s1 + $0x10] sm:$0xff]
      %v536 = vld [vmem:[%s1 + $0x18] sm:$0x7]
      %v537 = vld [vmem:[%s2] sm:$0x1]
      %v539 = vperm.slane %v537, 0
      %vm541 = vcmask 220160
      %v543 = vsel %vm541, %v501, 0
      %v546 = vsel %vm541, %v502, 0
      %v549 = vsel %vm541, %v503, 0
      %v552 = vsel %vm541, %v504, 0
      %v555 = vsel %vm541, %v505, 0
      %v558 = vsel %vm541, %v506, 0
      %v561 = vsel %vm541, %v507, 0
      %v564 = vsel %vm541, %v508, 0
      %v567 = vsel %vm541, %v509, 0
      %v570 = vsel %vm541, %v510, 0
      %v573 = vsel %vm541, %v511, 0
      %v576 = vsel %vm541, %v512, 0
      %v579 = vsel %vm541, %v513, 0
      %v582 = vsel %vm541, %v514, 0
      %v585 = vsel %vm541, %v515, 0
      %v588 = vsel %vm541, %v516, 0
      %v591 = vsel %vm541, %v517, 0
      %v594 = vsel %vm541, %v518, 0
      %v597 = vsel %vm541, %v519, 0
      %v600 = vsel %vm541, %v520, 0
      %v603 = vsel %vm541, %v521, 0
      %v606 = vsel %vm541, %v522, 0
      %v609 = vsel %vm541, %v523, 0
      %v612 = vsel %vm541, %v524, 0
      %v615 = vsel %vm541, %v525, 0
      %v618 = vsel %vm541, %v526, 0
      %v621 = vsel %vm541, %v527, 0
      %v624 = vsel %vm541, %v528, 0
      %v627 = vsel %vm541, %v529, 0
      %v630 = vsel %vm541, %v530, 0
      %v633 = vsel %vm541, %v531, 0
      %v636 = vsel %vm541, %v532, 0
      %vm638 = vcmask 1042432
      %v640 = vsel %vm638, %v536, 0
      %642 = vmatpush.msra.mxu0 0.0
      %643 = vmatpush.msra.mxu0 0.0
      %644 = vmatpush.msra.mxu0 0.0
      %645 = vmatpush.msra.mxu0 0.0
      %646 = vmatpush.msra.mxu0 0.0
      %647 = vmatpush.msra.mxu0 0.0
      %648 = vmatpush.msra.mxu0 0.0
      %649 = vmatpush.msra.mxu0 0.0
      %650 = vmatpush.msra.mxu0 0.0
      %651 = vmatpush.msra.mxu0 0.0
      %652 = vmatpush.msra.mxu0 0.0
      %653 = vmatpush.msra.mxu0 0.0
      %654 = vmatpush.msra.mxu0 %v640
      %655 = vmatpush.msra.mxu0 %v535
      %656 = vmatpush.msra.mxu0 %v534
      %657 = vmatpush.msra.mxu0 %v533
      %658 = vmatmul.f32.gmra.mxu0 %v543
      %v659 = vpop.f32.mrf.mxu0
      %v660 = vadd.f32 %v539, %v659
      %661 = vmatmul.f32.gmra.mxu0 %v546
      %v662 = vpop.f32.mrf.mxu0
      %v663 = vadd.f32 %v539, %v662
      %664 = vmatmul.f32.gmra.mxu0 %v549
      %v665 = vpop.f32.mrf.mxu0
      %v666 = vadd.f32 %v539, %v665
      %667 = vmatmul.f32.gmra.mxu0 %v552
      %v668 = vpop.f32.mrf.mxu0
      %v669 = vadd.f32 %v539, %v668
      %670 = vmatmul.f32.gmra.mxu0 %v555
      %v671 = vpop.f32.mrf.mxu0
      %v672 = vadd.f32 %v539, %v671
      %673 = vmatmul.f32.gmra.mxu0 %v558
      %v674 = vpop.f32.mrf.mxu0
      %v675 = vadd.f32 %v539, %v674
      %676 = vmatmul.f32.gmra.mxu0 %v561
      %v677 = vpop.f32.mrf.mxu0
      %v678 = vadd.f32 %v539, %v677
      %679 = vmatmul.f32.gmra.mxu0 %v564
      %v680 = vpop.f32.mrf.mxu0
      %v681 = vadd.f32 %v539, %v680
      %682 = vmatmul.f32.gmra.mxu0 %v567
      %v683 = vpop.f32.mrf.mxu0
      %v684 = vadd.f32 %v539, %v683
      %685 = vmatmul.f32.gmra.mxu0 %v570
      %v686 = vpop.f32.mrf.mxu0
      %v687 = vadd.f32 %v539, %v686
      %688 = vmatmul.f32.gmra.mxu0 %v573
      %v689 = vpop.f32.mrf.mxu0
      %v690 = vadd.f32 %v539, %v689
      %691 = vmatmul.f32.gmra.mxu0 %v576
      %v692 = vpop.f32.mrf.mxu0
      %v693 = vadd.f32 %v539, %v692
      %694 = vmatmul.f32.gmra.mxu0 %v579
      %v695 = vpop.f32.mrf.mxu0
      %v696 = vadd.f32 %v539, %v695
      %697 = vmatmul.f32.gmra.mxu0 %v582
      %v698 = vpop.f32.mrf.mxu0
      %v699 = vadd.f32 %v539, %v698
      %700 = vmatmul.f32.gmra.mxu0 %v585
      %v701 = vpop.f32.mrf.mxu0
      %v702 = vadd.f32 %v539, %v701
      %703 = vmatmul.f32.gmra.mxu0 %v588
      %v704 = vpop.f32.mrf.mxu0
      %v705 = vadd.f32 %v539, %v704
      %706 = vmatmul.f32.gmra.mxu0 %v591
      %v707 = vpop.f32.mrf.mxu0
      %v708 = vadd.f32 %v539, %v707
      %709 = vmatmul.f32.gmra.mxu0 %v594
      %v710 = vpop.f32.mrf.mxu0
      %v711 = vadd.f32 %v539, %v710
      %712 = vmatmul.f32.gmra.mxu0 %v597
      %v713 = vpop.f32.mrf.mxu0
      %v714 = vadd.f32 %v539, %v713
      %715 = vmatmul.f32.gmra.mxu0 %v600
      %v716 = vpop.f32.mrf.mxu0
      %v717 = vadd.f32 %v539, %v716
      %718 = vmatmul.f32.gmra.mxu0 %v603
      %v719 = vpop.f32.mrf.mxu0
      %v720 = vadd.f32 %v539, %v719
      %721 = vmatmul.f32.gmra.mxu0 %v606
      %v722 = vpop.f32.mrf.mxu0
      %v723 = vadd.f32 %v539, %v722
      %724 = vmatmul.f32.gmra.mxu0 %v609
      %v725 = vpop.f32.mrf.mxu0
      %v726 = vadd.f32 %v539, %v725
      %727 = vmatmul.f32.gmra.mxu0 %v612
      %v728 = vpop.f32.mrf.mxu0
      %v729 = vadd.f32 %v539, %v728
      %730 = vmatmul.f32.gmra.mxu0 %v615
      %v731 = vpop.f32.mrf.mxu0
      %v732 = vadd.f32 %v539, %v731
      %733 = vmatmul.f32.gmra.mxu0 %v618
      %v734 = vpop.f32.mrf.mxu0
      %v735 = vadd.f32 %v539, %v734
      %736 = vmatmul.f32.gmra.mxu0 %v621
      %v737 = vpop.f32.mrf.mxu0
      %v738 = vadd.f32 %v539, %v737
      %739 = vmatmul.f32.gmra.mxu0 %v624
      %v740 = vpop.f32.mrf.mxu0
      %v741 = vadd.f32 %v539, %v740
      %742 = vmatmul.f32.gmra.mxu0 %v627
      %v743 = vpop.f32.mrf.mxu0
      %v744 = vadd.f32 %v539, %v743
      %745 = vmatmul.f32.gmra.mxu0 %v630
      %v746 = vpop.f32.mrf.mxu0
      %v747 = vadd.f32 %v539, %v746
      %748 = vmatmul.f32.gmra.mxu0 %v633
      %v749 = vpop.f32.mrf.mxu0
      %v750 = vadd.f32 %v539, %v749
      %751 = vmatmul.f32.gmra.mxu0 %v636
      %v752 = vpop.f32.mrf.mxu0
      %v753 = vadd.f32 %v539, %v752
      %754 = vdwg.mxu0
      %v755 = vxor.u32 %v660, 2147483648
      %v756 = vxor.u32 %v663, 2147483648
      %v757 = vxor.u32 %v666, 2147483648
      %v758 = vxor.u32 %v669, 2147483648
      %v759 = vxor.u32 %v672, 2147483648
      %v760 = vxor.u32 %v675, 2147483648
      %v761 = vxor.u32 %v678, 2147483648
      %v762 = vxor.u32 %v681, 2147483648
      %v763 = vxor.u32 %v684, 2147483648
      %v764 = vxor.u32 %v687, 2147483648
      %v765 = vxor.u32 %v690, 2147483648
      %v766 = vxor.u32 %v693, 2147483648
      %v767 = vxor.u32 %v696, 2147483648
      %v768 = vxor.u32 %v699, 2147483648
      %v769 = vxor.u32 %v702, 2147483648
      %v770 = vxor.u32 %v705, 2147483648
      %v771 = vxor.u32 %v708, 2147483648
      %v772 = vxor.u32 %v711, 2147483648
      %v773 = vxor.u32 %v714, 2147483648
      %v774 = vxor.u32 %v717, 2147483648
      %v775 = vxor.u32 %v720, 2147483648
      %v776 = vxor.u32 %v723, 2147483648
      %v777 = vxor.u32 %v726, 2147483648
      %v778 = vxor.u32 %v729, 2147483648
      %v779 = vxor.u32 %v732, 2147483648
      %v780 = vxor.u32 %v735, 2147483648
      %v781 = vxor.u32 %v738, 2147483648
      %v782 = vxor.u32 %v741, 2147483648
      %v783 = vxor.u32 %v744, 2147483648
      %v784 = vxor.u32 %v747, 2147483648
      %v785 = vxor.u32 %v750, 2147483648
      %v786 = vxor.u32 %v753, 2147483648
      %v787 = vmul.f32 %v755, 1.442695
      %v788 = vpow.pop %v787
      %v789 = vmul.f32 %v756, 1.442695
      %v790 = vpow.pop %v789
      %v791 = vmul.f32 %v757, 1.442695
      %v792 = vpow.pop %v791
      %v793 = vmul.f32 %v758, 1.442695
      %v794 = vpow.pop %v793
      %v795 = vmul.f32 %v759, 1.442695
      %v796 = vpow.pop %v795
      %v797 = vmul.f32 %v760, 1.442695
      %v798 = vpow.pop %v797
      %v799 = vmul.f32 %v761, 1.442695
      %v800 = vpow.pop %v799
      %v801 = vmul.f32 %v762, 1.442695
      %v802 = vpow.pop %v801
      %v803 = vmul.f32 %v763, 1.442695
      %v804 = vpow.pop %v803
      %v805 = vmul.f32 %v764, 1.442695
      %v806 = vpow.pop %v805
      %v807 = vmul.f32 %v765, 1.442695
      %v808 = vpow.pop %v807
      %v809 = vmul.f32 %v766, 1.442695
      %v810 = vpow.pop %v809
      %v811 = vmul.f32 %v767, 1.442695
      %v812 = vpow.pop %v811
      %v813 = vmul.f32 %v768, 1.442695
      %v814 = vpow.pop %v813
      %v815 = vmul.f32 %v769, 1.442695
      %v816 = vpow.pop %v815
      %v817 = vmul.f32 %v770, 1.442695
      %v818 = vpow.pop %v817
      %v819 = vmul.f32 %v771, 1.442695
      %v820 = vpow.pop %v819
      %v821 = vmul.f32 %v772, 1.442695
      %v822 = vpow.pop %v821
      %v823 = vmul.f32 %v773, 1.442695
      %v824 = vpow.pop %v823
      %v825 = vmul.f32 %v774, 1.442695
      %v826 = vpow.pop %v825
      %v827 = vmul.f32 %v775, 1.442695
      %v828 = vpow.pop %v827
      %v829 = vmul.f32 %v776, 1.442695
      %v830 = vpow.pop %v829
      %v831 = vmul.f32 %v777, 1.442695
      %v832 = vpow.pop %v831
      %v833 = vmul.f32 %v778, 1.442695
      %v834 = vpow.pop %v833
      %v835 = vmul.f32 %v779, 1.442695
      %v836 = vpow.pop %v835
      %v837 = vmul.f32 %v780, 1.442695
      %v838 = vpow.pop %v837
      %v839 = vmul.f32 %v781, 1.442695
      %v840 = vpow.pop %v839
      %v841 = vmul.f32 %v782, 1.442695
      %v842 = vpow.pop %v841
      %v843 = vmul.f32 %v783, 1.442695
      %v844 = vpow.pop %v843
      %v845 = vmul.f32 %v784, 1.442695
      %v846 = vpow.pop %v845
      %v847 = vmul.f32 %v785, 1.442695
      %v848 = vpow.pop %v847
      %v849 = vmul.f32 %v786, 1.442695
      %v850 = vpow.pop %v849
      %v851 = vadd.f32 %v788, 1.0
      %v852 = vadd.f32 %v790, 1.0
      %v853 = vadd.f32 %v792, 1.0
      %v854 = vadd.f32 %v794, 1.0
      %v855 = vadd.f32 %v796, 1.0
      %v856 = vadd.f32 %v798, 1.0
      %v857 = vadd.f32 %v800, 1.0
      %v858 = vadd.f32 %v802, 1.0
      %v859 = vadd.f32 %v804, 1.0
      %v860 = vadd.f32 %v806, 1.0
      %v861 = vadd.f32 %v808, 1.0
      %v862 = vadd.f32 %v810, 1.0
      %v863 = vadd.f32 %v812, 1.0
      %v864 = vadd.f32 %v814, 1.0
      %v865 = vadd.f32 %v816, 1.0
      %v866 = vadd.f32 %v818, 1.0
      %v867 = vadd.f32 %v820, 1.0
      %v868 = vadd.f32 %v822, 1.0
      %v869 = vadd.f32 %v824, 1.0
      %v870 = vadd.f32 %v826, 1.0
      %v871 = vadd.f32 %v828, 1.0
      %v872 = vadd.f32 %v830, 1.0
      %v873 = vadd.f32 %v832, 1.0
      %v874 = vadd.f32 %v834, 1.0
      %v875 = vadd.f32 %v836, 1.0
      %v876 = vadd.f32 %v838, 1.0
      %v877 = vadd.f32 %v840, 1.0
      %v878 = vadd.f32 %v842, 1.0
      %v879 = vadd.f32 %v844, 1.0
      %v880 = vadd.f32 %v846, 1.0
      %v881 = vadd.f32 %v848, 1.0
      %v882 = vadd.f32 %v850, 1.0
      %v883 = vrcp.pop %v851
      %v884 = vmul.f32 %v851, %v883
      %v885 = vsub.f32 1.0, %v884
      %v886 = vmul.f32 %v883, %v885
      %v887 = vadd.f32 %v883, %v886
      %vm888 = vweird.f32 %v851
      %vm889 = vweird.f32 %v883
      %vm890 = vmor %vm888, %vm889
      %v891 = vsel %vm890, %v883, %v887
      %v892 = vand.u32 2147483647, %v851
      %vm893 = vcmp.eq.f32.partialorder %v892, 8.507059e+37
      %v894 = vand.u32 %v851, 2147483648
      %v895 = vor.u32 1.1754944e-38, %v894
      %v896 = vsel %vm893, %v895, %v891
      %v897 = vmul.f32 1.0, %v896
      %v898 = vrcp.pop %v852
      %v899 = vmul.f32 %v852, %v898
      %v900 = vsub.f32 1.0, %v899
      %v901 = vmul.f32 %v898, %v900
      %v902 = vadd.f32 %v898, %v901
      %vm903 = vweird.f32 %v852
      %vm904 = vweird.f32 %v898
      %vm905 = vmor %vm903, %vm904
      %v906 = vsel %vm905, %v898, %v902
      %v907 = vand.u32 2147483647, %v852
      %vm908 = vcmp.eq.f32.partialorder %v907, 8.507059e+37
      %v909 = vand.u32 %v852, 2147483648
      %v910 = vor.u32 1.1754944e-38, %v909
      %v911 = vsel %vm908, %v910, %v906
      %v912 = vmul.f32 1.0, %v911
      %v913 = vrcp.pop %v853
      %v914 = vmul.f32 %v853, %v913
      %v915 = vsub.f32 1.0, %v914
      %v916 = vmul.f32 %v913, %v915
      %v917 = vadd.f32 %v913, %v916
      %vm918 = vweird.f32 %v853
      %vm919 = vweird.f32 %v913
      %vm920 = vmor %vm918, %vm919
      %v921 = vsel %vm920, %v913, %v917
      %v922 = vand.u32 2147483647, %v853
      %vm923 = vcmp.eq.f32.partialorder %v922, 8.507059e+37
      %v924 = vand.u32 %v853, 2147483648
      %v925 = vor.u32 1.1754944e-38, %v924
      %v926 = vsel %vm923, %v925, %v921
      %v927 = vmul.f32 1.0, %v926
      %v928 = vrcp.pop %v854
      %v929 = vmul.f32 %v854, %v928
      %v930 = vsub.f32 1.0, %v929
      %v931 = vmul.f32 %v928, %v930
      %v932 = vadd.f32 %v928, %v931
      %vm933 = vweird.f32 %v854
      %vm934 = vweird.f32 %v928
      %vm935 = vmor %vm933, %vm934
      %v936 = vsel %vm935, %v928, %v932
      %v937 = vand.u32 2147483647, %v854
      %vm938 = vcmp.eq.f32.partialorder %v937, 8.507059e+37
      %v939 = vand.u32 %v854, 2147483648
      %v940 = vor.u32 1.1754944e-38, %v939
      %v941 = vsel %vm938, %v940, %v936
      %v942 = vmul.f32 1.0, %v941
      %v943 = vrcp.pop %v855
      %v944 = vmul.f32 %v855, %v943
      %v945 = vsub.f32 1.0, %v944
      %v946 = vmul.f32 %v943, %v945
      %v947 = vadd.f32 %v943, %v946
      %vm948 = vweird.f32 %v855
      %vm949 = vweird.f32 %v943
      %vm950 = vmor %vm948, %vm949
      %v951 = vsel %vm950, %v943, %v947
      %v952 = vand.u32 2147483647, %v855
      %vm953 = vcmp.eq.f32.partialorder %v952, 8.507059e+37
      %v954 = vand.u32 %v855, 2147483648
      %v955 = vor.u32 1.1754944e-38, %v954
      %v956 = vsel %vm953, %v955, %v951
      %v957 = vmul.f32 1.0, %v956
      %v958 = vrcp.pop %v856
      %v959 = vmul.f32 %v856, %v958
      %v960 = vsub.f32 1.0, %v959
      %v961 = vmul.f32 %v958, %v960
      %v962 = vadd.f32 %v958, %v961
      %vm963 = vweird.f32 %v856
      %vm964 = vweird.f32 %v958
      %vm965 = vmor %vm963, %vm964
      %v966 = vsel %vm965, %v958, %v962
      %v967 = vand.u32 2147483647, %v856
      %vm968 = vcmp.eq.f32.partialorder %v967, 8.507059e+37
      %v969 = vand.u32 %v856, 2147483648
      %v970 = vor.u32 1.1754944e-38, %v969
      %v971 = vsel %vm968, %v970, %v966
      %v972 = vmul.f32 1.0, %v971
      %v973 = vrcp.pop %v857
      %v974 = vmul.f32 %v857, %v973
      %v975 = vsub.f32 1.0, %v974
      %v976 = vmul.f32 %v973, %v975
      %v977 = vadd.f32 %v973, %v976
      %vm978 = vweird.f32 %v857
      %vm979 = vweird.f32 %v973
      %vm980 = vmor %vm978, %vm979
      %v981 = vsel %vm980, %v973, %v977
      %v982 = vand.u32 2147483647, %v857
      %vm983 = vcmp.eq.f32.partialorder %v982, 8.507059e+37
      %v984 = vand.u32 %v857, 2147483648
      %v985 = vor.u32 1.1754944e-38, %v984
      %v986 = vsel %vm983, %v985, %v981
      %v987 = vmul.f32 1.0, %v986
      %v988 = vrcp.pop %v858
      %v989 = vmul.f32 %v858, %v988
      %v990 = vsub.f32 1.0, %v989
      %v991 = vmul.f32 %v988, %v990
      %v992 = vadd.f32 %v988, %v991
      %vm993 = vweird.f32 %v858
      %vm994 = vweird.f32 %v988
      %vm995 = vmor %vm993, %vm994
      %v996 = vsel %vm995, %v988, %v992
      %v997 = vand.u32 2147483647, %v858
      %vm998 = vcmp.eq.f32.partialorder %v997, 8.507059e+37
      %v999 = vand.u32 %v858, 2147483648
      %v1000 = vor.u32 1.1754944e-38, %v999
      %v1001 = vsel %vm998, %v1000, %v996
      %v1002 = vmul.f32 1.0, %v1001
      %v1003 = vrcp.pop %v859
      %v1004 = vmul.f32 %v859, %v1003
      %v1005 = vsub.f32 1.0, %v1004
      %v1006 = vmul.f32 %v1003, %v1005
      %v1007 = vadd.f32 %v1003, %v1006
      %vm1008 = vweird.f32 %v859
      %vm1009 = vweird.f32 %v1003
      %vm1010 = vmor %vm1008, %vm1009
      %v1011 = vsel %vm1010, %v1003, %v1007
      %v1012 = vand.u32 2147483647, %v859
      %vm1013 = vcmp.eq.f32.partialorder %v1012, 8.507059e+37
      %v1014 = vand.u32 %v859, 2147483648
      %v1015 = vor.u32 1.1754944e-38, %v1014
      %v1016 = vsel %vm1013, %v1015, %v1011
      %v1017 = vmul.f32 1.0, %v1016
      %v1018 = vrcp.pop %v860
      %v1019 = vmul.f32 %v860, %v1018
      %v1020 = vsub.f32 1.0, %v1019
      %v1021 = vmul.f32 %v1018, %v1020
      %v1022 = vadd.f32 %v1018, %v1021
      %vm1023 = vweird.f32 %v860
      %vm1024 = vweird.f32 %v1018
      %vm1025 = vmor %vm1023, %vm1024
      %v1026 = vsel %vm1025, %v1018, %v1022
      %v1027 = vand.u32 2147483647, %v860
      %vm1028 = vcmp.eq.f32.partialorder %v1027, 8.507059e+37
      %v1029 = vand.u32 %v860, 2147483648
      %v1030 = vor.u32 1.1754944e-38, %v1029
      %v1031 = vsel %vm1028, %v1030, %v1026
      %v1032 = vmul.f32 1.0, %v1031
      %v1033 = vrcp.pop %v861
      %v1034 = vmul.f32 %v861, %v1033
      %v1035 = vsub.f32 1.0, %v1034
      %v1036 = vmul.f32 %v1033, %v1035
      %v1037 = vadd.f32 %v1033, %v1036
      %vm1038 = vweird.f32 %v861
      %vm1039 = vweird.f32 %v1033
      %vm1040 = vmor %vm1038, %vm1039
      %v1041 = vsel %vm1040, %v1033, %v1037
      %v1042 = vand.u32 2147483647, %v861
      %vm1043 = vcmp.eq.f32.partialorder %v1042, 8.507059e+37
      %v1044 = vand.u32 %v861, 2147483648
      %v1045 = vor.u32 1.1754944e-38, %v1044
      %v1046 = vsel %vm1043, %v1045, %v1041
      %v1047 = vmul.f32 1.0, %v1046
      %v1048 = vrcp.pop %v862
      %v1049 = vmul.f32 %v862, %v1048
      %v1050 = vsub.f32 1.0, %v1049
      %v1051 = vmul.f32 %v1048, %v1050
      %v1052 = vadd.f32 %v1048, %v1051
      %vm1053 = vweird.f32 %v862
      %vm1054 = vweird.f32 %v1048
      %vm1055 = vmor %vm1053, %vm1054
      %v1056 = vsel %vm1055, %v1048, %v1052
      %v1057 = vand.u32 2147483647, %v862
      %vm1058 = vcmp.eq.f32.partialorder %v1057, 8.507059e+37
      %v1059 = vand.u32 %v862, 2147483648
      %v1060 = vor.u32 1.1754944e-38, %v1059
      %v1061 = vsel %vm1058, %v1060, %v1056
      %v1062 = vmul.f32 1.0, %v1061
      %v1063 = vrcp.pop %v863
      %v1064 = vmul.f32 %v863, %v1063
      %v1065 = vsub.f32 1.0, %v1064
      %v1066 = vmul.f32 %v1063, %v1065
      %v1067 = vadd.f32 %v1063, %v1066
      %vm1068 = vweird.f32 %v863
      %vm1069 = vweird.f32 %v1063
      %vm1070 = vmor %vm1068, %vm1069
      %v1071 = vsel %vm1070, %v1063, %v1067
      %v1072 = vand.u32 2147483647, %v863
      %vm1073 = vcmp.eq.f32.partialorder %v1072, 8.507059e+37
      %v1074 = vand.u32 %v863, 2147483648
      %v1075 = vor.u32 1.1754944e-38, %v1074
      %v1076 = vsel %vm1073, %v1075, %v1071
      %v1077 = vmul.f32 1.0, %v1076
      %v1078 = vrcp.pop %v864
      %v1079 = vmul.f32 %v864, %v1078
      %v1080 = vsub.f32 1.0, %v1079
      %v1081 = vmul.f32 %v1078, %v1080
      %v1082 = vadd.f32 %v1078, %v1081
      %vm1083 = vweird.f32 %v864
      %vm1084 = vweird.f32 %v1078
      %vm1085 = vmor %vm1083, %vm1084
      %v1086 = vsel %vm1085, %v1078, %v1082
      %v1087 = vand.u32 2147483647, %v864
      %vm1088 = vcmp.eq.f32.partialorder %v1087, 8.507059e+37
      %v1089 = vand.u32 %v864, 2147483648
      %v1090 = vor.u32 1.1754944e-38, %v1089
      %v1091 = vsel %vm1088, %v1090, %v1086
      %v1092 = vmul.f32 1.0, %v1091
      %v1093 = vrcp.pop %v865
      %v1094 = vmul.f32 %v865, %v1093
      %v1095 = vsub.f32 1.0, %v1094
      %v1096 = vmul.f32 %v1093, %v1095
      %v1097 = vadd.f32 %v1093, %v1096
      %vm1098 = vweird.f32 %v865
      %vm1099 = vweird.f32 %v1093
      %vm1100 = vmor %vm1098, %vm1099
      %v1101 = vsel %vm1100, %v1093, %v1097
      %v1102 = vand.u32 2147483647, %v865
      %vm1103 = vcmp.eq.f32.partialorder %v1102, 8.507059e+37
      %v1104 = vand.u32 %v865, 2147483648
      %v1105 = vor.u32 1.1754944e-38, %v1104
      %v1106 = vsel %vm1103, %v1105, %v1101
      %v1107 = vmul.f32 1.0, %v1106
      %v1108 = vrcp.pop %v866
      %v1109 = vmul.f32 %v866, %v1108
      %v1110 = vsub.f32 1.0, %v1109
      %v1111 = vmul.f32 %v1108, %v1110
      %v1112 = vadd.f32 %v1108, %v1111
      %vm1113 = vweird.f32 %v866
      %vm1114 = vweird.f32 %v1108
      %vm1115 = vmor %vm1113, %vm1114
      %v1116 = vsel %vm1115, %v1108, %v1112
      %v1117 = vand.u32 2147483647, %v866
      %vm1118 = vcmp.eq.f32.partialorder %v1117, 8.507059e+37
      %v1119 = vand.u32 %v866, 2147483648
      %v1120 = vor.u32 1.1754944e-38, %v1119
      %v1121 = vsel %vm1118, %v1120, %v1116
      %v1122 = vmul.f32 1.0, %v1121
      %v1123 = vrcp.pop %v867
      %v1124 = vmul.f32 %v867, %v1123
      %v1125 = vsub.f32 1.0, %v1124
      %v1126 = vmul.f32 %v1123, %v1125
      %v1127 = vadd.f32 %v1123, %v1126
      %vm1128 = vweird.f32 %v867
      %vm1129 = vweird.f32 %v1123
      %vm1130 = vmor %vm1128, %vm1129
      %v1131 = vsel %vm1130, %v1123, %v1127
      %v1132 = vand.u32 2147483647, %v867
      %vm1133 = vcmp.eq.f32.partialorder %v1132, 8.507059e+37
      %v1134 = vand.u32 %v867, 2147483648
      %v1135 = vor.u32 1.1754944e-38, %v1134
      %v1136 = vsel %vm1133, %v1135, %v1131
      %v1137 = vmul.f32 1.0, %v1136
      %v1138 = vrcp.pop %v868
      %v1139 = vmul.f32 %v868, %v1138
      %v1140 = vsub.f32 1.0, %v1139
      %v1141 = vmul.f32 %v1138, %v1140
      %v1142 = vadd.f32 %v1138, %v1141
      %vm1143 = vweird.f32 %v868
      %vm1144 = vweird.f32 %v1138
      %vm1145 = vmor %vm1143, %vm1144
      %v1146 = vsel %vm1145, %v1138, %v1142
      %v1147 = vand.u32 2147483647, %v868
      %vm1148 = vcmp.eq.f32.partialorder %v1147, 8.507059e+37
      %v1149 = vand.u32 %v868, 2147483648
      %v1150 = vor.u32 1.1754944e-38, %v1149
      %v1151 = vsel %vm1148, %v1150, %v1146
      %v1152 = vmul.f32 1.0, %v1151
      %v1153 = vrcp.pop %v869
      %v1154 = vmul.f32 %v869, %v1153
      %v1155 = vsub.f32 1.0, %v1154
      %v1156 = vmul.f32 %v1153, %v1155
      %v1157 = vadd.f32 %v1153, %v1156
      %vm1158 = vweird.f32 %v869
      %vm1159 = vweird.f32 %v1153
      %vm1160 = vmor %vm1158, %vm1159
      %v1161 = vsel %vm1160, %v1153, %v1157
      %v1162 = vand.u32 2147483647, %v869
      %vm1163 = vcmp.eq.f32.partialorder %v1162, 8.507059e+37
      %v1164 = vand.u32 %v869, 2147483648
      %v1165 = vor.u32 1.1754944e-38, %v1164
      %v1166 = vsel %vm1163, %v1165, %v1161
      %v1167 = vmul.f32 1.0, %v1166
      %v1168 = vrcp.pop %v870
      %v1169 = vmul.f32 %v870, %v1168
      %v1170 = vsub.f32 1.0, %v1169
      %v1171 = vmul.f32 %v1168, %v1170
      %v1172 = vadd.f32 %v1168, %v1171
      %vm1173 = vweird.f32 %v870
      %vm1174 = vweird.f32 %v1168
      %vm1175 = vmor %vm1173, %vm1174
      %v1176 = vsel %vm1175, %v1168, %v1172
      %v1177 = vand.u32 2147483647, %v870
      %vm1178 = vcmp.eq.f32.partialorder %v1177, 8.507059e+37
      %v1179 = vand.u32 %v870, 2147483648
      %v1180 = vor.u32 1.1754944e-38, %v1179
      %v1181 = vsel %vm1178, %v1180, %v1176
      %v1182 = vmul.f32 1.0, %v1181
      %v1183 = vrcp.pop %v871
      %v1184 = vmul.f32 %v871, %v1183
      %v1185 = vsub.f32 1.0, %v1184
      %v1186 = vmul.f32 %v1183, %v1185
      %v1187 = vadd.f32 %v1183, %v1186
      %vm1188 = vweird.f32 %v871
      %vm1189 = vweird.f32 %v1183
      %vm1190 = vmor %vm1188, %vm1189
      %v1191 = vsel %vm1190, %v1183, %v1187
      %v1192 = vand.u32 2147483647, %v871
      %vm1193 = vcmp.eq.f32.partialorder %v1192, 8.507059e+37
      %v1194 = vand.u32 %v871, 2147483648
      %v1195 = vor.u32 1.1754944e-38, %v1194
      %v1196 = vsel %vm1193, %v1195, %v1191
      %v1197 = vmul.f32 1.0, %v1196
      %v1198 = vrcp.pop %v872
      %v1199 = vmul.f32 %v872, %v1198
      %v1200 = vsub.f32 1.0, %v1199
      %v1201 = vmul.f32 %v1198, %v1200
      %v1202 = vadd.f32 %v1198, %v1201
      %vm1203 = vweird.f32 %v872
      %vm1204 = vweird.f32 %v1198
      %vm1205 = vmor %vm1203, %vm1204
      %v1206 = vsel %vm1205, %v1198, %v1202
      %v1207 = vand.u32 2147483647, %v872
      %vm1208 = vcmp.eq.f32.partialorder %v1207, 8.507059e+37
      %v1209 = vand.u32 %v872, 2147483648
      %v1210 = vor.u32 1.1754944e-38, %v1209
      %v1211 = vsel %vm1208, %v1210, %v1206
      %v1212 = vmul.f32 1.0, %v1211
      %v1213 = vrcp.pop %v873
      %v1214 = vmul.f32 %v873, %v1213
      %v1215 = vsub.f32 1.0, %v1214
      %v1216 = vmul.f32 %v1213, %v1215
      %v1217 = vadd.f32 %v1213, %v1216
      %vm1218 = vweird.f32 %v873
      %vm1219 = vweird.f32 %v1213
      %vm1220 = vmor %vm1218, %vm1219
      %v1221 = vsel %vm1220, %v1213, %v1217
      %v1222 = vand.u32 2147483647, %v873
      %vm1223 = vcmp.eq.f32.partialorder %v1222, 8.507059e+37
      %v1224 = vand.u32 %v873, 2147483648
      %v1225 = vor.u32 1.1754944e-38, %v1224
      %v1226 = vsel %vm1223, %v1225, %v1221
      %v1227 = vmul.f32 1.0, %v1226
      %v1228 = vrcp.pop %v874
      %v1229 = vmul.f32 %v874, %v1228
      %v1230 = vsub.f32 1.0, %v1229
      %v1231 = vmul.f32 %v1228, %v1230
      %v1232 = vadd.f32 %v1228, %v1231
      %vm1233 = vweird.f32 %v874
      %vm1234 = vweird.f32 %v1228
      %vm1235 = vmor %vm1233, %vm1234
      %v1236 = vsel %vm1235, %v1228, %v1232
      %v1237 = vand.u32 2147483647, %v874
      %vm1238 = vcmp.eq.f32.partialorder %v1237, 8.507059e+37
      %v1239 = vand.u32 %v874, 2147483648
      %v1240 = vor.u32 1.1754944e-38, %v1239
      %v1241 = vsel %vm1238, %v1240, %v1236
      %v1242 = vmul.f32 1.0, %v1241
      %v1243 = vrcp.pop %v875
      %v1244 = vmul.f32 %v875, %v1243
      %v1245 = vsub.f32 1.0, %v1244
      %v1246 = vmul.f32 %v1243, %v1245
      %v1247 = vadd.f32 %v1243, %v1246
      %vm1248 = vweird.f32 %v875
      %vm1249 = vweird.f32 %v1243
      %vm1250 = vmor %vm1248, %vm1249
      %v1251 = vsel %vm1250, %v1243, %v1247
      %v1252 = vand.u32 2147483647, %v875
      %vm1253 = vcmp.eq.f32.partialorder %v1252, 8.507059e+37
      %v1254 = vand.u32 %v875, 2147483648
      %v1255 = vor.u32 1.1754944e-38, %v1254
      %v1256 = vsel %vm1253, %v1255, %v1251
      %v1257 = vmul.f32 1.0, %v1256
      %v1258 = vrcp.pop %v876
      %v1259 = vmul.f32 %v876, %v1258
      %v1260 = vsub.f32 1.0, %v1259
      %v1261 = vmul.f32 %v1258, %v1260
      %v1262 = vadd.f32 %v1258, %v1261
      %vm1263 = vweird.f32 %v876
      %vm1264 = vweird.f32 %v1258
      %vm1265 = vmor %vm1263, %vm1264
      %v1266 = vsel %vm1265, %v1258, %v1262
      %v1267 = vand.u32 2147483647, %v876
      %vm1268 = vcmp.eq.f32.partialorder %v1267, 8.507059e+37
      %v1269 = vand.u32 %v876, 2147483648
      %v1270 = vor.u32 1.1754944e-38, %v1269
      %v1271 = vsel %vm1268, %v1270, %v1266
      %v1272 = vmul.f32 1.0, %v1271
      %v1273 = vrcp.pop %v877
      %v1274 = vmul.f32 %v877, %v1273
      %v1275 = vsub.f32 1.0, %v1274
      %v1276 = vmul.f32 %v1273, %v1275
      %v1277 = vadd.f32 %v1273, %v1276
      %vm1278 = vweird.f32 %v877
      %vm1279 = vweird.f32 %v1273
      %vm1280 = vmor %vm1278, %vm1279
      %v1281 = vsel %vm1280, %v1273, %v1277
      %v1282 = vand.u32 2147483647, %v877
      %vm1283 = vcmp.eq.f32.partialorder %v1282, 8.507059e+37
      %v1284 = vand.u32 %v877, 2147483648
      %v1285 = vor.u32 1.1754944e-38, %v1284
      %v1286 = vsel %vm1283, %v1285, %v1281
      %v1287 = vmul.f32 1.0, %v1286
      %v1288 = vrcp.pop %v878
      %v1289 = vmul.f32 %v878, %v1288
      %v1290 = vsub.f32 1.0, %v1289
      %v1291 = vmul.f32 %v1288, %v1290
      %v1292 = vadd.f32 %v1288, %v1291
      %vm1293 = vweird.f32 %v878
      %vm1294 = vweird.f32 %v1288
      %vm1295 = vmor %vm1293, %vm1294
      %v1296 = vsel %vm1295, %v1288, %v1292
      %v1297 = vand.u32 2147483647, %v878
      %vm1298 = vcmp.eq.f32.partialorder %v1297, 8.507059e+37
      %v1299 = vand.u32 %v878, 2147483648
      %v1300 = vor.u32 1.1754944e-38, %v1299
      %v1301 = vsel %vm1298, %v1300, %v1296
      %v1302 = vmul.f32 1.0, %v1301
      %v1303 = vrcp.pop %v879
      %v1304 = vmul.f32 %v879, %v1303
      %v1305 = vsub.f32 1.0, %v1304
      %v1306 = vmul.f32 %v1303, %v1305
      %v1307 = vadd.f32 %v1303, %v1306
      %vm1308 = vweird.f32 %v879
      %vm1309 = vweird.f32 %v1303
      %vm1310 = vmor %vm1308, %vm1309
      %v1311 = vsel %vm1310, %v1303, %v1307
      %v1312 = vand.u32 2147483647, %v879
      %vm1313 = vcmp.eq.f32.partialorder %v1312, 8.507059e+37
      %v1314 = vand.u32 %v879, 2147483648
      %v1315 = vor.u32 1.1754944e-38, %v1314
      %v1316 = vsel %vm1313, %v1315, %v1311
      %v1317 = vmul.f32 1.0, %v1316
      %v1318 = vrcp.pop %v880
      %v1319 = vmul.f32 %v880, %v1318
      %v1320 = vsub.f32 1.0, %v1319
      %v1321 = vmul.f32 %v1318, %v1320
      %v1322 = vadd.f32 %v1318, %v1321
      %vm1323 = vweird.f32 %v880
      %vm1324 = vweird.f32 %v1318
      %vm1325 = vmor %vm1323, %vm1324
      %v1326 = vsel %vm1325, %v1318, %v1322
      %v1327 = vand.u32 2147483647, %v880
      %vm1328 = vcmp.eq.f32.partialorder %v1327, 8.507059e+37
      %v1329 = vand.u32 %v880, 2147483648
      %v1330 = vor.u32 1.1754944e-38, %v1329
      %v1331 = vsel %vm1328, %v1330, %v1326
      %v1332 = vmul.f32 1.0, %v1331
      %v1333 = vrcp.pop %v881
      %v1334 = vmul.f32 %v881, %v1333
      %v1335 = vsub.f32 1.0, %v1334
      %v1336 = vmul.f32 %v1333, %v1335
      %v1337 = vadd.f32 %v1333, %v1336
      %vm1338 = vweird.f32 %v881
      %vm1339 = vweird.f32 %v1333
      %vm1340 = vmor %vm1338, %vm1339
      %v1341 = vsel %vm1340, %v1333, %v1337
      %v1342 = vand.u32 2147483647, %v881
      %vm1343 = vcmp.eq.f32.partialorder %v1342, 8.507059e+37
      %v1344 = vand.u32 %v881, 2147483648
      %v1345 = vor.u32 1.1754944e-38, %v1344
      %v1346 = vsel %vm1343, %v1345, %v1341
      %v1347 = vmul.f32 1.0, %v1346
      %v1348 = vrcp.pop %v882
      %v1349 = vmul.f32 %v882, %v1348
      %v1350 = vsub.f32 1.0, %v1349
      %v1351 = vmul.f32 %v1348, %v1350
      %v1352 = vadd.f32 %v1348, %v1351
      %vm1353 = vweird.f32 %v882
      %vm1354 = vweird.f32 %v1348
      %vm1355 = vmor %vm1353, %vm1354
      %v1356 = vsel %vm1355, %v1348, %v1352
      %v1357 = vand.u32 2147483647, %v882
      %vm1358 = vcmp.eq.f32.partialorder %v1357, 8.507059e+37
      %v1359 = vand.u32 %v882, 2147483648
      %v1360 = vor.u32 1.1754944e-38, %v1359
      %v1361 = vsel %vm1358, %v1360, %v1356
      %v1362 = vmul.f32 1.0, %v1361
      %v1363 = vmul.f32 %v660, %v897
      %v1364 = vmul.f32 %v663, %v912
      %v1365 = vmul.f32 %v666, %v927
      %v1366 = vmul.f32 %v669, %v942
      %v1367 = vmul.f32 %v672, %v957
      %v1368 = vmul.f32 %v675, %v972
      %v1369 = vmul.f32 %v678, %v987
      %v1370 = vmul.f32 %v681, %v1002
      %v1371 = vmul.f32 %v684, %v1017
      %v1372 = vmul.f32 %v687, %v1032
      %v1373 = vmul.f32 %v690, %v1047
      %v1374 = vmul.f32 %v693, %v1062
      %v1375 = vmul.f32 %v696, %v1077
      %v1376 = vmul.f32 %v699, %v1092
      %v1377 = vmul.f32 %v702, %v1107
      %v1378 = vmul.f32 %v705, %v1122
      %v1379 = vmul.f32 %v708, %v1137
      %v1380 = vmul.f32 %v711, %v1152
      %v1381 = vmul.f32 %v714, %v1167
      %v1382 = vmul.f32 %v717, %v1182
      %v1383 = vmul.f32 %v720, %v1197
      %v1384 = vmul.f32 %v723, %v1212
      %v1385 = vmul.f32 %v726, %v1227
      %v1386 = vmul.f32 %v729, %v1242
      %v1387 = vmul.f32 %v732, %v1257
      %v1388 = vmul.f32 %v735, %v1272
      %v1389 = vmul.f32 %v738, %v1287
      %v1390 = vmul.f32 %v741, %v1302
      %v1391 = vmul.f32 %v744, %v1317
      %v1392 = vmul.f32 %v747, %v1332
      %v1393 = vmul.f32 %v750, %v1347
      %v1394 = vmul.f32 %v753, %v1362
      %v1395 = vpack.c.bf16 %v1364, %v1363
      %v1396 = vpack.c.bf16 %v1366, %v1365
      %v1397 = vpack.c.bf16 %v1368, %v1367
      %v1398 = vpack.c.bf16 %v1370, %v1369
      %v1399 = vpack.c.bf16 %v1372, %v1371
      %v1400 = vpack.c.bf16 %v1374, %v1373
      %v1401 = vpack.c.bf16 %v1376, %v1375
      %v1402 = vpack.c.bf16 %v1378, %v1377
      %v1403 = vpack.c.bf16 %v1380, %v1379
      %v1404 = vpack.c.bf16 %v1382, %v1381
      %v1405 = vpack.c.bf16 %v1384, %v1383
      %v1406 = vpack.c.bf16 %v1386, %v1385
      %v1407 = vpack.c.bf16 %v1388, %v1387
      %v1408 = vpack.c.bf16 %v1390, %v1389
      %v1409 = vpack.c.bf16 %v1392, %v1391
      %v1410 = vpack.c.bf16 %v1394, %v1393
      %v1411 = vld [vmem:[%s3] sm:$0xf]
      %v1412 = vld [vmem:[%s4] sm:$0x1]
      %v1414 = vperm.slane %v1412, 0
      %vm1416 = vcmask 64512
      %v1418 = vsel %vm1416, %v1395, 0
      %v1421 = vsel %vm1416, %v1396, 0
      %v1424 = vsel %vm1416, %v1397, 0
      %v1427 = vsel %vm1416, %v1398, 0
      %v1430 = vsel %vm1416, %v1399, 0
      %v1433 = vsel %vm1416, %v1400, 0
      %v1436 = vsel %vm1416, %v1401, 0
      %v1439 = vsel %vm1416, %v1402, 0
      %v1442 = vsel %vm1416, %v1403, 0
      %v1445 = vsel %vm1416, %v1404, 0
      %v1448 = vsel %vm1416, %v1405, 0
      %v1451 = vsel %vm1416, %v1406, 0
      %v1454 = vsel %vm1416, %v1407, 0
      %v1457 = vsel %vm1416, %v1408, 0
      %v1460 = vsel %vm1416, %v1409, 0
      %v1463 = vsel %vm1416, %v1410, 0
      %vm1465 = vcmask 1043456
      %v1467 = vsel %vm1465, %v1411, 0
      %1469 = vmatpush.bf16.msra.mxu0 0
      %1470 = vmatpush.bf16.msra.mxu0 0
      %1471 = vmatpush.bf16.msra.mxu0 0
      %1472 = vmatpush.bf16.msra.mxu0 0
      %1473 = vmatpush.bf16.msra.mxu0 0
      %1474 = vmatpush.bf16.msra.mxu0 0
      %1475 = vmatpush.bf16.msra.mxu0 0
      %1476 = vmatpush.bf16.msra.mxu0 %v1467
      %1477 = vmatmul.bf16.gmra.mxu0 %v1418
      %v1478 = vpop.f32.mrf.mxu0
      %v1479 = vadd.f32 %v1414, %v1478
      %v1480 = vpop.f32.mrf.mxu0
      %v1481 = vadd.f32 %v1414, %v1480
      %1482 = vmatmul.bf16.gmra.mxu0 %v1421
      %v1483 = vpop.f32.mrf.mxu0
      %v1484 = vadd.f32 %v1414, %v1483
      %v1485 = vpop.f32.mrf.mxu0
      %v1486 = vadd.f32 %v1414, %v1485
      %1487 = vmatmul.bf16.gmra.mxu0 %v1424
      %v1488 = vpop.f32.mrf.mxu0
      %v1489 = vadd.f32 %v1414, %v1488
      %v1490 = vpop.f32.mrf.mxu0
      %v1491 = vadd.f32 %v1414, %v1490
      %1492 = vmatmul.bf16.gmra.mxu0 %v1427
      %v1493 = vpop.f32.mrf.mxu0
      %v1494 = vadd.f32 %v1414, %v1493
      %v1495 = vpop.f32.mrf.mxu0
      %v1496 = vadd.f32 %v1414, %v1495
      %1497 = vmatmul.bf16.gmra.mxu0 %v1430
      %v1498 = vpop.f32.mrf.mxu0
      %v1499 = vadd.f32 %v1414, %v1498
      %v1500 = vpop.f32.mrf.mxu0
      %v1501 = vadd.f32 %v1414, %v1500
      %1502 = vmatmul.bf16.gmra.mxu0 %v1433
      %v1503 = vpop.f32.mrf.mxu0
      %v1504 = vadd.f32 %v1414, %v1503
      %v1505 = vpop.f32.mrf.mxu0
      %v1506 = vadd.f32 %v1414, %v1505
      %1507 = vmatmul.bf16.gmra.mxu0 %v1436
      %v1508 = vpop.f32.mrf.mxu0
      %v1509 = vadd.f32 %v1414, %v1508
      %v1510 = vpop.f32.mrf.mxu0
      %v1511 = vadd.f32 %v1414, %v1510
      %1512 = vmatmul.bf16.gmra.mxu0 %v1439
      %v1513 = vpop.f32.mrf.mxu0
      %v1514 = vadd.f32 %v1414, %v1513
      %v1515 = vpop.f32.mrf.mxu0
      %v1516 = vadd.f32 %v1414, %v1515
      %1517 = vmatmul.bf16.gmra.mxu0 %v1442
      %v1518 = vpop.f32.mrf.mxu0
      %v1519 = vadd.f32 %v1414, %v1518
      %v1520 = vpop.f32.mrf.mxu0
      %v1521 = vadd.f32 %v1414, %v1520
      %1522 = vmatmul.bf16.gmra.mxu0 %v1445
      %v1523 = vpop.f32.mrf.mxu0
      %v1524 = vadd.f32 %v1414, %v1523
      %v1525 = vpop.f32.mrf.mxu0
      %v1526 = vadd.f32 %v1414, %v1525
      %1527 = vmatmul.bf16.gmra.mxu0 %v1448
      %v1528 = vpop.f32.mrf.mxu0
      %v1529 = vadd.f32 %v1414, %v1528
      %v1530 = vpop.f32.mrf.mxu0
      %v1531 = vadd.f32 %v1414, %v1530
      %1532 = vmatmul.bf16.gmra.mxu0 %v1451
      %v1533 = vpop.f32.mrf.mxu0
      %v1534 = vadd.f32 %v1414, %v1533
      %v1535 = vpop.f32.mrf.mxu0
      %v1536 = vadd.f32 %v1414, %v1535
      %1537 = vmatmul.bf16.gmra.mxu0 %v1454
      %v1538 = vpop.f32.mrf.mxu0
      %v1539 = vadd.f32 %v1414, %v1538
      %v1540 = vpop.f32.mrf.mxu0
      %v1541 = vadd.f32 %v1414, %v1540
      %1542 = vmatmul.bf16.gmra.mxu0 %v1457
      %v1543 = vpop.f32.mrf.mxu0
      %v1544 = vadd.f32 %v1414, %v1543
      %v1545 = vpop.f32.mrf.mxu0
      %v1546 = vadd.f32 %v1414, %v1545
      %1547 = vmatmul.bf16.gmra.mxu0 %v1460
      %v1548 = vpop.f32.mrf.mxu0
      %v1549 = vadd.f32 %v1414, %v1548
      %v1550 = vpop.f32.mrf.mxu0
      %v1551 = vadd.f32 %v1414, %v1550
      %1552 = vmatmul.bf16.gmra.mxu0 %v1463
      %v1553 = vpop.f32.mrf.mxu0
      %v1554 = vadd.f32 %v1414, %v1553
      %v1555 = vpop.f32.mrf.mxu0
      %v1556 = vadd.f32 %v1414, %v1555
      %1557 = vdwg.mxu0
      %v1558 = vxor.u32 %v1479, 2147483648
      %v1559 = vxor.u32 %v1481, 2147483648
      %v1560 = vxor.u32 %v1484, 2147483648
      %v1561 = vxor.u32 %v1486, 2147483648
      %v1562 = vxor.u32 %v1489, 2147483648
      %v1563 = vxor.u32 %v1491, 2147483648
      %v1564 = vxor.u32 %v1494, 2147483648
      %v1565 = vxor.u32 %v1496, 2147483648
      %v1566 = vxor.u32 %v1499, 2147483648
      %v1567 = vxor.u32 %v1501, 2147483648
      %v1568 = vxor.u32 %v1504, 2147483648
      %v1569 = vxor.u32 %v1506, 2147483648
      %v1570 = vxor.u32 %v1509, 2147483648
      %v1571 = vxor.u32 %v1511, 2147483648
      %v1572 = vxor.u32 %v1514, 2147483648
      %v1573 = vxor.u32 %v1516, 2147483648
      %v1574 = vxor.u32 %v1519, 2147483648
      %v1575 = vxor.u32 %v1521, 2147483648
      %v1576 = vxor.u32 %v1524, 2147483648
      %v1577 = vxor.u32 %v1526, 2147483648
      %v1578 = vxor.u32 %v1529, 2147483648
      %v1579 = vxor.u32 %v1531, 2147483648
      %v1580 = vxor.u32 %v1534, 2147483648
      %v1581 = vxor.u32 %v1536, 2147483648
      %v1582 = vxor.u32 %v1539, 2147483648
      %v1583 = vxor.u32 %v1541, 2147483648
      %v1584 = vxor.u32 %v1544, 2147483648
      %v1585 = vxor.u32 %v1546, 2147483648
      %v1586 = vxor.u32 %v1549, 2147483648
      %v1587 = vxor.u32 %v1551, 2147483648
      %v1588 = vxor.u32 %v1554, 2147483648
      %v1589 = vxor.u32 %v1556, 2147483648
      %v1590 = vmul.f32 %v1558, 1.442695
      %v1591 = vpow.pop %v1590
      %v1592 = vmul.f32 %v1559, 1.442695
      %v1593 = vpow.pop %v1592
      %v1594 = vmul.f32 %v1560, 1.442695
      %v1595 = vpow.pop %v1594
      %v1596 = vmul.f32 %v1561, 1.442695
      %v1597 = vpow.pop %v1596
      %v1598 = vmul.f32 %v1562, 1.442695
      %v1599 = vpow.pop %v1598
      %v1600 = vmul.f32 %v1563, 1.442695
      %v1601 = vpow.pop %v1600
      %v1602 = vmul.f32 %v1564, 1.442695
      %v1603 = vpow.pop %v1602
      %v1604 = vmul.f32 %v1565, 1.442695
      %v1605 = vpow.pop %v1604
      %v1606 = vmul.f32 %v1566, 1.442695
      %v1607 = vpow.pop %v1606
      %v1608 = vmul.f32 %v1567, 1.442695
      %v1609 = vpow.pop %v1608
      %v1610 = vmul.f32 %v1568, 1.442695
      %v1611 = vpow.pop %v1610
      %v1612 = vmul.f32 %v1569, 1.442695
      %v1613 = vpow.pop %v1612
      %v1614 = vmul.f32 %v1570, 1.442695
      %v1615 = vpow.pop %v1614
      %v1616 = vmul.f32 %v1571, 1.442695
      %v1617 = vpow.pop %v1616
      %v1618 = vmul.f32 %v1572, 1.442695
      %v1619 = vpow.pop %v1618
      %v1620 = vmul.f32 %v1573, 1.442695
      %v1621 = vpow.pop %v1620
      %v1622 = vmul.f32 %v1574, 1.442695
      %v1623 = vpow.pop %v1622
      %v1624 = vmul.f32 %v1575, 1.442695
      %v1625 = vpow.pop %v1624
      %v1626 = vmul.f32 %v1576, 1.442695
      %v1627 = vpow.pop %v1626
      %v1628 = vmul.f32 %v1577, 1.442695
      %v1629 = vpow.pop %v1628
      %v1630 = vmul.f32 %v1578, 1.442695
      %v1631 = vpow.pop %v1630
      %v1632 = vmul.f32 %v1579, 1.442695
      %v1633 = vpow.pop %v1632
      %v1634 = vmul.f32 %v1580, 1.442695
      %v1635 = vpow.pop %v1634
      %v1636 = vmul.f32 %v1581, 1.442695
      %v1637 = vpow.pop %v1636
      %v1638 = vmul.f32 %v1582, 1.442695
      %v1639 = vpow.pop %v1638
      %v1640 = vmul.f32 %v1583, 1.442695
      %v1641 = vpow.pop %v1640
      %v1642 = vmul.f32 %v1584, 1.442695
      %v1643 = vpow.pop %v1642
      %v1644 = vmul.f32 %v1585, 1.442695
      %v1645 = vpow.pop %v1644
      %v1646 = vmul.f32 %v1586, 1.442695
      %v1647 = vpow.pop %v1646
      %v1648 = vmul.f32 %v1587, 1.442695
      %v1649 = vpow.pop %v1648
      %v1650 = vmul.f32 %v1588, 1.442695
      %v1651 = vpow.pop %v1650
      %v1652 = vmul.f32 %v1589, 1.442695
      %v1653 = vpow.pop %v1652
      %v1654 = vadd.f32 %v1591, 1.0
      %v1655 = vadd.f32 %v1593, 1.0
      %v1656 = vadd.f32 %v1595, 1.0
      %v1657 = vadd.f32 %v1597, 1.0
      %v1658 = vadd.f32 %v1599, 1.0
      %v1659 = vadd.f32 %v1601, 1.0
      %v1660 = vadd.f32 %v1603, 1.0
      %v1661 = vadd.f32 %v1605, 1.0
      %v1662 = vadd.f32 %v1607, 1.0
      %v1663 = vadd.f32 %v1609, 1.0
      %v1664 = vadd.f32 %v1611, 1.0
      %v1665 = vadd.f32 %v1613, 1.0
      %v1666 = vadd.f32 %v1615, 1.0
      %v1667 = vadd.f32 %v1617, 1.0
      %v1668 = vadd.f32 %v1619, 1.0
      %v1669 = vadd.f32 %v1621, 1.0
      %v1670 = vadd.f32 %v1623, 1.0
      %v1671 = vadd.f32 %v1625, 1.0
      %v1672 = vadd.f32 %v1627, 1.0
      %v1673 = vadd.f32 %v1629, 1.0
      %v1674 = vadd.f32 %v1631, 1.0
      %v1675 = vadd.f32 %v1633, 1.0
      %v1676 = vadd.f32 %v1635, 1.0
      %v1677 = vadd.f32 %v1637, 1.0
      %v1678 = vadd.f32 %v1639, 1.0
      %v1679 = vadd.f32 %v1641, 1.0
      %v1680 = vadd.f32 %v1643, 1.0
      %v1681 = vadd.f32 %v1645, 1.0
      %v1682 = vadd.f32 %v1647, 1.0
      %v1683 = vadd.f32 %v1649, 1.0
      %v1684 = vadd.f32 %v1651, 1.0
      %v1685 = vadd.f32 %v1653, 1.0
      %v1686 = vrcp.pop %v1654
      %v1687 = vmul.f32 %v1654, %v1686
      %v1688 = vsub.f32 1.0, %v1687
      %v1689 = vmul.f32 %v1686, %v1688
      %v1690 = vadd.f32 %v1686, %v1689
      %vm1691 = vweird.f32 %v1654
      %vm1692 = vweird.f32 %v1686
      %vm1693 = vmor %vm1691, %vm1692
      %v1694 = vsel %vm1693, %v1686, %v1690
      %v1695 = vand.u32 2147483647, %v1654
      %vm1696 = vcmp.eq.f32.partialorder %v1695, 8.507059e+37
      %v1697 = vand.u32 %v1654, 2147483648
      %v1698 = vor.u32 1.1754944e-38, %v1697
      %v1699 = vsel %vm1696, %v1698, %v1694
      %v1700 = vmul.f32 1.0, %v1699
      %v1701 = vrcp.pop %v1655
      %v1702 = vmul.f32 %v1655, %v1701
      %v1703 = vsub.f32 1.0, %v1702
      %v1704 = vmul.f32 %v1701, %v1703
      %v1705 = vadd.f32 %v1701, %v1704
      %vm1706 = vweird.f32 %v1655
      %vm1707 = vweird.f32 %v1701
      %vm1708 = vmor %vm1706, %vm1707
      %v1709 = vsel %vm1708, %v1701, %v1705
      %v1710 = vand.u32 2147483647, %v1655
      %vm1711 = vcmp.eq.f32.partialorder %v1710, 8.507059e+37
      %v1712 = vand.u32 %v1655, 2147483648
      %v1713 = vor.u32 1.1754944e-38, %v1712
      %v1714 = vsel %vm1711, %v1713, %v1709
      %v1715 = vmul.f32 1.0, %v1714
      %v1716 = vrcp.pop %v1656
      %v1717 = vmul.f32 %v1656, %v1716
      %v1718 = vsub.f32 1.0, %v1717
      %v1719 = vmul.f32 %v1716, %v1718
      %v1720 = vadd.f32 %v1716, %v1719
      %vm1721 = vweird.f32 %v1656
      %vm1722 = vweird.f32 %v1716
      %vm1723 = vmor %vm1721, %vm1722
      %v1724 = vsel %vm1723, %v1716, %v1720
      %v1725 = vand.u32 2147483647, %v1656
      %vm1726 = vcmp.eq.f32.partialorder %v1725, 8.507059e+37
      %v1727 = vand.u32 %v1656, 2147483648
      %v1728 = vor.u32 1.1754944e-38, %v1727
      %v1729 = vsel %vm1726, %v1728, %v1724
      %v1730 = vmul.f32 1.0, %v1729
      %v1731 = vrcp.pop %v1657
      %v1732 = vmul.f32 %v1657, %v1731
      %v1733 = vsub.f32 1.0, %v1732
      %v1734 = vmul.f32 %v1731, %v1733
      %v1735 = vadd.f32 %v1731, %v1734
      %vm1736 = vweird.f32 %v1657
      %vm1737 = vweird.f32 %v1731
      %vm1738 = vmor %vm1736, %vm1737
      %v1739 = vsel %vm1738, %v1731, %v1735
      %v1740 = vand.u32 2147483647, %v1657
      %vm1741 = vcmp.eq.f32.partialorder %v1740, 8.507059e+37
      %v1742 = vand.u32 %v1657, 2147483648
      %v1743 = vor.u32 1.1754944e-38, %v1742
      %v1744 = vsel %vm1741, %v1743, %v1739
      %v1745 = vmul.f32 1.0, %v1744
      %v1746 = vrcp.pop %v1658
      %v1747 = vmul.f32 %v1658, %v1746
      %v1748 = vsub.f32 1.0, %v1747
      %v1749 = vmul.f32 %v1746, %v1748
      %v1750 = vadd.f32 %v1746, %v1749
      %vm1751 = vweird.f32 %v1658
      %vm1752 = vweird.f32 %v1746
      %vm1753 = vmor %vm1751, %vm1752
      %v1754 = vsel %vm1753, %v1746, %v1750
      %v1755 = vand.u32 2147483647, %v1658
      %vm1756 = vcmp.eq.f32.partialorder %v1755, 8.507059e+37
      %v1757 = vand.u32 %v1658, 2147483648
      %v1758 = vor.u32 1.1754944e-38, %v1757
      %v1759 = vsel %vm1756, %v1758, %v1754
      %v1760 = vmul.f32 1.0, %v1759
      %v1761 = vrcp.pop %v1659
      %v1762 = vmul.f32 %v1659, %v1761
      %v1763 = vsub.f32 1.0, %v1762
      %v1764 = vmul.f32 %v1761, %v1763
      %v1765 = vadd.f32 %v1761, %v1764
      %vm1766 = vweird.f32 %v1659
      %vm1767 = vweird.f32 %v1761
      %vm1768 = vmor %vm1766, %vm1767
      %v1769 = vsel %vm1768, %v1761, %v1765
      %v1770 = vand.u32 2147483647, %v1659
      %vm1771 = vcmp.eq.f32.partialorder %v1770, 8.507059e+37
      %v1772 = vand.u32 %v1659, 2147483648
      %v1773 = vor.u32 1.1754944e-38, %v1772
      %v1774 = vsel %vm1771, %v1773, %v1769
      %v1775 = vmul.f32 1.0, %v1774
      %v1776 = vrcp.pop %v1660
      %v1777 = vmul.f32 %v1660, %v1776
      %v1778 = vsub.f32 1.0, %v1777
      %v1779 = vmul.f32 %v1776, %v1778
      %v1780 = vadd.f32 %v1776, %v1779
      %vm1781 = vweird.f32 %v1660
      %vm1782 = vweird.f32 %v1776
      %vm1783 = vmor %vm1781, %vm1782
      %v1784 = vsel %vm1783, %v1776, %v1780
      %v1785 = vand.u32 2147483647, %v1660
      %vm1786 = vcmp.eq.f32.partialorder %v1785, 8.507059e+37
      %v1787 = vand.u32 %v1660, 2147483648
      %v1788 = vor.u32 1.1754944e-38, %v1787
      %v1789 = vsel %vm1786, %v1788, %v1784
      %v1790 = vmul.f32 1.0, %v1789
      %v1791 = vrcp.pop %v1661
      %v1792 = vmul.f32 %v1661, %v1791
      %v1793 = vsub.f32 1.0, %v1792
      %v1794 = vmul.f32 %v1791, %v1793
      %v1795 = vadd.f32 %v1791, %v1794
      %vm1796 = vweird.f32 %v1661
      %vm1797 = vweird.f32 %v1791
      %vm1798 = vmor %vm1796, %vm1797
      %v1799 = vsel %vm1798, %v1791, %v1795
      %v1800 = vand.u32 2147483647, %v1661
      %vm1801 = vcmp.eq.f32.partialorder %v1800, 8.507059e+37
      %v1802 = vand.u32 %v1661, 2147483648
      %v1803 = vor.u32 1.1754944e-38, %v1802
      %v1804 = vsel %vm1801, %v1803, %v1799
      %v1805 = vmul.f32 1.0, %v1804
      %v1806 = vrcp.pop %v1662
      %v1807 = vmul.f32 %v1662, %v1806
      %v1808 = vsub.f32 1.0, %v1807
      %v1809 = vmul.f32 %v1806, %v1808
      %v1810 = vadd.f32 %v1806, %v1809
      %vm1811 = vweird.f32 %v1662
      %vm1812 = vweird.f32 %v1806
      %vm1813 = vmor %vm1811, %vm1812
      %v1814 = vsel %vm1813, %v1806, %v1810
      %v1815 = vand.u32 2147483647, %v1662
      %vm1816 = vcmp.eq.f32.partialorder %v1815, 8.507059e+37
      %v1817 = vand.u32 %v1662, 2147483648
      %v1818 = vor.u32 1.1754944e-38, %v1817
      %v1819 = vsel %vm1816, %v1818, %v1814
      %v1820 = vmul.f32 1.0, %v1819
      %v1821 = vrcp.pop %v1663
      %v1822 = vmul.f32 %v1663, %v1821
      %v1823 = vsub.f32 1.0, %v1822
      %v1824 = vmul.f32 %v1821, %v1823
      %v1825 = vadd.f32 %v1821, %v1824
      %vm1826 = vweird.f32 %v1663
      %vm1827 = vweird.f32 %v1821
      %vm1828 = vmor %vm1826, %vm1827
      %v1829 = vsel %vm1828, %v1821, %v1825
      %v1830 = vand.u32 2147483647, %v1663
      %vm1831 = vcmp.eq.f32.partialorder %v1830, 8.507059e+37
      %v1832 = vand.u32 %v1663, 2147483648
      %v1833 = vor.u32 1.1754944e-38, %v1832
      %v1834 = vsel %vm1831, %v1833, %v1829
      %v1835 = vmul.f32 1.0, %v1834
      %v1836 = vrcp.pop %v1664
      %v1837 = vmul.f32 %v1664, %v1836
      %v1838 = vsub.f32 1.0, %v1837
      %v1839 = vmul.f32 %v1836, %v1838
      %v1840 = vadd.f32 %v1836, %v1839
      %vm1841 = vweird.f32 %v1664
      %vm1842 = vweird.f32 %v1836
      %vm1843 = vmor %vm1841, %vm1842
      %v1844 = vsel %vm1843, %v1836, %v1840
      %v1845 = vand.u32 2147483647, %v1664
      %vm1846 = vcmp.eq.f32.partialorder %v1845, 8.507059e+37
      %v1847 = vand.u32 %v1664, 2147483648
      %v1848 = vor.u32 1.1754944e-38, %v1847
      %v1849 = vsel %vm1846, %v1848, %v1844
      %v1850 = vmul.f32 1.0, %v1849
      %v1851 = vrcp.pop %v1665
      %v1852 = vmul.f32 %v1665, %v1851
      %v1853 = vsub.f32 1.0, %v1852
      %v1854 = vmul.f32 %v1851, %v1853
      %v1855 = vadd.f32 %v1851, %v1854
      %vm1856 = vweird.f32 %v1665
      %vm1857 = vweird.f32 %v1851
      %vm1858 = vmor %vm1856, %vm1857
      %v1859 = vsel %vm1858, %v1851, %v1855
      %v1860 = vand.u32 2147483647, %v1665
      %vm1861 = vcmp.eq.f32.partialorder %v1860, 8.507059e+37
      %v1862 = vand.u32 %v1665, 2147483648
      %v1863 = vor.u32 1.1754944e-38, %v1862
      %v1864 = vsel %vm1861, %v1863, %v1859
      %v1865 = vmul.f32 1.0, %v1864
      %v1866 = vrcp.pop %v1666
      %v1867 = vmul.f32 %v1666, %v1866
      %v1868 = vsub.f32 1.0, %v1867
      %v1869 = vmul.f32 %v1866, %v1868
      %v1870 = vadd.f32 %v1866, %v1869
      %vm1871 = vweird.f32 %v1666
      %vm1872 = vweird.f32 %v1866
      %vm1873 = vmor %vm1871, %vm1872
      %v1874 = vsel %vm1873, %v1866, %v1870
      %v1875 = vand.u32 2147483647, %v1666
      %vm1876 = vcmp.eq.f32.partialorder %v1875, 8.507059e+37
      %v1877 = vand.u32 %v1666, 2147483648
      %v1878 = vor.u32 1.1754944e-38, %v1877
      %v1879 = vsel %vm1876, %v1878, %v1874
      %v1880 = vmul.f32 1.0, %v1879
      %v1881 = vrcp.pop %v1667
      %v1882 = vmul.f32 %v1667, %v1881
      %v1883 = vsub.f32 1.0, %v1882
      %v1884 = vmul.f32 %v1881, %v1883
      %v1885 = vadd.f32 %v1881, %v1884
      %vm1886 = vweird.f32 %v1667
      %vm1887 = vweird.f32 %v1881
      %vm1888 = vmor %vm1886, %vm1887
      %v1889 = vsel %vm1888, %v1881, %v1885
      %v1890 = vand.u32 2147483647, %v1667
      %vm1891 = vcmp.eq.f32.partialorder %v1890, 8.507059e+37
      %v1892 = vand.u32 %v1667, 2147483648
      %v1893 = vor.u32 1.1754944e-38, %v1892
      %v1894 = vsel %vm1891, %v1893, %v1889
      %v1895 = vmul.f32 1.0, %v1894
      %v1896 = vrcp.pop %v1668
      %v1897 = vmul.f32 %v1668, %v1896
      %v1898 = vsub.f32 1.0, %v1897
      %v1899 = vmul.f32 %v1896, %v1898
      %v1900 = vadd.f32 %v1896, %v1899
      %vm1901 = vweird.f32 %v1668
      %vm1902 = vweird.f32 %v1896
      %vm1903 = vmor %vm1901, %vm1902
      %v1904 = vsel %vm1903, %v1896, %v1900
      %v1905 = vand.u32 2147483647, %v1668
      %vm1906 = vcmp.eq.f32.partialorder %v1905, 8.507059e+37
      %v1907 = vand.u32 %v1668, 2147483648
      %v1908 = vor.u32 1.1754944e-38, %v1907
      %v1909 = vsel %vm1906, %v1908, %v1904
      %v1910 = vmul.f32 1.0, %v1909
      %v1911 = vrcp.pop %v1669
      %v1912 = vmul.f32 %v1669, %v1911
      %v1913 = vsub.f32 1.0, %v1912
      %v1914 = vmul.f32 %v1911, %v1913
      %v1915 = vadd.f32 %v1911, %v1914
      %vm1916 = vweird.f32 %v1669
      %vm1917 = vweird.f32 %v1911
      %vm1918 = vmor %vm1916, %vm1917
      %v1919 = vsel %vm1918, %v1911, %v1915
      %v1920 = vand.u32 2147483647, %v1669
      %vm1921 = vcmp.eq.f32.partialorder %v1920, 8.507059e+37
      %v1922 = vand.u32 %v1669, 2147483648
      %v1923 = vor.u32 1.1754944e-38, %v1922
      %v1924 = vsel %vm1921, %v1923, %v1919
      %v1925 = vmul.f32 1.0, %v1924
      %v1926 = vrcp.pop %v1670
      %v1927 = vmul.f32 %v1670, %v1926
      %v1928 = vsub.f32 1.0, %v1927
      %v1929 = vmul.f32 %v1926, %v1928
      %v1930 = vadd.f32 %v1926, %v1929
      %vm1931 = vweird.f32 %v1670
      %vm1932 = vweird.f32 %v1926
      %vm1933 = vmor %vm1931, %vm1932
      %v1934 = vsel %vm1933, %v1926, %v1930
      %v1935 = vand.u32 2147483647, %v1670
      %vm1936 = vcmp.eq.f32.partialorder %v1935, 8.507059e+37
      %v1937 = vand.u32 %v1670, 2147483648
      %v1938 = vor.u32 1.1754944e-38, %v1937
      %v1939 = vsel %vm1936, %v1938, %v1934
      %v1940 = vmul.f32 1.0, %v1939
      %v1941 = vrcp.pop %v1671
      %v1942 = vmul.f32 %v1671, %v1941
      %v1943 = vsub.f32 1.0, %v1942
      %v1944 = vmul.f32 %v1941, %v1943
      %v1945 = vadd.f32 %v1941, %v1944
      %vm1946 = vweird.f32 %v1671
      %vm1947 = vweird.f32 %v1941
      %vm1948 = vmor %vm1946, %vm1947
      %v1949 = vsel %vm1948, %v1941, %v1945
      %v1950 = vand.u32 2147483647, %v1671
      %vm1951 = vcmp.eq.f32.partialorder %v1950, 8.507059e+37
      %v1952 = vand.u32 %v1671, 2147483648
      %v1953 = vor.u32 1.1754944e-38, %v1952
      %v1954 = vsel %vm1951, %v1953, %v1949
      %v1955 = vmul.f32 1.0, %v1954
      %v1956 = vrcp.pop %v1672
      %v1957 = vmul.f32 %v1672, %v1956
      %v1958 = vsub.f32 1.0, %v1957
      %v1959 = vmul.f32 %v1956, %v1958
      %v1960 = vadd.f32 %v1956, %v1959
      %vm1961 = vweird.f32 %v1672
      %vm1962 = vweird.f32 %v1956
      %vm1963 = vmor %vm1961, %vm1962
      %v1964 = vsel %vm1963, %v1956, %v1960
      %v1965 = vand.u32 2147483647, %v1672
      %vm1966 = vcmp.eq.f32.partialorder %v1965, 8.507059e+37
      %v1967 = vand.u32 %v1672, 2147483648
      %v1968 = vor.u32 1.1754944e-38, %v1967
      %v1969 = vsel %vm1966, %v1968, %v1964
      %v1970 = vmul.f32 1.0, %v1969
      %v1971 = vrcp.pop %v1673
      %v1972 = vmul.f32 %v1673, %v1971
      %v1973 = vsub.f32 1.0, %v1972
      %v1974 = vmul.f32 %v1971, %v1973
      %v1975 = vadd.f32 %v1971, %v1974
      %vm1976 = vweird.f32 %v1673
      %vm1977 = vweird.f32 %v1971
      %vm1978 = vmor %vm1976, %vm1977
      %v1979 = vsel %vm1978, %v1971, %v1975
      %v1980 = vand.u32 2147483647, %v1673
      %vm1981 = vcmp.eq.f32.partialorder %v1980, 8.507059e+37
      %v1982 = vand.u32 %v1673, 2147483648
      %v1983 = vor.u32 1.1754944e-38, %v1982
      %v1984 = vsel %vm1981, %v1983, %v1979
      %v1985 = vmul.f32 1.0, %v1984
      %v1986 = vrcp.pop %v1674
      %v1987 = vmul.f32 %v1674, %v1986
      %v1988 = vsub.f32 1.0, %v1987
      %v1989 = vmul.f32 %v1986, %v1988
      %v1990 = vadd.f32 %v1986, %v1989
      %vm1991 = vweird.f32 %v1674
      %vm1992 = vweird.f32 %v1986
      %vm1993 = vmor %vm1991, %vm1992
      %v1994 = vsel %vm1993, %v1986, %v1990
      %v1995 = vand.u32 2147483647, %v1674
      %vm1996 = vcmp.eq.f32.partialorder %v1995, 8.507059e+37
      %v1997 = vand.u32 %v1674, 2147483648
      %v1998 = vor.u32 1.1754944e-38, %v1997
      %v1999 = vsel %vm1996, %v1998, %v1994
      %v2000 = vmul.f32 1.0, %v1999
      %v2001 = vrcp.pop %v1675
      %v2002 = vmul.f32 %v1675, %v2001
      %v2003 = vsub.f32 1.0, %v2002
      %v2004 = vmul.f32 %v2001, %v2003
      %v2005 = vadd.f32 %v2001, %v2004
      %vm2006 = vweird.f32 %v1675
      %vm2007 = vweird.f32 %v2001
      %vm2008 = vmor %vm2006, %vm2007
      %v2009 = vsel %vm2008, %v2001, %v2005
      %v2010 = vand.u32 2147483647, %v1675
      %vm2011 = vcmp.eq.f32.partialorder %v2010, 8.507059e+37
      %v2012 = vand.u32 %v1675, 2147483648
      %v2013 = vor.u32 1.1754944e-38, %v2012
      %v2014 = vsel %vm2011, %v2013, %v2009
      %v2015 = vmul.f32 1.0, %v2014
      %v2016 = vrcp.pop %v1676
      %v2017 = vmul.f32 %v1676, %v2016
      %v2018 = vsub.f32 1.0, %v2017
      %v2019 = vmul.f32 %v2016, %v2018
      %v2020 = vadd.f32 %v2016, %v2019
      %vm2021 = vweird.f32 %v1676
      %vm2022 = vweird.f32 %v2016
      %vm2023 = vmor %vm2021, %vm2022
      %v2024 = vsel %vm2023, %v2016, %v2020
      %v2025 = vand.u32 2147483647, %v1676
      %vm2026 = vcmp.eq.f32.partialorder %v2025, 8.507059e+37
      %v2027 = vand.u32 %v1676, 2147483648
      %v2028 = vor.u32 1.1754944e-38, %v2027
      %v2029 = vsel %vm2026, %v2028, %v2024
      %v2030 = vmul.f32 1.0, %v2029
      %v2031 = vrcp.pop %v1677
      %v2032 = vmul.f32 %v1677, %v2031
      %v2033 = vsub.f32 1.0, %v2032
      %v2034 = vmul.f32 %v2031, %v2033
      %v2035 = vadd.f32 %v2031, %v2034
      %vm2036 = vweird.f32 %v1677
      %vm2037 = vweird.f32 %v2031
      %vm2038 = vmor %vm2036, %vm2037
      %v2039 = vsel %vm2038, %v2031, %v2035
      %v2040 = vand.u32 2147483647, %v1677
      %vm2041 = vcmp.eq.f32.partialorder %v2040, 8.507059e+37
      %v2042 = vand.u32 %v1677, 2147483648
      %v2043 = vor.u32 1.1754944e-38, %v2042
      %v2044 = vsel %vm2041, %v2043, %v2039
      %v2045 = vmul.f32 1.0, %v2044
      %v2046 = vrcp.pop %v1678
      %v2047 = vmul.f32 %v1678, %v2046
      %v2048 = vsub.f32 1.0, %v2047
      %v2049 = vmul.f32 %v2046, %v2048
      %v2050 = vadd.f32 %v2046, %v2049
      %vm2051 = vweird.f32 %v1678
      %vm2052 = vweird.f32 %v2046
      %vm2053 = vmor %vm2051, %vm2052
      %v2054 = vsel %vm2053, %v2046, %v2050
      %v2055 = vand.u32 2147483647, %v1678
      %vm2056 = vcmp.eq.f32.partialorder %v2055, 8.507059e+37
      %v2057 = vand.u32 %v1678, 2147483648
      %v2058 = vor.u32 1.1754944e-38, %v2057
      %v2059 = vsel %vm2056, %v2058, %v2054
      %v2060 = vmul.f32 1.0, %v2059
      %v2061 = vrcp.pop %v1679
      %v2062 = vmul.f32 %v1679, %v2061
      %v2063 = vsub.f32 1.0, %v2062
      %v2064 = vmul.f32 %v2061, %v2063
      %v2065 = vadd.f32 %v2061, %v2064
      %vm2066 = vweird.f32 %v1679
      %vm2067 = vweird.f32 %v2061
      %vm2068 = vmor %vm2066, %vm2067
      %v2069 = vsel %vm2068, %v2061, %v2065
      %v2070 = vand.u32 2147483647, %v1679
      %vm2071 = vcmp.eq.f32.partialorder %v2070, 8.507059e+37
      %v2072 = vand.u32 %v1679, 2147483648
      %v2073 = vor.u32 1.1754944e-38, %v2072
      %v2074 = vsel %vm2071, %v2073, %v2069
      %v2075 = vmul.f32 1.0, %v2074
      %v2076 = vrcp.pop %v1680
      %v2077 = vmul.f32 %v1680, %v2076
      %v2078 = vsub.f32 1.0, %v2077
      %v2079 = vmul.f32 %v2076, %v2078
      %v2080 = vadd.f32 %v2076, %v2079
      %vm2081 = vweird.f32 %v1680
      %vm2082 = vweird.f32 %v2076
      %vm2083 = vmor %vm2081, %vm2082
      %v2084 = vsel %vm2083, %v2076, %v2080
      %v2085 = vand.u32 2147483647, %v1680
      %vm2086 = vcmp.eq.f32.partialorder %v2085, 8.507059e+37
      %v2087 = vand.u32 %v1680, 2147483648
      %v2088 = vor.u32 1.1754944e-38, %v2087
      %v2089 = vsel %vm2086, %v2088, %v2084
      %v2090 = vmul.f32 1.0, %v2089
      %v2091 = vrcp.pop %v1681
      %v2092 = vmul.f32 %v1681, %v2091
      %v2093 = vsub.f32 1.0, %v2092
      %v2094 = vmul.f32 %v2091, %v2093
      %v2095 = vadd.f32 %v2091, %v2094
      %vm2096 = vweird.f32 %v1681
      %vm2097 = vweird.f32 %v2091
      %vm2098 = vmor %vm2096, %vm2097
      %v2099 = vsel %vm2098, %v2091, %v2095
      %v2100 = vand.u32 2147483647, %v1681
      %vm2101 = vcmp.eq.f32.partialorder %v2100, 8.507059e+37
      %v2102 = vand.u32 %v1681, 2147483648
      %v2103 = vor.u32 1.1754944e-38, %v2102
      %v2104 = vsel %vm2101, %v2103, %v2099
      %v2105 = vmul.f32 1.0, %v2104
      %v2106 = vrcp.pop %v1682
      %v2107 = vmul.f32 %v1682, %v2106
      %v2108 = vsub.f32 1.0, %v2107
      %v2109 = vmul.f32 %v2106, %v2108
      %v2110 = vadd.f32 %v2106, %v2109
      %vm2111 = vweird.f32 %v1682
      %vm2112 = vweird.f32 %v2106
      %vm2113 = vmor %vm2111, %vm2112
      %v2114 = vsel %vm2113, %v2106, %v2110
      %v2115 = vand.u32 2147483647, %v1682
      %vm2116 = vcmp.eq.f32.partialorder %v2115, 8.507059e+37
      %v2117 = vand.u32 %v1682, 2147483648
      %v2118 = vor.u32 1.1754944e-38, %v2117
      %v2119 = vsel %vm2116, %v2118, %v2114
      %v2120 = vmul.f32 1.0, %v2119
      %v2121 = vrcp.pop %v1683
      %v2122 = vmul.f32 %v1683, %v2121
      %v2123 = vsub.f32 1.0, %v2122
      %v2124 = vmul.f32 %v2121, %v2123
      %v2125 = vadd.f32 %v2121, %v2124
      %vm2126 = vweird.f32 %v1683
      %vm2127 = vweird.f32 %v2121
      %vm2128 = vmor %vm2126, %vm2127
      %v2129 = vsel %vm2128, %v2121, %v2125
      %v2130 = vand.u32 2147483647, %v1683
      %vm2131 = vcmp.eq.f32.partialorder %v2130, 8.507059e+37
      %v2132 = vand.u32 %v1683, 2147483648
      %v2133 = vor.u32 1.1754944e-38, %v2132
      %v2134 = vsel %vm2131, %v2133, %v2129
      %v2135 = vmul.f32 1.0, %v2134
      %v2136 = vrcp.pop %v1684
      %v2137 = vmul.f32 %v1684, %v2136
      %v2138 = vsub.f32 1.0, %v2137
      %v2139 = vmul.f32 %v2136, %v2138
      %v2140 = vadd.f32 %v2136, %v2139
      %vm2141 = vweird.f32 %v1684
      %vm2142 = vweird.f32 %v2136
      %vm2143 = vmor %vm2141, %vm2142
      %v2144 = vsel %vm2143, %v2136, %v2140
      %v2145 = vand.u32 2147483647, %v1684
      %vm2146 = vcmp.eq.f32.partialorder %v2145, 8.507059e+37
      %v2147 = vand.u32 %v1684, 2147483648
      %v2148 = vor.u32 1.1754944e-38, %v2147
      %v2149 = vsel %vm2146, %v2148, %v2144
      %v2150 = vmul.f32 1.0, %v2149
      %v2151 = vrcp.pop %v1685
      %v2152 = vmul.f32 %v1685, %v2151
      %v2153 = vsub.f32 1.0, %v2152
      %v2154 = vmul.f32 %v2151, %v2153
      %v2155 = vadd.f32 %v2151, %v2154
      %vm2156 = vweird.f32 %v1685
      %vm2157 = vweird.f32 %v2151
      %vm2158 = vmor %vm2156, %vm2157
      %v2159 = vsel %vm2158, %v2151, %v2155
      %v2160 = vand.u32 2147483647, %v1685
      %vm2161 = vcmp.eq.f32.partialorder %v2160, 8.507059e+37
      %v2162 = vand.u32 %v1685, 2147483648
      %v2163 = vor.u32 1.1754944e-38, %v2162
      %v2164 = vsel %vm2161, %v2163, %v2159
      %v2165 = vmul.f32 1.0, %v2164
      %v2166 = vmul.f32 %v1479, %v1700
      %v2167 = vmul.f32 %v1481, %v1715
      %v2168 = vmul.f32 %v1484, %v1730
      %v2169 = vmul.f32 %v1486, %v1745
      %v2170 = vmul.f32 %v1489, %v1760
      %v2171 = vmul.f32 %v1491, %v1775
      %v2172 = vmul.f32 %v1494, %v1790
      %v2173 = vmul.f32 %v1496, %v1805
      %v2174 = vmul.f32 %v1499, %v1820
      %v2175 = vmul.f32 %v1501, %v1835
      %v2176 = vmul.f32 %v1504, %v1850
      %v2177 = vmul.f32 %v1506, %v1865
      %v2178 = vmul.f32 %v1509, %v1880
      %v2179 = vmul.f32 %v1511, %v1895
      %v2180 = vmul.f32 %v1514, %v1910
      %v2181 = vmul.f32 %v1516, %v1925
      %v2182 = vmul.f32 %v1519, %v1940
      %v2183 = vmul.f32 %v1521, %v1955
      %v2184 = vmul.f32 %v1524, %v1970
      %v2185 = vmul.f32 %v1526, %v1985
      %v2186 = vmul.f32 %v1529, %v2000
      %v2187 = vmul.f32 %v1531, %v2015
      %v2188 = vmul.f32 %v1534, %v2030
      %v2189 = vmul.f32 %v1536, %v2045
      %v2190 = vmul.f32 %v1539, %v2060
      %v2191 = vmul.f32 %v1541, %v2075
      %v2192 = vmul.f32 %v1544, %v2090
      %v2193 = vmul.f32 %v1546, %v2105
      %v2194 = vmul.f32 %v1549, %v2120
      %v2195 = vmul.f32 %v1551, %v2135
      %v2196 = vmul.f32 %v1554, %v2150
      %v2197 = vmul.f32 %v1556, %v2165
      %vm2198 = vcmask 261120
      %2199 = vst.msk [vmem:[#allocation2] sm:$0xff] %vm2198, 0.0
      %vm2200 = vcmask 254976
      %2201 = vst.msk [vmem:[#allocation2 + $0x8] sm:$0x3] %vm2200, 0.0
      %2202 = vst.msk [vmem:[#allocation2 + $0xa0] sm:$0xff] %vm2198, 0.0
      %2203 = vst.msk [vmem:[#allocation2 + $0xa8] sm:$0x3] %vm2200, 0.0
      %2204 = vst.msk [vmem:[#allocation2 + $0x140] sm:$0xff] %vm2198, 0.0
      %2205 = vst.msk [vmem:[#allocation2 + $0x148] sm:$0x3] %vm2200, 0.0
      %2206 = vst.msk [vmem:[#allocation2 + $0x1e0] sm:$0xff] %vm2198, 0.0
      %2207 = vst.msk [vmem:[#allocation2 + $0x1e8] sm:$0x3] %vm2200, 0.0
      %s2208 = scalar_lea.vmem [#allocation2], 144
      %2209 = vst.msk [vmem:[%s2208] sm:$0xff] %vm2198, 0.0
      %2210 = vst.msk [vmem:[%s2208 + $0x8] sm:$0x3] %vm2200, 0.0
      %2211 = vst.msk [vmem:[%s2208 + $0xa0] sm:$0xff] %vm2198, 0.0
      %2212 = vst.msk [vmem:[%s2208 + $0xa8] sm:$0x3] %vm2200, 0.0
      %2213 = vst.msk [vmem:[%s2208 + $0x140] sm:$0xff] %vm2198, 0.0
      %2214 = vst.msk [vmem:[%s2208 + $0x148] sm:$0x3] %vm2200, 0.0
      %2215 = vst.msk [vmem:[%s2208 + $0x1e0] sm:$0xff] %vm2198, 0.0
      %2216 = vst.msk [vmem:[%s2208 + $0x1e8] sm:$0x3] %vm2200, 0.0
      %vm2217 = vcmask 253952
      %2218 = vst.msk [vmem:[#allocation2] sm:$0x1] %vm2217, 0.0
      %2219 = vst.msk [vmem:[#allocation2 + $0x10] sm:$0x1] %vm2217, 0.0
      %2220 = vst.msk [vmem:[#allocation2 + $0x20] sm:$0x1] %vm2217, 0.0
      %2221 = vst.msk [vmem:[#allocation2 + $0x30] sm:$0x1] %vm2217, 0.0
      %2222 = vst.msk [vmem:[#allocation2 + $0x40] sm:$0x1] %vm2217, 0.0
      %2223 = vst.msk [vmem:[#allocation2 + $0x50] sm:$0x1] %vm2217, 0.0
      %2224 = vst.msk [vmem:[#allocation2 + $0x60] sm:$0x1] %vm2217, 0.0
      %2225 = vst.msk [vmem:[#allocation2 + $0x70] sm:$0x1] %vm2217, 0.0
      %2226 = vst.msk [vmem:[#allocation2 + $0x80] sm:$0x1] %vm2217, 0.0
      %2227 = vst.msk [vmem:[#allocation2 + $0x90] sm:$0x1] %vm2217, 0.0
      %2228 = vst.msk [vmem:[#allocation2 + $0xa0] sm:$0x1] %vm2217, 0.0
      %2229 = vst.msk [vmem:[#allocation2 + $0xb0] sm:$0x1] %vm2217, 0.0
      %2230 = vst.msk [vmem:[#allocation2 + $0xc0] sm:$0x1] %vm2217, 0.0
      %2231 = vst.msk [vmem:[#allocation2 + $0xd0] sm:$0x1] %vm2217, 0.0
      %2232 = vst.msk [vmem:[#allocation2 + $0xe0] sm:$0x1] %vm2217, 0.0
      %2233 = vst.msk [vmem:[#allocation2 + $0xf0] sm:$0x1] %vm2217, 0.0
      %2234 = vst.msk [vmem:[#allocation2 + $0x100] sm:$0x1] %vm2217, 0.0
      %2235 = vst.msk [vmem:[#allocation2 + $0x110] sm:$0x1] %vm2217, 0.0
      %2236 = vst.msk [vmem:[#allocation2 + $0x120] sm:$0x1] %vm2217, 0.0
      %2237 = vst.msk [vmem:[#allocation2 + $0x130] sm:$0x1] %vm2217, 0.0
      %2238 = vst.msk [vmem:[#allocation2 + $0x140] sm:$0x1] %vm2217, 0.0
      %2239 = vst.msk [vmem:[#allocation2 + $0x150] sm:$0x1] %vm2217, 0.0
      %2240 = vst.msk [vmem:[#allocation2 + $0x160] sm:$0x1] %vm2217, 0.0
      %2241 = vst.msk [vmem:[#allocation2 + $0x170] sm:$0x1] %vm2217, 0.0
      %2242 = vst.msk [vmem:[#allocation2 + $0x180] sm:$0x1] %vm2217, 0.0
      %2243 = vst.msk [vmem:[#allocation2 + $0x190] sm:$0x1] %vm2217, 0.0
      %2244 = vst.msk [vmem:[#allocation2 + $0x1a0] sm:$0x1] %vm2217, 0.0
      %2245 = vst.msk [vmem:[#allocation2 + $0x1b0] sm:$0x1] %vm2217, 0.0
      %2246 = vst.msk [vmem:[#allocation2 + $0x1c0] sm:$0x1] %vm2217, 0.0
      %2247 = vst.msk [vmem:[#allocation2 + $0x1d0] sm:$0x1] %vm2217, 0.0
      %2248 = vst.msk [vmem:[#allocation2 + $0x1e0] sm:$0x1] %vm2217, 0.0
      %2249 = vst.msk [vmem:[#allocation2 + $0x1f0] sm:$0x1] %vm2217, 0.0
      %2250 = vst.msk [vmem:[#allocation2 + $0x200] sm:$0x1] %vm2217, 0.0
      %2251 = vst.msk [vmem:[#allocation2 + $0x210] sm:$0x1] %vm2217, 0.0
      %2252 = vst.msk [vmem:[#allocation2 + $0x220] sm:$0x1] %vm2217, 0.0
      %2253 = vst.msk [vmem:[#allocation2 + $0x230] sm:$0x1] %vm2217, 0.0
      %2254 = vst.msk [vmem:[#allocation2 + $0x240] sm:$0x1] %vm2217, 0.0
      %2255 = vst.msk [vmem:[#allocation2 + $0x250] sm:$0x1] %vm2217, 0.0
      %2256 = vst.msk [vmem:[#allocation2 + $0x260] sm:$0x1] %vm2217, 0.0
      %2257 = vst.msk [vmem:[#allocation2 + $0x270] sm:$0x1] %vm2217, 0.0
      %2258 = vst.msk [vmem:[#allocation2 + $0x9] sm:$0x1] %vm2217, 0.0
      %2259 = vst.msk [vmem:[#allocation2 + $0x19] sm:$0x1] %vm2217, 0.0
      %2260 = vst.msk [vmem:[#allocation2 + $0x29] sm:$0x1] %vm2217, 0.0
      %2261 = vst.msk [vmem:[#allocation2 + $0x39] sm:$0x1] %vm2217, 0.0
      %2262 = vst.msk [vmem:[#allocation2 + $0x49] sm:$0x1] %vm2217, 0.0
      %2263 = vst.msk [vmem:[#allocation2 + $0x59] sm:$0x1] %vm2217, 0.0
      %2264 = vst.msk [vmem:[#allocation2 + $0x69] sm:$0x1] %vm2217, 0.0
      %2265 = vst.msk [vmem:[#allocation2 + $0x79] sm:$0x1] %vm2217, 0.0
      %2266 = vst.msk [vmem:[#allocation2 + $0x89] sm:$0x1] %vm2217, 0.0
      %2267 = vst.msk [vmem:[#allocation2 + $0x99] sm:$0x1] %vm2217, 0.0
      %2268 = vst.msk [vmem:[#allocation2 + $0xa9] sm:$0x1] %vm2217, 0.0
      %2269 = vst.msk [vmem:[#allocation2 + $0xb9] sm:$0x1] %vm2217, 0.0
      %2270 = vst.msk [vmem:[#allocation2 + $0xc9] sm:$0x1] %vm2217, 0.0
      %2271 = vst.msk [vmem:[#allocation2 + $0xd9] sm:$0x1] %vm2217, 0.0
      %2272 = vst.msk [vmem:[#allocation2 + $0xe9] sm:$0x1] %vm2217, 0.0
      %2273 = vst.msk [vmem:[#allocation2 + $0xf9] sm:$0x1] %vm2217, 0.0
      %2274 = vst.msk [vmem:[#allocation2 + $0x109] sm:$0x1] %vm2217, 0.0
      %2275 = vst.msk [vmem:[#allocation2 + $0x119] sm:$0x1] %vm2217, 0.0
      %2276 = vst.msk [vmem:[#allocation2 + $0x129] sm:$0x1] %vm2217, 0.0
      %2277 = vst.msk [vmem:[#allocation2 + $0x139] sm:$0x1] %vm2217, 0.0
      %2278 = vst.msk [vmem:[#allocation2 + $0x149] sm:$0x1] %vm2217, 0.0
      %2279 = vst.msk [vmem:[#allocation2 + $0x159] sm:$0x1] %vm2217, 0.0
      %2280 = vst.msk [vmem:[#allocation2 + $0x169] sm:$0x1] %vm2217, 0.0
      %2281 = vst.msk [vmem:[#allocation2 + $0x179] sm:$0x1] %vm2217, 0.0
      %2282 = vst.msk [vmem:[#allocation2 + $0x189] sm:$0x1] %vm2217, 0.0
      %2283 = vst.msk [vmem:[#allocation2 + $0x199] sm:$0x1] %vm2217, 0.0
      %2284 = vst.msk [vmem:[#allocation2 + $0x1a9] sm:$0x1] %vm2217, 0.0
      %2285 = vst.msk [vmem:[#allocation2 + $0x1b9] sm:$0x1] %vm2217, 0.0
      %2286 = vst.msk [vmem:[#allocation2 + $0x1c9] sm:$0x1] %vm2217, 0.0
      %2287 = vst.msk [vmem:[#allocation2 + $0x1d9] sm:$0x1] %vm2217, 0.0
      %2288 = vst.msk [vmem:[#allocation2 + $0x1e9] sm:$0x1] %vm2217, 0.0
      %2289 = vst.msk [vmem:[#allocation2 + $0x1f9] sm:$0x1] %vm2217, 0.0
      %2290 = vst.msk [vmem:[#allocation2 + $0x209] sm:$0x1] %vm2217, 0.0
      %2291 = vst.msk [vmem:[#allocation2 + $0x219] sm:$0x1] %vm2217, 0.0
      %2292 = vst.msk [vmem:[#allocation2 + $0x229] sm:$0x1] %vm2217, 0.0
      %2293 = vst.msk [vmem:[#allocation2 + $0x239] sm:$0x1] %vm2217, 0.0
      %2294 = vst.msk [vmem:[#allocation2 + $0x249] sm:$0x1] %vm2217, 0.0
      %2295 = vst.msk [vmem:[#allocation2 + $0x259] sm:$0x1] %vm2217, 0.0
      %2296 = vst.msk [vmem:[#allocation2 + $0x269] sm:$0x1] %vm2217, 0.0
      %2297 = vst.msk [vmem:[#allocation2 + $0x279] sm:$0x1] %vm2217, 0.0
      %s2298 = scalar_lea.vmem [#allocation2], 16
      %2299 = vst.msk [vmem:[%s2298 + $0x1] sm:$0xff] %vm2198, %v2166
      %2300 = vst.msk [vmem:[%s2298 + $0x11] sm:$0xff] %vm2198, %v2167
      %2301 = vst.msk [vmem:[%s2298 + $0x21] sm:$0xff] %vm2198, %v2168
      %2302 = vst.msk [vmem:[%s2298 + $0x31] sm:$0xff] %vm2198, %v2169
      %2303 = vst.msk [vmem:[%s2298 + $0x41] sm:$0xff] %vm2198, %v2170
      %2304 = vst.msk [vmem:[%s2298 + $0x51] sm:$0xff] %vm2198, %v2171
      %2305 = vst.msk [vmem:[%s2298 + $0x61] sm:$0xff] %vm2198, %v2172
      %2306 = vst.msk [vmem:[%s2298 + $0x71] sm:$0xff] %vm2198, %v2173
      %2307 = vst.msk [vmem:[%s2298 + $0xa1] sm:$0xff] %vm2198, %v2174
      %2308 = vst.msk [vmem:[%s2298 + $0xb1] sm:$0xff] %vm2198, %v2175
      %2309 = vst.msk [vmem:[%s2298 + $0xc1] sm:$0xff] %vm2198, %v2176
      %2310 = vst.msk [vmem:[%s2298 + $0xd1] sm:$0xff] %vm2198, %v2177
      %2311 = vst.msk [vmem:[%s2298 + $0xe1] sm:$0xff] %vm2198, %v2178
      %2312 = vst.msk [vmem:[%s2298 + $0xf1] sm:$0xff] %vm2198, %v2179
      %2313 = vst.msk [vmem:[%s2298 + $0x101] sm:$0xff] %vm2198, %v2180
      %2314 = vst.msk [vmem:[%s2298 + $0x111] sm:$0xff] %vm2198, %v2181
      %2315 = vst.msk [vmem:[%s2298 + $0x141] sm:$0xff] %vm2198, %v2182
      %2316 = vst.msk [vmem:[%s2298 + $0x151] sm:$0xff] %vm2198, %v2183
      %2317 = vst.msk [vmem:[%s2298 + $0x161] sm:$0xff] %vm2198, %v2184
      %2318 = vst.msk [vmem:[%s2298 + $0x171] sm:$0xff] %vm2198, %v2185
      %2319 = vst.msk [vmem:[%s2298 + $0x181] sm:$0xff] %vm2198, %v2186
      %2320 = vst.msk [vmem:[%s2298 + $0x191] sm:$0xff] %vm2198, %v2187
      %2321 = vst.msk [vmem:[%s2298 + $0x1a1] sm:$0xff] %vm2198, %v2188
      %2322 = vst.msk [vmem:[%s2298 + $0x1b1] sm:$0xff] %vm2198, %v2189
      %2323 = vst.msk [vmem:[%s2298 + $0x1e1] sm:$0xff] %vm2198, %v2190
      %2324 = vst.msk [vmem:[%s2298 + $0x1f1] sm:$0xff] %vm2198, %v2191
      %2325 = vst.msk [vmem:[%s2298 + $0x201] sm:$0xff] %vm2198, %v2192
      %2326 = vst.msk [vmem:[%s2298 + $0x211] sm:$0xff] %vm2198, %v2193
      %2327 = vst.msk [vmem:[%s2298 + $0x221] sm:$0xff] %vm2198, %v2194
      %2328 = vst.msk [vmem:[%s2298 + $0x231] sm:$0xff] %vm2198, %v2195
      %2329 = vst.msk [vmem:[%s2298 + $0x241] sm:$0xff] %vm2198, %v2196
      %2330 = vst.msk [vmem:[%s2298 + $0x251] sm:$0xff] %vm2198, %v2197
      %v2331 = vld [vmem:[%s5] sm:$0xff]
      %v2332 = vld [vmem:[%s5 + $0x8] sm:$0x1]
      %v2333 = vld [vmem:[#allocation2] sm:$0xff]
      %v2334 = vld [vmem:[#allocation2 + $0x10] sm:$0xff]
      %v2335 = vld [vmem:[#allocation2 + $0x20] sm:$0xff]
      %v2336 = vld [vmem:[#allocation2 + $0x30] sm:$0xff]
      %v2337 = vld [vmem:[#allocation2 + $0x40] sm:$0xff]
      %v2338 = vld [vmem:[#allocation2 + $0x50] sm:$0xff]
      %v2339 = vld [vmem:[#allocation2 + $0x60] sm:$0xff]
      %v2340 = vld [vmem:[#allocation2 + $0x70] sm:$0xff]
      %v2341 = vld [vmem:[#allocation2 + $0xa0] sm:$0xff]
      %v2342 = vld [vmem:[#allocation2 + $0xb0] sm:$0xff]
      %v2343 = vld [vmem:[#allocation2 + $0xc0] sm:$0xff]
      %v2344 = vld [vmem:[#allocation2 + $0xd0] sm:$0xff]
      %v2345 = vld [vmem:[#allocation2 + $0xe0] sm:$0xff]
      %v2346 = vld [vmem:[#allocation2 + $0xf0] sm:$0xff]
      %v2347 = vld [vmem:[#allocation2 + $0x100] sm:$0xff]
      %v2348 = vld [vmem:[#allocation2 + $0x110] sm:$0xff]
      %v2349 = vld [vmem:[#allocation2 + $0x140] sm:$0xff]
      %v2350 = vld [vmem:[#allocation2 + $0x150] sm:$0xff]
      %v2351 = vld [vmem:[#allocation2 + $0x160] sm:$0xff]
      %v2352 = vld [vmem:[#allocation2 + $0x170] sm:$0xff]
      %v2353 = vld [vmem:[#allocation2 + $0x180] sm:$0xff]
      %v2354 = vld [vmem:[#allocation2 + $0x190] sm:$0xff]
      %v2355 = vld [vmem:[#allocation2 + $0x1a0] sm:$0xff]
      %v2356 = vld [vmem:[#allocation2 + $0x1b0] sm:$0xff]
      %v2357 = vld [vmem:[#allocation2 + $0x1e0] sm:$0xff]
      %v2358 = vld [vmem:[#allocation2 + $0x1f0] sm:$0xff]
      %v2359 = vld [vmem:[#allocation2 + $0x200] sm:$0xff]
      %v2360 = vld [vmem:[#allocation2 + $0x210] sm:$0xff]
      %v2361 = vld [vmem:[#allocation2 + $0x220] sm:$0xff]
      %v2362 = vld [vmem:[#allocation2 + $0x230] sm:$0xff]
      %v2363 = vld [vmem:[#allocation2 + $0x240] sm:$0xff]
      %v2364 = vld [vmem:[#allocation2 + $0x250] sm:$0xff]
      %v2365 = vperm.slane %v2331, 0
      %v2366 = vmul.f32 %v2333, %v2365
      %v2367 = vmul.f32 %v2334, %v2365
      %v2368 = vmul.f32 %v2335, %v2365
      %v2369 = vmul.f32 %v2336, %v2365
      %v2370 = vmul.f32 %v2337, %v2365
      %v2371 = vmul.f32 %v2338, %v2365
      %v2372 = vmul.f32 %v2339, %v2365
      %v2373 = vmul.f32 %v2340, %v2365
      %v2374 = vmul.f32 %v2341, %v2365
      %v2375 = vmul.f32 %v2342, %v2365
      %v2376 = vmul.f32 %v2343, %v2365
      %v2377 = vmul.f32 %v2344, %v2365
      %v2378 = vmul.f32 %v2345, %v2365
      %v2379 = vmul.f32 %v2346, %v2365
      %v2380 = vmul.f32 %v2347, %v2365
      %v2381 = vmul.f32 %v2348, %v2365
      %v2382 = vmul.f32 %v2349, %v2365
      %v2383 = vmul.f32 %v2350, %v2365
      %v2384 = vmul.f32 %v2351, %v2365
      %v2385 = vmul.f32 %v2352, %v2365
      %v2386 = vmul.f32 %v2353, %v2365
      %v2387 = vmul.f32 %v2354, %v2365
      %v2388 = vmul.f32 %v2355, %v2365
      %v2389 = vmul.f32 %v2356, %v2365
      %v2390 = vmul.f32 %v2357, %v2365
      %v2391 = vmul.f32 %v2358, %v2365
      %v2392 = vmul.f32 %v2359, %v2365
      %v2393 = vmul.f32 %v2360, %v2365
      %v2394 = vmul.f32 %v2361, %v2365
      %v2395 = vmul.f32 %v2362, %v2365
      %v2396 = vmul.f32 %v2363, %v2365
      %v2397 = vmul.f32 %v2364, %v2365
      %v2398 = vadd.f32 %v2366, 0.0
      %v2399 = vadd.f32 %v2367, 0.0
      %v2400 = vadd.f32 %v2368, 0.0
      %v2401 = vadd.f32 %v2369, 0.0
      %v2402 = vadd.f32 %v2370, 0.0
      %v2403 = vadd.f32 %v2371, 0.0
      %v2404 = vadd.f32 %v2372, 0.0
      %v2405 = vadd.f32 %v2373, 0.0
      %v2406 = vadd.f32 %v2374, 0.0
      %v2407 = vadd.f32 %v2375, 0.0
      %v2408 = vadd.f32 %v2376, 0.0
      %v2409 = vadd.f32 %v2377, 0.0
      %v2410 = vadd.f32 %v2378, 0.0
      %v2411 = vadd.f32 %v2379, 0.0
      %v2412 = vadd.f32 %v2380, 0.0
      %v2413 = vadd.f32 %v2381, 0.0
      %v2414 = vadd.f32 %v2382, 0.0
      %v2415 = vadd.f32 %v2383, 0.0
      %v2416 = vadd.f32 %v2384, 0.0
      %v2417 = vadd.f32 %v2385, 0.0
      %v2418 = vadd.f32 %v2386, 0.0
      %v2419 = vadd.f32 %v2387, 0.0
      %v2420 = vadd.f32 %v2388, 0.0
      %v2421 = vadd.f32 %v2389, 0.0
      %v2422 = vadd.f32 %v2390, 0.0
      %v2423 = vadd.f32 %v2391, 0.0
      %v2424 = vadd.f32 %v2392, 0.0
      %v2425 = vadd.f32 %v2393, 0.0
      %v2426 = vadd.f32 %v2394, 0.0
      %v2427 = vadd.f32 %v2395, 0.0
      %v2428 = vadd.f32 %v2396, 0.0
      %v2429 = vadd.f32 %v2397, 0.0
      %v2430 = vld [vmem:[#allocation2 + $0x1] sm:$0xff]
      %v2431 = vld [vmem:[#allocation2 + $0x11] sm:$0xff]
      %v2432 = vld [vmem:[#allocation2 + $0x21] sm:$0xff]
      %v2433 = vld [vmem:[#allocation2 + $0x31] sm:$0xff]
      %v2434 = vld [vmem:[#allocation2 + $0x41] sm:$0xff]
      %v2435 = vld [vmem:[#allocation2 + $0x51] sm:$0xff]
      %v2436 = vld [vmem:[#allocation2 + $0x61] sm:$0xff]
      %v2437 = vld [vmem:[#allocation2 + $0x71] sm:$0xff]
      %v2438 = vld [vmem:[#allocation2 + $0xa1] sm:$0xff]
      %v2439 = vld [vmem:[#allocation2 + $0xb1] sm:$0xff]
      %v2440 = vld [vmem:[#allocation2 + $0xc1] sm:$0xff]
      %v2441 = vld [vmem:[#allocation2 + $0xd1] sm:$0xff]
      %v2442 = vld [vmem:[#allocation2 + $0xe1] sm:$0xff]
      %v2443 = vld [vmem:[#allocation2 + $0xf1] sm:$0xff]
      %v2444 = vld [vmem:[#allocation2 + $0x101] sm:$0xff]
      %v2445 = vld [vmem:[#allocation2 + $0x111] sm:$0xff]
      %v2446 = vld [vmem:[#allocation2 + $0x141] sm:$0xff]
      %v2447 = vld [vmem:[#allocation2 + $0x151] sm:$0xff]
      %v2448 = vld [vmem:[#allocation2 + $0x161] sm:$0xff]
      %v2449 = vld [vmem:[#allocation2 + $0x171] sm:$0xff]
      %v2450 = vld [vmem:[#allocation2 + $0x181] sm:$0xff]
      %v2451 = vld [vmem:[#allocation2 + $0x191] sm:$0xff]
      %v2452 = vld [vmem:[#allocation2 + $0x1a1] sm:$0xff]
      %v2453 = vld [vmem:[#allocation2 + $0x1b1] sm:$0xff]
      %v2454 = vld [vmem:[#allocation2 + $0x1e1] sm:$0xff]
      %v2455 = vld [vmem:[#allocation2 + $0x1f1] sm:$0xff]
      %v2456 = vld [vmem:[#allocation2 + $0x201] sm:$0xff]
      %v2457 = vld [vmem:[#allocation2 + $0x211] sm:$0xff]
      %v2458 = vld [vmem:[#allocation2 + $0x221] sm:$0xff]
      %v2459 = vld [vmem:[#allocation2 + $0x231] sm:$0xff]
      %v2460 = vld [vmem:[#allocation2 + $0x241] sm:$0xff]
      %v2461 = vld [vmem:[#allocation2 + $0x251] sm:$0xff]
      %v2462 = vperm.slane %v2331, 1
      %v2463 = vmul.f32 %v2430, %v2462
      %v2464 = vmul.f32 %v2431, %v2462
      %v2465 = vmul.f32 %v2432, %v2462
      %v2466 = vmul.f32 %v2433, %v2462
      %v2467 = vmul.f32 %v2434, %v2462
      %v2468 = vmul.f32 %v2435, %v2462
      %v2469 = vmul.f32 %v2436, %v2462
      %v2470 = vmul.f32 %v2437, %v2462
      %v2471 = vmul.f32 %v2438, %v2462
      %v2472 = vmul.f32 %v2439, %v2462
      %v2473 = vmul.f32 %v2440, %v2462
      %v2474 = vmul.f32 %v2441, %v2462
      %v2475 = vmul.f32 %v2442, %v2462
      %v2476 = vmul.f32 %v2443, %v2462
      %v2477 = vmul.f32 %v2444, %v2462
      %v2478 = vmul.f32 %v2445, %v2462
      %v2479 = vmul.f32 %v2446, %v2462
      %v2480 = vmul.f32 %v2447, %v2462
      %v2481 = vmul.f32 %v2448, %v2462
      %v2482 = vmul.f32 %v2449, %v2462
      %v2483 = vmul.f32 %v2450, %v2462
      %v2484 = vmul.f32 %v2451, %v2462
      %v2485 = vmul.f32 %v2452, %v2462
      %v2486 = vmul.f32 %v2453, %v2462
      %v2487 = vmul.f32 %v2454, %v2462
      %v2488 = vmul.f32 %v2455, %v2462
      %v2489 = vmul.f32 %v2456, %v2462
      %v2490 = vmul.f32 %v2457, %v2462
      %v2491 = vmul.f32 %v2458, %v2462
      %v2492 = vmul.f32 %v2459, %v2462
      %v2493 = vmul.f32 %v2460, %v2462
      %v2494 = vmul.f32 %v2461, %v2462
      %v2495 = vadd.f32 %v2398, %v2463
      %v2496 = vadd.f32 %v2399, %v2464
      %v2497 = vadd.f32 %v2400, %v2465
      %v2498 = vadd.f32 %v2401, %v2466
      %v2499 = vadd.f32 %v2402, %v2467
      %v2500 = vadd.f32 %v2403, %v2468
      %v2501 = vadd.f32 %v2404, %v2469
      %v2502 = vadd.f32 %v2405, %v2470
      %v2503 = vadd.f32 %v2406, %v2471
      %v2504 = vadd.f32 %v2407, %v2472
      %v2505 = vadd.f32 %v2408, %v2473
      %v2506 = vadd.f32 %v2409, %v2474
      %v2507 = vadd.f32 %v2410, %v2475
      %v2508 = vadd.f32 %v2411, %v2476
      %v2509 = vadd.f32 %v2412, %v2477
      %v2510 = vadd.f32 %v2413, %v2478
      %v2511 = vadd.f32 %v2414, %v2479
      %v2512 = vadd.f32 %v2415, %v2480
      %v2513 = vadd.f32 %v2416, %v2481
      %v2514 = vadd.f32 %v2417, %v2482
      %v2515 = vadd.f32 %v2418, %v2483
      %v2516 = vadd.f32 %v2419, %v2484
      %v2517 = vadd.f32 %v2420, %v2485
      %v2518 = vadd.f32 %v2421, %v2486
      %v2519 = vadd.f32 %v2422, %v2487
      %v2520 = vadd.f32 %v2423, %v2488
      %v2521 = vadd.f32 %v2424, %v2489
      %v2522 = vadd.f32 %v2425, %v2490
      %v2523 = vadd.f32 %v2426, %v2491
      %v2524 = vadd.f32 %v2427, %v2492
      %v2525 = vadd.f32 %v2428, %v2493
      %v2526 = vadd.f32 %v2429, %v2494
      %v2527 = vld [vmem:[#allocation2 + $0x2] sm:$0xff]
      %v2528 = vld [vmem:[#allocation2 + $0x12] sm:$0xff]
      %v2529 = vld [vmem:[#allocation2 + $0x22] sm:$0xff]
      %v2530 = vld [vmem:[#allocation2 + $0x32] sm:$0xff]
      %v2531 = vld [vmem:[#allocation2 + $0x42] sm:$0xff]
      %v2532 = vld [vmem:[#allocation2 + $0x52] sm:$0xff]
      %v2533 = vld [vmem:[#allocation2 + $0x62] sm:$0xff]
      %v2534 = vld [vmem:[#allocation2 + $0x72] sm:$0xff]
      %v2535 = vld [vmem:[#allocation2 + $0xa2] sm:$0xff]
      %v2536 = vld [vmem:[#allocation2 + $0xb2] sm:$0xff]
      %v2537 = vld [vmem:[#allocation2 + $0xc2] sm:$0xff]
      %v2538 = vld [vmem:[#allocation2 + $0xd2] sm:$0xff]
      %v2539 = vld [vmem:[#allocation2 + $0xe2] sm:$0xff]
      %v2540 = vld [vmem:[#allocation2 + $0xf2] sm:$0xff]
      %v2541 = vld [vmem:[#allocation2 + $0x102] sm:$0xff]
      %v2542 = vld [vmem:[#allocation2 + $0x112] sm:$0xff]
      %v2543 = vld [vmem:[#allocation2 + $0x142] sm:$0xff]
      %v2544 = vld [vmem:[#allocation2 + $0x152] sm:$0xff]
      %v2545 = vld [vmem:[#allocation2 + $0x162] sm:$0xff]
      %v2546 = vld [vmem:[#allocation2 + $0x172] sm:$0xff]
      %v2547 = vld [vmem:[#allocation2 + $0x182] sm:$0xff]
      %v2548 = vld [vmem:[#allocation2 + $0x192] sm:$0xff]
      %v2549 = vld [vmem:[#allocation2 + $0x1a2] sm:$0xff]
      %v2550 = vld [vmem:[#allocation2 + $0x1b2] sm:$0xff]
      %v2551 = vld [vmem:[#allocation2 + $0x1e2] sm:$0xff]
      %v2552 = vld [vmem:[#allocation2 + $0x1f2] sm:$0xff]
      %v2553 = vld [vmem:[#allocation2 + $0x202] sm:$0xff]
      %v2554 = vld [vmem:[#allocation2 + $0x212] sm:$0xff]
      %v2555 = vld [vmem:[#allocation2 + $0x222] sm:$0xff]
      %v2556 = vld [vmem:[#allocation2 + $0x232] sm:$0xff]
      %v2557 = vld [vmem:[#allocation2 + $0x242] sm:$0xff]
      %v2558 = vld [vmem:[#allocation2 + $0x252] sm:$0xff]
      %v2559 = vperm.slane %v2331, 2
      %v2560 = vmul.f32 %v2527, %v2559
      %v2561 = vmul.f32 %v2528, %v2559
      %v2562 = vmul.f32 %v2529, %v2559
      %v2563 = vmul.f32 %v2530, %v2559
      %v2564 = vmul.f32 %v2531, %v2559
      %v2565 = vmul.f32 %v2532, %v2559
      %v2566 = vmul.f32 %v2533, %v2559
      %v2567 = vmul.f32 %v2534, %v2559
      %v2568 = vmul.f32 %v2535, %v2559
      %v2569 = vmul.f32 %v2536, %v2559
      %v2570 = vmul.f32 %v2537, %v2559
      %v2571 = vmul.f32 %v2538, %v2559
      %v2572 = vmul.f32 %v2539, %v2559
      %v2573 = vmul.f32 %v2540, %v2559
      %v2574 = vmul.f32 %v2541, %v2559
      %v2575 = vmul.f32 %v2542, %v2559
      %v2576 = vmul.f32 %v2543, %v2559
      %v2577 = vmul.f32 %v2544, %v2559
      %v2578 = vmul.f32 %v2545, %v2559
      %v2579 = vmul.f32 %v2546, %v2559
      %v2580 = vmul.f32 %v2547, %v2559
      %v2581 = vmul.f32 %v2548, %v2559
      %v2582 = vmul.f32 %v2549, %v2559
      %v2583 = vmul.f32 %v2550, %v2559
      %v2584 = vmul.f32 %v2551, %v2559
      %v2585 = vmul.f32 %v2552, %v2559
      %v2586 = vmul.f32 %v2553, %v2559
      %v2587 = vmul.f32 %v2554, %v2559
      %v2588 = vmul.f32 %v2555, %v2559
      %v2589 = vmul.f32 %v2556, %v2559
      %v2590 = vmul.f32 %v2557, %v2559
      %v2591 = vmul.f32 %v2558, %v2559
      %v2592 = vadd.f32 %v2495, %v2560
      %v2593 = vadd.f32 %v2496, %v2561
      %v2594 = vadd.f32 %v2497, %v2562
      %v2595 = vadd.f32 %v2498, %v2563
      %v2596 = vadd.f32 %v2499, %v2564
      %v2597 = vadd.f32 %v2500, %v2565
      %v2598 = vadd.f32 %v2501, %v2566
      %v2599 = vadd.f32 %v2502, %v2567
      %v2600 = vadd.f32 %v2503, %v2568
      %v2601 = vadd.f32 %v2504, %v2569
      %v2602 = vadd.f32 %v2505, %v2570
      %v2603 = vadd.f32 %v2506, %v2571
      %v2604 = vadd.f32 %v2507, %v2572
      %v2605 = vadd.f32 %v2508, %v2573
      %v2606 = vadd.f32 %v2509, %v2574
      %v2607 = vadd.f32 %v2510, %v2575
      %v2608 = vadd.f32 %v2511, %v2576
      %v2609 = vadd.f32 %v2512, %v2577
      %v2610 = vadd.f32 %v2513, %v2578
      %v2611 = vadd.f32 %v2514, %v2579
      %v2612 = vadd.f32 %v2515, %v2580
      %v2613 = vadd.f32 %v2516, %v2581
      %v2614 = vadd.f32 %v2517, %v2582
      %v2615 = vadd.f32 %v2518, %v2583
      %v2616 = vadd.f32 %v2519, %v2584
      %v2617 = vadd.f32 %v2520, %v2585
      %v2618 = vadd.f32 %v2521, %v2586
      %v2619 = vadd.f32 %v2522, %v2587
      %v2620 = vadd.f32 %v2523, %v2588
      %v2621 = vadd.f32 %v2524, %v2589
      %v2622 = vadd.f32 %v2525, %v2590
      %v2623 = vadd.f32 %v2526, %v2591
      %v2624 = vld [vmem:[%s2298] sm:$0xff]
      %v2625 = vld [vmem:[%s2298 + $0x10] sm:$0xff]
      %v2626 = vld [vmem:[%s2298 + $0x20] sm:$0xff]
      %v2627 = vld [vmem:[%s2298 + $0x30] sm:$0xff]
      %v2628 = vld [vmem:[%s2298 + $0x40] sm:$0xff]
      %v2629 = vld [vmem:[%s2298 + $0x50] sm:$0xff]
      %v2630 = vld [vmem:[%s2298 + $0x60] sm:$0xff]
      %v2631 = vld [vmem:[%s2298 + $0x70] sm:$0xff]
      %v2632 = vld [vmem:[%s2298 + $0xa0] sm:$0xff]
      %v2633 = vld [vmem:[%s2298 + $0xb0] sm:$0xff]
      %v2634 = vld [vmem:[%s2298 + $0xc0] sm:$0xff]
      %v2635 = vld [vmem:[%s2298 + $0xd0] sm:$0xff]
      %v2636 = vld [vmem:[%s2298 + $0xe0] sm:$0xff]
      %v2637 = vld [vmem:[%s2298 + $0xf0] sm:$0xff]
      %v2638 = vld [vmem:[%s2298 + $0x100] sm:$0xff]
      %v2639 = vld [vmem:[%s2298 + $0x110] sm:$0xff]
      %v2640 = vld [vmem:[%s2298 + $0x140] sm:$0xff]
      %v2641 = vld [vmem:[%s2298 + $0x150] sm:$0xff]
      %v2642 = vld [vmem:[%s2298 + $0x160] sm:$0xff]
      %v2643 = vld [vmem:[%s2298 + $0x170] sm:$0xff]
      %v2644 = vld [vmem:[%s2298 + $0x180] sm:$0xff]
      %v2645 = vld [vmem:[%s2298 + $0x190] sm:$0xff]
      %v2646 = vld [vmem:[%s2298 + $0x1a0] sm:$0xff]
      %v2647 = vld [vmem:[%s2298 + $0x1b0] sm:$0xff]
      %v2648 = vld [vmem:[%s2298 + $0x1e0] sm:$0xff]
      %v2649 = vld [vmem:[%s2298 + $0x1f0] sm:$0xff]
      %v2650 = vld [vmem:[%s2298 + $0x200] sm:$0xff]
      %v2651 = vld [vmem:[%s2298 + $0x210] sm:$0xff]
      %v2652 = vld [vmem:[%s2298 + $0x220] sm:$0xff]
      %v2653 = vld [vmem:[%s2298 + $0x230] sm:$0xff]
      %v2654 = vld [vmem:[%s2298 + $0x240] sm:$0xff]
      %v2655 = vld [vmem:[%s2298 + $0x250] sm:$0xff]
      %v2656 = vperm.slane %v2331, 3
      %v2657 = vmul.f32 %v2624, %v2656
      %v2658 = vmul.f32 %v2625, %v2656
      %v2659 = vmul.f32 %v2626, %v2656
      %v2660 = vmul.f32 %v2627, %v2656
      %v2661 = vmul.f32 %v2628, %v2656
      %v2662 = vmul.f32 %v2629, %v2656
      %v2663 = vmul.f32 %v2630, %v2656
      %v2664 = vmul.f32 %v2631, %v2656
      %v2665 = vmul.f32 %v2632, %v2656
      %v2666 = vmul.f32 %v2633, %v2656
      %v2667 = vmul.f32 %v2634, %v2656
      %v2668 = vmul.f32 %v2635, %v2656
      %v2669 = vmul.f32 %v2636, %v2656
      %v2670 = vmul.f32 %v2637, %v2656
      %v2671 = vmul.f32 %v2638, %v2656
      %v2672 = vmul.f32 %v2639, %v2656
      %v2673 = vmul.f32 %v2640, %v2656
      %v2674 = vmul.f32 %v2641, %v2656
      %v2675 = vmul.f32 %v2642, %v2656
      %v2676 = vmul.f32 %v2643, %v2656
      %v2677 = vmul.f32 %v2644, %v2656
      %v2678 = vmul.f32 %v2645, %v2656
      %v2679 = vmul.f32 %v2646, %v2656
      %v2680 = vmul.f32 %v2647, %v2656
      %v2681 = vmul.f32 %v2648, %v2656
      %v2682 = vmul.f32 %v2649, %v2656
      %v2683 = vmul.f32 %v2650, %v2656
      %v2684 = vmul.f32 %v2651, %v2656
      %v2685 = vmul.f32 %v2652, %v2656
      %v2686 = vmul.f32 %v2653, %v2656
      %v2687 = vmul.f32 %v2654, %v2656
      %v2688 = vmul.f32 %v2655, %v2656
      %v2689 = vadd.f32 %v2592, %v2657
      %v2690 = vadd.f32 %v2593, %v2658
      %v2691 = vadd.f32 %v2594, %v2659
      %v2692 = vadd.f32 %v2595, %v2660
      %v2693 = vadd.f32 %v2596, %v2661
      %v2694 = vadd.f32 %v2597, %v2662
      %v2695 = vadd.f32 %v2598, %v2663
      %v2696 = vadd.f32 %v2599, %v2664
      %v2697 = vadd.f32 %v2600, %v2665
      %v2698 = vadd.f32 %v2601, %v2666
      %v2699 = vadd.f32 %v2602, %v2667
      %v2700 = vadd.f32 %v2603, %v2668
      %v2701 = vadd.f32 %v2604, %v2669
      %v2702 = vadd.f32 %v2605, %v2670
      %v2703 = vadd.f32 %v2606, %v2671
      %v2704 = vadd.f32 %v2607, %v2672
      %v2705 = vadd.f32 %v2608, %v2673
      %v2706 = vadd.f32 %v2609, %v2674
      %v2707 = vadd.f32 %v2610, %v2675
      %v2708 = vadd.f32 %v2611, %v2676
      %v2709 = vadd.f32 %v2612, %v2677
      %v2710 = vadd.f32 %v2613, %v2678
      %v2711 = vadd.f32 %v2614, %v2679
      %v2712 = vadd.f32 %v2615, %v2680
      %v2713 = vadd.f32 %v2616, %v2681
      %v2714 = vadd.f32 %v2617, %v2682
      %v2715 = vadd.f32 %v2618, %v2683
      %v2716 = vadd.f32 %v2619, %v2684
      %v2717 = vadd.f32 %v2620, %v2685
      %v2718 = vadd.f32 %v2621, %v2686
      %v2719 = vadd.f32 %v2622, %v2687
      %v2720 = vadd.f32 %v2623, %v2688
      %v2721 = vld [vmem:[%s2298 + $0x1] sm:$0xff]
      %v2722 = vld [vmem:[%s2298 + $0x11] sm:$0xff]
      %v2723 = vld [vmem:[%s2298 + $0x21] sm:$0xff]
      %v2724 = vld [vmem:[%s2298 + $0x31] sm:$0xff]
      %v2725 = vld [vmem:[%s2298 + $0x41] sm:$0xff]
      %v2726 = vld [vmem:[%s2298 + $0x51] sm:$0xff]
      %v2727 = vld [vmem:[%s2298 + $0x61] sm:$0xff]
      %v2728 = vld [vmem:[%s2298 + $0x71] sm:$0xff]
      %v2729 = vld [vmem:[%s2298 + $0xa1] sm:$0xff]
      %v2730 = vld [vmem:[%s2298 + $0xb1] sm:$0xff]
      %v2731 = vld [vmem:[%s2298 + $0xc1] sm:$0xff]
      %v2732 = vld [vmem:[%s2298 + $0xd1] sm:$0xff]
      %v2733 = vld [vmem:[%s2298 + $0xe1] sm:$0xff]
      %v2734 = vld [vmem:[%s2298 + $0xf1] sm:$0xff]
      %v2735 = vld [vmem:[%s2298 + $0x101] sm:$0xff]
      %v2736 = vld [vmem:[%s2298 + $0x111] sm:$0xff]
      %v2737 = vld [vmem:[%s2298 + $0x141] sm:$0xff]
      %v2738 = vld [vmem:[%s2298 + $0x151] sm:$0xff]
      %v2739 = vld [vmem:[%s2298 + $0x161] sm:$0xff]
      %v2740 = vld [vmem:[%s2298 + $0x171] sm:$0xff]
      %v2741 = vld [vmem:[%s2298 + $0x181] sm:$0xff]
      %v2742 = vld [vmem:[%s2298 + $0x191] sm:$0xff]
      %v2743 = vld [vmem:[%s2298 + $0x1a1] sm:$0xff]
      %v2744 = vld [vmem:[%s2298 + $0x1b1] sm:$0xff]
      %v2745 = vld [vmem:[%s2298 + $0x1e1] sm:$0xff]
      %v2746 = vld [vmem:[%s2298 + $0x1f1] sm:$0xff]
      %v2747 = vld [vmem:[%s2298 + $0x201] sm:$0xff]
      %v2748 = vld [vmem:[%s2298 + $0x211] sm:$0xff]
      %v2749 = vld [vmem:[%s2298 + $0x221] sm:$0xff]
      %v2750 = vld [vmem:[%s2298 + $0x231] sm:$0xff]
      %v2751 = vld [vmem:[%s2298 + $0x241] sm:$0xff]
      %v2752 = vld [vmem:[%s2298 + $0x251] sm:$0xff]
      %v2753 = vperm.slane %v2331, 4
      %v2754 = vmul.f32 %v2721, %v2753
      %v2755 = vmul.f32 %v2722, %v2753
      %v2756 = vmul.f32 %v2723, %v2753
      %v2757 = vmul.f32 %v2724, %v2753
      %v2758 = vmul.f32 %v2725, %v2753
      %v2759 = vmul.f32 %v2726, %v2753
      %v2760 = vmul.f32 %v2727, %v2753
      %v2761 = vmul.f32 %v2728, %v2753
      %v2762 = vmul.f32 %v2729, %v2753
      %v2763 = vmul.f32 %v2730, %v2753
      %v2764 = vmul.f32 %v2731, %v2753
      %v2765 = vmul.f32 %v2732, %v2753
      %v2766 = vmul.f32 %v2733, %v2753
      %v2767 = vmul.f32 %v2734, %v2753
      %v2768 = vmul.f32 %v2735, %v2753
      %v2769 = vmul.f32 %v2736, %v2753
      %v2770 = vmul.f32 %v2737, %v2753
      %v2771 = vmul.f32 %v2738, %v2753
      %v2772 = vmul.f32 %v2739, %v2753
      %v2773 = vmul.f32 %v2740, %v2753
      %v2774 = vmul.f32 %v2741, %v2753
      %v2775 = vmul.f32 %v2742, %v2753
      %v2776 = vmul.f32 %v2743, %v2753
      %v2777 = vmul.f32 %v2744, %v2753
      %v2778 = vmul.f32 %v2745, %v2753
      %v2779 = vmul.f32 %v2746, %v2753
      %v2780 = vmul.f32 %v2747, %v2753
      %v2781 = vmul.f32 %v2748, %v2753
      %v2782 = vmul.f32 %v2749, %v2753
      %v2783 = vmul.f32 %v2750, %v2753
      %v2784 = vmul.f32 %v2751, %v2753
      %v2785 = vmul.f32 %v2752, %v2753
      %v2786 = vadd.f32 %v2689, %v2754
      %v2787 = vadd.f32 %v2690, %v2755
      %v2788 = vadd.f32 %v2691, %v2756
      %v2789 = vadd.f32 %v2692, %v2757
      %v2790 = vadd.f32 %v2693, %v2758
      %v2791 = vadd.f32 %v2694, %v2759
      %v2792 = vadd.f32 %v2695, %v2760
      %v2793 = vadd.f32 %v2696, %v2761
      %v2794 = vadd.f32 %v2697, %v2762
      %v2795 = vadd.f32 %v2698, %v2763
      %v2796 = vadd.f32 %v2699, %v2764
      %v2797 = vadd.f32 %v2700, %v2765
      %v2798 = vadd.f32 %v2701, %v2766
      %v2799 = vadd.f32 %v2702, %v2767
      %v2800 = vadd.f32 %v2703, %v2768
      %v2801 = vadd.f32 %v2704, %v2769
      %v2802 = vadd.f32 %v2705, %v2770
      %v2803 = vadd.f32 %v2706, %v2771
      %v2804 = vadd.f32 %v2707, %v2772
      %v2805 = vadd.f32 %v2708, %v2773
      %v2806 = vadd.f32 %v2709, %v2774
      %v2807 = vadd.f32 %v2710, %v2775
      %v2808 = vadd.f32 %v2711, %v2776
      %v2809 = vadd.f32 %v2712, %v2777
      %v2810 = vadd.f32 %v2713, %v2778
      %v2811 = vadd.f32 %v2714, %v2779
      %v2812 = vadd.f32 %v2715, %v2780
      %v2813 = vadd.f32 %v2716, %v2781
      %v2814 = vadd.f32 %v2717, %v2782
      %v2815 = vadd.f32 %v2718, %v2783
      %v2816 = vadd.f32 %v2719, %v2784
      %v2817 = vadd.f32 %v2720, %v2785
      %v2818 = vld [vmem:[%s2298 + $0x2] sm:$0xff]
      %v2819 = vld [vmem:[%s2298 + $0x12] sm:$0xff]
      %v2820 = vld [vmem:[%s2298 + $0x22] sm:$0xff]
      %v2821 = vld [vmem:[%s2298 + $0x32] sm:$0xff]
      %v2822 = vld [vmem:[%s2298 + $0x42] sm:$0xff]
      %v2823 = vld [vmem:[%s2298 + $0x52] sm:$0xff]
      %v2824 = vld [vmem:[%s2298 + $0x62] sm:$0xff]
      %v2825 = vld [vmem:[%s2298 + $0x72] sm:$0xff]
      %v2826 = vld [vmem:[%s2298 + $0xa2] sm:$0xff]
      %v2827 = vld [vmem:[%s2298 + $0xb2] sm:$0xff]
      %v2828 = vld [vmem:[%s2298 + $0xc2] sm:$0xff]
      %v2829 = vld [vmem:[%s2298 + $0xd2] sm:$0xff]
      %v2830 = vld [vmem:[%s2298 + $0xe2] sm:$0xff]
      %v2831 = vld [vmem:[%s2298 + $0xf2] sm:$0xff]
      %v2832 = vld [vmem:[%s2298 + $0x102] sm:$0xff]
      %v2833 = vld [vmem:[%s2298 + $0x112] sm:$0xff]
      %v2834 = vld [vmem:[%s2298 + $0x142] sm:$0xff]
      %v2835 = vld [vmem:[%s2298 + $0x152] sm:$0xff]
      %v2836 = vld [vmem:[%s2298 + $0x162] sm:$0xff]
      %v2837 = vld [vmem:[%s2298 + $0x172] sm:$0xff]
      %v2838 = vld [vmem:[%s2298 + $0x182] sm:$0xff]
      %v2839 = vld [vmem:[%s2298 + $0x192] sm:$0xff]
      %v2840 = vld [vmem:[%s2298 + $0x1a2] sm:$0xff]
      %v2841 = vld [vmem:[%s2298 + $0x1b2] sm:$0xff]
      %v2842 = vld [vmem:[%s2298 + $0x1e2] sm:$0xff]
      %v2843 = vld [vmem:[%s2298 + $0x1f2] sm:$0xff]
      %v2844 = vld [vmem:[%s2298 + $0x202] sm:$0xff]
      %v2845 = vld [vmem:[%s2298 + $0x212] sm:$0xff]
      %v2846 = vld [vmem:[%s2298 + $0x222] sm:$0xff]
      %v2847 = vld [vmem:[%s2298 + $0x232] sm:$0xff]
      %v2848 = vld [vmem:[%s2298 + $0x242] sm:$0xff]
      %v2849 = vld [vmem:[%s2298 + $0x252] sm:$0xff]
      %v2850 = vperm.slane %v2331, 5
      %v2851 = vmul.f32 %v2818, %v2850
      %v2852 = vmul.f32 %v2819, %v2850
      %v2853 = vmul.f32 %v2820, %v2850
      %v2854 = vmul.f32 %v2821, %v2850
      %v2855 = vmul.f32 %v2822, %v2850
      %v2856 = vmul.f32 %v2823, %v2850
      %v2857 = vmul.f32 %v2824, %v2850
      %v2858 = vmul.f32 %v2825, %v2850
      %v2859 = vmul.f32 %v2826, %v2850
      %v2860 = vmul.f32 %v2827, %v2850
      %v2861 = vmul.f32 %v2828, %v2850
      %v2862 = vmul.f32 %v2829, %v2850
      %v2863 = vmul.f32 %v2830, %v2850
      %v2864 = vmul.f32 %v2831, %v2850
      %v2865 = vmul.f32 %v2832, %v2850
      %v2866 = vmul.f32 %v2833, %v2850
      %v2867 = vmul.f32 %v2834, %v2850
      %v2868 = vmul.f32 %v2835, %v2850
      %v2869 = vmul.f32 %v2836, %v2850
      %v2870 = vmul.f32 %v2837, %v2850
      %v2871 = vmul.f32 %v2838, %v2850
      %v2872 = vmul.f32 %v2839, %v2850
      %v2873 = vmul.f32 %v2840, %v2850
      %v2874 = vmul.f32 %v2841, %v2850
      %v2875 = vmul.f32 %v2842, %v2850
      %v2876 = vmul.f32 %v2843, %v2850
      %v2877 = vmul.f32 %v2844, %v2850
      %v2878 = vmul.f32 %v2845, %v2850
      %v2879 = vmul.f32 %v2846, %v2850
      %v2880 = vmul.f32 %v2847, %v2850
      %v2881 = vmul.f32 %v2848, %v2850
      %v2882 = vmul.f32 %v2849, %v2850
      %v2883 = vadd.f32 %v2786, %v2851
      %v2884 = vadd.f32 %v2787, %v2852
      %v2885 = vadd.f32 %v2788, %v2853
      %v2886 = vadd.f32 %v2789, %v2854
      %v2887 = vadd.f32 %v2790, %v2855
      %v2888 = vadd.f32 %v2791, %v2856
      %v2889 = vadd.f32 %v2792, %v2857
      %v2890 = vadd.f32 %v2793, %v2858
      %v2891 = vadd.f32 %v2794, %v2859
      %v2892 = vadd.f32 %v2795, %v2860
      %v2893 = vadd.f32 %v2796, %v2861
      %v2894 = vadd.f32 %v2797, %v2862
      %v2895 = vadd.f32 %v2798, %v2863
      %v2896 = vadd.f32 %v2799, %v2864
      %v2897 = vadd.f32 %v2800, %v2865
      %v2898 = vadd.f32 %v2801, %v2866
      %v2899 = vadd.f32 %v2802, %v2867
      %v2900 = vadd.f32 %v2803, %v2868
      %v2901 = vadd.f32 %v2804, %v2869
      %v2902 = vadd.f32 %v2805, %v2870
      %v2903 = vadd.f32 %v2806, %v2871
      %v2904 = vadd.f32 %v2807, %v2872
      %v2905 = vadd.f32 %v2808, %v2873
      %v2906 = vadd.f32 %v2809, %v2874
      %v2907 = vadd.f32 %v2810, %v2875
      %v2908 = vadd.f32 %v2811, %v2876
      %v2909 = vadd.f32 %v2812, %v2877
      %v2910 = vadd.f32 %v2813, %v2878
      %v2911 = vadd.f32 %v2814, %v2879
      %v2912 = vadd.f32 %v2815, %v2880
      %v2913 = vadd.f32 %v2816, %v2881
      %v2914 = vadd.f32 %v2817, %v2882
      %s2915 = scalar_lea.vmem [#allocation2], 32
      %v2916 = vld [vmem:[%s2915] sm:$0xff]
      %v2917 = vld [vmem:[%s2915 + $0x10] sm:$0xff]
      %v2918 = vld [vmem:[%s2915 + $0x20] sm:$0xff]
      %v2919 = vld [vmem:[%s2915 + $0x30] sm:$0xff]
      %v2920 = vld [vmem:[%s2915 + $0x40] sm:$0xff]
      %v2921 = vld [vmem:[%s2915 + $0x50] sm:$0xff]
      %v2922 = vld [vmem:[%s2915 + $0x60] sm:$0xff]
      %v2923 = vld [vmem:[%s2915 + $0x70] sm:$0xff]
      %v2924 = vld [vmem:[%s2915 + $0xa0] sm:$0xff]
      %v2925 = vld [vmem:[%s2915 + $0xb0] sm:$0xff]
      %v2926 = vld [vmem:[%s2915 + $0xc0] sm:$0xff]
      %v2927 = vld [vmem:[%s2915 + $0xd0] sm:$0xff]
      %v2928 = vld [vmem:[%s2915 + $0xe0] sm:$0xff]
      %v2929 = vld [vmem:[%s2915 + $0xf0] sm:$0xff]
      %v2930 = vld [vmem:[%s2915 + $0x100] sm:$0xff]
      %v2931 = vld [vmem:[%s2915 + $0x110] sm:$0xff]
      %v2932 = vld [vmem:[%s2915 + $0x140] sm:$0xff]
      %v2933 = vld [vmem:[%s2915 + $0x150] sm:$0xff]
      %v2934 = vld [vmem:[%s2915 + $0x160] sm:$0xff]
      %v2935 = vld [vmem:[%s2915 + $0x170] sm:$0xff]
      %v2936 = vld [vmem:[%s2915 + $0x180] sm:$0xff]
      %v2937 = vld [vmem:[%s2915 + $0x190] sm:$0xff]
      %v2938 = vld [vmem:[%s2915 + $0x1a0] sm:$0xff]
      %v2939 = vld [vmem:[%s2915 + $0x1b0] sm:$0xff]
      %v2940 = vld [vmem:[%s2915 + $0x1e0] sm:$0xff]
      %v2941 = vld [vmem:[%s2915 + $0x1f0] sm:$0xff]
      %v2942 = vld [vmem:[%s2915 + $0x200] sm:$0xff]
      %v2943 = vld [vmem:[%s2915 + $0x210] sm:$0xff]
      %v2944 = vld [vmem:[%s2915 + $0x220] sm:$0xff]
      %v2945 = vld [vmem:[%s2915 + $0x230] sm:$0xff]
      %v2946 = vld [vmem:[%s2915 + $0x240] sm:$0xff]
      %v2947 = vld [vmem:[%s2915 + $0x250] sm:$0xff]
      %v2948 = vperm.slane %v2331, 6
      %v2949 = vmul.f32 %v2916, %v2948
      %v2950 = vmul.f32 %v2917, %v2948
      %v2951 = vmul.f32 %v2918, %v2948
      %v2952 = vmul.f32 %v2919, %v2948
      %v2953 = vmul.f32 %v2920, %v2948
      %v2954 = vmul.f32 %v2921, %v2948
      %v2955 = vmul.f32 %v2922, %v2948
      %v2956 = vmul.f32 %v2923, %v2948
      %v2957 = vmul.f32 %v2924, %v2948
      %v2958 = vmul.f32 %v2925, %v2948
      %v2959 = vmul.f32 %v2926, %v2948
      %v2960 = vmul.f32 %v2927, %v2948
      %v2961 = vmul.f32 %v2928, %v2948
      %v2962 = vmul.f32 %v2929, %v2948
      %v2963 = vmul.f32 %v2930, %v2948
      %v2964 = vmul.f32 %v2931, %v2948
      %v2965 = vmul.f32 %v2932, %v2948
      %v2966 = vmul.f32 %v2933, %v2948
      %v2967 = vmul.f32 %v2934, %v2948
      %v2968 = vmul.f32 %v2935, %v2948
      %v2969 = vmul.f32 %v2936, %v2948
      %v2970 = vmul.f32 %v2937, %v2948
      %v2971 = vmul.f32 %v2938, %v2948
      %v2972 = vmul.f32 %v2939, %v2948
      %v2973 = vmul.f32 %v2940, %v2948
      %v2974 = vmul.f32 %v2941, %v2948
      %v2975 = vmul.f32 %v2942, %v2948
      %v2976 = vmul.f32 %v2943, %v2948
      %v2977 = vmul.f32 %v2944, %v2948
      %v2978 = vmul.f32 %v2945, %v2948
      %v2979 = vmul.f32 %v2946, %v2948
      %v2980 = vmul.f32 %v2947, %v2948
      %v2981 = vadd.f32 %v2883, %v2949
      %v2982 = vadd.f32 %v2884, %v2950
      %v2983 = vadd.f32 %v2885, %v2951
      %v2984 = vadd.f32 %v2886, %v2952
      %v2985 = vadd.f32 %v2887, %v2953
      %v2986 = vadd.f32 %v2888, %v2954
      %v2987 = vadd.f32 %v2889, %v2955
      %v2988 = vadd.f32 %v2890, %v2956
      %v2989 = vadd.f32 %v2891, %v2957
      %v2990 = vadd.f32 %v2892, %v2958
      %v2991 = vadd.f32 %v2893, %v2959
      %v2992 = vadd.f32 %v2894, %v2960
      %v2993 = vadd.f32 %v2895, %v2961
      %v2994 = vadd.f32 %v2896, %v2962
      %v2995 = vadd.f32 %v2897, %v2963
      %v2996 = vadd.f32 %v2898, %v2964
      %v2997 = vadd.f32 %v2899, %v2965
      %v2998 = vadd.f32 %v2900, %v2966
      %v2999 = vadd.f32 %v2901, %v2967
      %v3000 = vadd.f32 %v2902, %v2968
      %v3001 = vadd.f32 %v2903, %v2969
      %v3002 = vadd.f32 %v2904, %v2970
      %v3003 = vadd.f32 %v2905, %v2971
      %v3004 = vadd.f32 %v2906, %v2972
      %v3005 = vadd.f32 %v2907, %v2973
      %v3006 = vadd.f32 %v2908, %v2974
      %v3007 = vadd.f32 %v2909, %v2975
      %v3008 = vadd.f32 %v2910, %v2976
      %v3009 = vadd.f32 %v2911, %v2977
      %v3010 = vadd.f32 %v2912, %v2978
      %v3011 = vadd.f32 %v2913, %v2979
      %v3012 = vadd.f32 %v2914, %v2980
      %v3013 = vld [vmem:[%s2915 + $0x1] sm:$0xff]
      %v3014 = vld [vmem:[%s2915 + $0x11] sm:$0xff]
      %v3015 = vld [vmem:[%s2915 + $0x21] sm:$0xff]
      %v3016 = vld [vmem:[%s2915 + $0x31] sm:$0xff]
      %v3017 = vld [vmem:[%s2915 + $0x41] sm:$0xff]
      %v3018 = vld [vmem:[%s2915 + $0x51] sm:$0xff]
      %v3019 = vld [vmem:[%s2915 + $0x61] sm:$0xff]
      %v3020 = vld [vmem:[%s2915 + $0x71] sm:$0xff]
      %v3021 = vld [vmem:[%s2915 + $0xa1] sm:$0xff]
      %v3022 = vld [vmem:[%s2915 + $0xb1] sm:$0xff]
      %v3023 = vld [vmem:[%s2915 + $0xc1] sm:$0xff]
      %v3024 = vld [vmem:[%s2915 + $0xd1] sm:$0xff]
      %v3025 = vld [vmem:[%s2915 + $0xe1] sm:$0xff]
      %v3026 = vld [vmem:[%s2915 + $0xf1] sm:$0xff]
      %v3027 = vld [vmem:[%s2915 + $0x101] sm:$0xff]
      %v3028 = vld [vmem:[%s2915 + $0x111] sm:$0xff]
      %v3029 = vld [vmem:[%s2915 + $0x141] sm:$0xff]
      %v3030 = vld [vmem:[%s2915 + $0x151] sm:$0xff]
      %v3031 = vld [vmem:[%s2915 + $0x161] sm:$0xff]
      %v3032 = vld [vmem:[%s2915 + $0x171] sm:$0xff]
      %v3033 = vld [vmem:[%s2915 + $0x181] sm:$0xff]
      %v3034 = vld [vmem:[%s2915 + $0x191] sm:$0xff]
      %v3035 = vld [vmem:[%s2915 + $0x1a1] sm:$0xff]
      %v3036 = vld [vmem:[%s2915 + $0x1b1] sm:$0xff]
      %v3037 = vld [vmem:[%s2915 + $0x1e1] sm:$0xff]
      %v3038 = vld [vmem:[%s2915 + $0x1f1] sm:$0xff]
      %v3039 = vld [vmem:[%s2915 + $0x201] sm:$0xff]
      %v3040 = vld [vmem:[%s2915 + $0x211] sm:$0xff]
      %v3041 = vld [vmem:[%s2915 + $0x221] sm:$0xff]
      %v3042 = vld [vmem:[%s2915 + $0x231] sm:$0xff]
      %v3043 = vld [vmem:[%s2915 + $0x241] sm:$0xff]
      %v3044 = vld [vmem:[%s2915 + $0x251] sm:$0xff]
      %v3045 = vperm.slane %v2331, 7
      %v3046 = vmul.f32 %v3013, %v3045
      %v3047 = vmul.f32 %v3014, %v3045
      %v3048 = vmul.f32 %v3015, %v3045
      %v3049 = vmul.f32 %v3016, %v3045
      %v3050 = vmul.f32 %v3017, %v3045
      %v3051 = vmul.f32 %v3018, %v3045
      %v3052 = vmul.f32 %v3019, %v3045
      %v3053 = vmul.f32 %v3020, %v3045
      %v3054 = vmul.f32 %v3021, %v3045
      %v3055 = vmul.f32 %v3022, %v3045
      %v3056 = vmul.f32 %v3023, %v3045
      %v3057 = vmul.f32 %v3024, %v3045
      %v3058 = vmul.f32 %v3025, %v3045
      %v3059 = vmul.f32 %v3026, %v3045
      %v3060 = vmul.f32 %v3027, %v3045
      %v3061 = vmul.f32 %v3028, %v3045
      %v3062 = vmul.f32 %v3029, %v3045
      %v3063 = vmul.f32 %v3030, %v3045
      %v3064 = vmul.f32 %v3031, %v3045
      %v3065 = vmul.f32 %v3032, %v3045
      %v3066 = vmul.f32 %v3033, %v3045
      %v3067 = vmul.f32 %v3034, %v3045
      %v3068 = vmul.f32 %v3035, %v3045
      %v3069 = vmul.f32 %v3036, %v3045
      %v3070 = vmul.f32 %v3037, %v3045
      %v3071 = vmul.f32 %v3038, %v3045
      %v3072 = vmul.f32 %v3039, %v3045
      %v3073 = vmul.f32 %v3040, %v3045
      %v3074 = vmul.f32 %v3041, %v3045
      %v3075 = vmul.f32 %v3042, %v3045
      %v3076 = vmul.f32 %v3043, %v3045
      %v3077 = vmul.f32 %v3044, %v3045
      %v3078 = vadd.f32 %v2981, %v3046
      %v3079 = vadd.f32 %v2982, %v3047
      %v3080 = vadd.f32 %v2983, %v3048
      %v3081 = vadd.f32 %v2984, %v3049
      %v3082 = vadd.f32 %v2985, %v3050
      %v3083 = vadd.f32 %v2986, %v3051
      %v3084 = vadd.f32 %v2987, %v3052
      %v3085 = vadd.f32 %v2988, %v3053
      %v3086 = vadd.f32 %v2989, %v3054
      %v3087 = vadd.f32 %v2990, %v3055
      %v3088 = vadd.f32 %v2991, %v3056
      %v3089 = vadd.f32 %v2992, %v3057
      %v3090 = vadd.f32 %v2993, %v3058
      %v3091 = vadd.f32 %v2994, %v3059
      %v3092 = vadd.f32 %v2995, %v3060
      %v3093 = vadd.f32 %v2996, %v3061
      %v3094 = vadd.f32 %v2997, %v3062
      %v3095 = vadd.f32 %v2998, %v3063
      %v3096 = vadd.f32 %v2999, %v3064
      %v3097 = vadd.f32 %v3000, %v3065
      %v3098 = vadd.f32 %v3001, %v3066
      %v3099 = vadd.f32 %v3002, %v3067
      %v3100 = vadd.f32 %v3003, %v3068
      %v3101 = vadd.f32 %v3004, %v3069
      %v3102 = vadd.f32 %v3005, %v3070
      %v3103 = vadd.f32 %v3006, %v3071
      %v3104 = vadd.f32 %v3007, %v3072
      %v3105 = vadd.f32 %v3008, %v3073
      %v3106 = vadd.f32 %v3009, %v3074
      %v3107 = vadd.f32 %v3010, %v3075
      %v3108 = vadd.f32 %v3011, %v3076
      %v3109 = vadd.f32 %v3012, %v3077
      %v3110 = vld [vmem:[%s2915 + $0x2] sm:$0xff]
      %v3111 = vld [vmem:[%s2915 + $0x12] sm:$0xff]
      %v3112 = vld [vmem:[%s2915 + $0x22] sm:$0xff]
      %v3113 = vld [vmem:[%s2915 + $0x32] sm:$0xff]
      %v3114 = vld [vmem:[%s2915 + $0x42] sm:$0xff]
      %v3115 = vld [vmem:[%s2915 + $0x52] sm:$0xff]
      %v3116 = vld [vmem:[%s2915 + $0x62] sm:$0xff]
      %v3117 = vld [vmem:[%s2915 + $0x72] sm:$0xff]
      %v3118 = vld [vmem:[%s2915 + $0xa2] sm:$0xff]
      %v3119 = vld [vmem:[%s2915 + $0xb2] sm:$0xff]
      %v3120 = vld [vmem:[%s2915 + $0xc2] sm:$0xff]
      %v3121 = vld [vmem:[%s2915 + $0xd2] sm:$0xff]
      %v3122 = vld [vmem:[%s2915 + $0xe2] sm:$0xff]
      %v3123 = vld [vmem:[%s2915 + $0xf2] sm:$0xff]
      %v3124 = vld [vmem:[%s2915 + $0x102] sm:$0xff]
      %v3125 = vld [vmem:[%s2915 + $0x112] sm:$0xff]
      %v3126 = vld [vmem:[%s2915 + $0x142] sm:$0xff]
      %v3127 = vld [vmem:[%s2915 + $0x152] sm:$0xff]
      %v3128 = vld [vmem:[%s2915 + $0x162] sm:$0xff]
      %v3129 = vld [vmem:[%s2915 + $0x172] sm:$0xff]
      %v3130 = vld [vmem:[%s2915 + $0x182] sm:$0xff]
      %v3131 = vld [vmem:[%s2915 + $0x192] sm:$0xff]
      %v3132 = vld [vmem:[%s2915 + $0x1a2] sm:$0xff]
      %v3133 = vld [vmem:[%s2915 + $0x1b2] sm:$0xff]
      %v3134 = vld [vmem:[%s2915 + $0x1e2] sm:$0xff]
      %v3135 = vld [vmem:[%s2915 + $0x1f2] sm:$0xff]
      %v3136 = vld [vmem:[%s2915 + $0x202] sm:$0xff]
      %v3137 = vld [vmem:[%s2915 + $0x212] sm:$0xff]
      %v3138 = vld [vmem:[%s2915 + $0x222] sm:$0xff]
      %v3139 = vld [vmem:[%s2915 + $0x232] sm:$0xff]
      %v3140 = vld [vmem:[%s2915 + $0x242] sm:$0xff]
      %v3141 = vld [vmem:[%s2915 + $0x252] sm:$0xff]
      %v3142 = vperm.slane %v2332, 0
      %v3143 = vmul.f32 %v3110, %v3142
      %v3144 = vmul.f32 %v3111, %v3142
      %v3145 = vmul.f32 %v3112, %v3142
      %v3146 = vmul.f32 %v3113, %v3142
      %v3147 = vmul.f32 %v3114, %v3142
      %v3148 = vmul.f32 %v3115, %v3142
      %v3149 = vmul.f32 %v3116, %v3142
      %v3150 = vmul.f32 %v3117, %v3142
      %v3151 = vmul.f32 %v3118, %v3142
      %v3152 = vmul.f32 %v3119, %v3142
      %v3153 = vmul.f32 %v3120, %v3142
      %v3154 = vmul.f32 %v3121, %v3142
      %v3155 = vmul.f32 %v3122, %v3142
      %v3156 = vmul.f32 %v3123, %v3142
      %v3157 = vmul.f32 %v3124, %v3142
      %v3158 = vmul.f32 %v3125, %v3142
      %v3159 = vmul.f32 %v3126, %v3142
      %v3160 = vmul.f32 %v3127, %v3142
      %v3161 = vmul.f32 %v3128, %v3142
      %v3162 = vmul.f32 %v3129, %v3142
      %v3163 = vmul.f32 %v3130, %v3142
      %v3164 = vmul.f32 %v3131, %v3142
      %v3165 = vmul.f32 %v3132, %v3142
      %v3166 = vmul.f32 %v3133, %v3142
      %v3167 = vmul.f32 %v3134, %v3142
      %v3168 = vmul.f32 %v3135, %v3142
      %v3169 = vmul.f32 %v3136, %v3142
      %v3170 = vmul.f32 %v3137, %v3142
      %v3171 = vmul.f32 %v3138, %v3142
      %v3172 = vmul.f32 %v3139, %v3142
      %v3173 = vmul.f32 %v3140, %v3142
      %v3174 = vmul.f32 %v3141, %v3142
      %v3175 = vadd.f32 %v3078, %v3143
      %v3176 = vadd.f32 %v3079, %v3144
      %v3177 = vadd.f32 %v3080, %v3145
      %v3178 = vadd.f32 %v3081, %v3146
      %v3179 = vadd.f32 %v3082, %v3147
      %v3180 = vadd.f32 %v3083, %v3148
      %v3181 = vadd.f32 %v3084, %v3149
      %v3182 = vadd.f32 %v3085, %v3150
      %v3183 = vadd.f32 %v3086, %v3151
      %v3184 = vadd.f32 %v3087, %v3152
      %v3185 = vadd.f32 %v3088, %v3153
      %v3186 = vadd.f32 %v3089, %v3154
      %v3187 = vadd.f32 %v3090, %v3155
      %v3188 = vadd.f32 %v3091, %v3156
      %v3189 = vadd.f32 %v3092, %v3157
      %v3190 = vadd.f32 %v3093, %v3158
      %v3191 = vadd.f32 %v3094, %v3159
      %v3192 = vadd.f32 %v3095, %v3160
      %v3193 = vadd.f32 %v3096, %v3161
      %v3194 = vadd.f32 %v3097, %v3162
      %v3195 = vadd.f32 %v3098, %v3163
      %v3196 = vadd.f32 %v3099, %v3164
      %v3197 = vadd.f32 %v3100, %v3165
      %v3198 = vadd.f32 %v3101, %v3166
      %v3199 = vadd.f32 %v3102, %v3167
      %v3200 = vadd.f32 %v3103, %v3168
      %v3201 = vadd.f32 %v3104, %v3169
      %v3202 = vadd.f32 %v3105, %v3170
      %v3203 = vadd.f32 %v3106, %v3171
      %v3204 = vadd.f32 %v3107, %v3172
      %v3205 = vadd.f32 %v3108, %v3173
      %v3206 = vadd.f32 %v3109, %v3174
      %v3207 = vld [vmem:[%s6] sm:$0x1]
      %v3209 = vperm.slane %v3207, 0
      %v3211 = vadd.f32 %v3175, %v3209
      %v3212 = vadd.f32 %v3176, %v3209
      %v3213 = vadd.f32 %v3177, %v3209
      %v3214 = vadd.f32 %v3178, %v3209
      %v3215 = vadd.f32 %v3179, %v3209
      %v3216 = vadd.f32 %v3180, %v3209
      %v3217 = vadd.f32 %v3181, %v3209
      %v3218 = vadd.f32 %v3182, %v3209
      %v3219 = vadd.f32 %v3183, %v3209
      %v3220 = vadd.f32 %v3184, %v3209
      %v3221 = vadd.f32 %v3185, %v3209
      %v3222 = vadd.f32 %v3186, %v3209
      %v3223 = vadd.f32 %v3187, %v3209
      %v3224 = vadd.f32 %v3188, %v3209
      %v3225 = vadd.f32 %v3189, %v3209
      %v3226 = vadd.f32 %v3190, %v3209
      %v3227 = vadd.f32 %v3191, %v3209
      %v3228 = vadd.f32 %v3192, %v3209
      %v3229 = vadd.f32 %v3193, %v3209
      %v3230 = vadd.f32 %v3194, %v3209
      %v3231 = vadd.f32 %v3195, %v3209
      %v3232 = vadd.f32 %v3196, %v3209
      %v3233 = vadd.f32 %v3197, %v3209
      %v3234 = vadd.f32 %v3198, %v3209
      %v3235 = vadd.f32 %v3199, %v3209
      %v3236 = vadd.f32 %v3200, %v3209
      %v3237 = vadd.f32 %v3201, %v3209
      %v3238 = vadd.f32 %v3202, %v3209
      %v3239 = vadd.f32 %v3203, %v3209
      %v3240 = vadd.f32 %v3204, %v3209
      %v3241 = vadd.f32 %v3205, %v3209
      %v3242 = vadd.f32 %v3206, %v3209
      %v3243 = vxor.u32 %v3211, 2147483648
      %v3244 = vxor.u32 %v3212, 2147483648
      %v3245 = vxor.u32 %v3213, 2147483648
      %v3246 = vxor.u32 %v3214, 2147483648
      %v3247 = vxor.u32 %v3215, 2147483648
      %v3248 = vxor.u32 %v3216, 2147483648
      %v3249 = vxor.u32 %v3217, 2147483648
      %v3250 = vxor.u32 %v3218, 2147483648
      %v3251 = vxor.u32 %v3219, 2147483648
      %v3252 = vxor.u32 %v3220, 2147483648
      %v3253 = vxor.u32 %v3221, 2147483648
      %v3254 = vxor.u32 %v3222, 2147483648
      %v3255 = vxor.u32 %v3223, 2147483648
      %v3256 = vxor.u32 %v3224, 2147483648
      %v3257 = vxor.u32 %v3225, 2147483648
      %v3258 = vxor.u32 %v3226, 2147483648
      %v3259 = vxor.u32 %v3227, 2147483648
      %v3260 = vxor.u32 %v3228, 2147483648
      %v3261 = vxor.u32 %v3229, 2147483648
      %v3262 = vxor.u32 %v3230, 2147483648
      %v3263 = vxor.u32 %v3231, 2147483648
      %v3264 = vxor.u32 %v3232, 2147483648
      %v3265 = vxor.u32 %v3233, 2147483648
      %v3266 = vxor.u32 %v3234, 2147483648
      %v3267 = vxor.u32 %v3235, 2147483648
      %v3268 = vxor.u32 %v3236, 2147483648
      %v3269 = vxor.u32 %v3237, 2147483648
      %v3270 = vxor.u32 %v3238, 2147483648
      %v3271 = vxor.u32 %v3239, 2147483648
      %v3272 = vxor.u32 %v3240, 2147483648
      %v3273 = vxor.u32 %v3241, 2147483648
      %v3274 = vxor.u32 %v3242, 2147483648
      %v3275 = vmul.f32 %v3243, 1.442695
      %v3276 = vpow.pop %v3275
      %v3277 = vmul.f32 %v3244, 1.442695
      %v3278 = vpow.pop %v3277
      %v3279 = vmul.f32 %v3245, 1.442695
      %v3280 = vpow.pop %v3279
      %v3281 = vmul.f32 %v3246, 1.442695
      %v3282 = vpow.pop %v3281
      %v3283 = vmul.f32 %v3247, 1.442695
      %v3284 = vpow.pop %v3283
      %v3285 = vmul.f32 %v3248, 1.442695
      %v3286 = vpow.pop %v3285
      %v3287 = vmul.f32 %v3249, 1.442695
      %v3288 = vpow.pop %v3287
      %v3289 = vmul.f32 %v3250, 1.442695
      %v3290 = vpow.pop %v3289
      %v3291 = vmul.f32 %v3251, 1.442695
      %v3292 = vpow.pop %v3291
      %v3293 = vmul.f32 %v3252, 1.442695
      %v3294 = vpow.pop %v3293
      %v3295 = vmul.f32 %v3253, 1.442695
      %v3296 = vpow.pop %v3295
      %v3297 = vmul.f32 %v3254, 1.442695
      %v3298 = vpow.pop %v3297
      %v3299 = vmul.f32 %v3255, 1.442695
      %v3300 = vpow.pop %v3299
      %v3301 = vmul.f32 %v3256, 1.442695
      %v3302 = vpow.pop %v3301
      %v3303 = vmul.f32 %v3257, 1.442695
      %v3304 = vpow.pop %v3303
      %v3305 = vmul.f32 %v3258, 1.442695
      %v3306 = vpow.pop %v3305
      %v3307 = vmul.f32 %v3259, 1.442695
      %v3308 = vpow.pop %v3307
      %v3309 = vmul.f32 %v3260, 1.442695
      %v3310 = vpow.pop %v3309
      %v3311 = vmul.f32 %v3261, 1.442695
      %v3312 = vpow.pop %v3311
      %v3313 = vmul.f32 %v3262, 1.442695
      %v3314 = vpow.pop %v3313
      %v3315 = vmul.f32 %v3263, 1.442695
      %v3316 = vpow.pop %v3315
      %v3317 = vmul.f32 %v3264, 1.442695
      %v3318 = vpow.pop %v3317
      %v3319 = vmul.f32 %v3265, 1.442695
      %v3320 = vpow.pop %v3319
      %v3321 = vmul.f32 %v3266, 1.442695
      %v3322 = vpow.pop %v3321
      %v3323 = vmul.f32 %v3267, 1.442695
      %v3324 = vpow.pop %v3323
      %v3325 = vmul.f32 %v3268, 1.442695
      %v3326 = vpow.pop %v3325
      %v3327 = vmul.f32 %v3269, 1.442695
      %v3328 = vpow.pop %v3327
      %v3329 = vmul.f32 %v3270, 1.442695
      %v3330 = vpow.pop %v3329
      %v3331 = vmul.f32 %v3271, 1.442695
      %v3332 = vpow.pop %v3331
      %v3333 = vmul.f32 %v3272, 1.442695
      %v3334 = vpow.pop %v3333
      %v3335 = vmul.f32 %v3273, 1.442695
      %v3336 = vpow.pop %v3335
      %v3337 = vmul.f32 %v3274, 1.442695
      %v3338 = vpow.pop %v3337
      %v3339 = vadd.f32 %v3276, 1.0
      %v3340 = vadd.f32 %v3278, 1.0
      %v3341 = vadd.f32 %v3280, 1.0
      %v3342 = vadd.f32 %v3282, 1.0
      %v3343 = vadd.f32 %v3284, 1.0
      %v3344 = vadd.f32 %v3286, 1.0
      %v3345 = vadd.f32 %v3288, 1.0
      %v3346 = vadd.f32 %v3290, 1.0
      %v3347 = vadd.f32 %v3292, 1.0
      %v3348 = vadd.f32 %v3294, 1.0
      %v3349 = vadd.f32 %v3296, 1.0
      %v3350 = vadd.f32 %v3298, 1.0
      %v3351 = vadd.f32 %v3300, 1.0
      %v3352 = vadd.f32 %v3302, 1.0
      %v3353 = vadd.f32 %v3304, 1.0
      %v3354 = vadd.f32 %v3306, 1.0
      %v3355 = vadd.f32 %v3308, 1.0
      %v3356 = vadd.f32 %v3310, 1.0
      %v3357 = vadd.f32 %v3312, 1.0
      %v3358 = vadd.f32 %v3314, 1.0
      %v3359 = vadd.f32 %v3316, 1.0
      %v3360 = vadd.f32 %v3318, 1.0
      %v3361 = vadd.f32 %v3320, 1.0
      %v3362 = vadd.f32 %v3322, 1.0
      %v3363 = vadd.f32 %v3324, 1.0
      %v3364 = vadd.f32 %v3326, 1.0
      %v3365 = vadd.f32 %v3328, 1.0
      %v3366 = vadd.f32 %v3330, 1.0
      %v3367 = vadd.f32 %v3332, 1.0
      %v3368 = vadd.f32 %v3334, 1.0
      %v3369 = vadd.f32 %v3336, 1.0
      %v3370 = vadd.f32 %v3338, 1.0
      %v3371 = vrcp.pop %v3339
      %v3372 = vmul.f32 %v3339, %v3371
      %v3373 = vsub.f32 1.0, %v3372
      %v3374 = vmul.f32 %v3371, %v3373
      %v3375 = vadd.f32 %v3371, %v3374
      %vm3376 = vweird.f32 %v3339
      %vm3377 = vweird.f32 %v3371
      %vm3378 = vmor %vm3376, %vm3377
      %v3379 = vsel %vm3378, %v3371, %v3375
      %v3380 = vand.u32 2147483647, %v3339
      %vm3381 = vcmp.eq.f32.partialorder %v3380, 8.507059e+37
      %v3382 = vand.u32 %v3339, 2147483648
      %v3383 = vor.u32 1.1754944e-38, %v3382
      %v3384 = vsel %vm3381, %v3383, %v3379
      %v3385 = vmul.f32 1.0, %v3384
      %v3386 = vrcp.pop %v3340
      %v3387 = vmul.f32 %v3340, %v3386
      %v3388 = vsub.f32 1.0, %v3387
      %v3389 = vmul.f32 %v3386, %v3388
      %v3390 = vadd.f32 %v3386, %v3389
      %vm3391 = vweird.f32 %v3340
      %vm3392 = vweird.f32 %v3386
      %vm3393 = vmor %vm3391, %vm3392
      %v3394 = vsel %vm3393, %v3386, %v3390
      %v3395 = vand.u32 2147483647, %v3340
      %vm3396 = vcmp.eq.f32.partialorder %v3395, 8.507059e+37
      %v3397 = vand.u32 %v3340, 2147483648
      %v3398 = vor.u32 1.1754944e-38, %v3397
      %v3399 = vsel %vm3396, %v3398, %v3394
      %v3400 = vmul.f32 1.0, %v3399
      %v3401 = vrcp.pop %v3341
      %v3402 = vmul.f32 %v3341, %v3401
      %v3403 = vsub.f32 1.0, %v3402
      %v3404 = vmul.f32 %v3401, %v3403
      %v3405 = vadd.f32 %v3401, %v3404
      %vm3406 = vweird.f32 %v3341
      %vm3407 = vweird.f32 %v3401
      %vm3408 = vmor %vm3406, %vm3407
      %v3409 = vsel %vm3408, %v3401, %v3405
      %v3410 = vand.u32 2147483647, %v3341
      %vm3411 = vcmp.eq.f32.partialorder %v3410, 8.507059e+37
      %v3412 = vand.u32 %v3341, 2147483648
      %v3413 = vor.u32 1.1754944e-38, %v3412
      %v3414 = vsel %vm3411, %v3413, %v3409
      %v3415 = vmul.f32 1.0, %v3414
      %v3416 = vrcp.pop %v3342
      %v3417 = vmul.f32 %v3342, %v3416
      %v3418 = vsub.f32 1.0, %v3417
      %v3419 = vmul.f32 %v3416, %v3418
      %v3420 = vadd.f32 %v3416, %v3419
      %vm3421 = vweird.f32 %v3342
      %vm3422 = vweird.f32 %v3416
      %vm3423 = vmor %vm3421, %vm3422
      %v3424 = vsel %vm3423, %v3416, %v3420
      %v3425 = vand.u32 2147483647, %v3342
      %vm3426 = vcmp.eq.f32.partialorder %v3425, 8.507059e+37
      %v3427 = vand.u32 %v3342, 2147483648
      %v3428 = vor.u32 1.1754944e-38, %v3427
      %v3429 = vsel %vm3426, %v3428, %v3424
      %v3430 = vmul.f32 1.0, %v3429
      %v3431 = vrcp.pop %v3343
      %v3432 = vmul.f32 %v3343, %v3431
      %v3433 = vsub.f32 1.0, %v3432
      %v3434 = vmul.f32 %v3431, %v3433
      %v3435 = vadd.f32 %v3431, %v3434
      %vm3436 = vweird.f32 %v3343
      %vm3437 = vweird.f32 %v3431
      %vm3438 = vmor %vm3436, %vm3437
      %v3439 = vsel %vm3438, %v3431, %v3435
      %v3440 = vand.u32 2147483647, %v3343
      %vm3441 = vcmp.eq.f32.partialorder %v3440, 8.507059e+37
      %v3442 = vand.u32 %v3343, 2147483648
      %v3443 = vor.u32 1.1754944e-38, %v3442
      %v3444 = vsel %vm3441, %v3443, %v3439
      %v3445 = vmul.f32 1.0, %v3444
      %v3446 = vrcp.pop %v3344
      %v3447 = vmul.f32 %v3344, %v3446
      %v3448 = vsub.f32 1.0, %v3447
      %v3449 = vmul.f32 %v3446, %v3448
      %v3450 = vadd.f32 %v3446, %v3449
      %vm3451 = vweird.f32 %v3344
      %vm3452 = vweird.f32 %v3446
      %vm3453 = vmor %vm3451, %vm3452
      %v3454 = vsel %vm3453, %v3446, %v3450
      %v3455 = vand.u32 2147483647, %v3344
      %vm3456 = vcmp.eq.f32.partialorder %v3455, 8.507059e+37
      %v3457 = vand.u32 %v3344, 2147483648
      %v3458 = vor.u32 1.1754944e-38, %v3457
      %v3459 = vsel %vm3456, %v3458, %v3454
      %v3460 = vmul.f32 1.0, %v3459
      %v3461 = vrcp.pop %v3345
      %v3462 = vmul.f32 %v3345, %v3461
      %v3463 = vsub.f32 1.0, %v3462
      %v3464 = vmul.f32 %v3461, %v3463
      %v3465 = vadd.f32 %v3461, %v3464
      %vm3466 = vweird.f32 %v3345
      %vm3467 = vweird.f32 %v3461
      %vm3468 = vmor %vm3466, %vm3467
      %v3469 = vsel %vm3468, %v3461, %v3465
      %v3470 = vand.u32 2147483647, %v3345
      %vm3471 = vcmp.eq.f32.partialorder %v3470, 8.507059e+37
      %v3472 = vand.u32 %v3345, 2147483648
      %v3473 = vor.u32 1.1754944e-38, %v3472
      %v3474 = vsel %vm3471, %v3473, %v3469
      %v3475 = vmul.f32 1.0, %v3474
      %v3476 = vrcp.pop %v3346
      %v3477 = vmul.f32 %v3346, %v3476
      %v3478 = vsub.f32 1.0, %v3477
      %v3479 = vmul.f32 %v3476, %v3478
      %v3480 = vadd.f32 %v3476, %v3479
      %vm3481 = vweird.f32 %v3346
      %vm3482 = vweird.f32 %v3476
      %vm3483 = vmor %vm3481, %vm3482
      %v3484 = vsel %vm3483, %v3476, %v3480
      %v3485 = vand.u32 2147483647, %v3346
      %vm3486 = vcmp.eq.f32.partialorder %v3485, 8.507059e+37
      %v3487 = vand.u32 %v3346, 2147483648
      %v3488 = vor.u32 1.1754944e-38, %v3487
      %v3489 = vsel %vm3486, %v3488, %v3484
      %v3490 = vmul.f32 1.0, %v3489
      %v3491 = vrcp.pop %v3347
      %v3492 = vmul.f32 %v3347, %v3491
      %v3493 = vsub.f32 1.0, %v3492
      %v3494 = vmul.f32 %v3491, %v3493
      %v3495 = vadd.f32 %v3491, %v3494
      %vm3496 = vweird.f32 %v3347
      %vm3497 = vweird.f32 %v3491
      %vm3498 = vmor %vm3496, %vm3497
      %v3499 = vsel %vm3498, %v3491, %v3495
      %v3500 = vand.u32 2147483647, %v3347
      %vm3501 = vcmp.eq.f32.partialorder %v3500, 8.507059e+37
      %v3502 = vand.u32 %v3347, 2147483648
      %v3503 = vor.u32 1.1754944e-38, %v3502
      %v3504 = vsel %vm3501, %v3503, %v3499
      %v3505 = vmul.f32 1.0, %v3504
      %v3506 = vrcp.pop %v3348
      %v3507 = vmul.f32 %v3348, %v3506
      %v3508 = vsub.f32 1.0, %v3507
      %v3509 = vmul.f32 %v3506, %v3508
      %v3510 = vadd.f32 %v3506, %v3509
      %vm3511 = vweird.f32 %v3348
      %vm3512 = vweird.f32 %v3506
      %vm3513 = vmor %vm3511, %vm3512
      %v3514 = vsel %vm3513, %v3506, %v3510
      %v3515 = vand.u32 2147483647, %v3348
      %vm3516 = vcmp.eq.f32.partialorder %v3515, 8.507059e+37
      %v3517 = vand.u32 %v3348, 2147483648
      %v3518 = vor.u32 1.1754944e-38, %v3517
      %v3519 = vsel %vm3516, %v3518, %v3514
      %v3520 = vmul.f32 1.0, %v3519
      %v3521 = vrcp.pop %v3349
      %v3522 = vmul.f32 %v3349, %v3521
      %v3523 = vsub.f32 1.0, %v3522
      %v3524 = vmul.f32 %v3521, %v3523
      %v3525 = vadd.f32 %v3521, %v3524
      %vm3526 = vweird.f32 %v3349
      %vm3527 = vweird.f32 %v3521
      %vm3528 = vmor %vm3526, %vm3527
      %v3529 = vsel %vm3528, %v3521, %v3525
      %v3530 = vand.u32 2147483647, %v3349
      %vm3531 = vcmp.eq.f32.partialorder %v3530, 8.507059e+37
      %v3532 = vand.u32 %v3349, 2147483648
      %v3533 = vor.u32 1.1754944e-38, %v3532
      %v3534 = vsel %vm3531, %v3533, %v3529
      %v3535 = vmul.f32 1.0, %v3534
      %v3536 = vrcp.pop %v3350
      %v3537 = vmul.f32 %v3350, %v3536
      %v3538 = vsub.f32 1.0, %v3537
      %v3539 = vmul.f32 %v3536, %v3538
      %v3540 = vadd.f32 %v3536, %v3539
      %vm3541 = vweird.f32 %v3350
      %vm3542 = vweird.f32 %v3536
      %vm3543 = vmor %vm3541, %vm3542
      %v3544 = vsel %vm3543, %v3536, %v3540
      %v3545 = vand.u32 2147483647, %v3350
      %vm3546 = vcmp.eq.f32.partialorder %v3545, 8.507059e+37
      %v3547 = vand.u32 %v3350, 2147483648
      %v3548 = vor.u32 1.1754944e-38, %v3547
      %v3549 = vsel %vm3546, %v3548, %v3544
      %v3550 = vmul.f32 1.0, %v3549
      %v3551 = vrcp.pop %v3351
      %v3552 = vmul.f32 %v3351, %v3551
      %v3553 = vsub.f32 1.0, %v3552
      %v3554 = vmul.f32 %v3551, %v3553
      %v3555 = vadd.f32 %v3551, %v3554
      %vm3556 = vweird.f32 %v3351
      %vm3557 = vweird.f32 %v3551
      %vm3558 = vmor %vm3556, %vm3557
      %v3559 = vsel %vm3558, %v3551, %v3555
      %v3560 = vand.u32 2147483647, %v3351
      %vm3561 = vcmp.eq.f32.partialorder %v3560, 8.507059e+37
      %v3562 = vand.u32 %v3351, 2147483648
      %v3563 = vor.u32 1.1754944e-38, %v3562
      %v3564 = vsel %vm3561, %v3563, %v3559
      %v3565 = vmul.f32 1.0, %v3564
      %v3566 = vrcp.pop %v3352
      %v3567 = vmul.f32 %v3352, %v3566
      %v3568 = vsub.f32 1.0, %v3567
      %v3569 = vmul.f32 %v3566, %v3568
      %v3570 = vadd.f32 %v3566, %v3569
      %vm3571 = vweird.f32 %v3352
      %vm3572 = vweird.f32 %v3566
      %vm3573 = vmor %vm3571, %vm3572
      %v3574 = vsel %vm3573, %v3566, %v3570
      %v3575 = vand.u32 2147483647, %v3352
      %vm3576 = vcmp.eq.f32.partialorder %v3575, 8.507059e+37
      %v3577 = vand.u32 %v3352, 2147483648
      %v3578 = vor.u32 1.1754944e-38, %v3577
      %v3579 = vsel %vm3576, %v3578, %v3574
      %v3580 = vmul.f32 1.0, %v3579
      %v3581 = vrcp.pop %v3353
      %v3582 = vmul.f32 %v3353, %v3581
      %v3583 = vsub.f32 1.0, %v3582
      %v3584 = vmul.f32 %v3581, %v3583
      %v3585 = vadd.f32 %v3581, %v3584
      %vm3586 = vweird.f32 %v3353
      %vm3587 = vweird.f32 %v3581
      %vm3588 = vmor %vm3586, %vm3587
      %v3589 = vsel %vm3588, %v3581, %v3585
      %v3590 = vand.u32 2147483647, %v3353
      %vm3591 = vcmp.eq.f32.partialorder %v3590, 8.507059e+37
      %v3592 = vand.u32 %v3353, 2147483648
      %v3593 = vor.u32 1.1754944e-38, %v3592
      %v3594 = vsel %vm3591, %v3593, %v3589
      %v3595 = vmul.f32 1.0, %v3594
      %v3596 = vrcp.pop %v3354
      %v3597 = vmul.f32 %v3354, %v3596
      %v3598 = vsub.f32 1.0, %v3597
      %v3599 = vmul.f32 %v3596, %v3598
      %v3600 = vadd.f32 %v3596, %v3599
      %vm3601 = vweird.f32 %v3354
      %vm3602 = vweird.f32 %v3596
      %vm3603 = vmor %vm3601, %vm3602
      %v3604 = vsel %vm3603, %v3596, %v3600
      %v3605 = vand.u32 2147483647, %v3354
      %vm3606 = vcmp.eq.f32.partialorder %v3605, 8.507059e+37
      %v3607 = vand.u32 %v3354, 2147483648
      %v3608 = vor.u32 1.1754944e-38, %v3607
      %v3609 = vsel %vm3606, %v3608, %v3604
      %v3610 = vmul.f32 1.0, %v3609
      %v3611 = vrcp.pop %v3355
      %v3612 = vmul.f32 %v3355, %v3611
      %v3613 = vsub.f32 1.0, %v3612
      %v3614 = vmul.f32 %v3611, %v3613
      %v3615 = vadd.f32 %v3611, %v3614
      %vm3616 = vweird.f32 %v3355
      %vm3617 = vweird.f32 %v3611
      %vm3618 = vmor %vm3616, %vm3617
      %v3619 = vsel %vm3618, %v3611, %v3615
      %v3620 = vand.u32 2147483647, %v3355
      %vm3621 = vcmp.eq.f32.partialorder %v3620, 8.507059e+37
      %v3622 = vand.u32 %v3355, 2147483648
      %v3623 = vor.u32 1.1754944e-38, %v3622
      %v3624 = vsel %vm3621, %v3623, %v3619
      %v3625 = vmul.f32 1.0, %v3624
      %v3626 = vrcp.pop %v3356
      %v3627 = vmul.f32 %v3356, %v3626
      %v3628 = vsub.f32 1.0, %v3627
      %v3629 = vmul.f32 %v3626, %v3628
      %v3630 = vadd.f32 %v3626, %v3629
      %vm3631 = vweird.f32 %v3356
      %vm3632 = vweird.f32 %v3626
      %vm3633 = vmor %vm3631, %vm3632
      %v3634 = vsel %vm3633, %v3626, %v3630
      %v3635 = vand.u32 2147483647, %v3356
      %vm3636 = vcmp.eq.f32.partialorder %v3635, 8.507059e+37
      %v3637 = vand.u32 %v3356, 2147483648
      %v3638 = vor.u32 1.1754944e-38, %v3637
      %v3639 = vsel %vm3636, %v3638, %v3634
      %v3640 = vmul.f32 1.0, %v3639
      %v3641 = vrcp.pop %v3357
      %v3642 = vmul.f32 %v3357, %v3641
      %v3643 = vsub.f32 1.0, %v3642
      %v3644 = vmul.f32 %v3641, %v3643
      %v3645 = vadd.f32 %v3641, %v3644
      %vm3646 = vweird.f32 %v3357
      %vm3647 = vweird.f32 %v3641
      %vm3648 = vmor %vm3646, %vm3647
      %v3649 = vsel %vm3648, %v3641, %v3645
      %v3650 = vand.u32 2147483647, %v3357
      %vm3651 = vcmp.eq.f32.partialorder %v3650, 8.507059e+37
      %v3652 = vand.u32 %v3357, 2147483648
      %v3653 = vor.u32 1.1754944e-38, %v3652
      %v3654 = vsel %vm3651, %v3653, %v3649
      %v3655 = vmul.f32 1.0, %v3654
      %v3656 = vrcp.pop %v3358
      %v3657 = vmul.f32 %v3358, %v3656
      %v3658 = vsub.f32 1.0, %v3657
      %v3659 = vmul.f32 %v3656, %v3658
      %v3660 = vadd.f32 %v3656, %v3659
      %vm3661 = vweird.f32 %v3358
      %vm3662 = vweird.f32 %v3656
      %vm3663 = vmor %vm3661, %vm3662
      %v3664 = vsel %vm3663, %v3656, %v3660
      %v3665 = vand.u32 2147483647, %v3358
      %vm3666 = vcmp.eq.f32.partialorder %v3665, 8.507059e+37
      %v3667 = vand.u32 %v3358, 2147483648
      %v3668 = vor.u32 1.1754944e-38, %v3667
      %v3669 = vsel %vm3666, %v3668, %v3664
      %v3670 = vmul.f32 1.0, %v3669
      %v3671 = vrcp.pop %v3359
      %v3672 = vmul.f32 %v3359, %v3671
      %v3673 = vsub.f32 1.0, %v3672
      %v3674 = vmul.f32 %v3671, %v3673
      %v3675 = vadd.f32 %v3671, %v3674
      %vm3676 = vweird.f32 %v3359
      %vm3677 = vweird.f32 %v3671
      %vm3678 = vmor %vm3676, %vm3677
      %v3679 = vsel %vm3678, %v3671, %v3675
      %v3680 = vand.u32 2147483647, %v3359
      %vm3681 = vcmp.eq.f32.partialorder %v3680, 8.507059e+37
      %v3682 = vand.u32 %v3359, 2147483648
      %v3683 = vor.u32 1.1754944e-38, %v3682
      %v3684 = vsel %vm3681, %v3683, %v3679
      %v3685 = vmul.f32 1.0, %v3684
      %v3686 = vrcp.pop %v3360
      %v3687 = vmul.f32 %v3360, %v3686
      %v3688 = vsub.f32 1.0, %v3687
      %v3689 = vmul.f32 %v3686, %v3688
      %v3690 = vadd.f32 %v3686, %v3689
      %vm3691 = vweird.f32 %v3360
      %vm3692 = vweird.f32 %v3686
      %vm3693 = vmor %vm3691, %vm3692
      %v3694 = vsel %vm3693, %v3686, %v3690
      %v3695 = vand.u32 2147483647, %v3360
      %vm3696 = vcmp.eq.f32.partialorder %v3695, 8.507059e+37
      %v3697 = vand.u32 %v3360, 2147483648
      %v3698 = vor.u32 1.1754944e-38, %v3697
      %v3699 = vsel %vm3696, %v3698, %v3694
      %v3700 = vmul.f32 1.0, %v3699
      %v3701 = vrcp.pop %v3361
      %v3702 = vmul.f32 %v3361, %v3701
      %v3703 = vsub.f32 1.0, %v3702
      %v3704 = vmul.f32 %v3701, %v3703
      %v3705 = vadd.f32 %v3701, %v3704
      %vm3706 = vweird.f32 %v3361
      %vm3707 = vweird.f32 %v3701
      %vm3708 = vmor %vm3706, %vm3707
      %v3709 = vsel %vm3708, %v3701, %v3705
      %v3710 = vand.u32 2147483647, %v3361
      %vm3711 = vcmp.eq.f32.partialorder %v3710, 8.507059e+37
      %v3712 = vand.u32 %v3361, 2147483648
      %v3713 = vor.u32 1.1754944e-38, %v3712
      %v3714 = vsel %vm3711, %v3713, %v3709
      %v3715 = vmul.f32 1.0, %v3714
      %v3716 = vrcp.pop %v3362
      %v3717 = vmul.f32 %v3362, %v3716
      %v3718 = vsub.f32 1.0, %v3717
      %v3719 = vmul.f32 %v3716, %v3718
      %v3720 = vadd.f32 %v3716, %v3719
      %vm3721 = vweird.f32 %v3362
      %vm3722 = vweird.f32 %v3716
      %vm3723 = vmor %vm3721, %vm3722
      %v3724 = vsel %vm3723, %v3716, %v3720
      %v3725 = vand.u32 2147483647, %v3362
      %vm3726 = vcmp.eq.f32.partialorder %v3725, 8.507059e+37
      %v3727 = vand.u32 %v3362, 2147483648
      %v3728 = vor.u32 1.1754944e-38, %v3727
      %v3729 = vsel %vm3726, %v3728, %v3724
      %v3730 = vmul.f32 1.0, %v3729
      %v3731 = vrcp.pop %v3363
      %v3732 = vmul.f32 %v3363, %v3731
      %v3733 = vsub.f32 1.0, %v3732
      %v3734 = vmul.f32 %v3731, %v3733
      %v3735 = vadd.f32 %v3731, %v3734
      %vm3736 = vweird.f32 %v3363
      %vm3737 = vweird.f32 %v3731
      %vm3738 = vmor %vm3736, %vm3737
      %v3739 = vsel %vm3738, %v3731, %v3735
      %v3740 = vand.u32 2147483647, %v3363
      %vm3741 = vcmp.eq.f32.partialorder %v3740, 8.507059e+37
      %v3742 = vand.u32 %v3363, 2147483648
      %v3743 = vor.u32 1.1754944e-38, %v3742
      %v3744 = vsel %vm3741, %v3743, %v3739
      %v3745 = vmul.f32 1.0, %v3744
      %v3746 = vrcp.pop %v3364
      %v3747 = vmul.f32 %v3364, %v3746
      %v3748 = vsub.f32 1.0, %v3747
      %v3749 = vmul.f32 %v3746, %v3748
      %v3750 = vadd.f32 %v3746, %v3749
      %vm3751 = vweird.f32 %v3364
      %vm3752 = vweird.f32 %v3746
      %vm3753 = vmor %vm3751, %vm3752
      %v3754 = vsel %vm3753, %v3746, %v3750
      %v3755 = vand.u32 2147483647, %v3364
      %vm3756 = vcmp.eq.f32.partialorder %v3755, 8.507059e+37
      %v3757 = vand.u32 %v3364, 2147483648
      %v3758 = vor.u32 1.1754944e-38, %v3757
      %v3759 = vsel %vm3756, %v3758, %v3754
      %v3760 = vmul.f32 1.0, %v3759
      %v3761 = vrcp.pop %v3365
      %v3762 = vmul.f32 %v3365, %v3761
      %v3763 = vsub.f32 1.0, %v3762
      %v3764 = vmul.f32 %v3761, %v3763
      %v3765 = vadd.f32 %v3761, %v3764
      %vm3766 = vweird.f32 %v3365
      %vm3767 = vweird.f32 %v3761
      %vm3768 = vmor %vm3766, %vm3767
      %v3769 = vsel %vm3768, %v3761, %v3765
      %v3770 = vand.u32 2147483647, %v3365
      %vm3771 = vcmp.eq.f32.partialorder %v3770, 8.507059e+37
      %v3772 = vand.u32 %v3365, 2147483648
      %v3773 = vor.u32 1.1754944e-38, %v3772
      %v3774 = vsel %vm3771, %v3773, %v3769
      %v3775 = vmul.f32 1.0, %v3774
      %v3776 = vrcp.pop %v3366
      %v3777 = vmul.f32 %v3366, %v3776
      %v3778 = vsub.f32 1.0, %v3777
      %v3779 = vmul.f32 %v3776, %v3778
      %v3780 = vadd.f32 %v3776, %v3779
      %vm3781 = vweird.f32 %v3366
      %vm3782 = vweird.f32 %v3776
      %vm3783 = vmor %vm3781, %vm3782
      %v3784 = vsel %vm3783, %v3776, %v3780
      %v3785 = vand.u32 2147483647, %v3366
      %vm3786 = vcmp.eq.f32.partialorder %v3785, 8.507059e+37
      %v3787 = vand.u32 %v3366, 2147483648
      %v3788 = vor.u32 1.1754944e-38, %v3787
      %v3789 = vsel %vm3786, %v3788, %v3784
      %v3790 = vmul.f32 1.0, %v3789
      %v3791 = vrcp.pop %v3367
      %v3792 = vmul.f32 %v3367, %v3791
      %v3793 = vsub.f32 1.0, %v3792
      %v3794 = vmul.f32 %v3791, %v3793
      %v3795 = vadd.f32 %v3791, %v3794
      %vm3796 = vweird.f32 %v3367
      %vm3797 = vweird.f32 %v3791
      %vm3798 = vmor %vm3796, %vm3797
      %v3799 = vsel %vm3798, %v3791, %v3795
      %v3800 = vand.u32 2147483647, %v3367
      %vm3801 = vcmp.eq.f32.partialorder %v3800, 8.507059e+37
      %v3802 = vand.u32 %v3367, 2147483648
      %v3803 = vor.u32 1.1754944e-38, %v3802
      %v3804 = vsel %vm3801, %v3803, %v3799
      %v3805 = vmul.f32 1.0, %v3804
      %v3806 = vrcp.pop %v3368
      %v3807 = vmul.f32 %v3368, %v3806
      %v3808 = vsub.f32 1.0, %v3807
      %v3809 = vmul.f32 %v3806, %v3808
      %v3810 = vadd.f32 %v3806, %v3809
      %vm3811 = vweird.f32 %v3368
      %vm3812 = vweird.f32 %v3806
      %vm3813 = vmor %vm3811, %vm3812
      %v3814 = vsel %vm3813, %v3806, %v3810
      %v3815 = vand.u32 2147483647, %v3368
      %vm3816 = vcmp.eq.f32.partialorder %v3815, 8.507059e+37
      %v3817 = vand.u32 %v3368, 2147483648
      %v3818 = vor.u32 1.1754944e-38, %v3817
      %v3819 = vsel %vm3816, %v3818, %v3814
      %v3820 = vmul.f32 1.0, %v3819
      %v3821 = vrcp.pop %v3369
      %v3822 = vmul.f32 %v3369, %v3821
      %v3823 = vsub.f32 1.0, %v3822
      %v3824 = vmul.f32 %v3821, %v3823
      %v3825 = vadd.f32 %v3821, %v3824
      %vm3826 = vweird.f32 %v3369
      %vm3827 = vweird.f32 %v3821
      %vm3828 = vmor %vm3826, %vm3827
      %v3829 = vsel %vm3828, %v3821, %v3825
      %v3830 = vand.u32 2147483647, %v3369
      %vm3831 = vcmp.eq.f32.partialorder %v3830, 8.507059e+37
      %v3832 = vand.u32 %v3369, 2147483648
      %v3833 = vor.u32 1.1754944e-38, %v3832
      %v3834 = vsel %vm3831, %v3833, %v3829
      %v3835 = vmul.f32 1.0, %v3834
      %v3836 = vrcp.pop %v3370
      %v3837 = vmul.f32 %v3370, %v3836
      %v3838 = vsub.f32 1.0, %v3837
      %v3839 = vmul.f32 %v3836, %v3838
      %v3840 = vadd.f32 %v3836, %v3839
      %vm3841 = vweird.f32 %v3370
      %vm3842 = vweird.f32 %v3836
      %vm3843 = vmor %vm3841, %vm3842
      %v3844 = vsel %vm3843, %v3836, %v3840
      %v3845 = vand.u32 2147483647, %v3370
      %vm3846 = vcmp.eq.f32.partialorder %v3845, 8.507059e+37
      %v3847 = vand.u32 %v3370, 2147483648
      %v3848 = vor.u32 1.1754944e-38, %v3847
      %v3849 = vsel %vm3846, %v3848, %v3844
      %v3850 = vmul.f32 1.0, %v3849
      %v3851 = vmul.f32 %v3211, %v3385
      %v3852 = vmul.f32 %v3212, %v3400
      %v3853 = vmul.f32 %v3213, %v3415
      %v3854 = vmul.f32 %v3214, %v3430
      %v3855 = vmul.f32 %v3215, %v3445
      %v3856 = vmul.f32 %v3216, %v3460
      %v3857 = vmul.f32 %v3217, %v3475
      %v3858 = vmul.f32 %v3218, %v3490
      %v3859 = vmul.f32 %v3219, %v3505
      %v3860 = vmul.f32 %v3220, %v3520
      %v3861 = vmul.f32 %v3221, %v3535
      %v3862 = vmul.f32 %v3222, %v3550
      %v3863 = vmul.f32 %v3223, %v3565
      %v3864 = vmul.f32 %v3224, %v3580
      %v3865 = vmul.f32 %v3225, %v3595
      %v3866 = vmul.f32 %v3226, %v3610
      %v3867 = vmul.f32 %v3227, %v3625
      %v3868 = vmul.f32 %v3228, %v3640
      %v3869 = vmul.f32 %v3229, %v3655
      %v3870 = vmul.f32 %v3230, %v3670
      %v3871 = vmul.f32 %v3231, %v3685
      %v3872 = vmul.f32 %v3232, %v3700
      %v3873 = vmul.f32 %v3233, %v3715
      %v3874 = vmul.f32 %v3234, %v3730
      %v3875 = vmul.f32 %v3235, %v3745
      %v3876 = vmul.f32 %v3236, %v3760
      %v3877 = vmul.f32 %v3237, %v3775
      %v3878 = vmul.f32 %v3238, %v3790
      %v3879 = vmul.f32 %v3239, %v3805
      %v3880 = vmul.f32 %v3240, %v3820
      %v3881 = vmul.f32 %v3241, %v3835
      %v3882 = vmul.f32 %v3242, %v3850
      %v3883 = vsel %vm2198, %v3851, 0.0
      %v3884 = vsel %vm2198, %v3852, 0.0
      %v3885 = vadd.f32 %v3883, %v3884
      %v3886 = vsel %vm2198, %v3853, 0.0
      %v3887 = vadd.f32 %v3885, %v3886
      %v3888 = vsel %vm2198, %v3854, 0.0
      %v3889 = vadd.f32 %v3887, %v3888
      %v3890 = vsel %vm2198, %v3855, 0.0
      %v3891 = vadd.f32 %v3889, %v3890
      %v3892 = vsel %vm2198, %v3856, 0.0
      %v3893 = vadd.f32 %v3891, %v3892
      %v3894 = vsel %vm2198, %v3857, 0.0
      %v3895 = vadd.f32 %v3893, %v3894
      %v3896 = vsel %vm2198, %v3858, 0.0
      %v3897 = vadd.f32 %v3895, %v3896
      %v3898 = vrot.slane %v3897, 4
      %v3899 = vadd.f32 %v3897, %v3898
      %v3900 = vrot.slane %v3899, 2
      %v3901 = vadd.f32 %v3899, %v3900
      %v3902 = vrot.slane %v3901, 1
      %v3903 = vadd.f32 %v3901, %v3902
      %v3904 = vsel %vm2198, %v3859, 0.0
      %v3905 = vsel %vm2198, %v3860, 0.0
      %v3906 = vadd.f32 %v3904, %v3905
      %v3907 = vsel %vm2198, %v3861, 0.0
      %v3908 = vadd.f32 %v3906, %v3907
      %v3909 = vsel %vm2198, %v3862, 0.0
      %v3910 = vadd.f32 %v3908, %v3909
      %v3911 = vsel %vm2198, %v3863, 0.0
      %v3912 = vadd.f32 %v3910, %v3911
      %v3913 = vsel %vm2198, %v3864, 0.0
      %v3914 = vadd.f32 %v3912, %v3913
      %v3915 = vsel %vm2198, %v3865, 0.0
      %v3916 = vadd.f32 %v3914, %v3915
      %v3917 = vsel %vm2198, %v3866, 0.0
      %v3918 = vadd.f32 %v3916, %v3917
      %v3919 = vrot.slane %v3918, 4
      %v3920 = vadd.f32 %v3918, %v3919
      %v3921 = vrot.slane %v3920, 2
      %v3922 = vadd.f32 %v3920, %v3921
      %v3923 = vrot.slane %v3922, 1
      %v3924 = vadd.f32 %v3922, %v3923
      %v3925 = vsel %vm2198, %v3867, 0.0
      %v3926 = vsel %vm2198, %v3868, 0.0
      %v3927 = vadd.f32 %v3925, %v3926
      %v3928 = vsel %vm2198, %v3869, 0.0
      %v3929 = vadd.f32 %v3927, %v3928
      %v3930 = vsel %vm2198, %v3870, 0.0
      %v3931 = vadd.f32 %v3929, %v3930
      %v3932 = vsel %vm2198, %v3871, 0.0
      %v3933 = vadd.f32 %v3931, %v3932
      %v3934 = vsel %vm2198, %v3872, 0.0
      %v3935 = vadd.f32 %v3933, %v3934
      %v3936 = vsel %vm2198, %v3873, 0.0
      %v3937 = vadd.f32 %v3935, %v3936
      %v3938 = vsel %vm2198, %v3874, 0.0
      %v3939 = vadd.f32 %v3937, %v3938
      %v3940 = vrot.slane %v3939, 4
      %v3941 = vadd.f32 %v3939, %v3940
      %v3942 = vrot.slane %v3941, 2
      %v3943 = vadd.f32 %v3941, %v3942
      %v3944 = vrot.slane %v3943, 1
      %v3945 = vadd.f32 %v3943, %v3944
      %v3946 = vsel %vm2198, %v3875, 0.0
      %v3947 = vsel %vm2198, %v3876, 0.0
      %v3948 = vadd.f32 %v3946, %v3947
      %v3949 = vsel %vm2198, %v3877, 0.0
      %v3950 = vadd.f32 %v3948, %v3949
      %v3951 = vsel %vm2198, %v3878, 0.0
      %v3952 = vadd.f32 %v3950, %v3951
      %v3953 = vsel %vm2198, %v3879, 0.0
      %v3954 = vadd.f32 %v3952, %v3953
      %v3955 = vsel %vm2198, %v3880, 0.0
      %v3956 = vadd.f32 %v3954, %v3955
      %v3957 = vsel %vm2198, %v3881, 0.0
      %v3958 = vadd.f32 %v3956, %v3957
      %v3959 = vsel %vm2198, %v3882, 0.0
      %v3960 = vadd.f32 %v3958, %v3959
      %v3961 = vrot.slane %v3960, 4
      %v3962 = vadd.f32 %v3960, %v3961
      %v3963 = vrot.slane %v3962, 2
      %v3964 = vadd.f32 %v3962, %v3963
      %v3965 = vrot.slane %v3964, 1
      %v3966 = vadd.f32 %v3964, %v3965
      %v3967 = vmul.f32 %v3903, 0.015625
      %v3968 = vmul.f32 %v3924, 0.015625
      %v3969 = vmul.f32 %v3945, 0.015625
      %v3970 = vmul.f32 %v3966, 0.015625
      %v3971 = vld [vmem:[%s7] sm:$0xff]
      %v3972 = vmul.f32 %v3967, %v3971
      %v3973 = vmul.f32 %v3968, %v3971
      %v3974 = vmul.f32 %v3969, %v3971
      %v3975 = vmul.f32 %v3970, %v3971
      %v3976 = vsel %vm2198, %v3972, 0.0
      %3977 = vadd.xlane.f32.xlu0 %v3976
      %v3978 = vpop.xlane.xlu0 %3977
      %v3979 = vsel %vm2198, %v3973, 0.0
      %3980 = vadd.xlane.f32.xlu0 %v3979
      %v3981 = vpop.xlane.xlu0 %3980
      %v3982 = vsel %vm2198, %v3974, 0.0
      %3983 = vadd.xlane.f32.xlu0 %v3982
      %v3984 = vpop.xlane.xlu0 %3983
      %v3985 = vsel %vm2198, %v3975, 0.0
      %3986 = vadd.xlane.f32.xlu0 %v3985
      %v3987 = vpop.xlane.xlu0 %3986
      %v3988 = vld [vmem:[%s8] sm:$0x1]
      %v3990 = vperm.slane %v3988, 0
      %v3991 = vlaneseq
      %v3992 = vshrl.u32 %v3991, 7
      %3994 = vset.pattern.permute.xlu0 %v3992
      %3995 = vperm.xlu0 %3994, %v3990
      %v3996 = vpop.permute.xlu0 %3995
      %v3998 = vadd.f32 %v3978, %v3996
      %v3999 = vadd.f32 %v3981, %v3996
      %v4000 = vadd.f32 %v3984, %v3996
      %v4001 = vadd.f32 %v3987, %v3996
      %v4002 = vxor.u32 %v3998, 2147483648
      %v4003 = vxor.u32 %v3999, 2147483648
      %v4004 = vxor.u32 %v4000, 2147483648
      %v4005 = vxor.u32 %v4001, 2147483648
      %v4006 = vmul.f32 %v4002, 1.442695
      %v4007 = vpow.pop %v4006
      %v4008 = vmul.f32 %v4003, 1.442695
      %v4009 = vpow.pop %v4008
      %v4010 = vmul.f32 %v4004, 1.442695
      %v4011 = vpow.pop %v4010
      %v4012 = vmul.f32 %v4005, 1.442695
      %v4013 = vpow.pop %v4012
      %v4014 = vadd.f32 %v4007, 1.0
      %v4015 = vadd.f32 %v4009, 1.0
      %v4016 = vadd.f32 %v4011, 1.0
      %v4017 = vadd.f32 %v4013, 1.0
      %v4018 = vrcp.pop %v4014
      %v4019 = vmul.f32 %v4014, %v4018
      %v4020 = vsub.f32 1.0, %v4019
      %v4021 = vmul.f32 %v4018, %v4020
      %v4022 = vadd.f32 %v4018, %v4021
      %vm4023 = vweird.f32 %v4014
      %vm4024 = vweird.f32 %v4018
      %vm4025 = vmor %vm4023, %vm4024
      %v4026 = vsel %vm4025, %v4018, %v4022
      %v4027 = vand.u32 2147483647, %v4014
      %vm4028 = vcmp.eq.f32.partialorder %v4027, 8.507059e+37
      %v4029 = vand.u32 %v4014, 2147483648
      %v4030 = vor.u32 1.1754944e-38, %v4029
      %v4031 = vsel %vm4028, %v4030, %v4026
      %v4032 = vmul.f32 1.0, %v4031
      %v4033 = vrcp.pop %v4015
      %v4034 = vmul.f32 %v4015, %v4033
      %v4035 = vsub.f32 1.0, %v4034
      %v4036 = vmul.f32 %v4033, %v4035
      %v4037 = vadd.f32 %v4033, %v4036
      %vm4038 = vweird.f32 %v4015
      %vm4039 = vweird.f32 %v4033
      %vm4040 = vmor %vm4038, %vm4039
      %v4041 = vsel %vm4040, %v4033, %v4037
      %v4042 = vand.u32 2147483647, %v4015
      %vm4043 = vcmp.eq.f32.partialorder %v4042, 8.507059e+37
      %v4044 = vand.u32 %v4015, 2147483648
      %v4045 = vor.u32 1.1754944e-38, %v4044
      %v4046 = vsel %vm4043, %v4045, %v4041
      %v4047 = vmul.f32 1.0, %v4046
      %v4048 = vrcp.pop %v4016
      %v4049 = vmul.f32 %v4016, %v4048
      %v4050 = vsub.f32 1.0, %v4049
      %v4051 = vmul.f32 %v4048, %v4050
      %v4052 = vadd.f32 %v4048, %v4051
      %vm4053 = vweird.f32 %v4016
      %vm4054 = vweird.f32 %v4048
      %vm4055 = vmor %vm4053, %vm4054
      %v4056 = vsel %vm4055, %v4048, %v4052
      %v4057 = vand.u32 2147483647, %v4016
      %vm4058 = vcmp.eq.f32.partialorder %v4057, 8.507059e+37
      %v4059 = vand.u32 %v4016, 2147483648
      %v4060 = vor.u32 1.1754944e-38, %v4059
      %v4061 = vsel %vm4058, %v4060, %v4056
      %v4062 = vmul.f32 1.0, %v4061
      %v4063 = vrcp.pop %v4017
      %v4064 = vmul.f32 %v4017, %v4063
      %v4065 = vsub.f32 1.0, %v4064
      %v4066 = vmul.f32 %v4063, %v4065
      %v4067 = vadd.f32 %v4063, %v4066
      %vm4068 = vweird.f32 %v4017
      %vm4069 = vweird.f32 %v4063
      %vm4070 = vmor %vm4068, %vm4069
      %v4071 = vsel %vm4070, %v4063, %v4067
      %v4072 = vand.u32 2147483647, %v4017
      %vm4073 = vcmp.eq.f32.partialorder %v4072, 8.507059e+37
      %v4074 = vand.u32 %v4017, 2147483648
      %v4075 = vor.u32 1.1754944e-38, %v4074
      %v4076 = vsel %vm4073, %v4075, %v4071
      %v4077 = vmul.f32 1.0, %v4076
      %v4078 = vmul.f32 %v3998, %v4032
      %v4079 = vmul.f32 %v3999, %v4047
      %v4080 = vmul.f32 %v4000, %v4062
      %v4081 = vmul.f32 %v4001, %v4077
      %v4082 = vld [vmem:[%s9] sm:$0xff]
      %v4083 = vld [vmem:[%s9 + $0x8] sm:$0xff]
      %v4084 = vld [vmem:[%s9 + $0x10] sm:$0xff]
      %v4085 = vld [vmem:[%s9 + $0x18] sm:$0xff]
      %v4090 = vperm.slane %v4082, 0
      %v4091 = vlaneseq
      %v4092 = vshrl.u32 %v4091, 7
      %4094 = vset.pattern.permute.xlu0 %v4092
      %4095 = vperm.xlu0 %4094, %v4090
      %v4096 = vpop.permute.xlu0 %4095
      %v4097 = vperm.slane %v4082, 1
      %v4098 = vlaneseq
      %v4099 = vshrl.u32 %v4098, 7
      %4101 = vset.pattern.permute.xlu0 %v4099
      %4102 = vperm.xlu0 %4101, %v4097
      %v4103 = vpop.permute.xlu0 %4102
      %v4104 = vperm.slane %v4082, 2
      %v4105 = vlaneseq
      %v4106 = vshrl.u32 %v4105, 7
      %4108 = vset.pattern.permute.xlu0 %v4106
      %4109 = vperm.xlu0 %4108, %v4104
      %v4110 = vpop.permute.xlu0 %4109
      %v4111 = vperm.slane %v4082, 3
      %v4112 = vlaneseq
      %v4113 = vshrl.u32 %v4112, 7
      %4115 = vset.pattern.permute.xlu0 %v4113
      %4116 = vperm.xlu0 %4115, %v4111
      %v4117 = vpop.permute.xlu0 %4116
      %v4118 = vperm.slane %v4082, 4
      %v4119 = vlaneseq
      %v4120 = vshrl.u32 %v4119, 7
      %4122 = vset.pattern.permute.xlu0 %v4120
      %4123 = vperm.xlu0 %4122, %v4118
      %v4124 = vpop.permute.xlu0 %4123
      %v4125 = vperm.slane %v4082, 5
      %v4126 = vlaneseq
      %v4127 = vshrl.u32 %v4126, 7
      %4129 = vset.pattern.permute.xlu0 %v4127
      %4130 = vperm.xlu0 %4129, %v4125
      %v4131 = vpop.permute.xlu0 %4130
      %v4132 = vperm.slane %v4082, 6
      %v4133 = vlaneseq
      %v4134 = vshrl.u32 %v4133, 7
      %4136 = vset.pattern.permute.xlu0 %v4134
      %4137 = vperm.xlu0 %4136, %v4132
      %v4138 = vpop.permute.xlu0 %4137
      %v4139 = vperm.slane %v4082, 7
      %v4140 = vlaneseq
      %v4141 = vshrl.u32 %v4140, 7
      %4143 = vset.pattern.permute.xlu0 %v4141
      %4144 = vperm.xlu0 %4143, %v4139
      %v4145 = vpop.permute.xlu0 %4144
      %v4146 = vperm.slane %v4083, 0
      %v4147 = vlaneseq
      %v4148 = vshrl.u32 %v4147, 7
      %4150 = vset.pattern.permute.xlu0 %v4148
      %4151 = vperm.xlu0 %4150, %v4146
      %v4152 = vpop.permute.xlu0 %4151
      %v4153 = vperm.slane %v4083, 1
      %v4154 = vlaneseq
      %v4155 = vshrl.u32 %v4154, 7
      %4157 = vset.pattern.permute.xlu0 %v4155
      %4158 = vperm.xlu0 %4157, %v4153
      %v4159 = vpop.permute.xlu0 %4158
      %v4160 = vperm.slane %v4083, 2
      %v4161 = vlaneseq
      %v4162 = vshrl.u32 %v4161, 7
      %4164 = vset.pattern.permute.xlu0 %v4162
      %4165 = vperm.xlu0 %4164, %v4160
      %v4166 = vpop.permute.xlu0 %4165
      %v4167 = vperm.slane %v4083, 3
      %v4168 = vlaneseq
      %v4169 = vshrl.u32 %v4168, 7
      %4171 = vset.pattern.permute.xlu0 %v4169
      %4172 = vperm.xlu0 %4171, %v4167
      %v4173 = vpop.permute.xlu0 %4172
      %v4174 = vperm.slane %v4083, 4
      %v4175 = vlaneseq
      %v4176 = vshrl.u32 %v4175, 7
      %4178 = vset.pattern.permute.xlu0 %v4176
      %4179 = vperm.xlu0 %4178, %v4174
      %v4180 = vpop.permute.xlu0 %4179
      %v4181 = vperm.slane %v4083, 5
      %v4182 = vlaneseq
      %v4183 = vshrl.u32 %v4182, 7
      %4185 = vset.pattern.permute.xlu0 %v4183
      %4186 = vperm.xlu0 %4185, %v4181
      %v4187 = vpop.permute.xlu0 %4186
      %v4188 = vperm.slane %v4083, 6
      %v4189 = vlaneseq
      %v4190 = vshrl.u32 %v4189, 7
      %4192 = vset.pattern.permute.xlu0 %v4190
      %4193 = vperm.xlu0 %4192, %v4188
      %v4194 = vpop.permute.xlu0 %4193
      %v4195 = vperm.slane %v4083, 7
      %v4196 = vlaneseq
      %v4197 = vshrl.u32 %v4196, 7
      %4199 = vset.pattern.permute.xlu0 %v4197
      %4200 = vperm.xlu0 %4199, %v4195
      %v4201 = vpop.permute.xlu0 %4200
      %v4202 = vperm.slane %v4084, 0
      %v4203 = vlaneseq
      %v4204 = vshrl.u32 %v4203, 7
      %4206 = vset.pattern.permute.xlu0 %v4204
      %4207 = vperm.xlu0 %4206, %v4202
      %v4208 = vpop.permute.xlu0 %4207
      %v4209 = vperm.slane %v4084, 1
      %v4210 = vlaneseq
      %v4211 = vshrl.u32 %v4210, 7
      %4213 = vset.pattern.permute.xlu0 %v4211
      %4214 = vperm.xlu0 %4213, %v4209
      %v4215 = vpop.permute.xlu0 %4214
      %v4216 = vperm.slane %v4084, 2
      %v4217 = vlaneseq
      %v4218 = vshrl.u32 %v4217, 7
      %4220 = vset.pattern.permute.xlu0 %v4218
      %4221 = vperm.xlu0 %4220, %v4216
      %v4222 = vpop.permute.xlu0 %4221
      %v4223 = vperm.slane %v4084, 3
      %v4224 = vlaneseq
      %v4225 = vshrl.u32 %v4224, 7
      %4227 = vset.pattern.permute.xlu0 %v4225
      %4228 = vperm.xlu0 %4227, %v4223
      %v4229 = vpop.permute.xlu0 %4228
      %v4230 = vperm.slane %v4084, 4
      %v4231 = vlaneseq
      %v4232 = vshrl.u32 %v4231, 7
      %4234 = vset.pattern.permute.xlu0 %v4232
      %4235 = vperm.xlu0 %4234, %v4230
      %v4236 = vpop.permute.xlu0 %4235
      %v4237 = vperm.slane %v4084, 5
      %v4238 = vlaneseq
      %v4239 = vshrl.u32 %v4238, 7
      %4241 = vset.pattern.permute.xlu0 %v4239
      %4242 = vperm.xlu0 %4241, %v4237
      %v4243 = vpop.permute.xlu0 %4242
      %v4244 = vperm.slane %v4084, 6
      %v4245 = vlaneseq
      %v4246 = vshrl.u32 %v4245, 7
      %4248 = vset.pattern.permute.xlu0 %v4246
      %4249 = vperm.xlu0 %4248, %v4244
      %v4250 = vpop.permute.xlu0 %4249
      %v4251 = vperm.slane %v4084, 7
      %v4252 = vlaneseq
      %v4253 = vshrl.u32 %v4252, 7
      %4255 = vset.pattern.permute.xlu0 %v4253
      %4256 = vperm.xlu0 %4255, %v4251
      %v4257 = vpop.permute.xlu0 %4256
      %v4258 = vperm.slane %v4085, 0
      %v4259 = vlaneseq
      %v4260 = vshrl.u32 %v4259, 7
      %4262 = vset.pattern.permute.xlu0 %v4260
      %4263 = vperm.xlu0 %4262, %v4258
      %v4264 = vpop.permute.xlu0 %4263
      %v4265 = vperm.slane %v4085, 1
      %v4266 = vlaneseq
      %v4267 = vshrl.u32 %v4266, 7
      %4269 = vset.pattern.permute.xlu0 %v4267
      %4270 = vperm.xlu0 %4269, %v4265
      %v4271 = vpop.permute.xlu0 %4270
      %v4272 = vperm.slane %v4085, 2
      %v4273 = vlaneseq
      %v4274 = vshrl.u32 %v4273, 7
      %4276 = vset.pattern.permute.xlu0 %v4274
      %4277 = vperm.xlu0 %4276, %v4272
      %v4278 = vpop.permute.xlu0 %4277
      %v4279 = vperm.slane %v4085, 3
      %v4280 = vlaneseq
      %v4281 = vshrl.u32 %v4280, 7
      %4283 = vset.pattern.permute.xlu0 %v4281
      %4284 = vperm.xlu0 %4283, %v4279
      %v4285 = vpop.permute.xlu0 %4284
      %v4286 = vperm.slane %v4085, 4
      %v4287 = vlaneseq
      %v4288 = vshrl.u32 %v4287, 7
      %4290 = vset.pattern.permute.xlu0 %v4288
      %4291 = vperm.xlu0 %4290, %v4286
      %v4292 = vpop.permute.xlu0 %4291
      %v4293 = vperm.slane %v4085, 5
      %v4294 = vlaneseq
      %v4295 = vshrl.u32 %v4294, 7
      %4297 = vset.pattern.permute.xlu0 %v4295
      %4298 = vperm.xlu0 %4297, %v4293
      %v4299 = vpop.permute.xlu0 %4298
      %v4300 = vperm.slane %v4085, 6
      %v4301 = vlaneseq
      %v4302 = vshrl.u32 %v4301, 7
      %4304 = vset.pattern.permute.xlu0 %v4302
      %4305 = vperm.xlu0 %4304, %v4300
      %v4306 = vpop.permute.xlu0 %4305
      %v4307 = vperm.slane %v4085, 7
      %v4308 = vlaneseq
      %v4309 = vshrl.u32 %v4308, 7
      %4311 = vset.pattern.permute.xlu0 %v4309
      %4312 = vperm.xlu0 %4311, %v4307
      %v4313 = vpop.permute.xlu0 %4312
      %v4346 = vmul.f32 %v4078, %v4096
      %v4347 = vmul.f32 %v4078, %v4103
      %v4348 = vmul.f32 %v4078, %v4110
      %v4349 = vmul.f32 %v4078, %v4117
      %v4350 = vmul.f32 %v4078, %v4124
      %v4351 = vmul.f32 %v4078, %v4131
      %v4352 = vmul.f32 %v4078, %v4138
      %v4353 = vmul.f32 %v4078, %v4145
      %v4354 = vmul.f32 %v4078, %v4152
      %v4355 = vmul.f32 %v4078, %v4159
      %v4356 = vmul.f32 %v4078, %v4166
      %v4357 = vmul.f32 %v4078, %v4173
      %v4358 = vmul.f32 %v4078, %v4180
      %v4359 = vmul.f32 %v4078, %v4187
      %v4360 = vmul.f32 %v4078, %v4194
      %v4361 = vmul.f32 %v4078, %v4201
      %v4362 = vmul.f32 %v4078, %v4208
      %v4363 = vmul.f32 %v4078, %v4215
      %v4364 = vmul.f32 %v4078, %v4222
      %v4365 = vmul.f32 %v4078, %v4229
      %v4366 = vmul.f32 %v4078, %v4236
      %v4367 = vmul.f32 %v4078, %v4243
      %v4368 = vmul.f32 %v4078, %v4250
      %v4369 = vmul.f32 %v4078, %v4257
      %v4370 = vmul.f32 %v4078, %v4264
      %v4371 = vmul.f32 %v4078, %v4271
      %v4372 = vmul.f32 %v4078, %v4278
      %v4373 = vmul.f32 %v4078, %v4285
      %v4374 = vmul.f32 %v4078, %v4292
      %v4375 = vmul.f32 %v4078, %v4299
      %v4376 = vmul.f32 %v4078, %v4306
      %v4377 = vmul.f32 %v4078, %v4313
      %v4378 = vmul.f32 %v4079, %v4096
      %v4379 = vmul.f32 %v4079, %v4103
      %v4380 = vmul.f32 %v4079, %v4110
      %v4381 = vmul.f32 %v4079, %v4117
      %v4382 = vmul.f32 %v4079, %v4124
      %v4383 = vmul.f32 %v4079, %v4131
      %v4384 = vmul.f32 %v4079, %v4138
      %v4385 = vmul.f32 %v4079, %v4145
      %v4386 = vmul.f32 %v4079, %v4152
      %v4387 = vmul.f32 %v4079, %v4159
      %v4388 = vmul.f32 %v4079, %v4166
      %v4389 = vmul.f32 %v4079, %v4173
      %v4390 = vmul.f32 %v4079, %v4180
      %v4391 = vmul.f32 %v4079, %v4187
      %v4392 = vmul.f32 %v4079, %v4194
      %v4393 = vmul.f32 %v4079, %v4201
      %v4394 = vmul.f32 %v4079, %v4208
      %v4395 = vmul.f32 %v4079, %v4215
      %v4396 = vmul.f32 %v4079, %v4222
      %v4397 = vmul.f32 %v4079, %v4229
      %v4398 = vmul.f32 %v4079, %v4236
      %v4399 = vmul.f32 %v4079, %v4243
      %v4400 = vmul.f32 %v4079, %v4250
      %v4401 = vmul.f32 %v4079, %v4257
      %v4402 = vmul.f32 %v4079, %v4264
      %v4403 = vmul.f32 %v4079, %v4271
      %v4404 = vmul.f32 %v4079, %v4278
      %v4405 = vmul.f32 %v4079, %v4285
      %v4406 = vmul.f32 %v4079, %v4292
      %v4407 = vmul.f32 %v4079, %v4299
      %v4408 = vmul.f32 %v4079, %v4306
      %v4409 = vmul.f32 %v4079, %v4313
      %v4410 = vmul.f32 %v4080, %v4096
      %v4411 = vmul.f32 %v4080, %v4103
      %v4412 = vmul.f32 %v4080, %v4110
      %v4413 = vmul.f32 %v4080, %v4117
      %v4414 = vmul.f32 %v4080, %v4124
      %v4415 = vmul.f32 %v4080, %v4131
      %v4416 = vmul.f32 %v4080, %v4138
      %v4417 = vmul.f32 %v4080, %v4145
      %v4418 = vmul.f32 %v4080, %v4152
      %v4419 = vmul.f32 %v4080, %v4159
      %v4420 = vmul.f32 %v4080, %v4166
      %v4421 = vmul.f32 %v4080, %v4173
      %v4422 = vmul.f32 %v4080, %v4180
      %v4423 = vmul.f32 %v4080, %v4187
      %v4424 = vmul.f32 %v4080, %v4194
      %v4425 = vmul.f32 %v4080, %v4201
      %v4426 = vmul.f32 %v4080, %v4208
      %v4427 = vmul.f32 %v4080, %v4215
      %v4428 = vmul.f32 %v4080, %v4222
      %v4429 = vmul.f32 %v4080, %v4229
      %v4430 = vmul.f32 %v4080, %v4236
      %v4431 = vmul.f32 %v4080, %v4243
      %v4432 = vmul.f32 %v4080, %v4250
      %v4433 = vmul.f32 %v4080, %v4257
      %v4434 = vmul.f32 %v4080, %v4264
      %v4435 = vmul.f32 %v4080, %v4271
      %v4436 = vmul.f32 %v4080, %v4278
      %v4437 = vmul.f32 %v4080, %v4285
      %v4438 = vmul.f32 %v4080, %v4292
      %v4439 = vmul.f32 %v4080, %v4299
      %v4440 = vmul.f32 %v4080, %v4306
      %v4441 = vmul.f32 %v4080, %v4313
      %v4442 = vmul.f32 %v4081, %v4096
      %v4443 = vmul.f32 %v4081, %v4103
      %v4444 = vmul.f32 %v4081, %v4110
      %v4445 = vmul.f32 %v4081, %v4117
      %v4446 = vmul.f32 %v4081, %v4124
      %v4447 = vmul.f32 %v4081, %v4131
      %v4448 = vmul.f32 %v4081, %v4138
      %v4449 = vmul.f32 %v4081, %v4145
      %v4450 = vmul.f32 %v4081, %v4152
      %v4451 = vmul.f32 %v4081, %v4159
      %v4452 = vmul.f32 %v4081, %v4166
      %v4453 = vmul.f32 %v4081, %v4173
      %v4454 = vmul.f32 %v4081, %v4180
      %v4455 = vmul.f32 %v4081, %v4187
      %v4456 = vmul.f32 %v4081, %v4194
      %v4457 = vmul.f32 %v4081, %v4201
      %v4458 = vmul.f32 %v4081, %v4208
      %v4459 = vmul.f32 %v4081, %v4215
      %v4460 = vmul.f32 %v4081, %v4222
      %v4461 = vmul.f32 %v4081, %v4229
      %v4462 = vmul.f32 %v4081, %v4236
      %v4463 = vmul.f32 %v4081, %v4243
      %v4464 = vmul.f32 %v4081, %v4250
      %v4465 = vmul.f32 %v4081, %v4257
      %v4466 = vmul.f32 %v4081, %v4264
      %v4467 = vmul.f32 %v4081, %v4271
      %v4468 = vmul.f32 %v4081, %v4278
      %v4469 = vmul.f32 %v4081, %v4285
      %v4470 = vmul.f32 %v4081, %v4292
      %v4471 = vmul.f32 %v4081, %v4299
      %v4472 = vmul.f32 %v4081, %v4306
      %v4473 = vmul.f32 %v4081, %v4313
      %4602 = vset.pattern.permute.xlu0 0
      %4603 = vperm.xlu0 %4602, %v4346
      %v4604 = vpop.permute.xlu0 %4603
      %4605 = vset.pattern.permute.xlu0 0
      %4606 = vperm.xlu0 %4605, %v4347
      %v4607 = vpop.permute.xlu0 %4606
      %4608 = vset.pattern.permute.xlu0 0
      %4609 = vperm.xlu0 %4608, %v4348
      %v4610 = vpop.permute.xlu0 %4609
      %4611 = vset.pattern.permute.xlu0 0
      %4612 = vperm.xlu0 %4611, %v4349
      %v4613 = vpop.permute.xlu0 %4612
      %4614 = vset.pattern.permute.xlu0 0
      %4615 = vperm.xlu0 %4614, %v4350
      %v4616 = vpop.permute.xlu0 %4615
      %4617 = vset.pattern.permute.xlu0 0
      %4618 = vperm.xlu0 %4617, %v4351
      %v4619 = vpop.permute.xlu0 %4618
      %4620 = vset.pattern.permute.xlu0 0
      %4621 = vperm.xlu0 %4620, %v4352
      %v4622 = vpop.permute.xlu0 %4621
      %4623 = vset.pattern.permute.xlu0 0
      %4624 = vperm.xlu0 %4623, %v4353
      %v4625 = vpop.permute.xlu0 %4624
      %4626 = vset.pattern.permute.xlu0 0
      %4627 = vperm.xlu0 %4626, %v4354
      %v4628 = vpop.permute.xlu0 %4627
      %4629 = vset.pattern.permute.xlu0 0
      %4630 = vperm.xlu0 %4629, %v4355
      %v4631 = vpop.permute.xlu0 %4630
      %4632 = vset.pattern.permute.xlu0 0
      %4633 = vperm.xlu0 %4632, %v4356
      %v4634 = vpop.permute.xlu0 %4633
      %4635 = vset.pattern.permute.xlu0 0
      %4636 = vperm.xlu0 %4635, %v4357
      %v4637 = vpop.permute.xlu0 %4636
      %4638 = vset.pattern.permute.xlu0 0
      %4639 = vperm.xlu0 %4638, %v4358
      %v4640 = vpop.permute.xlu0 %4639
      %4641 = vset.pattern.permute.xlu0 0
      %4642 = vperm.xlu0 %4641, %v4359
      %v4643 = vpop.permute.xlu0 %4642
      %4644 = vset.pattern.permute.xlu0 0
      %4645 = vperm.xlu0 %4644, %v4360
      %v4646 = vpop.permute.xlu0 %4645
      %4647 = vset.pattern.permute.xlu0 0
      %4648 = vperm.xlu0 %4647, %v4361
      %v4649 = vpop.permute.xlu0 %4648
      %4650 = vset.pattern.permute.xlu0 0
      %4651 = vperm.xlu0 %4650, %v4362
      %v4652 = vpop.permute.xlu0 %4651
      %4653 = vset.pattern.permute.xlu0 0
      %4654 = vperm.xlu0 %4653, %v4363
      %v4655 = vpop.permute.xlu0 %4654
      %4656 = vset.pattern.permute.xlu0 0
      %4657 = vperm.xlu0 %4656, %v4364
      %v4658 = vpop.permute.xlu0 %4657
      %4659 = vset.pattern.permute.xlu0 0
      %4660 = vperm.xlu0 %4659, %v4365
      %v4661 = vpop.permute.xlu0 %4660
      %4662 = vset.pattern.permute.xlu0 0
      %4663 = vperm.xlu0 %4662, %v4366
      %v4664 = vpop.permute.xlu0 %4663
      %4665 = vset.pattern.permute.xlu0 0
      %4666 = vperm.xlu0 %4665, %v4367
      %v4667 = vpop.permute.xlu0 %4666
      %4668 = vset.pattern.permute.xlu0 0
      %4669 = vperm.xlu0 %4668, %v4368
      %v4670 = vpop.permute.xlu0 %4669
      %4671 = vset.pattern.permute.xlu0 0
      %4672 = vperm.xlu0 %4671, %v4369
      %v4673 = vpop.permute.xlu0 %4672
      %4674 = vset.pattern.permute.xlu0 0
      %4675 = vperm.xlu0 %4674, %v4370
      %v4676 = vpop.permute.xlu0 %4675
      %4677 = vset.pattern.permute.xlu0 0
      %4678 = vperm.xlu0 %4677, %v4371
      %v4679 = vpop.permute.xlu0 %4678
      %4680 = vset.pattern.permute.xlu0 0
      %4681 = vperm.xlu0 %4680, %v4372
      %v4682 = vpop.permute.xlu0 %4681
      %4683 = vset.pattern.permute.xlu0 0
      %4684 = vperm.xlu0 %4683, %v4373
      %v4685 = vpop.permute.xlu0 %4684
      %4686 = vset.pattern.permute.xlu0 0
      %4687 = vperm.xlu0 %4686, %v4374
      %v4688 = vpop.permute.xlu0 %4687
      %4689 = vset.pattern.permute.xlu0 0
      %4690 = vperm.xlu0 %4689, %v4375
      %v4691 = vpop.permute.xlu0 %4690
      %4692 = vset.pattern.permute.xlu0 0
      %4693 = vperm.xlu0 %4692, %v4376
      %v4694 = vpop.permute.xlu0 %4693
      %4695 = vset.pattern.permute.xlu0 0
      %4696 = vperm.xlu0 %4695, %v4377
      %v4697 = vpop.permute.xlu0 %4696
      %4698 = vset.pattern.permute.xlu0 0
      %4699 = vperm.xlu0 %4698, %v4378
      %v4700 = vpop.permute.xlu0 %4699
      %4701 = vset.pattern.permute.xlu0 0
      %4702 = vperm.xlu0 %4701, %v4379
      %v4703 = vpop.permute.xlu0 %4702
      %4704 = vset.pattern.permute.xlu0 0
      %4705 = vperm.xlu0 %4704, %v4380
      %v4706 = vpop.permute.xlu0 %4705
      %4707 = vset.pattern.permute.xlu0 0
      %4708 = vperm.xlu0 %4707, %v4381
      %v4709 = vpop.permute.xlu0 %4708
      %4710 = vset.pattern.permute.xlu0 0
      %4711 = vperm.xlu0 %4710, %v4382
      %v4712 = vpop.permute.xlu0 %4711
      %4713 = vset.pattern.permute.xlu0 0
      %4714 = vperm.xlu0 %4713, %v4383
      %v4715 = vpop.permute.xlu0 %4714
      %4716 = vset.pattern.permute.xlu0 0
      %4717 = vperm.xlu0 %4716, %v4384
      %v4718 = vpop.permute.xlu0 %4717
      %4719 = vset.pattern.permute.xlu0 0
      %4720 = vperm.xlu0 %4719, %v4385
      %v4721 = vpop.permute.xlu0 %4720
      %4722 = vset.pattern.permute.xlu0 0
      %4723 = vperm.xlu0 %4722, %v4386
      %v4724 = vpop.permute.xlu0 %4723
      %4725 = vset.pattern.permute.xlu0 0
      %4726 = vperm.xlu0 %4725, %v4387
      %v4727 = vpop.permute.xlu0 %4726
      %4728 = vset.pattern.permute.xlu0 0
      %4729 = vperm.xlu0 %4728, %v4388
      %v4730 = vpop.permute.xlu0 %4729
      %4731 = vset.pattern.permute.xlu0 0
      %4732 = vperm.xlu0 %4731, %v4389
      %v4733 = vpop.permute.xlu0 %4732
      %4734 = vset.pattern.permute.xlu0 0
      %4735 = vperm.xlu0 %4734, %v4390
      %v4736 = vpop.permute.xlu0 %4735
      %4737 = vset.pattern.permute.xlu0 0
      %4738 = vperm.xlu0 %4737, %v4391
      %v4739 = vpop.permute.xlu0 %4738
      %4740 = vset.pattern.permute.xlu0 0
      %4741 = vperm.xlu0 %4740, %v4392
      %v4742 = vpop.permute.xlu0 %4741
      %4743 = vset.pattern.permute.xlu0 0
      %4744 = vperm.xlu0 %4743, %v4393
      %v4745 = vpop.permute.xlu0 %4744
      %4746 = vset.pattern.permute.xlu0 0
      %4747 = vperm.xlu0 %4746, %v4394
      %v4748 = vpop.permute.xlu0 %4747
      %4749 = vset.pattern.permute.xlu0 0
      %4750 = vperm.xlu0 %4749, %v4395
      %v4751 = vpop.permute.xlu0 %4750
      %4752 = vset.pattern.permute.xlu0 0
      %4753 = vperm.xlu0 %4752, %v4396
      %v4754 = vpop.permute.xlu0 %4753
      %4755 = vset.pattern.permute.xlu0 0
      %4756 = vperm.xlu0 %4755, %v4397
      %v4757 = vpop.permute.xlu0 %4756
      %4758 = vset.pattern.permute.xlu0 0
      %4759 = vperm.xlu0 %4758, %v4398
      %v4760 = vpop.permute.xlu0 %4759
      %4761 = vset.pattern.permute.xlu0 0
      %4762 = vperm.xlu0 %4761, %v4399
      %v4763 = vpop.permute.xlu0 %4762
      %4764 = vset.pattern.permute.xlu0 0
      %4765 = vperm.xlu0 %4764, %v4400
      %v4766 = vpop.permute.xlu0 %4765
      %4767 = vset.pattern.permute.xlu0 0
      %4768 = vperm.xlu0 %4767, %v4401
      %v4769 = vpop.permute.xlu0 %4768
      %4770 = vset.pattern.permute.xlu0 0
      %4771 = vperm.xlu0 %4770, %v4402
      %v4772 = vpop.permute.xlu0 %4771
      %4773 = vset.pattern.permute.xlu0 0
      %4774 = vperm.xlu0 %4773, %v4403
      %v4775 = vpop.permute.xlu0 %4774
      %4776 = vset.pattern.permute.xlu0 0
      %4777 = vperm.xlu0 %4776, %v4404
      %v4778 = vpop.permute.xlu0 %4777
      %4779 = vset.pattern.permute.xlu0 0
      %4780 = vperm.xlu0 %4779, %v4405
      %v4781 = vpop.permute.xlu0 %4780
      %4782 = vset.pattern.permute.xlu0 0
      %4783 = vperm.xlu0 %4782, %v4406
      %v4784 = vpop.permute.xlu0 %4783
      %4785 = vset.pattern.permute.xlu0 0
      %4786 = vperm.xlu0 %4785, %v4407
      %v4787 = vpop.permute.xlu0 %4786
      %4788 = vset.pattern.permute.xlu0 0
      %4789 = vperm.xlu0 %4788, %v4408
      %v4790 = vpop.permute.xlu0 %4789
      %4791 = vset.pattern.permute.xlu0 0
      %4792 = vperm.xlu0 %4791, %v4409
      %v4793 = vpop.permute.xlu0 %4792
      %4794 = vset.pattern.permute.xlu0 0
      %4795 = vperm.xlu0 %4794, %v4410
      %v4796 = vpop.permute.xlu0 %4795
      %4797 = vset.pattern.permute.xlu0 0
      %4798 = vperm.xlu0 %4797, %v4411
      %v4799 = vpop.permute.xlu0 %4798
      %4800 = vset.pattern.permute.xlu0 0
      %4801 = vperm.xlu0 %4800, %v4412
      %v4802 = vpop.permute.xlu0 %4801
      %4803 = vset.pattern.permute.xlu0 0
      %4804 = vperm.xlu0 %4803, %v4413
      %v4805 = vpop.permute.xlu0 %4804
      %4806 = vset.pattern.permute.xlu0 0
      %4807 = vperm.xlu0 %4806, %v4414
      %v4808 = vpop.permute.xlu0 %4807
      %4809 = vset.pattern.permute.xlu0 0
      %4810 = vperm.xlu0 %4809, %v4415
      %v4811 = vpop.permute.xlu0 %4810
      %4812 = vset.pattern.permute.xlu0 0
      %4813 = vperm.xlu0 %4812, %v4416
      %v4814 = vpop.permute.xlu0 %4813
      %4815 = vset.pattern.permute.xlu0 0
      %4816 = vperm.xlu0 %4815, %v4417
      %v4817 = vpop.permute.xlu0 %4816
      %4818 = vset.pattern.permute.xlu0 0
      %4819 = vperm.xlu0 %4818, %v4418
      %v4820 = vpop.permute.xlu0 %4819
      %4821 = vset.pattern.permute.xlu0 0
      %4822 = vperm.xlu0 %4821, %v4419
      %v4823 = vpop.permute.xlu0 %4822
      %4824 = vset.pattern.permute.xlu0 0
      %4825 = vperm.xlu0 %4824, %v4420
      %v4826 = vpop.permute.xlu0 %4825
      %4827 = vset.pattern.permute.xlu0 0
      %4828 = vperm.xlu0 %4827, %v4421
      %v4829 = vpop.permute.xlu0 %4828
      %4830 = vset.pattern.permute.xlu0 0
      %4831 = vperm.xlu0 %4830, %v4422
      %v4832 = vpop.permute.xlu0 %4831
      %4833 = vset.pattern.permute.xlu0 0
      %4834 = vperm.xlu0 %4833, %v4423
      %v4835 = vpop.permute.xlu0 %4834
      %4836 = vset.pattern.permute.xlu0 0
      %4837 = vperm.xlu0 %4836, %v4424
      %v4838 = vpop.permute.xlu0 %4837
      %4839 = vset.pattern.permute.xlu0 0
      %4840 = vperm.xlu0 %4839, %v4425
      %v4841 = vpop.permute.xlu0 %4840
      %4842 = vset.pattern.permute.xlu0 0
      %4843 = vperm.xlu0 %4842, %v4426
      %v4844 = vpop.permute.xlu0 %4843
      %4845 = vset.pattern.permute.xlu0 0
      %4846 = vperm.xlu0 %4845, %v4427
      %v4847 = vpop.permute.xlu0 %4846
      %4848 = vset.pattern.permute.xlu0 0
      %4849 = vperm.xlu0 %4848, %v4428
      %v4850 = vpop.permute.xlu0 %4849
      %4851 = vset.pattern.permute.xlu0 0
      %4852 = vperm.xlu0 %4851, %v4429
      %v4853 = vpop.permute.xlu0 %4852
      %4854 = vset.pattern.permute.xlu0 0
      %4855 = vperm.xlu0 %4854, %v4430
      %v4856 = vpop.permute.xlu0 %4855
      %4857 = vset.pattern.permute.xlu0 0
      %4858 = vperm.xlu0 %4857, %v4431
      %v4859 = vpop.permute.xlu0 %4858
      %4860 = vset.pattern.permute.xlu0 0
      %4861 = vperm.xlu0 %4860, %v4432
      %v4862 = vpop.permute.xlu0 %4861
      %4863 = vset.pattern.permute.xlu0 0
      %4864 = vperm.xlu0 %4863, %v4433
      %v4865 = vpop.permute.xlu0 %4864
      %4866 = vset.pattern.permute.xlu0 0
      %4867 = vperm.xlu0 %4866, %v4434
      %v4868 = vpop.permute.xlu0 %4867
      %4869 = vset.pattern.permute.xlu0 0
      %4870 = vperm.xlu0 %4869, %v4435
      %v4871 = vpop.permute.xlu0 %4870
      %4872 = vset.pattern.permute.xlu0 0
      %4873 = vperm.xlu0 %4872, %v4436
      %v4874 = vpop.permute.xlu0 %4873
      %4875 = vset.pattern.permute.xlu0 0
      %4876 = vperm.xlu0 %4875, %v4437
      %v4877 = vpop.permute.xlu0 %4876
      %4878 = vset.pattern.permute.xlu0 0
      %4879 = vperm.xlu0 %4878, %v4438
      %v4880 = vpop.permute.xlu0 %4879
      %4881 = vset.pattern.permute.xlu0 0
      %4882 = vperm.xlu0 %4881, %v4439
      %v4883 = vpop.permute.xlu0 %4882
      %4884 = vset.pattern.permute.xlu0 0
      %4885 = vperm.xlu0 %4884, %v4440
      %v4886 = vpop.permute.xlu0 %4885
      %4887 = vset.pattern.permute.xlu0 0
      %4888 = vperm.xlu0 %4887, %v4441
      %v4889 = vpop.permute.xlu0 %4888
      %4890 = vset.pattern.permute.xlu0 0
      %4891 = vperm.xlu0 %4890, %v4442
      %v4892 = vpop.permute.xlu0 %4891
      %4893 = vset.pattern.permute.xlu0 0
      %4894 = vperm.xlu0 %4893, %v4443
      %v4895 = vpop.permute.xlu0 %4894
      %4896 = vset.pattern.permute.xlu0 0
      %4897 = vperm.xlu0 %4896, %v4444
      %v4898 = vpop.permute.xlu0 %4897
      %4899 = vset.pattern.permute.xlu0 0
      %4900 = vperm.xlu0 %4899, %v4445
      %v4901 = vpop.permute.xlu0 %4900
      %4902 = vset.pattern.permute.xlu0 0
      %4903 = vperm.xlu0 %4902, %v4446
      %v4904 = vpop.permute.xlu0 %4903
      %4905 = vset.pattern.permute.xlu0 0
      %4906 = vperm.xlu0 %4905, %v4447
      %v4907 = vpop.permute.xlu0 %4906
      %4908 = vset.pattern.permute.xlu0 0
      %4909 = vperm.xlu0 %4908, %v4448
      %v4910 = vpop.permute.xlu0 %4909
      %4911 = vset.pattern.permute.xlu0 0
      %4912 = vperm.xlu0 %4911, %v4449
      %v4913 = vpop.permute.xlu0 %4912
      %4914 = vset.pattern.permute.xlu0 0
      %4915 = vperm.xlu0 %4914, %v4450
      %v4916 = vpop.permute.xlu0 %4915
      %4917 = vset.pattern.permute.xlu0 0
      %4918 = vperm.xlu0 %4917, %v4451
      %v4919 = vpop.permute.xlu0 %4918
      %4920 = vset.pattern.permute.xlu0 0
      %4921 = vperm.xlu0 %4920, %v4452
      %v4922 = vpop.permute.xlu0 %4921
      %4923 = vset.pattern.permute.xlu0 0
      %4924 = vperm.xlu0 %4923, %v4453
      %v4925 = vpop.permute.xlu0 %4924
      %4926 = vset.pattern.permute.xlu0 0
      %4927 = vperm.xlu0 %4926, %v4454
      %v4928 = vpop.permute.xlu0 %4927
      %4929 = vset.pattern.permute.xlu0 0
      %4930 = vperm.xlu0 %4929, %v4455
      %v4931 = vpop.permute.xlu0 %4930
      %4932 = vset.pattern.permute.xlu0 0
      %4933 = vperm.xlu0 %4932, %v4456
      %v4934 = vpop.permute.xlu0 %4933
      %4935 = vset.pattern.permute.xlu0 0
      %4936 = vperm.xlu0 %4935, %v4457
      %v4937 = vpop.permute.xlu0 %4936
      %4938 = vset.pattern.permute.xlu0 0
      %4939 = vperm.xlu0 %4938, %v4458
      %v4940 = vpop.permute.xlu0 %4939
      %4941 = vset.pattern.permute.xlu0 0
      %4942 = vperm.xlu0 %4941, %v4459
      %v4943 = vpop.permute.xlu0 %4942
      %4944 = vset.pattern.permute.xlu0 0
      %4945 = vperm.xlu0 %4944, %v4460
      %v4946 = vpop.permute.xlu0 %4945
      %4947 = vset.pattern.permute.xlu0 0
      %4948 = vperm.xlu0 %4947, %v4461
      %v4949 = vpop.permute.xlu0 %4948
      %4950 = vset.pattern.permute.xlu0 0
      %4951 = vperm.xlu0 %4950, %v4462
      %v4952 = vpop.permute.xlu0 %4951
      %4953 = vset.pattern.permute.xlu0 0
      %4954 = vperm.xlu0 %4953, %v4463
      %v4955 = vpop.permute.xlu0 %4954
      %4956 = vset.pattern.permute.xlu0 0
      %4957 = vperm.xlu0 %4956, %v4464
      %v4958 = vpop.permute.xlu0 %4957
      %4959 = vset.pattern.permute.xlu0 0
      %4960 = vperm.xlu0 %4959, %v4465
      %v4961 = vpop.permute.xlu0 %4960
      %4962 = vset.pattern.permute.xlu0 0
      %4963 = vperm.xlu0 %4962, %v4466
      %v4964 = vpop.permute.xlu0 %4963
      %4965 = vset.pattern.permute.xlu0 0
      %4966 = vperm.xlu0 %4965, %v4467
      %v4967 = vpop.permute.xlu0 %4966
      %4968 = vset.pattern.permute.xlu0 0
      %4969 = vperm.xlu0 %4968, %v4468
      %v4970 = vpop.permute.xlu0 %4969
      %4971 = vset.pattern.permute.xlu0 0
      %4972 = vperm.xlu0 %4971, %v4469
      %v4973 = vpop.permute.xlu0 %4972
      %4974 = vset.pattern.permute.xlu0 0
      %4975 = vperm.xlu0 %4974, %v4470
      %v4976 = vpop.permute.xlu0 %4975
      %4977 = vset.pattern.permute.xlu0 0
      %4978 = vperm.xlu0 %4977, %v4471
      %v4979 = vpop.permute.xlu0 %4978
      %4980 = vset.pattern.permute.xlu0 0
      %4981 = vperm.xlu0 %4980, %v4472
      %v4982 = vpop.permute.xlu0 %4981
      %4983 = vset.pattern.permute.xlu0 0
      %4984 = vperm.xlu0 %4983, %v4473
      %v4985 = vpop.permute.xlu0 %4984
      %v4986 = vlaneseq
      %v4987 = vand.u32 %v4986, 127
      %v4988 = vperm.slane %v4604, %v4987
      %v4989 = vperm.slane %v4607, %v4987
      %v4990 = vperm.slane %v4610, %v4987
      %v4991 = vperm.slane %v4613, %v4987
      %v4992 = vperm.slane %v4616, %v4987
      %v4993 = vperm.slane %v4619, %v4987
      %v4994 = vperm.slane %v4622, %v4987
      %v4995 = vperm.slane %v4625, %v4987
      %v4996 = vperm.slane %v4628, %v4987
      %v4997 = vperm.slane %v4631, %v4987
      %v4998 = vperm.slane %v4634, %v4987
      %v4999 = vperm.slane %v4637, %v4987
      %v5000 = vperm.slane %v4640, %v4987
      %v5001 = vperm.slane %v4643, %v4987
      %v5002 = vperm.slane %v4646, %v4987
      %v5003 = vperm.slane %v4649, %v4987
      %v5004 = vperm.slane %v4652, %v4987
      %v5005 = vperm.slane %v4655, %v4987
      %v5006 = vperm.slane %v4658, %v4987
      %v5007 = vperm.slane %v4661, %v4987
      %v5008 = vperm.slane %v4664, %v4987
      %v5009 = vperm.slane %v4667, %v4987
      %v5010 = vperm.slane %v4670, %v4987
      %v5011 = vperm.slane %v4673, %v4987
      %v5012 = vperm.slane %v4676, %v4987
      %v5013 = vperm.slane %v4679, %v4987
      %v5014 = vperm.slane %v4682, %v4987
      %v5015 = vperm.slane %v4685, %v4987
      %v5016 = vperm.slane %v4688, %v4987
      %v5017 = vperm.slane %v4691, %v4987
      %v5018 = vperm.slane %v4694, %v4987
      %v5019 = vperm.slane %v4697, %v4987
      %v5020 = vperm.slane %v4700, %v4987
      %v5021 = vperm.slane %v4703, %v4987
      %v5022 = vperm.slane %v4706, %v4987
      %v5023 = vperm.slane %v4709, %v4987
      %v5024 = vperm.slane %v4712, %v4987
      %v5025 = vperm.slane %v4715, %v4987
      %v5026 = vperm.slane %v4718, %v4987
      %v5027 = vperm.slane %v4721, %v4987
      %v5028 = vperm.slane %v4724, %v4987
      %v5029 = vperm.slane %v4727, %v4987
      %v5030 = vperm.slane %v4730, %v4987
      %v5031 = vperm.slane %v4733, %v4987
      %v5032 = vperm.slane %v4736, %v4987
      %v5033 = vperm.slane %v4739, %v4987
      %v5034 = vperm.slane %v4742, %v4987
      %v5035 = vperm.slane %v4745, %v4987
      %v5036 = vperm.slane %v4748, %v4987
      %v5037 = vperm.slane %v4751, %v4987
      %v5038 = vperm.slane %v4754, %v4987
      %v5039 = vperm.slane %v4757, %v4987
      %v5040 = vperm.slane %v4760, %v4987
      %v5041 = vperm.slane %v4763, %v4987
      %v5042 = vperm.slane %v4766, %v4987
      %v5043 = vperm.slane %v4769, %v4987
      %v5044 = vperm.slane %v4772, %v4987
      %v5045 = vperm.slane %v4775, %v4987
      %v5046 = vperm.slane %v4778, %v4987
      %v5047 = vperm.slane %v4781, %v4987
      %v5048 = vperm.slane %v4784, %v4987
      %v5049 = vperm.slane %v4787, %v4987
      %v5050 = vperm.slane %v4790, %v4987
      %v5051 = vperm.slane %v4793, %v4987
      %v5052 = vperm.slane %v4796, %v4987
      %v5053 = vperm.slane %v4799, %v4987
      %v5054 = vperm.slane %v4802, %v4987
      %v5055 = vperm.slane %v4805, %v4987
      %v5056 = vperm.slane %v4808, %v4987
      %v5057 = vperm.slane %v4811, %v4987
      %v5058 = vperm.slane %v4814, %v4987
      %v5059 = vperm.slane %v4817, %v4987
      %v5060 = vperm.slane %v4820, %v4987
      %v5061 = vperm.slane %v4823, %v4987
      %v5062 = vperm.slane %v4826, %v4987
      %v5063 = vperm.slane %v4829, %v4987
      %v5064 = vperm.slane %v4832, %v4987
      %v5065 = vperm.slane %v4835, %v4987
      %v5066 = vperm.slane %v4838, %v4987
      %v5067 = vperm.slane %v4841, %v4987
      %v5068 = vperm.slane %v4844, %v4987
      %v5069 = vperm.slane %v4847, %v4987
      %v5070 = vperm.slane %v4850, %v4987
      %v5071 = vperm.slane %v4853, %v4987
      %v5072 = vperm.slane %v4856, %v4987
      %v5073 = vperm.slane %v4859, %v4987
      %v5074 = vperm.slane %v4862, %v4987
      %v5075 = vperm.slane %v4865, %v4987
      %v5076 = vperm.slane %v4868, %v4987
      %v5077 = vperm.slane %v4871, %v4987
      %v5078 = vperm.slane %v4874, %v4987
      %v5079 = vperm.slane %v4877, %v4987
      %v5080 = vperm.slane %v4880, %v4987
      %v5081 = vperm.slane %v4883, %v4987
      %v5082 = vperm.slane %v4886, %v4987
      %v5083 = vperm.slane %v4889, %v4987
      %v5084 = vperm.slane %v4892, %v4987
      %v5085 = vperm.slane %v4895, %v4987
      %v5086 = vperm.slane %v4898, %v4987
      %v5087 = vperm.slane %v4901, %v4987
      %v5088 = vperm.slane %v4904, %v4987
      %v5089 = vperm.slane %v4907, %v4987
      %v5090 = vperm.slane %v4910, %v4987
      %v5091 = vperm.slane %v4913, %v4987
      %v5092 = vperm.slane %v4916, %v4987
      %v5093 = vperm.slane %v4919, %v4987
      %v5094 = vperm.slane %v4922, %v4987
      %v5095 = vperm.slane %v4925, %v4987
      %v5096 = vperm.slane %v4928, %v4987
      %v5097 = vperm.slane %v4931, %v4987
      %v5098 = vperm.slane %v4934, %v4987
      %v5099 = vperm.slane %v4937, %v4987
      %v5100 = vperm.slane %v4940, %v4987
      %v5101 = vperm.slane %v4943, %v4987
      %v5102 = vperm.slane %v4946, %v4987
      %v5103 = vperm.slane %v4949, %v4987
      %v5104 = vperm.slane %v4952, %v4987
      %v5105 = vperm.slane %v4955, %v4987
      %v5106 = vperm.slane %v4958, %v4987
      %v5107 = vperm.slane %v4961, %v4987
      %v5108 = vperm.slane %v4964, %v4987
      %v5109 = vperm.slane %v4967, %v4987
      %v5110 = vperm.slane %v4970, %v4987
      %v5111 = vperm.slane %v4973, %v4987
      %v5112 = vperm.slane %v4976, %v4987
      %v5113 = vperm.slane %v4979, %v4987
      %v5114 = vperm.slane %v4982, %v4987
      %v5115 = vperm.slane %v4985, %v4987
      %vm5116 = vcmask 1041409
      %v5117 = vsel %vm5116, %v4989, %v4988
      %vm5118 = vcmask 1042434
      %v5119 = vsel %vm5118, %v4990, %v5117
      %vm5120 = vcmask 1043459
      %v5121 = vsel %vm5120, %v4991, %v5119
      %vm5122 = vcmask 1044484
      %v5123 = vsel %vm5122, %v4992, %v5121
      %vm5124 = vcmask 1045509
      %v5125 = vsel %vm5124, %v4993, %v5123
      %vm5126 = vcmask 1046534
      %v5127 = vsel %vm5126, %v4994, %v5125
      %vm5128 = vcmask 1047559
      %v5129 = vsel %vm5128, %v4995, %v5127
      %v5130 = vsel %vm5116, %v4997, %v4996
      %v5131 = vsel %vm5118, %v4998, %v5130
      %v5132 = vsel %vm5120, %v4999, %v5131
      %v5133 = vsel %vm5122, %v5000, %v5132
      %v5134 = vsel %vm5124, %v5001, %v5133
      %v5135 = vsel %vm5126, %v5002, %v5134
      %v5136 = vsel %vm5128, %v5003, %v5135
      %v5137 = vsel %vm5116, %v5005, %v5004
      %v5138 = vsel %vm5118, %v5006, %v5137
      %v5139 = vsel %vm5120, %v5007, %v5138
      %v5140 = vsel %vm5122, %v5008, %v5139
      %v5141 = vsel %vm5124, %v5009, %v5140
      %v5142 = vsel %vm5126, %v5010, %v5141
      %v5143 = vsel %vm5128, %v5011, %v5142
      %v5144 = vsel %vm5116, %v5013, %v5012
      %v5145 = vsel %vm5118, %v5014, %v5144
      %v5146 = vsel %vm5120, %v5015, %v5145
      %v5147 = vsel %vm5122, %v5016, %v5146
      %v5148 = vsel %vm5124, %v5017, %v5147
      %v5149 = vsel %vm5126, %v5018, %v5148
      %v5150 = vsel %vm5128, %v5019, %v5149
      %v5151 = vsel %vm5116, %v5021, %v5020
      %v5152 = vsel %vm5118, %v5022, %v5151
      %v5153 = vsel %vm5120, %v5023, %v5152
      %v5154 = vsel %vm5122, %v5024, %v5153
      %v5155 = vsel %vm5124, %v5025, %v5154
      %v5156 = vsel %vm5126, %v5026, %v5155
      %v5157 = vsel %vm5128, %v5027, %v5156
      %v5158 = vsel %vm5116, %v5029, %v5028
      %v5159 = vsel %vm5118, %v5030, %v5158
      %v5160 = vsel %vm5120, %v5031, %v5159
      %v5161 = vsel %vm5122, %v5032, %v5160
      %v5162 = vsel %vm5124, %v5033, %v5161
      %v5163 = vsel %vm5126, %v5034, %v5162
      %v5164 = vsel %vm5128, %v5035, %v5163
      %v5165 = vsel %vm5116, %v5037, %v5036
      %v5166 = vsel %vm5118, %v5038, %v5165
      %v5167 = vsel %vm5120, %v5039, %v5166
      %v5168 = vsel %vm5122, %v5040, %v5167
      %v5169 = vsel %vm5124, %v5041, %v5168
      %v5170 = vsel %vm5126, %v5042, %v5169
      %v5171 = vsel %vm5128, %v5043, %v5170
      %v5172 = vsel %vm5116, %v5045, %v5044
      %v5173 = vsel %vm5118, %v5046, %v5172
      %v5174 = vsel %vm5120, %v5047, %v5173
      %v5175 = vsel %vm5122, %v5048, %v5174
      %v5176 = vsel %vm5124, %v5049, %v5175
      %v5177 = vsel %vm5126, %v5050, %v5176
      %v5178 = vsel %vm5128, %v5051, %v5177
      %v5179 = vsel %vm5116, %v5053, %v5052
      %v5180 = vsel %vm5118, %v5054, %v5179
      %v5181 = vsel %vm5120, %v5055, %v5180
      %v5182 = vsel %vm5122, %v5056, %v5181
      %v5183 = vsel %vm5124, %v5057, %v5182
      %v5184 = vsel %vm5126, %v5058, %v5183
      %v5185 = vsel %vm5128, %v5059, %v5184
      %v5186 = vsel %vm5116, %v5061, %v5060
      %v5187 = vsel %vm5118, %v5062, %v5186
      %v5188 = vsel %vm5120, %v5063, %v5187
      %v5189 = vsel %vm5122, %v5064, %v5188
      %v5190 = vsel %vm5124, %v5065, %v5189
      %v5191 = vsel %vm5126, %v5066, %v5190
      %v5192 = vsel %vm5128, %v5067, %v5191
      %v5193 = vsel %vm5116, %v5069, %v5068
      %v5194 = vsel %vm5118, %v5070, %v5193
      %v5195 = vsel %vm5120, %v5071, %v5194
      %v5196 = vsel %vm5122, %v5072, %v5195
      %v5197 = vsel %vm5124, %v5073, %v5196
      %v5198 = vsel %vm5126, %v5074, %v5197
      %v5199 = vsel %vm5128, %v5075, %v5198
      %v5200 = vsel %vm5116, %v5077, %v5076
      %v5201 = vsel %vm5118, %v5078, %v5200
      %v5202 = vsel %vm5120, %v5079, %v5201
      %v5203 = vsel %vm5122, %v5080, %v5202
      %v5204 = vsel %vm5124, %v5081, %v5203
      %v5205 = vsel %vm5126, %v5082, %v5204
      %v5206 = vsel %vm5128, %v5083, %v5205
      %v5207 = vsel %vm5116, %v5085, %v5084
      %v5208 = vsel %vm5118, %v5086, %v5207
      %v5209 = vsel %vm5120, %v5087, %v5208
      %v5210 = vsel %vm5122, %v5088, %v5209
      %v5211 = vsel %vm5124, %v5089, %v5210
      %v5212 = vsel %vm5126, %v5090, %v5211
      %v5213 = vsel %vm5128, %v5091, %v5212
      %v5214 = vsel %vm5116, %v5093, %v5092
      %v5215 = vsel %vm5118, %v5094, %v5214
      %v5216 = vsel %vm5120, %v5095, %v5215
      %v5217 = vsel %vm5122, %v5096, %v5216
      %v5218 = vsel %vm5124, %v5097, %v5217
      %v5219 = vsel %vm5126, %v5098, %v5218
      %v5220 = vsel %vm5128, %v5099, %v5219
      %v5221 = vsel %vm5116, %v5101, %v5100
      %v5222 = vsel %vm5118, %v5102, %v5221
      %v5223 = vsel %vm5120, %v5103, %v5222
      %v5224 = vsel %vm5122, %v5104, %v5223
      %v5225 = vsel %vm5124, %v5105, %v5224
      %v5226 = vsel %vm5126, %v5106, %v5225
      %v5227 = vsel %vm5128, %v5107, %v5226
      %v5228 = vsel %vm5116, %v5109, %v5108
      %v5229 = vsel %vm5118, %v5110, %v5228
      %v5230 = vsel %vm5120, %v5111, %v5229
      %v5231 = vsel %vm5122, %v5112, %v5230
      %v5232 = vsel %vm5124, %v5113, %v5231
      %v5233 = vsel %vm5126, %v5114, %v5232
      %v5234 = vsel %vm5128, %v5115, %v5233
      %v5251 = vsel %vm1416, %v5129, 0.0
      %5252 = vadd.xlane.f32.xlu0 %v5251
      %v5253 = vpop.xlane.xlu0 %5252
      %v5254 = vsel %vm1416, %v5136, 0.0
      %5255 = vadd.xlane.f32.xlu0 %v5254
      %v5256 = vpop.xlane.xlu0 %5255
      %v5257 = vsel %vm1416, %v5143, 0.0
      %5258 = vadd.xlane.f32.xlu0 %v5257
      %v5259 = vpop.xlane.xlu0 %5258
      %v5260 = vsel %vm1416, %v5150, 0.0
      %5261 = vadd.xlane.f32.xlu0 %v5260
      %v5262 = vpop.xlane.xlu0 %5261
      %v5263 = vsel %vm1416, %v5157, 0.0
      %5264 = vadd.xlane.f32.xlu0 %v5263
      %v5265 = vpop.xlane.xlu0 %5264
      %v5266 = vsel %vm1416, %v5164, 0.0
      %5267 = vadd.xlane.f32.xlu0 %v5266
      %v5268 = vpop.xlane.xlu0 %5267
      %v5269 = vsel %vm1416, %v5171, 0.0
      %5270 = vadd.xlane.f32.xlu0 %v5269
      %v5271 = vpop.xlane.xlu0 %5270
      %v5272 = vsel %vm1416, %v5178, 0.0
      %5273 = vadd.xlane.f32.xlu0 %v5272
      %v5274 = vpop.xlane.xlu0 %5273
      %v5275 = vsel %vm1416, %v5185, 0.0
      %5276 = vadd.xlane.f32.xlu0 %v5275
      %v5277 = vpop.xlane.xlu0 %5276
      %v5278 = vsel %vm1416, %v5192, 0.0
      %5279 = vadd.xlane.f32.xlu0 %v5278
      %v5280 = vpop.xlane.xlu0 %5279
      %v5281 = vsel %vm1416, %v5199, 0.0
      %5282 = vadd.xlane.f32.xlu0 %v5281
      %v5283 = vpop.xlane.xlu0 %5282
      %v5284 = vsel %vm1416, %v5206, 0.0
      %5285 = vadd.xlane.f32.xlu0 %v5284
      %v5286 = vpop.xlane.xlu0 %5285
      %v5287 = vsel %vm1416, %v5213, 0.0
      %5288 = vadd.xlane.f32.xlu0 %v5287
      %v5289 = vpop.xlane.xlu0 %5288
      %v5290 = vsel %vm1416, %v5220, 0.0
      %5291 = vadd.xlane.f32.xlu0 %v5290
      %v5292 = vpop.xlane.xlu0 %5291
      %v5293 = vsel %vm1416, %v5227, 0.0
      %5294 = vadd.xlane.f32.xlu0 %v5293
      %v5295 = vpop.xlane.xlu0 %5294
      %v5296 = vsel %vm1416, %v5234, 0.0
      %5297 = vadd.xlane.f32.xlu0 %v5296
      %v5298 = vpop.xlane.xlu0 %5297
      %v5299 = vld [vmem:[%s10] sm:$0x1]
      %v5301 = vperm.slane %v5299, 0
      %v5302 = vlaneseq
      %v5303 = vshrl.u32 %v5302, 7
      %5305 = vset.pattern.permute.xlu0 %v5303
      %5306 = vperm.xlu0 %5305, %v5301
      %v5307 = vpop.permute.xlu0 %5306
      %v5308 = vlaneseq
      %v5309 = vshrl.u32 %v5308, 7
      %v5310 = vadd.s32 %v5309, 8
      %5311 = vset.pattern.permute.xlu0 %v5310
      %5312 = vperm.xlu0 %5311, %v5301
      %v5313 = vpop.permute.xlu0 %5312
      %v5314 = vlaneseq
      %v5315 = vshrl.u32 %v5314, 7
      %v5316 = vadd.s32 %v5315, 16
      %5317 = vset.pattern.permute.xlu0 %v5316
      %5318 = vperm.xlu0 %5317, %v5301
      %v5319 = vpop.permute.xlu0 %5318
      %v5320 = vlaneseq
      %v5321 = vshrl.u32 %v5320, 7
      %v5322 = vadd.s32 %v5321, 24
      %5323 = vset.pattern.permute.xlu0 %v5322
      %5324 = vperm.xlu0 %5323, %v5301
      %v5325 = vpop.permute.xlu0 %5324
      %v5330 = vadd.f32 %v5253, %v5307
      %v5331 = vadd.f32 %v5256, %v5313
      %v5332 = vadd.f32 %v5259, %v5319
      %v5333 = vadd.f32 %v5262, %v5325
      %v5334 = vadd.f32 %v5265, %v5307
      %v5335 = vadd.f32 %v5268, %v5313
      %v5336 = vadd.f32 %v5271, %v5319
      %v5337 = vadd.f32 %v5274, %v5325
      %v5338 = vadd.f32 %v5277, %v5307
      %v5339 = vadd.f32 %v5280, %v5313
      %v5340 = vadd.f32 %v5283, %v5319
      %v5341 = vadd.f32 %v5286, %v5325
      %v5342 = vadd.f32 %v5289, %v5307
      %v5343 = vadd.f32 %v5292, %v5313
      %v5344 = vadd.f32 %v5295, %v5319
      %v5345 = vadd.f32 %v5298, %v5325
      %v5346 = vxor.u32 %v5330, 2147483648
      %v5347 = vxor.u32 %v5331, 2147483648
      %v5348 = vxor.u32 %v5332, 2147483648
      %v5349 = vxor.u32 %v5333, 2147483648
      %v5350 = vxor.u32 %v5334, 2147483648
      %v5351 = vxor.u32 %v5335, 2147483648
      %v5352 = vxor.u32 %v5336, 2147483648
      %v5353 = vxor.u32 %v5337, 2147483648
      %v5354 = vxor.u32 %v5338, 2147483648
      %v5355 = vxor.u32 %v5339, 2147483648
      %v5356 = vxor.u32 %v5340, 2147483648
      %v5357 = vxor.u32 %v5341, 2147483648
      %v5358 = vxor.u32 %v5342, 2147483648
      %v5359 = vxor.u32 %v5343, 2147483648
      %v5360 = vxor.u32 %v5344, 2147483648
      %v5361 = vxor.u32 %v5345, 2147483648
      %v5362 = vmul.f32 %v5346, 1.442695
      %v5363 = vpow.pop %v5362
      %v5364 = vmul.f32 %v5347, 1.442695
      %v5365 = vpow.pop %v5364
      %v5366 = vmul.f32 %v5348, 1.442695
      %v5367 = vpow.pop %v5366
      %v5368 = vmul.f32 %v5349, 1.442695
      %v5369 = vpow.pop %v5368
      %v5370 = vmul.f32 %v5350, 1.442695
      %v5371 = vpow.pop %v5370
      %v5372 = vmul.f32 %v5351, 1.442695
      %v5373 = vpow.pop %v5372
      %v5374 = vmul.f32 %v5352, 1.442695
      %v5375 = vpow.pop %v5374
      %v5376 = vmul.f32 %v5353, 1.442695
      %v5377 = vpow.pop %v5376
      %v5378 = vmul.f32 %v5354, 1.442695
      %v5379 = vpow.pop %v5378
      %v5380 = vmul.f32 %v5355, 1.442695
      %v5381 = vpow.pop %v5380
      %v5382 = vmul.f32 %v5356, 1.442695
      %v5383 = vpow.pop %v5382
      %v5384 = vmul.f32 %v5357, 1.442695
      %v5385 = vpow.pop %v5384
      %v5386 = vmul.f32 %v5358, 1.442695
      %v5387 = vpow.pop %v5386
      %v5388 = vmul.f32 %v5359, 1.442695
      %v5389 = vpow.pop %v5388
      %v5390 = vmul.f32 %v5360, 1.442695
      %v5391 = vpow.pop %v5390
      %v5392 = vmul.f32 %v5361, 1.442695
      %v5393 = vpow.pop %v5392
      %v5394 = vadd.f32 %v5363, 1.0
      %v5395 = vadd.f32 %v5365, 1.0
      %v5396 = vadd.f32 %v5367, 1.0
      %v5397 = vadd.f32 %v5369, 1.0
      %v5398 = vadd.f32 %v5371, 1.0
      %v5399 = vadd.f32 %v5373, 1.0
      %v5400 = vadd.f32 %v5375, 1.0
      %v5401 = vadd.f32 %v5377, 1.0
      %v5402 = vadd.f32 %v5379, 1.0
      %v5403 = vadd.f32 %v5381, 1.0
      %v5404 = vadd.f32 %v5383, 1.0
      %v5405 = vadd.f32 %v5385, 1.0
      %v5406 = vadd.f32 %v5387, 1.0
      %v5407 = vadd.f32 %v5389, 1.0
      %v5408 = vadd.f32 %v5391, 1.0
      %v5409 = vadd.f32 %v5393, 1.0
      %v5410 = vrcp.pop %v5394
      %v5411 = vmul.f32 %v5394, %v5410
      %v5412 = vsub.f32 1.0, %v5411
      %v5413 = vmul.f32 %v5410, %v5412
      %v5414 = vadd.f32 %v5410, %v5413
      %vm5415 = vweird.f32 %v5394
      %vm5416 = vweird.f32 %v5410
      %vm5417 = vmor %vm5415, %vm5416
      %v5418 = vsel %vm5417, %v5410, %v5414
      %v5419 = vand.u32 2147483647, %v5394
      %vm5420 = vcmp.eq.f32.partialorder %v5419, 8.507059e+37
      %v5421 = vand.u32 %v5394, 2147483648
      %v5422 = vor.u32 1.1754944e-38, %v5421
      %v5423 = vsel %vm5420, %v5422, %v5418
      %v5424 = vmul.f32 1.0, %v5423
      %v5425 = vrcp.pop %v5395
      %v5426 = vmul.f32 %v5395, %v5425
      %v5427 = vsub.f32 1.0, %v5426
      %v5428 = vmul.f32 %v5425, %v5427
      %v5429 = vadd.f32 %v5425, %v5428
      %vm5430 = vweird.f32 %v5395
      %vm5431 = vweird.f32 %v5425
      %vm5432 = vmor %vm5430, %vm5431
      %v5433 = vsel %vm5432, %v5425, %v5429
      %v5434 = vand.u32 2147483647, %v5395
      %vm5435 = vcmp.eq.f32.partialorder %v5434, 8.507059e+37
      %v5436 = vand.u32 %v5395, 2147483648
      %v5437 = vor.u32 1.1754944e-38, %v5436
      %v5438 = vsel %vm5435, %v5437, %v5433
      %v5439 = vmul.f32 1.0, %v5438
      %v5440 = vrcp.pop %v5396
      %v5441 = vmul.f32 %v5396, %v5440
      %v5442 = vsub.f32 1.0, %v5441
      %v5443 = vmul.f32 %v5440, %v5442
      %v5444 = vadd.f32 %v5440, %v5443
      %vm5445 = vweird.f32 %v5396
      %vm5446 = vweird.f32 %v5440
      %vm5447 = vmor %vm5445, %vm5446
      %v5448 = vsel %vm5447, %v5440, %v5444
      %v5449 = vand.u32 2147483647, %v5396
      %vm5450 = vcmp.eq.f32.partialorder %v5449, 8.507059e+37
      %v5451 = vand.u32 %v5396, 2147483648
      %v5452 = vor.u32 1.1754944e-38, %v5451
      %v5453 = vsel %vm5450, %v5452, %v5448
      %v5454 = vmul.f32 1.0, %v5453
      %v5455 = vrcp.pop %v5397
      %v5456 = vmul.f32 %v5397, %v5455
      %v5457 = vsub.f32 1.0, %v5456
      %v5458 = vmul.f32 %v5455, %v5457
      %v5459 = vadd.f32 %v5455, %v5458
      %vm5460 = vweird.f32 %v5397
      %vm5461 = vweird.f32 %v5455
      %vm5462 = vmor %vm5460, %vm5461
      %v5463 = vsel %vm5462, %v5455, %v5459
      %v5464 = vand.u32 2147483647, %v5397
      %vm5465 = vcmp.eq.f32.partialorder %v5464, 8.507059e+37
      %v5466 = vand.u32 %v5397, 2147483648
      %v5467 = vor.u32 1.1754944e-38, %v5466
      %v5468 = vsel %vm5465, %v5467, %v5463
      %v5469 = vmul.f32 1.0, %v5468
      %v5470 = vrcp.pop %v5398
      %v5471 = vmul.f32 %v5398, %v5470
      %v5472 = vsub.f32 1.0, %v5471
      %v5473 = vmul.f32 %v5470, %v5472
      %v5474 = vadd.f32 %v5470, %v5473
      %vm5475 = vweird.f32 %v5398
      %vm5476 = vweird.f32 %v5470
      %vm5477 = vmor %vm5475, %vm5476
      %v5478 = vsel %vm5477, %v5470, %v5474
      %v5479 = vand.u32 2147483647, %v5398
      %vm5480 = vcmp.eq.f32.partialorder %v5479, 8.507059e+37
      %v5481 = vand.u32 %v5398, 2147483648
      %v5482 = vor.u32 1.1754944e-38, %v5481
      %v5483 = vsel %vm5480, %v5482, %v5478
      %v5484 = vmul.f32 1.0, %v5483
      %v5485 = vrcp.pop %v5399
      %v5486 = vmul.f32 %v5399, %v5485
      %v5487 = vsub.f32 1.0, %v5486
      %v5488 = vmul.f32 %v5485, %v5487
      %v5489 = vadd.f32 %v5485, %v5488
      %vm5490 = vweird.f32 %v5399
      %vm5491 = vweird.f32 %v5485
      %vm5492 = vmor %vm5490, %vm5491
      %v5493 = vsel %vm5492, %v5485, %v5489
      %v5494 = vand.u32 2147483647, %v5399
      %vm5495 = vcmp.eq.f32.partialorder %v5494, 8.507059e+37
      %v5496 = vand.u32 %v5399, 2147483648
      %v5497 = vor.u32 1.1754944e-38, %v5496
      %v5498 = vsel %vm5495, %v5497, %v5493
      %v5499 = vmul.f32 1.0, %v5498
      %v5500 = vrcp.pop %v5400
      %v5501 = vmul.f32 %v5400, %v5500
      %v5502 = vsub.f32 1.0, %v5501
      %v5503 = vmul.f32 %v5500, %v5502
      %v5504 = vadd.f32 %v5500, %v5503
      %vm5505 = vweird.f32 %v5400
      %vm5506 = vweird.f32 %v5500
      %vm5507 = vmor %vm5505, %vm5506
      %v5508 = vsel %vm5507, %v5500, %v5504
      %v5509 = vand.u32 2147483647, %v5400
      %vm5510 = vcmp.eq.f32.partialorder %v5509, 8.507059e+37
      %v5511 = vand.u32 %v5400, 2147483648
      %v5512 = vor.u32 1.1754944e-38, %v5511
      %v5513 = vsel %vm5510, %v5512, %v5508
      %v5514 = vmul.f32 1.0, %v5513
      %v5515 = vrcp.pop %v5401
      %v5516 = vmul.f32 %v5401, %v5515
      %v5517 = vsub.f32 1.0, %v5516
      %v5518 = vmul.f32 %v5515, %v5517
      %v5519 = vadd.f32 %v5515, %v5518
      %vm5520 = vweird.f32 %v5401
      %vm5521 = vweird.f32 %v5515
      %vm5522 = vmor %vm5520, %vm5521
      %v5523 = vsel %vm5522, %v5515, %v5519
      %v5524 = vand.u32 2147483647, %v5401
      %vm5525 = vcmp.eq.f32.partialorder %v5524, 8.507059e+37
      %v5526 = vand.u32 %v5401, 2147483648
      %v5527 = vor.u32 1.1754944e-38, %v5526
      %v5528 = vsel %vm5525, %v5527, %v5523
      %v5529 = vmul.f32 1.0, %v5528
      %v5530 = vrcp.pop %v5402
      %v5531 = vmul.f32 %v5402, %v5530
      %v5532 = vsub.f32 1.0, %v5531
      %v5533 = vmul.f32 %v5530, %v5532
      %v5534 = vadd.f32 %v5530, %v5533
      %vm5535 = vweird.f32 %v5402
      %vm5536 = vweird.f32 %v5530
      %vm5537 = vmor %vm5535, %vm5536
      %v5538 = vsel %vm5537, %v5530, %v5534
      %v5539 = vand.u32 2147483647, %v5402
      %vm5540 = vcmp.eq.f32.partialorder %v5539, 8.507059e+37
      %v5541 = vand.u32 %v5402, 2147483648
      %v5542 = vor.u32 1.1754944e-38, %v5541
      %v5543 = vsel %vm5540, %v5542, %v5538
      %v5544 = vmul.f32 1.0, %v5543
      %v5545 = vrcp.pop %v5403
      %v5546 = vmul.f32 %v5403, %v5545
      %v5547 = vsub.f32 1.0, %v5546
      %v5548 = vmul.f32 %v5545, %v5547
      %v5549 = vadd.f32 %v5545, %v5548
      %vm5550 = vweird.f32 %v5403
      %vm5551 = vweird.f32 %v5545
      %vm5552 = vmor %vm5550, %vm5551
      %v5553 = vsel %vm5552, %v5545, %v5549
      %v5554 = vand.u32 2147483647, %v5403
      %vm5555 = vcmp.eq.f32.partialorder %v5554, 8.507059e+37
      %v5556 = vand.u32 %v5403, 2147483648
      %v5557 = vor.u32 1.1754944e-38, %v5556
      %v5558 = vsel %vm5555, %v5557, %v5553
      %v5559 = vmul.f32 1.0, %v5558
      %v5560 = vrcp.pop %v5404
      %v5561 = vmul.f32 %v5404, %v5560
      %v5562 = vsub.f32 1.0, %v5561
      %v5563 = vmul.f32 %v5560, %v5562
      %v5564 = vadd.f32 %v5560, %v5563
      %vm5565 = vweird.f32 %v5404
      %vm5566 = vweird.f32 %v5560
      %vm5567 = vmor %vm5565, %vm5566
      %v5568 = vsel %vm5567, %v5560, %v5564
      %v5569 = vand.u32 2147483647, %v5404
      %vm5570 = vcmp.eq.f32.partialorder %v5569, 8.507059e+37
      %v5571 = vand.u32 %v5404, 2147483648
      %v5572 = vor.u32 1.1754944e-38, %v5571
      %v5573 = vsel %vm5570, %v5572, %v5568
      %v5574 = vmul.f32 1.0, %v5573
      %v5575 = vrcp.pop %v5405
      %v5576 = vmul.f32 %v5405, %v5575
      %v5577 = vsub.f32 1.0, %v5576
      %v5578 = vmul.f32 %v5575, %v5577
      %v5579 = vadd.f32 %v5575, %v5578
      %vm5580 = vweird.f32 %v5405
      %vm5581 = vweird.f32 %v5575
      %vm5582 = vmor %vm5580, %vm5581
      %v5583 = vsel %vm5582, %v5575, %v5579
      %v5584 = vand.u32 2147483647, %v5405
      %vm5585 = vcmp.eq.f32.partialorder %v5584, 8.507059e+37
      %v5586 = vand.u32 %v5405, 2147483648
      %v5587 = vor.u32 1.1754944e-38, %v5586
      %v5588 = vsel %vm5585, %v5587, %v5583
      %v5589 = vmul.f32 1.0, %v5588
      %v5590 = vrcp.pop %v5406
      %v5591 = vmul.f32 %v5406, %v5590
      %v5592 = vsub.f32 1.0, %v5591
      %v5593 = vmul.f32 %v5590, %v5592
      %v5594 = vadd.f32 %v5590, %v5593
      %vm5595 = vweird.f32 %v5406
      %vm5596 = vweird.f32 %v5590
      %vm5597 = vmor %vm5595, %vm5596
      %v5598 = vsel %vm5597, %v5590, %v5594
      %v5599 = vand.u32 2147483647, %v5406
      %vm5600 = vcmp.eq.f32.partialorder %v5599, 8.507059e+37
      %v5601 = vand.u32 %v5406, 2147483648
      %v5602 = vor.u32 1.1754944e-38, %v5601
      %v5603 = vsel %vm5600, %v5602, %v5598
      %v5604 = vmul.f32 1.0, %v5603
      %v5605 = vrcp.pop %v5407
      %v5606 = vmul.f32 %v5407, %v5605
      %v5607 = vsub.f32 1.0, %v5606
      %v5608 = vmul.f32 %v5605, %v5607
      %v5609 = vadd.f32 %v5605, %v5608
      %vm5610 = vweird.f32 %v5407
      %vm5611 = vweird.f32 %v5605
      %vm5612 = vmor %vm5610, %vm5611
      %v5613 = vsel %vm5612, %v5605, %v5609
      %v5614 = vand.u32 2147483647, %v5407
      %vm5615 = vcmp.eq.f32.partialorder %v5614, 8.507059e+37
      %v5616 = vand.u32 %v5407, 2147483648
      %v5617 = vor.u32 1.1754944e-38, %v5616
      %v5618 = vsel %vm5615, %v5617, %v5613
      %v5619 = vmul.f32 1.0, %v5618
      %v5620 = vrcp.pop %v5408
      %v5621 = vmul.f32 %v5408, %v5620
      %v5622 = vsub.f32 1.0, %v5621
      %v5623 = vmul.f32 %v5620, %v5622
      %v5624 = vadd.f32 %v5620, %v5623
      %vm5625 = vweird.f32 %v5408
      %vm5626 = vweird.f32 %v5620
      %vm5627 = vmor %vm5625, %vm5626
      %v5628 = vsel %vm5627, %v5620, %v5624
      %v5629 = vand.u32 2147483647, %v5408
      %vm5630 = vcmp.eq.f32.partialorder %v5629, 8.507059e+37
      %v5631 = vand.u32 %v5408, 2147483648
      %v5632 = vor.u32 1.1754944e-38, %v5631
      %v5633 = vsel %vm5630, %v5632, %v5628
      %v5634 = vmul.f32 1.0, %v5633
      %v5635 = vrcp.pop %v5409
      %v5636 = vmul.f32 %v5409, %v5635
      %v5637 = vsub.f32 1.0, %v5636
      %v5638 = vmul.f32 %v5635, %v5637
      %v5639 = vadd.f32 %v5635, %v5638
      %vm5640 = vweird.f32 %v5409
      %vm5641 = vweird.f32 %v5635
      %vm5642 = vmor %vm5640, %vm5641
      %v5643 = vsel %vm5642, %v5635, %v5639
      %v5644 = vand.u32 2147483647, %v5409
      %vm5645 = vcmp.eq.f32.partialorder %v5644, 8.507059e+37
      %v5646 = vand.u32 %v5409, 2147483648
      %v5647 = vor.u32 1.1754944e-38, %v5646
      %v5648 = vsel %vm5645, %v5647, %v5643
      %v5649 = vmul.f32 1.0, %v5648
      %5666 = vset.pattern.permute.xlu0 0
      %5667 = vperm.xlu0 %5666, %v5424
      %v5668 = vpop.permute.xlu0 %5667
      %5669 = vset.pattern.permute.xlu0 0
      %5670 = vperm.xlu0 %5669, %v5439
      %v5671 = vpop.permute.xlu0 %5670
      %5672 = vset.pattern.permute.xlu0 0
      %5673 = vperm.xlu0 %5672, %v5454
      %v5674 = vpop.permute.xlu0 %5673
      %5675 = vset.pattern.permute.xlu0 0
      %5676 = vperm.xlu0 %5675, %v5469
      %v5677 = vpop.permute.xlu0 %5676
      %5678 = vset.pattern.permute.xlu0 0
      %5679 = vperm.xlu0 %5678, %v5484
      %v5680 = vpop.permute.xlu0 %5679
      %5681 = vset.pattern.permute.xlu0 0
      %5682 = vperm.xlu0 %5681, %v5499
      %v5683 = vpop.permute.xlu0 %5682
      %5684 = vset.pattern.permute.xlu0 0
      %5685 = vperm.xlu0 %5684, %v5514
      %v5686 = vpop.permute.xlu0 %5685
      %5687 = vset.pattern.permute.xlu0 0
      %5688 = vperm.xlu0 %5687, %v5529
      %v5689 = vpop.permute.xlu0 %5688
      %5690 = vset.pattern.permute.xlu0 0
      %5691 = vperm.xlu0 %5690, %v5544
      %v5692 = vpop.permute.xlu0 %5691
      %5693 = vset.pattern.permute.xlu0 0
      %5694 = vperm.xlu0 %5693, %v5559
      %v5695 = vpop.permute.xlu0 %5694
      %5696 = vset.pattern.permute.xlu0 0
      %5697 = vperm.xlu0 %5696, %v5574
      %v5698 = vpop.permute.xlu0 %5697
      %5699 = vset.pattern.permute.xlu0 0
      %5700 = vperm.xlu0 %5699, %v5589
      %v5701 = vpop.permute.xlu0 %5700
      %5702 = vset.pattern.permute.xlu0 0
      %5703 = vperm.xlu0 %5702, %v5604
      %v5704 = vpop.permute.xlu0 %5703
      %5705 = vset.pattern.permute.xlu0 0
      %5706 = vperm.xlu0 %5705, %v5619
      %v5707 = vpop.permute.xlu0 %5706
      %5708 = vset.pattern.permute.xlu0 0
      %5709 = vperm.xlu0 %5708, %v5634
      %v5710 = vpop.permute.xlu0 %5709
      %5711 = vset.pattern.permute.xlu0 0
      %5712 = vperm.xlu0 %5711, %v5649
      %v5713 = vpop.permute.xlu0 %5712
      %v5714 = vperm.slane %v5668, %v4987
      %v5715 = vadd.s32 %v4987, 4294967288
      %v5716 = vperm.slane %v5671, %v5715
      %vm5717 = vcmask 130112
      %v5718 = vsel %vm5717, %v5716, %v5714
      %v5719 = vadd.s32 %v4987, 4294967280
      %v5720 = vperm.slane %v5674, %v5719
      %vm5721 = vcmask 195712
      %v5722 = vsel %vm5721, %v5720, %v5718
      %v5723 = vadd.s32 %v4987, 4294967272
      %v5724 = vperm.slane %v5677, %v5723
      %vm5725 = vcmask 261312
      %v5726 = vsel %vm5725, %v5724, %v5722
      %v5727 = vperm.slane %v5680, %v4987
      %v5728 = vperm.slane %v5683, %v5715
      %v5729 = vsel %vm5717, %v5728, %v5727
      %v5730 = vperm.slane %v5686, %v5719
      %v5731 = vsel %vm5721, %v5730, %v5729
      %v5732 = vperm.slane %v5689, %v5723
      %v5733 = vsel %vm5725, %v5732, %v5731
      %v5734 = vperm.slane %v5692, %v4987
      %v5735 = vperm.slane %v5695, %v5715
      %v5736 = vsel %vm5717, %v5735, %v5734
      %v5737 = vperm.slane %v5698, %v5719
      %v5738 = vsel %vm5721, %v5737, %v5736
      %v5739 = vperm.slane %v5701, %v5723
      %v5740 = vsel %vm5725, %v5739, %v5738
      %v5741 = vperm.slane %v5704, %v4987
      %v5742 = vperm.slane %v5707, %v5715
      %v5743 = vsel %vm5717, %v5742, %v5741
      %v5744 = vperm.slane %v5710, %v5719
      %v5745 = vsel %vm5721, %v5744, %v5743
      %v5746 = vperm.slane %v5713, %v5723
      %v5747 = vsel %vm5725, %v5746, %v5745
      %v5748 = vsel %vm5118, %v5726, %v5726
      %v5749 = vsel %vm5120, %v5726, %v5748
      %v5750 = vsel %vm5122, %v5726, %v5749
      %v5751 = vsel %vm5124, %v5726, %v5750
      %v5752 = vsel %vm5126, %v5726, %v5751
      %v5753 = vsel %vm5128, %v5726, %v5752
      %v5754 = vsel %vm5118, %v5733, %v5733
      %v5755 = vsel %vm5120, %v5733, %v5754
      %v5756 = vsel %vm5122, %v5733, %v5755
      %v5757 = vsel %vm5124, %v5733, %v5756
      %v5758 = vsel %vm5126, %v5733, %v5757
      %v5759 = vsel %vm5128, %v5733, %v5758
      %v5760 = vsel %vm5118, %v5740, %v5740
      %v5761 = vsel %vm5120, %v5740, %v5760
      %v5762 = vsel %vm5122, %v5740, %v5761
      %v5763 = vsel %vm5124, %v5740, %v5762
      %v5764 = vsel %vm5126, %v5740, %v5763
      %v5765 = vsel %vm5128, %v5740, %v5764
      %v5766 = vsel %vm5118, %v5747, %v5747
      %v5767 = vsel %vm5120, %v5747, %v5766
      %v5768 = vsel %vm5122, %v5747, %v5767
      %v5769 = vsel %vm5124, %v5747, %v5768
      %v5770 = vsel %vm5126, %v5747, %v5769
      %v5771 = vsel %vm5128, %v5747, %v5770
      %v5776 = vmul.f32 %v3851, %v5753
      %v5777 = vmul.f32 %v3852, %v5753
      %v5778 = vmul.f32 %v3853, %v5753
      %v5779 = vmul.f32 %v3854, %v5753
      %v5780 = vmul.f32 %v3855, %v5753
      %v5781 = vmul.f32 %v3856, %v5753
      %v5782 = vmul.f32 %v3857, %v5753
      %v5783 = vmul.f32 %v3858, %v5753
      %v5784 = vmul.f32 %v3859, %v5759
      %v5785 = vmul.f32 %v3860, %v5759
      %v5786 = vmul.f32 %v3861, %v5759
      %v5787 = vmul.f32 %v3862, %v5759
      %v5788 = vmul.f32 %v3863, %v5759
      %v5789 = vmul.f32 %v3864, %v5759
      %v5790 = vmul.f32 %v3865, %v5759
      %v5791 = vmul.f32 %v3866, %v5759
      %v5792 = vmul.f32 %v3867, %v5765
      %v5793 = vmul.f32 %v3868, %v5765
      %v5794 = vmul.f32 %v3869, %v5765
      %v5795 = vmul.f32 %v3870, %v5765
      %v5796 = vmul.f32 %v3871, %v5765
      %v5797 = vmul.f32 %v3872, %v5765
      %v5798 = vmul.f32 %v3873, %v5765
      %v5799 = vmul.f32 %v3874, %v5765
      %v5800 = vmul.f32 %v3875, %v5771
      %v5801 = vmul.f32 %v3876, %v5771
      %v5802 = vmul.f32 %v3877, %v5771
      %v5803 = vmul.f32 %v3878, %v5771
      %v5804 = vmul.f32 %v3879, %v5771
      %v5805 = vmul.f32 %v3880, %v5771
      %v5806 = vmul.f32 %v3881, %v5771
      %v5807 = vmul.f32 %v3882, %v5771
      %v5808 = vpack.c.bf16 %v5777, %v5776
      %v5809 = vpack.c.bf16 %v5779, %v5778
      %v5810 = vpack.c.bf16 %v5781, %v5780
      %v5811 = vpack.c.bf16 %v5783, %v5782
      %v5812 = vpack.c.bf16 %v5785, %v5784
      %v5813 = vpack.c.bf16 %v5787, %v5786
      %v5814 = vpack.c.bf16 %v5789, %v5788
      %v5815 = vpack.c.bf16 %v5791, %v5790
      %v5816 = vpack.c.bf16 %v5793, %v5792
      %v5817 = vpack.c.bf16 %v5795, %v5794
      %v5818 = vpack.c.bf16 %v5797, %v5796
      %v5819 = vpack.c.bf16 %v5799, %v5798
      %v5820 = vpack.c.bf16 %v5801, %v5800
      %v5821 = vpack.c.bf16 %v5803, %v5802
      %v5822 = vpack.c.bf16 %v5805, %v5804
      %v5823 = vpack.c.bf16 %v5807, %v5806
      %v5824 = vld [vmem:[%s11] sm:$0xf]
      %v5825 = vld [vmem:[%s11 + $0x4] sm:$0xf]
      %v5826 = vld [vmem:[%s11 + $0x8] sm:$0xf]
      %v5827 = vld [vmem:[%s11 + $0xc] sm:$0xf]
      %v5828 = vld [vmem:[%s12] sm:$0x1]
      %v5830 = vperm.slane %v5828, 0
      %v5836 = vunpack.c.l.b16 %v5824
      %v5837 = vunpack.c.l.b16 %v5825
      %v5838 = vunpack.c.l.b16 %v5826
      %v5839 = vunpack.c.l.b16 %v5827
      %v5840 = vpack.c.b16 %v5837, %v5836
      %v5841 = vpack.c.b16 %v5839, %v5838
      %v5845 = vsel %vm2198, %v5808, 0
      %v5848 = vsel %vm2198, %v5809, 0
      %v5851 = vsel %vm2198, %v5810, 0
      %v5854 = vsel %vm2198, %v5811, 0
      %v5857 = vsel %vm2198, %v5812, 0
      %v5860 = vsel %vm2198, %v5813, 0
      %v5863 = vsel %vm2198, %v5814, 0
      %v5866 = vsel %vm2198, %v5815, 0
      %v5869 = vsel %vm2198, %v5816, 0
      %v5872 = vsel %vm2198, %v5817, 0
      %v5875 = vsel %vm2198, %v5818, 0
      %v5878 = vsel %vm2198, %v5819, 0
      %v5881 = vsel %vm2198, %v5820, 0
      %v5884 = vsel %vm2198, %v5821, 0
      %v5887 = vsel %vm2198, %v5822, 0
      %v5890 = vsel %vm2198, %v5823, 0
      %5892 = vmatpush.bf16.msra.mxu0 0
      %5893 = vmatpush.bf16.msra.mxu0 0
      %5894 = vmatpush.bf16.msra.mxu0 0
      %5895 = vmatpush.bf16.msra.mxu0 0
      %5896 = vmatpush.bf16.msra.mxu0 0
      %5897 = vmatpush.bf16.msra.mxu0 0
      %5898 = vmatpush.bf16.msra.mxu0 %v5841
      %5899 = vmatpush.bf16.msra.mxu0 %v5840
      %5900 = vmatmul.bf16.gmra.mxu0 %v5845
      %v5901 = vpop.f32.mrf.mxu0
      %v5902 = vadd.f32 %v5830, %v5901
      %v5903 = vpop.f32.mrf.mxu0
      %v5904 = vadd.f32 %v5830, %v5903
      %5905 = vmatmul.bf16.gmra.mxu0 %v5848
      %v5906 = vpop.f32.mrf.mxu0
      %v5907 = vadd.f32 %v5830, %v5906
      %v5908 = vpop.f32.mrf.mxu0
      %v5909 = vadd.f32 %v5830, %v5908
      %5910 = vmatmul.bf16.gmra.mxu0 %v5851
      %v5911 = vpop.f32.mrf.mxu0
      %v5912 = vadd.f32 %v5830, %v5911
      %v5913 = vpop.f32.mrf.mxu0
      %v5914 = vadd.f32 %v5830, %v5913
      %5915 = vmatmul.bf16.gmra.mxu0 %v5854
      %v5916 = vpop.f32.mrf.mxu0
      %v5917 = vadd.f32 %v5830, %v5916
      %v5918 = vpop.f32.mrf.mxu0
      %v5919 = vadd.f32 %v5830, %v5918
      %5920 = vmatmul.bf16.gmra.mxu0 %v5857
      %v5921 = vpop.f32.mrf.mxu0
      %v5922 = vadd.f32 %v5830, %v5921
      %v5923 = vpop.f32.mrf.mxu0
      %v5924 = vadd.f32 %v5830, %v5923
      %5925 = vmatmul.bf16.gmra.mxu0 %v5860
      %v5926 = vpop.f32.mrf.mxu0
      %v5927 = vadd.f32 %v5830, %v5926
      %v5928 = vpop.f32.mrf.mxu0
      %v5929 = vadd.f32 %v5830, %v5928
      %5930 = vmatmul.bf16.gmra.mxu0 %v5863
      %v5931 = vpop.f32.mrf.mxu0
      %v5932 = vadd.f32 %v5830, %v5931
      %v5933 = vpop.f32.mrf.mxu0
      %v5934 = vadd.f32 %v5830, %v5933
      %5935 = vmatmul.bf16.gmra.mxu0 %v5866
      %v5936 = vpop.f32.mrf.mxu0
      %v5937 = vadd.f32 %v5830, %v5936
      %v5938 = vpop.f32.mrf.mxu0
      %v5939 = vadd.f32 %v5830, %v5938
      %5940 = vmatmul.bf16.gmra.mxu0 %v5869
      %v5941 = vpop.f32.mrf.mxu0
      %v5942 = vadd.f32 %v5830, %v5941
      %v5943 = vpop.f32.mrf.mxu0
      %v5944 = vadd.f32 %v5830, %v5943
      %5945 = vmatmul.bf16.gmra.mxu0 %v5872
      %v5946 = vpop.f32.mrf.mxu0
      %v5947 = vadd.f32 %v5830, %v5946
      %v5948 = vpop.f32.mrf.mxu0
      %v5949 = vadd.f32 %v5830, %v5948
      %5950 = vmatmul.bf16.gmra.mxu0 %v5875
      %v5951 = vpop.f32.mrf.mxu0
      %v5952 = vadd.f32 %v5830, %v5951
      %v5953 = vpop.f32.mrf.mxu0
      %v5954 = vadd.f32 %v5830, %v5953
      %5955 = vmatmul.bf16.gmra.mxu0 %v5878
      %v5956 = vpop.f32.mrf.mxu0
      %v5957 = vadd.f32 %v5830, %v5956
      %v5958 = vpop.f32.mrf.mxu0
      %v5959 = vadd.f32 %v5830, %v5958
      %5960 = vmatmul.bf16.gmra.mxu0 %v5881
      %v5961 = vpop.f32.mrf.mxu0
      %v5962 = vadd.f32 %v5830, %v5961
      %v5963 = vpop.f32.mrf.mxu0
      %v5964 = vadd.f32 %v5830, %v5963
      %5965 = vmatmul.bf16.gmra.mxu0 %v5884
      %v5966 = vpop.f32.mrf.mxu0
      %v5967 = vadd.f32 %v5830, %v5966
      %v5968 = vpop.f32.mrf.mxu0
      %v5969 = vadd.f32 %v5830, %v5968
      %5970 = vmatmul.bf16.gmra.mxu0 %v5887
      %v5971 = vpop.f32.mrf.mxu0
      %v5972 = vadd.f32 %v5830, %v5971
      %v5973 = vpop.f32.mrf.mxu0
      %v5974 = vadd.f32 %v5830, %v5973
      %5975 = vmatmul.bf16.gmra.mxu0 %v5890
      %v5976 = vpop.f32.mrf.mxu0
      %v5977 = vadd.f32 %v5830, %v5976
      %v5978 = vpop.f32.mrf.mxu0
      %v5979 = vadd.f32 %v5830, %v5978
      %5980 = vdwg.mxu0
      %v5981 = vxor.u32 %v5902, 2147483648
      %v5982 = vxor.u32 %v5904, 2147483648
      %v5983 = vxor.u32 %v5907, 2147483648
      %v5984 = vxor.u32 %v5909, 2147483648
      %v5985 = vxor.u32 %v5912, 2147483648
      %v5986 = vxor.u32 %v5914, 2147483648
      %v5987 = vxor.u32 %v5917, 2147483648
      %v5988 = vxor.u32 %v5919, 2147483648
      %v5989 = vxor.u32 %v5922, 2147483648
      %v5990 = vxor.u32 %v5924, 2147483648
      %v5991 = vxor.u32 %v5927, 2147483648
      %v5992 = vxor.u32 %v5929, 2147483648
      %v5993 = vxor.u32 %v5932, 2147483648
      %v5994 = vxor.u32 %v5934, 2147483648
      %v5995 = vxor.u32 %v5937, 2147483648
      %v5996 = vxor.u32 %v5939, 2147483648
      %v5997 = vxor.u32 %v5942, 2147483648
      %v5998 = vxor.u32 %v5944, 2147483648
      %v5999 = vxor.u32 %v5947, 2147483648
      %v6000 = vxor.u32 %v5949, 2147483648
      %v6001 = vxor.u32 %v5952, 2147483648
      %v6002 = vxor.u32 %v5954, 2147483648
      %v6003 = vxor.u32 %v5957, 2147483648
      %v6004 = vxor.u32 %v5959, 2147483648
      %v6005 = vxor.u32 %v5962, 2147483648
      %v6006 = vxor.u32 %v5964, 2147483648
      %v6007 = vxor.u32 %v5967, 2147483648
      %v6008 = vxor.u32 %v5969, 2147483648
      %v6009 = vxor.u32 %v5972, 2147483648
      %v6010 = vxor.u32 %v5974, 2147483648
      %v6011 = vxor.u32 %v5977, 2147483648
      %v6012 = vxor.u32 %v5979, 2147483648
      %v6013 = vmul.f32 %v5981, 1.442695
      %v6014 = vpow.pop %v6013
      %v6015 = vmul.f32 %v5982, 1.442695
      %v6016 = vpow.pop %v6015
      %v6017 = vmul.f32 %v5983, 1.442695
      %v6018 = vpow.pop %v6017
      %v6019 = vmul.f32 %v5984, 1.442695
      %v6020 = vpow.pop %v6019
      %v6021 = vmul.f32 %v5985, 1.442695
      %v6022 = vpow.pop %v6021
      %v6023 = vmul.f32 %v5986, 1.442695
      %v6024 = vpow.pop %v6023
      %v6025 = vmul.f32 %v5987, 1.442695
      %v6026 = vpow.pop %v6025
      %v6027 = vmul.f32 %v5988, 1.442695
      %v6028 = vpow.pop %v6027
      %v6029 = vmul.f32 %v5989, 1.442695
      %v6030 = vpow.pop %v6029
      %v6031 = vmul.f32 %v5990, 1.442695
      %v6032 = vpow.pop %v6031
      %v6033 = vmul.f32 %v5991, 1.442695
      %v6034 = vpow.pop %v6033
      %v6035 = vmul.f32 %v5992, 1.442695
      %v6036 = vpow.pop %v6035
      %v6037 = vmul.f32 %v5993, 1.442695
      %v6038 = vpow.pop %v6037
      %v6039 = vmul.f32 %v5994, 1.442695
      %v6040 = vpow.pop %v6039
      %v6041 = vmul.f32 %v5995, 1.442695
      %v6042 = vpow.pop %v6041
      %v6043 = vmul.f32 %v5996, 1.442695
      %v6044 = vpow.pop %v6043
      %v6045 = vmul.f32 %v5997, 1.442695
      %v6046 = vpow.pop %v6045
      %v6047 = vmul.f32 %v5998, 1.442695
      %v6048 = vpow.pop %v6047
      %v6049 = vmul.f32 %v5999, 1.442695
      %v6050 = vpow.pop %v6049
      %v6051 = vmul.f32 %v6000, 1.442695
      %v6052 = vpow.pop %v6051
      %v6053 = vmul.f32 %v6001, 1.442695
      %v6054 = vpow.pop %v6053
      %v6055 = vmul.f32 %v6002, 1.442695
      %v6056 = vpow.pop %v6055
      %v6057 = vmul.f32 %v6003, 1.442695
      %v6058 = vpow.pop %v6057
      %v6059 = vmul.f32 %v6004, 1.442695
      %v6060 = vpow.pop %v6059
      %v6061 = vmul.f32 %v6005, 1.442695
      %v6062 = vpow.pop %v6061
      %v6063 = vmul.f32 %v6006, 1.442695
      %v6064 = vpow.pop %v6063
      %v6065 = vmul.f32 %v6007, 1.442695
      %v6066 = vpow.pop %v6065
      %v6067 = vmul.f32 %v6008, 1.442695
      %v6068 = vpow.pop %v6067
      %v6069 = vmul.f32 %v6009, 1.442695
      %v6070 = vpow.pop %v6069
      %v6071 = vmul.f32 %v6010, 1.442695
      %v6072 = vpow.pop %v6071
      %v6073 = vmul.f32 %v6011, 1.442695
      %v6074 = vpow.pop %v6073
      %v6075 = vmul.f32 %v6012, 1.442695
      %v6076 = vpow.pop %v6075
      %v6077 = vadd.f32 %v6014, 1.0
      %v6078 = vadd.f32 %v6016, 1.0
      %v6079 = vadd.f32 %v6018, 1.0
      %v6080 = vadd.f32 %v6020, 1.0
      %v6081 = vadd.f32 %v6022, 1.0
      %v6082 = vadd.f32 %v6024, 1.0
      %v6083 = vadd.f32 %v6026, 1.0
      %v6084 = vadd.f32 %v6028, 1.0
      %v6085 = vadd.f32 %v6030, 1.0
      %v6086 = vadd.f32 %v6032, 1.0
      %v6087 = vadd.f32 %v6034, 1.0
      %v6088 = vadd.f32 %v6036, 1.0
      %v6089 = vadd.f32 %v6038, 1.0
      %v6090 = vadd.f32 %v6040, 1.0
      %v6091 = vadd.f32 %v6042, 1.0
      %v6092 = vadd.f32 %v6044, 1.0
      %v6093 = vadd.f32 %v6046, 1.0
      %v6094 = vadd.f32 %v6048, 1.0
      %v6095 = vadd.f32 %v6050, 1.0
      %v6096 = vadd.f32 %v6052, 1.0
      %v6097 = vadd.f32 %v6054, 1.0
      %v6098 = vadd.f32 %v6056, 1.0
      %v6099 = vadd.f32 %v6058, 1.0
      %v6100 = vadd.f32 %v6060, 1.0
      %v6101 = vadd.f32 %v6062, 1.0
      %v6102 = vadd.f32 %v6064, 1.0
      %v6103 = vadd.f32 %v6066, 1.0
      %v6104 = vadd.f32 %v6068, 1.0
      %v6105 = vadd.f32 %v6070, 1.0
      %v6106 = vadd.f32 %v6072, 1.0
      %v6107 = vadd.f32 %v6074, 1.0
      %v6108 = vadd.f32 %v6076, 1.0
      %v6109 = vrcp.pop %v6077
      %v6110 = vmul.f32 %v6077, %v6109
      %v6111 = vsub.f32 1.0, %v6110
      %v6112 = vmul.f32 %v6109, %v6111
      %v6113 = vadd.f32 %v6109, %v6112
      %vm6114 = vweird.f32 %v6077
      %vm6115 = vweird.f32 %v6109
      %vm6116 = vmor %vm6114, %vm6115
      %v6117 = vsel %vm6116, %v6109, %v6113
      %v6118 = vand.u32 2147483647, %v6077
      %vm6119 = vcmp.eq.f32.partialorder %v6118, 8.507059e+37
      %v6120 = vand.u32 %v6077, 2147483648
      %v6121 = vor.u32 1.1754944e-38, %v6120
      %v6122 = vsel %vm6119, %v6121, %v6117
      %v6123 = vmul.f32 1.0, %v6122
      %v6124 = vrcp.pop %v6078
      %v6125 = vmul.f32 %v6078, %v6124
      %v6126 = vsub.f32 1.0, %v6125
      %v6127 = vmul.f32 %v6124, %v6126
      %v6128 = vadd.f32 %v6124, %v6127
      %vm6129 = vweird.f32 %v6078
      %vm6130 = vweird.f32 %v6124
      %vm6131 = vmor %vm6129, %vm6130
      %v6132 = vsel %vm6131, %v6124, %v6128
      %v6133 = vand.u32 2147483647, %v6078
      %vm6134 = vcmp.eq.f32.partialorder %v6133, 8.507059e+37
      %v6135 = vand.u32 %v6078, 2147483648
      %v6136 = vor.u32 1.1754944e-38, %v6135
      %v6137 = vsel %vm6134, %v6136, %v6132
      %v6138 = vmul.f32 1.0, %v6137
      %v6139 = vrcp.pop %v6079
      %v6140 = vmul.f32 %v6079, %v6139
      %v6141 = vsub.f32 1.0, %v6140
      %v6142 = vmul.f32 %v6139, %v6141
      %v6143 = vadd.f32 %v6139, %v6142
      %vm6144 = vweird.f32 %v6079
      %vm6145 = vweird.f32 %v6139
      %vm6146 = vmor %vm6144, %vm6145
      %v6147 = vsel %vm6146, %v6139, %v6143
      %v6148 = vand.u32 2147483647, %v6079
      %vm6149 = vcmp.eq.f32.partialorder %v6148, 8.507059e+37
      %v6150 = vand.u32 %v6079, 2147483648
      %v6151 = vor.u32 1.1754944e-38, %v6150
      %v6152 = vsel %vm6149, %v6151, %v6147
      %v6153 = vmul.f32 1.0, %v6152
      %v6154 = vrcp.pop %v6080
      %v6155 = vmul.f32 %v6080, %v6154
      %v6156 = vsub.f32 1.0, %v6155
      %v6157 = vmul.f32 %v6154, %v6156
      %v6158 = vadd.f32 %v6154, %v6157
      %vm6159 = vweird.f32 %v6080
      %vm6160 = vweird.f32 %v6154
      %vm6161 = vmor %vm6159, %vm6160
      %v6162 = vsel %vm6161, %v6154, %v6158
      %v6163 = vand.u32 2147483647, %v6080
      %vm6164 = vcmp.eq.f32.partialorder %v6163, 8.507059e+37
      %v6165 = vand.u32 %v6080, 2147483648
      %v6166 = vor.u32 1.1754944e-38, %v6165
      %v6167 = vsel %vm6164, %v6166, %v6162
      %v6168 = vmul.f32 1.0, %v6167
      %v6169 = vrcp.pop %v6081
      %v6170 = vmul.f32 %v6081, %v6169
      %v6171 = vsub.f32 1.0, %v6170
      %v6172 = vmul.f32 %v6169, %v6171
      %v6173 = vadd.f32 %v6169, %v6172
      %vm6174 = vweird.f32 %v6081
      %vm6175 = vweird.f32 %v6169
      %vm6176 = vmor %vm6174, %vm6175
      %v6177 = vsel %vm6176, %v6169, %v6173
      %v6178 = vand.u32 2147483647, %v6081
      %vm6179 = vcmp.eq.f32.partialorder %v6178, 8.507059e+37
      %v6180 = vand.u32 %v6081, 2147483648
      %v6181 = vor.u32 1.1754944e-38, %v6180
      %v6182 = vsel %vm6179, %v6181, %v6177
      %v6183 = vmul.f32 1.0, %v6182
      %v6184 = vrcp.pop %v6082
      %v6185 = vmul.f32 %v6082, %v6184
      %v6186 = vsub.f32 1.0, %v6185
      %v6187 = vmul.f32 %v6184, %v6186
      %v6188 = vadd.f32 %v6184, %v6187
      %vm6189 = vweird.f32 %v6082
      %vm6190 = vweird.f32 %v6184
      %vm6191 = vmor %vm6189, %vm6190
      %v6192 = vsel %vm6191, %v6184, %v6188
      %v6193 = vand.u32 2147483647, %v6082
      %vm6194 = vcmp.eq.f32.partialorder %v6193, 8.507059e+37
      %v6195 = vand.u32 %v6082, 2147483648
      %v6196 = vor.u32 1.1754944e-38, %v6195
      %v6197 = vsel %vm6194, %v6196, %v6192
      %v6198 = vmul.f32 1.0, %v6197
      %v6199 = vrcp.pop %v6083
      %v6200 = vmul.f32 %v6083, %v6199
      %v6201 = vsub.f32 1.0, %v6200
      %v6202 = vmul.f32 %v6199, %v6201
      %v6203 = vadd.f32 %v6199, %v6202
      %vm6204 = vweird.f32 %v6083
      %vm6205 = vweird.f32 %v6199
      %vm6206 = vmor %vm6204, %vm6205
      %v6207 = vsel %vm6206, %v6199, %v6203
      %v6208 = vand.u32 2147483647, %v6083
      %vm6209 = vcmp.eq.f32.partialorder %v6208, 8.507059e+37
      %v6210 = vand.u32 %v6083, 2147483648
      %v6211 = vor.u32 1.1754944e-38, %v6210
      %v6212 = vsel %vm6209, %v6211, %v6207
      %v6213 = vmul.f32 1.0, %v6212
      %v6214 = vrcp.pop %v6084
      %v6215 = vmul.f32 %v6084, %v6214
      %v6216 = vsub.f32 1.0, %v6215
      %v6217 = vmul.f32 %v6214, %v6216
      %v6218 = vadd.f32 %v6214, %v6217
      %vm6219 = vweird.f32 %v6084
      %vm6220 = vweird.f32 %v6214
      %vm6221 = vmor %vm6219, %vm6220
      %v6222 = vsel %vm6221, %v6214, %v6218
      %v6223 = vand.u32 2147483647, %v6084
      %vm6224 = vcmp.eq.f32.partialorder %v6223, 8.507059e+37
      %v6225 = vand.u32 %v6084, 2147483648
      %v6226 = vor.u32 1.1754944e-38, %v6225
      %v6227 = vsel %vm6224, %v6226, %v6222
      %v6228 = vmul.f32 1.0, %v6227
      %v6229 = vrcp.pop %v6085
      %v6230 = vmul.f32 %v6085, %v6229
      %v6231 = vsub.f32 1.0, %v6230
      %v6232 = vmul.f32 %v6229, %v6231
      %v6233 = vadd.f32 %v6229, %v6232
      %vm6234 = vweird.f32 %v6085
      %vm6235 = vweird.f32 %v6229
      %vm6236 = vmor %vm6234, %vm6235
      %v6237 = vsel %vm6236, %v6229, %v6233
      %v6238 = vand.u32 2147483647, %v6085
      %vm6239 = vcmp.eq.f32.partialorder %v6238, 8.507059e+37
      %v6240 = vand.u32 %v6085, 2147483648
      %v6241 = vor.u32 1.1754944e-38, %v6240
      %v6242 = vsel %vm6239, %v6241, %v6237
      %v6243 = vmul.f32 1.0, %v6242
      %v6244 = vrcp.pop %v6086
      %v6245 = vmul.f32 %v6086, %v6244
      %v6246 = vsub.f32 1.0, %v6245
      %v6247 = vmul.f32 %v6244, %v6246
      %v6248 = vadd.f32 %v6244, %v6247
      %vm6249 = vweird.f32 %v6086
      %vm6250 = vweird.f32 %v6244
      %vm6251 = vmor %vm6249, %vm6250
      %v6252 = vsel %vm6251, %v6244, %v6248
      %v6253 = vand.u32 2147483647, %v6086
      %vm6254 = vcmp.eq.f32.partialorder %v6253, 8.507059e+37
      %v6255 = vand.u32 %v6086, 2147483648
      %v6256 = vor.u32 1.1754944e-38, %v6255
      %v6257 = vsel %vm6254, %v6256, %v6252
      %v6258 = vmul.f32 1.0, %v6257
      %v6259 = vrcp.pop %v6087
      %v6260 = vmul.f32 %v6087, %v6259
      %v6261 = vsub.f32 1.0, %v6260
      %v6262 = vmul.f32 %v6259, %v6261
      %v6263 = vadd.f32 %v6259, %v6262
      %vm6264 = vweird.f32 %v6087
      %vm6265 = vweird.f32 %v6259
      %vm6266 = vmor %vm6264, %vm6265
      %v6267 = vsel %vm6266, %v6259, %v6263
      %v6268 = vand.u32 2147483647, %v6087
      %vm6269 = vcmp.eq.f32.partialorder %v6268, 8.507059e+37
      %v6270 = vand.u32 %v6087, 2147483648
      %v6271 = vor.u32 1.1754944e-38, %v6270
      %v6272 = vsel %vm6269, %v6271, %v6267
      %v6273 = vmul.f32 1.0, %v6272
      %v6274 = vrcp.pop %v6088
      %v6275 = vmul.f32 %v6088, %v6274
      %v6276 = vsub.f32 1.0, %v6275
      %v6277 = vmul.f32 %v6274, %v6276
      %v6278 = vadd.f32 %v6274, %v6277
      %vm6279 = vweird.f32 %v6088
      %vm6280 = vweird.f32 %v6274
      %vm6281 = vmor %vm6279, %vm6280
      %v6282 = vsel %vm6281, %v6274, %v6278
      %v6283 = vand.u32 2147483647, %v6088
      %vm6284 = vcmp.eq.f32.partialorder %v6283, 8.507059e+37
      %v6285 = vand.u32 %v6088, 2147483648
      %v6286 = vor.u32 1.1754944e-38, %v6285
      %v6287 = vsel %vm6284, %v6286, %v6282
      %v6288 = vmul.f32 1.0, %v6287
      %v6289 = vrcp.pop %v6089
      %v6290 = vmul.f32 %v6089, %v6289
      %v6291 = vsub.f32 1.0, %v6290
      %v6292 = vmul.f32 %v6289, %v6291
      %v6293 = vadd.f32 %v6289, %v6292
      %vm6294 = vweird.f32 %v6089
      %vm6295 = vweird.f32 %v6289
      %vm6296 = vmor %vm6294, %vm6295
      %v6297 = vsel %vm6296, %v6289, %v6293
      %v6298 = vand.u32 2147483647, %v6089
      %vm6299 = vcmp.eq.f32.partialorder %v6298, 8.507059e+37
      %v6300 = vand.u32 %v6089, 2147483648
      %v6301 = vor.u32 1.1754944e-38, %v6300
      %v6302 = vsel %vm6299, %v6301, %v6297
      %v6303 = vmul.f32 1.0, %v6302
      %v6304 = vrcp.pop %v6090
      %v6305 = vmul.f32 %v6090, %v6304
      %v6306 = vsub.f32 1.0, %v6305
      %v6307 = vmul.f32 %v6304, %v6306
      %v6308 = vadd.f32 %v6304, %v6307
      %vm6309 = vweird.f32 %v6090
      %vm6310 = vweird.f32 %v6304
      %vm6311 = vmor %vm6309, %vm6310
      %v6312 = vsel %vm6311, %v6304, %v6308
      %v6313 = vand.u32 2147483647, %v6090
      %vm6314 = vcmp.eq.f32.partialorder %v6313, 8.507059e+37
      %v6315 = vand.u32 %v6090, 2147483648
      %v6316 = vor.u32 1.1754944e-38, %v6315
      %v6317 = vsel %vm6314, %v6316, %v6312
      %v6318 = vmul.f32 1.0, %v6317
      %v6319 = vrcp.pop %v6091
      %v6320 = vmul.f32 %v6091, %v6319
      %v6321 = vsub.f32 1.0, %v6320
      %v6322 = vmul.f32 %v6319, %v6321
      %v6323 = vadd.f32 %v6319, %v6322
      %vm6324 = vweird.f32 %v6091
      %vm6325 = vweird.f32 %v6319
      %vm6326 = vmor %vm6324, %vm6325
      %v6327 = vsel %vm6326, %v6319, %v6323
      %v6328 = vand.u32 2147483647, %v6091
      %vm6329 = vcmp.eq.f32.partialorder %v6328, 8.507059e+37
      %v6330 = vand.u32 %v6091, 2147483648
      %v6331 = vor.u32 1.1754944e-38, %v6330
      %v6332 = vsel %vm6329, %v6331, %v6327
      %v6333 = vmul.f32 1.0, %v6332
      %v6334 = vrcp.pop %v6092
      %v6335 = vmul.f32 %v6092, %v6334
      %v6336 = vsub.f32 1.0, %v6335
      %v6337 = vmul.f32 %v6334, %v6336
      %v6338 = vadd.f32 %v6334, %v6337
      %vm6339 = vweird.f32 %v6092
      %vm6340 = vweird.f32 %v6334
      %vm6341 = vmor %vm6339, %vm6340
      %v6342 = vsel %vm6341, %v6334, %v6338
      %v6343 = vand.u32 2147483647, %v6092
      %vm6344 = vcmp.eq.f32.partialorder %v6343, 8.507059e+37
      %v6345 = vand.u32 %v6092, 2147483648
      %v6346 = vor.u32 1.1754944e-38, %v6345
      %v6347 = vsel %vm6344, %v6346, %v6342
      %v6348 = vmul.f32 1.0, %v6347
      %v6349 = vrcp.pop %v6093
      %v6350 = vmul.f32 %v6093, %v6349
      %v6351 = vsub.f32 1.0, %v6350
      %v6352 = vmul.f32 %v6349, %v6351
      %v6353 = vadd.f32 %v6349, %v6352
      %vm6354 = vweird.f32 %v6093
      %vm6355 = vweird.f32 %v6349
      %vm6356 = vmor %vm6354, %vm6355
      %v6357 = vsel %vm6356, %v6349, %v6353
      %v6358 = vand.u32 2147483647, %v6093
      %vm6359 = vcmp.eq.f32.partialorder %v6358, 8.507059e+37
      %v6360 = vand.u32 %v6093, 2147483648
      %v6361 = vor.u32 1.1754944e-38, %v6360
      %v6362 = vsel %vm6359, %v6361, %v6357
      %v6363 = vmul.f32 1.0, %v6362
      %v6364 = vrcp.pop %v6094
      %v6365 = vmul.f32 %v6094, %v6364
      %v6366 = vsub.f32 1.0, %v6365
      %v6367 = vmul.f32 %v6364, %v6366
      %v6368 = vadd.f32 %v6364, %v6367
      %vm6369 = vweird.f32 %v6094
      %vm6370 = vweird.f32 %v6364
      %vm6371 = vmor %vm6369, %vm6370
      %v6372 = vsel %vm6371, %v6364, %v6368
      %v6373 = vand.u32 2147483647, %v6094
      %vm6374 = vcmp.eq.f32.partialorder %v6373, 8.507059e+37
      %v6375 = vand.u32 %v6094, 2147483648
      %v6376 = vor.u32 1.1754944e-38, %v6375
      %v6377 = vsel %vm6374, %v6376, %v6372
      %v6378 = vmul.f32 1.0, %v6377
      %v6379 = vrcp.pop %v6095
      %v6380 = vmul.f32 %v6095, %v6379
      %v6381 = vsub.f32 1.0, %v6380
      %v6382 = vmul.f32 %v6379, %v6381
      %v6383 = vadd.f32 %v6379, %v6382
      %vm6384 = vweird.f32 %v6095
      %vm6385 = vweird.f32 %v6379
      %vm6386 = vmor %vm6384, %vm6385
      %v6387 = vsel %vm6386, %v6379, %v6383
      %v6388 = vand.u32 2147483647, %v6095
      %vm6389 = vcmp.eq.f32.partialorder %v6388, 8.507059e+37
      %v6390 = vand.u32 %v6095, 2147483648
      %v6391 = vor.u32 1.1754944e-38, %v6390
      %v6392 = vsel %vm6389, %v6391, %v6387
      %v6393 = vmul.f32 1.0, %v6392
      %v6394 = vrcp.pop %v6096
      %v6395 = vmul.f32 %v6096, %v6394
      %v6396 = vsub.f32 1.0, %v6395
      %v6397 = vmul.f32 %v6394, %v6396
      %v6398 = vadd.f32 %v6394, %v6397
      %vm6399 = vweird.f32 %v6096
      %vm6400 = vweird.f32 %v6394
      %vm6401 = vmor %vm6399, %vm6400
      %v6402 = vsel %vm6401, %v6394, %v6398
      %v6403 = vand.u32 2147483647, %v6096
      %vm6404 = vcmp.eq.f32.partialorder %v6403, 8.507059e+37
      %v6405 = vand.u32 %v6096, 2147483648
      %v6406 = vor.u32 1.1754944e-38, %v6405
      %v6407 = vsel %vm6404, %v6406, %v6402
      %v6408 = vmul.f32 1.0, %v6407
      %v6409 = vrcp.pop %v6097
      %v6410 = vmul.f32 %v6097, %v6409
      %v6411 = vsub.f32 1.0, %v6410
      %v6412 = vmul.f32 %v6409, %v6411
      %v6413 = vadd.f32 %v6409, %v6412
      %vm6414 = vweird.f32 %v6097
      %vm6415 = vweird.f32 %v6409
      %vm6416 = vmor %vm6414, %vm6415
      %v6417 = vsel %vm6416, %v6409, %v6413
      %v6418 = vand.u32 2147483647, %v6097
      %vm6419 = vcmp.eq.f32.partialorder %v6418, 8.507059e+37
      %v6420 = vand.u32 %v6097, 2147483648
      %v6421 = vor.u32 1.1754944e-38, %v6420
      %v6422 = vsel %vm6419, %v6421, %v6417
      %v6423 = vmul.f32 1.0, %v6422
      %v6424 = vrcp.pop %v6098
      %v6425 = vmul.f32 %v6098, %v6424
      %v6426 = vsub.f32 1.0, %v6425
      %v6427 = vmul.f32 %v6424, %v6426
      %v6428 = vadd.f32 %v6424, %v6427
      %vm6429 = vweird.f32 %v6098
      %vm6430 = vweird.f32 %v6424
      %vm6431 = vmor %vm6429, %vm6430
      %v6432 = vsel %vm6431, %v6424, %v6428
      %v6433 = vand.u32 2147483647, %v6098
      %vm6434 = vcmp.eq.f32.partialorder %v6433, 8.507059e+37
      %v6435 = vand.u32 %v6098, 2147483648
      %v6436 = vor.u32 1.1754944e-38, %v6435
      %v6437 = vsel %vm6434, %v6436, %v6432
      %v6438 = vmul.f32 1.0, %v6437
      %v6439 = vrcp.pop %v6099
      %v6440 = vmul.f32 %v6099, %v6439
      %v6441 = vsub.f32 1.0, %v6440
      %v6442 = vmul.f32 %v6439, %v6441
      %v6443 = vadd.f32 %v6439, %v6442
      %vm6444 = vweird.f32 %v6099
      %vm6445 = vweird.f32 %v6439
      %vm6446 = vmor %vm6444, %vm6445
      %v6447 = vsel %vm6446, %v6439, %v6443
      %v6448 = vand.u32 2147483647, %v6099
      %vm6449 = vcmp.eq.f32.partialorder %v6448, 8.507059e+37
      %v6450 = vand.u32 %v6099, 2147483648
      %v6451 = vor.u32 1.1754944e-38, %v6450
      %v6452 = vsel %vm6449, %v6451, %v6447
      %v6453 = vmul.f32 1.0, %v6452
      %v6454 = vrcp.pop %v6100
      %v6455 = vmul.f32 %v6100, %v6454
      %v6456 = vsub.f32 1.0, %v6455
      %v6457 = vmul.f32 %v6454, %v6456
      %v6458 = vadd.f32 %v6454, %v6457
      %vm6459 = vweird.f32 %v6100
      %vm6460 = vweird.f32 %v6454
      %vm6461 = vmor %vm6459, %vm6460
      %v6462 = vsel %vm6461, %v6454, %v6458
      %v6463 = vand.u32 2147483647, %v6100
      %vm6464 = vcmp.eq.f32.partialorder %v6463, 8.507059e+37
      %v6465 = vand.u32 %v6100, 2147483648
      %v6466 = vor.u32 1.1754944e-38, %v6465
      %v6467 = vsel %vm6464, %v6466, %v6462
      %v6468 = vmul.f32 1.0, %v6467
      %v6469 = vrcp.pop %v6101
      %v6470 = vmul.f32 %v6101, %v6469
      %v6471 = vsub.f32 1.0, %v6470
      %v6472 = vmul.f32 %v6469, %v6471
      %v6473 = vadd.f32 %v6469, %v6472
      %vm6474 = vweird.f32 %v6101
      %vm6475 = vweird.f32 %v6469
      %vm6476 = vmor %vm6474, %vm6475
      %v6477 = vsel %vm6476, %v6469, %v6473
      %v6478 = vand.u32 2147483647, %v6101
      %vm6479 = vcmp.eq.f32.partialorder %v6478, 8.507059e+37
      %v6480 = vand.u32 %v6101, 2147483648
      %v6481 = vor.u32 1.1754944e-38, %v6480
      %v6482 = vsel %vm6479, %v6481, %v6477
      %v6483 = vmul.f32 1.0, %v6482
      %v6484 = vrcp.pop %v6102
      %v6485 = vmul.f32 %v6102, %v6484
      %v6486 = vsub.f32 1.0, %v6485
      %v6487 = vmul.f32 %v6484, %v6486
      %v6488 = vadd.f32 %v6484, %v6487
      %vm6489 = vweird.f32 %v6102
      %vm6490 = vweird.f32 %v6484
      %vm6491 = vmor %vm6489, %vm6490
      %v6492 = vsel %vm6491, %v6484, %v6488
      %v6493 = vand.u32 2147483647, %v6102
      %vm6494 = vcmp.eq.f32.partialorder %v6493, 8.507059e+37
      %v6495 = vand.u32 %v6102, 2147483648
      %v6496 = vor.u32 1.1754944e-38, %v6495
      %v6497 = vsel %vm6494, %v6496, %v6492
      %v6498 = vmul.f32 1.0, %v6497
      %v6499 = vrcp.pop %v6103
      %v6500 = vmul.f32 %v6103, %v6499
      %v6501 = vsub.f32 1.0, %v6500
      %v6502 = vmul.f32 %v6499, %v6501
      %v6503 = vadd.f32 %v6499, %v6502
      %vm6504 = vweird.f32 %v6103
      %vm6505 = vweird.f32 %v6499
      %vm6506 = vmor %vm6504, %vm6505
      %v6507 = vsel %vm6506, %v6499, %v6503
      %v6508 = vand.u32 2147483647, %v6103
      %vm6509 = vcmp.eq.f32.partialorder %v6508, 8.507059e+37
      %v6510 = vand.u32 %v6103, 2147483648
      %v6511 = vor.u32 1.1754944e-38, %v6510
      %v6512 = vsel %vm6509, %v6511, %v6507
      %v6513 = vmul.f32 1.0, %v6512
      %v6514 = vrcp.pop %v6104
      %v6515 = vmul.f32 %v6104, %v6514
      %v6516 = vsub.f32 1.0, %v6515
      %v6517 = vmul.f32 %v6514, %v6516
      %v6518 = vadd.f32 %v6514, %v6517
      %vm6519 = vweird.f32 %v6104
      %vm6520 = vweird.f32 %v6514
      %vm6521 = vmor %vm6519, %vm6520
      %v6522 = vsel %vm6521, %v6514, %v6518
      %v6523 = vand.u32 2147483647, %v6104
      %vm6524 = vcmp.eq.f32.partialorder %v6523, 8.507059e+37
      %v6525 = vand.u32 %v6104, 2147483648
      %v6526 = vor.u32 1.1754944e-38, %v6525
      %v6527 = vsel %vm6524, %v6526, %v6522
      %v6528 = vmul.f32 1.0, %v6527
      %v6529 = vrcp.pop %v6105
      %v6530 = vmul.f32 %v6105, %v6529
      %v6531 = vsub.f32 1.0, %v6530
      %v6532 = vmul.f32 %v6529, %v6531
      %v6533 = vadd.f32 %v6529, %v6532
      %vm6534 = vweird.f32 %v6105
      %vm6535 = vweird.f32 %v6529
      %vm6536 = vmor %vm6534, %vm6535
      %v6537 = vsel %vm6536, %v6529, %v6533
      %v6538 = vand.u32 2147483647, %v6105
      %vm6539 = vcmp.eq.f32.partialorder %v6538, 8.507059e+37
      %v6540 = vand.u32 %v6105, 2147483648
      %v6541 = vor.u32 1.1754944e-38, %v6540
      %v6542 = vsel %vm6539, %v6541, %v6537
      %v6543 = vmul.f32 1.0, %v6542
      %v6544 = vrcp.pop %v6106
      %v6545 = vmul.f32 %v6106, %v6544
      %v6546 = vsub.f32 1.0, %v6545
      %v6547 = vmul.f32 %v6544, %v6546
      %v6548 = vadd.f32 %v6544, %v6547
      %vm6549 = vweird.f32 %v6106
      %vm6550 = vweird.f32 %v6544
      %vm6551 = vmor %vm6549, %vm6550
      %v6552 = vsel %vm6551, %v6544, %v6548
      %v6553 = vand.u32 2147483647, %v6106
      %vm6554 = vcmp.eq.f32.partialorder %v6553, 8.507059e+37
      %v6555 = vand.u32 %v6106, 2147483648
      %v6556 = vor.u32 1.1754944e-38, %v6555
      %v6557 = vsel %vm6554, %v6556, %v6552
      %v6558 = vmul.f32 1.0, %v6557
      %v6559 = vrcp.pop %v6107
      %v6560 = vmul.f32 %v6107, %v6559
      %v6561 = vsub.f32 1.0, %v6560
      %v6562 = vmul.f32 %v6559, %v6561
      %v6563 = vadd.f32 %v6559, %v6562
      %vm6564 = vweird.f32 %v6107
      %vm6565 = vweird.f32 %v6559
      %vm6566 = vmor %vm6564, %vm6565
      %v6567 = vsel %vm6566, %v6559, %v6563
      %v6568 = vand.u32 2147483647, %v6107
      %vm6569 = vcmp.eq.f32.partialorder %v6568, 8.507059e+37
      %v6570 = vand.u32 %v6107, 2147483648
      %v6571 = vor.u32 1.1754944e-38, %v6570
      %v6572 = vsel %vm6569, %v6571, %v6567
      %v6573 = vmul.f32 1.0, %v6572
      %v6574 = vrcp.pop %v6108
      %v6575 = vmul.f32 %v6108, %v6574
      %v6576 = vsub.f32 1.0, %v6575
      %v6577 = vmul.f32 %v6574, %v6576
      %v6578 = vadd.f32 %v6574, %v6577
      %vm6579 = vweird.f32 %v6108
      %vm6580 = vweird.f32 %v6574
      %vm6581 = vmor %vm6579, %vm6580
      %v6582 = vsel %vm6581, %v6574, %v6578
      %v6583 = vand.u32 2147483647, %v6108
      %vm6584 = vcmp.eq.f32.partialorder %v6583, 8.507059e+37
      %v6585 = vand.u32 %v6108, 2147483648
      %v6586 = vor.u32 1.1754944e-38, %v6585
      %v6587 = vsel %vm6584, %v6586, %v6582
      %v6588 = vmul.f32 1.0, %v6587
      %v6589 = vmul.f32 %v5902, %v6123
      %v6590 = vmul.f32 %v5904, %v6138
      %v6591 = vmul.f32 %v5907, %v6153
      %v6592 = vmul.f32 %v5909, %v6168
      %v6593 = vmul.f32 %v5912, %v6183
      %v6594 = vmul.f32 %v5914, %v6198
      %v6595 = vmul.f32 %v5917, %v6213
      %v6596 = vmul.f32 %v5919, %v6228
      %v6597 = vmul.f32 %v5922, %v6243
      %v6598 = vmul.f32 %v5924, %v6258
      %v6599 = vmul.f32 %v5927, %v6273
      %v6600 = vmul.f32 %v5929, %v6288
      %v6601 = vmul.f32 %v5932, %v6303
      %v6602 = vmul.f32 %v5934, %v6318
      %v6603 = vmul.f32 %v5937, %v6333
      %v6604 = vmul.f32 %v5939, %v6348
      %v6605 = vmul.f32 %v5942, %v6363
      %v6606 = vmul.f32 %v5944, %v6378
      %v6607 = vmul.f32 %v5947, %v6393
      %v6608 = vmul.f32 %v5949, %v6408
      %v6609 = vmul.f32 %v5952, %v6423
      %v6610 = vmul.f32 %v5954, %v6438
      %v6611 = vmul.f32 %v5957, %v6453
      %v6612 = vmul.f32 %v5959, %v6468
      %v6613 = vmul.f32 %v5962, %v6483
      %v6614 = vmul.f32 %v5964, %v6498
      %v6615 = vmul.f32 %v5967, %v6513
      %v6616 = vmul.f32 %v5969, %v6528
      %v6617 = vmul.f32 %v5972, %v6543
      %v6618 = vmul.f32 %v5974, %v6558
      %v6619 = vmul.f32 %v5977, %v6573
      %v6620 = vmul.f32 %v5979, %v6588
      %v6621 = vsel %vm2198, %v6589, 0.0
      %v6622 = vsel %vm2198, %v6590, 0.0
      %v6623 = vadd.f32 %v6621, %v6622
      %v6624 = vsel %vm2198, %v6591, 0.0
      %v6625 = vadd.f32 %v6623, %v6624
      %v6626 = vsel %vm2198, %v6592, 0.0
      %v6627 = vadd.f32 %v6625, %v6626
      %v6628 = vsel %vm2198, %v6593, 0.0
      %v6629 = vadd.f32 %v6627, %v6628
      %v6630 = vsel %vm2198, %v6594, 0.0
      %v6631 = vadd.f32 %v6629, %v6630
      %v6632 = vsel %vm2198, %v6595, 0.0
      %v6633 = vadd.f32 %v6631, %v6632
      %v6634 = vsel %vm2198, %v6596, 0.0
      %v6635 = vadd.f32 %v6633, %v6634
      %v6636 = vrot.slane %v6635, 4
      %v6637 = vadd.f32 %v6635, %v6636
      %v6638 = vrot.slane %v6637, 2
      %v6639 = vadd.f32 %v6637, %v6638
      %v6640 = vrot.slane %v6639, 1
      %v6641 = vadd.f32 %v6639, %v6640
      %v6642 = vsel %vm2198, %v6597, 0.0
      %v6643 = vsel %vm2198, %v6598, 0.0
      %v6644 = vadd.f32 %v6642, %v6643
      %v6645 = vsel %vm2198, %v6599, 0.0
      %v6646 = vadd.f32 %v6644, %v6645
      %v6647 = vsel %vm2198, %v6600, 0.0
      %v6648 = vadd.f32 %v6646, %v6647
      %v6649 = vsel %vm2198, %v6601, 0.0
      %v6650 = vadd.f32 %v6648, %v6649
      %v6651 = vsel %vm2198, %v6602, 0.0
      %v6652 = vadd.f32 %v6650, %v6651
      %v6653 = vsel %vm2198, %v6603, 0.0
      %v6654 = vadd.f32 %v6652, %v6653
      %v6655 = vsel %vm2198, %v6604, 0.0
      %v6656 = vadd.f32 %v6654, %v6655
      %v6657 = vrot.slane %v6656, 4
      %v6658 = vadd.f32 %v6656, %v6657
      %v6659 = vrot.slane %v6658, 2
      %v6660 = vadd.f32 %v6658, %v6659
      %v6661 = vrot.slane %v6660, 1
      %v6662 = vadd.f32 %v6660, %v6661
      %v6663 = vsel %vm2198, %v6605, 0.0
      %v6664 = vsel %vm2198, %v6606, 0.0
      %v6665 = vadd.f32 %v6663, %v6664
      %v6666 = vsel %vm2198, %v6607, 0.0
      %v6667 = vadd.f32 %v6665, %v6666
      %v6668 = vsel %vm2198, %v6608, 0.0
      %v6669 = vadd.f32 %v6667, %v6668
      %v6670 = vsel %vm2198, %v6609, 0.0
      %v6671 = vadd.f32 %v6669, %v6670
      %v6672 = vsel %vm2198, %v6610, 0.0
      %v6673 = vadd.f32 %v6671, %v6672
      %v6674 = vsel %vm2198, %v6611, 0.0
      %v6675 = vadd.f32 %v6673, %v6674
      %v6676 = vsel %vm2198, %v6612, 0.0
      %v6677 = vadd.f32 %v6675, %v6676
      %v6678 = vrot.slane %v6677, 4
      %v6679 = vadd.f32 %v6677, %v6678
      %v6680 = vrot.slane %v6679, 2
      %v6681 = vadd.f32 %v6679, %v6680
      %v6682 = vrot.slane %v6681, 1
      %v6683 = vadd.f32 %v6681, %v6682
      %v6684 = vsel %vm2198, %v6613, 0.0
      %v6685 = vsel %vm2198, %v6614, 0.0
      %v6686 = vadd.f32 %v6684, %v6685
      %v6687 = vsel %vm2198, %v6615, 0.0
      %v6688 = vadd.f32 %v6686, %v6687
      %v6689 = vsel %vm2198, %v6616, 0.0
      %v6690 = vadd.f32 %v6688, %v6689
      %v6691 = vsel %vm2198, %v6617, 0.0
      %v6692 = vadd.f32 %v6690, %v6691
      %v6693 = vsel %vm2198, %v6618, 0.0
      %v6694 = vadd.f32 %v6692, %v6693
      %v6695 = vsel %vm2198, %v6619, 0.0
      %v6696 = vadd.f32 %v6694, %v6695
      %v6697 = vsel %vm2198, %v6620, 0.0
      %v6698 = vadd.f32 %v6696, %v6697
      %v6699 = vrot.slane %v6698, 4
      %v6700 = vadd.f32 %v6698, %v6699
      %v6701 = vrot.slane %v6700, 2
      %v6702 = vadd.f32 %v6700, %v6701
      %v6703 = vrot.slane %v6702, 1
      %v6704 = vadd.f32 %v6702, %v6703
      %v6705 = vmul.f32 %v6641, 0.015625
      %v6706 = vmul.f32 %v6662, 0.015625
      %v6707 = vmul.f32 %v6683, 0.015625
      %v6708 = vmul.f32 %v6704, 0.015625
      %v6709 = vld [vmem:[%s13] sm:$0x1]
      %v6711 = vperm.slane %v6709, 0
      %v6713 = vmul.f32 %v6705, %v6711
      %v6714 = vmul.f32 %v6706, %v6711
      %v6715 = vmul.f32 %v6707, %v6711
      %v6716 = vmul.f32 %v6708, %v6711
      %v6721 = vrot.slane %v6714, 7
      %v6722 = vsel %vm5116, %v6721, %v6713
      %v6723 = vrot.slane %v6715, 6
      %v6724 = vsel %vm5118, %v6723, %v6722
      %v6725 = vrot.slane %v6716, 5
      %v6726 = vsel %vm5120, %v6725, %v6724
      %vm6728 = vcmask 257024
      %v6729 = vsel %vm6728, %v6726, 0.0
      %6730 = vadd.xlane.f32.xlu0 %v6729
      %v6731 = vpop.xlane.xlu0 %6730
      %v6732 = vld [vmem:[#allocation3] sm:$0x1]
      %v6734 = vperm.slane %v6732, 0
      %v6736 = vadd.f32 %v6731, %v6734
      %vm6737 = vcmask 3072
      %6738 = vst.msk [vmem:[%s499] sm:$0xf] %vm6737, %v6736
      %p6739 = scmp.lt.s32.totalorder %s28, 1
      %s6740 = scalar_select %p6739, %s28, 1
      %s6741 = smul.addr %s6740, 4
      %s6742 = scalar_lea.vmem %s15, %s6741
      // Predicated region
      $region81: #{efficientnet_gen_forward.1} parent=79 // pred_check
        %p6743 = pneg %p366
      $region82: #{efficientnet_gen_forward.1} parent=79 // pred_check_branch
        %6745 = sbr.rel (%p6743) target = $region84
      $region83: #{efficientnet_gen_forward.1} parent=79 // pred_region
        _
      $region84: #{efficientnet_gen_forward.1} parent=79 // pred_fallthru
        _
    $region80: #{efficientnet_gen_forward.1} parent=5 // pred_fallthru
      _
    %p6746 = scmp.le.s32.totalorder 2, %s23
    // Predicated region
    $region85: #{efficientnet_gen_forward.1} parent=5 // pred_check
      %p6747 = pneg %p6746
    $region86: #{efficientnet_gen_forward.1} parent=5 // pred_check_branch
      %6749 = sbr.rel (%p6747) target = $region88
    $region87: #{efficientnet_gen_forward.1} parent=5 // pred_region
      %s6750 = ssub.s32 %s23, 2
      // Predicated region
      $region89: #{efficientnet_gen_forward.1} parent=87 // pred_check
        %p6751 = pneg %p372
      $region90: #{efficientnet_gen_forward.1} parent=87 // pred_check_branch
        %6753 = sbr.rel (%p6751) target = $region92
      $region91: #{efficientnet_gen_forward.1} parent=87 // pred_region
        %p6754 = scmp.lt.s32.totalorder %s29, 1
        %s6755 = scalar_select %p6754, %s29, 1
        %s6756 = smul.addr %s6755, 4
        %s6757 = scalar_lea.vmem %s15, %s6756
      $region92: #{efficientnet_gen_forward.1} parent=87 // pred_fallthru
        _
    $region88: #{efficientnet_gen_forward.1} parent=5 // pred_fallthru
      _
  $region6: #{efficientnet_gen_forward.1} parent=0 // loop_footer
    %s27 = sadd.s32 1, %s23
  $region7: #{efficientnet_gen_forward.1} parent=0 // loop_footer_branch
    %22 = sbr.rel target = $region3
  $region8: #{efficientnet_gen_forward.1} parent=0 // loop_exit
    _

</llo_original>
